<compile_context>
chip_gen: v5e
topology: v5e:2x2
jax: 0.10.0
libtpu: 0.0.40
codegen_flags: <defaults>
</compile_context>

<pallas_src>
import numpy as np
import jax
import jax.numpy as jnp
from jax import lax
from jax.experimental import pallas as pl
from jax.experimental.pallas import tpu as pltpu


# ----------------------------------------------------------------- one-time param prep
def prepare_params(w_c0, b_c0, w_c1, b_c1, w_l0, b_l0, w_l1, b_l1, w_l2, b_l2,
                   *, state_dim):
    """Re-layout PyTorch-layout parameters into the layouts the kernel consumes.
    Called ONCE at init (perf review item 3): the per-call wrapper does no weight
    relayout at all."""
    C0, Cin, K, _ = w_c0.shape                      # (64, 32, 3, 3)
    C1 = w_c1.shape[0]                              # 32
    D = w_l0.shape[0]                               # 512
    S = state_dim                                   # 50
    P = (w_l0.shape[1] - S) // C1                   # 25 spatial positions after c1

    # conv0 as a patch matmul: rows of w0 = tap-major / in-channel-minor.
    w0_mat = jnp.transpose(w_c0, (2, 3, 1, 0)).reshape(K * K * Cin, C0)       # (288, 64)
    # conv1 merged tap weight: columns = tap-major / out-channel-minor.
    w1_all = jnp.transpose(w_c1, (1, 2, 3, 0)).reshape(C0, K * K * C1)        # (64, 288)
    # l0 split: y part (S, D) and conv part reordered to s-major rows (P*C1, D),
    # so the kernel's (N, 800) packed operand hits it with ONE matmul.
    w_l0y = jnp.transpose(w_l0[:, :S])                                        # (50, 512)
    w_l0h = jnp.transpose(w_l0[:, S:].reshape(D, C1, P), (2, 1, 0)).reshape(P * C1, D)

    return dict(
        w0=w0_mat, b0=b_c0.reshape(1, C0),
        w1=w1_all, b1=b_c1.reshape(1, C1),
        w_l0y=w_l0y, w_l0h=w_l0h, b_l0=b_l0.reshape(1, D),
        w_l1=jnp.transpose(w_l1), b_l1=b_l1.reshape(1, D),
        w_l2=jnp.transpose(w_l2), b_l2=b_l2.reshape(1, 1),
    )


# ----------------------------------------------------------------------------- wrapper
@jax.jit
def global_discriminator(y, M, params):
    N, Cin, H, W = M.shape
    S = y.shape[1]
    C0 = params["w0"].shape[1]
    C1 = params["b1"].shape[1]
    D = params["b_l0"].shape[1]
    K = 3
    Hc0, Wc0 = H - K + 1, W - K + 1                 # 7, 7
    Hc1, Wc1 = Hc0 - K + 1, Wc0 - K + 1             # 5, 5
    P = Hc1 * Wc1                                   # 25
    R0 = N * Hc0 * Wc0                              # 196  (h0 rows)
    R1 = N * P                                      # 100  (h1 rows, s-major: i = s*N + b)

    # conv0 patches (activation-side im2col, ~0.2 MiB of layout plumbing in XLA).
    Mx = jnp.transpose(M, (0, 2, 3, 1))                                        # NHWC
    cols = [Mx[:, ky:ky + Hc0, kx:kx + Wc0, :] for ky in range(K) for kx in range(K)]
    patches0 = jnp.concatenate(cols, axis=-1).reshape(R0, K * K * Cin)         # (196, 288)

    # conv1 gather map: for h1 row i = s*N + b, the base h0 row is b*49 + yy*7 + xx.
    # Tiny (R1,1) int32 constant; per-tap offsets are added in-kernel.
    idx = np.arange(R1)
    b_idx, s_idx = idx % N, idx // N
    base_np = (b_idx * (Hc0 * Wc0) + (s_idx // Wc1) * Wc0 + (s_idx % Wc1)).astype(np.int32)
    base_map = jnp.asarray(base_np.reshape(R1, 1))
    deltas = tuple(ky * Wc0 + kx for ky in range(K) for kx in range(K))        # 9 taps

    def kernel(patches_ref, base_ref, y_ref,
               w0_ref, b0_ref, w1_ref, b1_ref,
               w_l0y_ref, b_l0_ref, w_l0h_hbm, w_l1_hbm, b_l1_ref,
               w_l2_ref, b_l2_ref,
               out_ref,
               w_l0h_vmem, w_l1_vmem, yall_scr, h1_scr, packed_scr, dma_sem):
        f32 = jnp.float32

        # Kick off DMAs of the late-used MLP weights so they overlap conv compute.
        cp_l0h = pltpu.make_async_copy(w_l0h_hbm, w_l0h_vmem, dma_sem.at[0])
        cp_l1 = pltpu.make_async_copy(w_l1_hbm, w_l1_vmem, dma_sem.at[1])
        cp_l0h.start()
        cp_l1.start()

        # --- conv0 + ReLU: one lane-dense matmul over pre-extracted 3x3 patches.
        h0 = jnp.dot(patches_ref[...], w0_ref[...], preferred_element_type=f32)
        h0 = jnp.maximum(h0 + b0_ref[...], 0.0)                                # (196, 64)

        # --- conv1 (reassociated): one matmul vs the merged 9-tap weight, then 9
        # row-gathers as matmuls whose one-hot selectors are built on the VPU
        # (iota compare) -- no selector constants streamed from HBM.
        yall_scr[...] = jnp.dot(h0, w1_ref[...], preferred_element_type=f32)   # (196, 288)
        jj = lax.broadcasted_iota(jnp.int32, (R1, R0), 1)
        base = base_ref[...]                                                   # (100, 1)
        h1 = jnp.zeros((R1, C1), f32)
        for t, dt in enumerate(deltas):                                        # 9 taps
            sel = (jj == base + dt).astype(f32)                                # (100, 196)
            h1 = h1 + jnp.dot(sel, yall_scr[:, t * C1:(t + 1) * C1],
                              preferred_element_type=f32)
        h1_scr[...] = h1 + b1_ref[...]                                         # (100, 32)

        # --- pack conv features into one lane-dense (N, 800) operand:
        # 25 contiguous 32-lane column writes (rows are s-major, so reads are
        # contiguous static slices).
        for s in range(P):
            packed_scr[:, s * C1:(s + 1) * C1] = h1_scr[s * N:(s + 1) * N, :]

        # --- l0: y-part + a single K=800 matmul for the conv part, then ReLU.
        cp_l0h.wait()
        z = jnp.dot(y_ref[...], w_l0y_ref[...], preferred_element_type=f32) + b_l0_ref[...]
        z = z + jnp.dot(packed_scr[...], w_l0h_vmem[...], preferred_element_type=f32)
        z = jnp.maximum(z, 0.0)

        # --- l1 + ReLU, l2.
        cp_l1.wait()
        z = jnp.maximum(jnp.dot(z, w_l1_vmem[...], preferred_element_type=f32)
                        + b_l1_ref[...], 0.0)
        out_ref[...] = jnp.dot(z, w_l2_ref[...], preferred_element_type=f32) + b_l2_ref[...]

    vmem = pl.BlockSpec(memory_space=pltpu.MemorySpace.VMEM)
    hbm = pl.BlockSpec(memory_space=pl.ANY)
    n_taps = len(deltas)

    out = pl.pallas_call(
        kernel,
        out_shape=jax.ShapeDtypeStruct((N, 1), jnp.float32),
        in_specs=[vmem, vmem, vmem,
                  vmem, vmem, vmem, vmem,
                  vmem, vmem, hbm, hbm, vmem,
                  vmem, vmem],
        out_specs=vmem,
        scratch_shapes=[
            pltpu.VMEM((P * C1, D), jnp.float32),          # w_l0h landing buffer (800, 512)
            pltpu.VMEM((D, D), jnp.float32),               # w_l1 landing buffer  (512, 512)
            pltpu.VMEM((R0, n_taps * C1), jnp.float32),    # y_all                (196, 288)
            pltpu.VMEM((R1, C1), jnp.float32),             # h1                   (100, 32)
            pltpu.VMEM((N, P * C1), jnp.float32),          # packed conv features (4, 800)
            pltpu.SemaphoreType.DMA((2,)),
        ],
    )(patches0, base_map, y,
      params["w0"], params["b0"], params["w1"], params["b1"],
      params["w_l0y"], params["b_l0"], params["w_l0h"], params["w_l1"], params["b_l1"],
      params["w_l2"], params["b_l2"])
    return out


# ----------------------------------------------------------------------------- reference
def global_discriminator_ref(y, M, w_c0, b_c0, w_c1, b_c1,
                             w_l0, b_l0, w_l1, b_l1, w_l2, b_l2):
    dn = ('NCHW', 'OIHW', 'NCHW')
    hi = jax.lax.Precision.HIGHEST
    h = jax.lax.conv_general_dilated(M, w_c0, (1, 1), 'VALID',
                                     dimension_numbers=dn, precision=hi)
    h = jnp.maximum(h + b_c0[None, :, None, None], 0.0)
    h = jax.lax.conv_general_dilated(h, w_c1, (1, 1), 'VALID',
                                     dimension_numbers=dn, precision=hi)
    h = h + b_c1[None, :, None, None]
    h = h.reshape(y.shape[0], -1)
    h = jnp.concatenate([y, h], axis=1)
    h = jnp.maximum(h @ w_l0.T + b_l0, 0.0)
    h = jnp.maximum(h @ w_l1.T + b_l1, 0.0)
    return h @ w_l2.T + b_l2


if __name__ == "__main__":
    key = jax.random.PRNGKey(0)
    ks = jax.random.split(key, 12)

    # Module defaults: local_layer_depth=32, state_dim=50, input_size=9; small batch.
    N, Cin, S, input_size = 4, 32, 50, 9
    C0, C1, D = 64, 32, 512
    conv_out = input_size - 4
    feat = C1 * conv_out * conv_out                 # 800

    M = jax.random.normal(ks[0], (N, Cin, input_size, input_size), jnp.float32)
    y = jax.random.normal(ks[1], (N, S), jnp.float32)

    def u(k, shape, fan_in):
        b = 1.0 / (fan_in ** 0.5)
        return jax.random.uniform(k, shape, jnp.float32, -b, b)

    w_c0 = u(ks[2], (C0, Cin, 3, 3), Cin * 9); b_c0 = u(ks[3], (C0,), Cin * 9)
    w_c1 = u(ks[4], (C1, C0, 3, 3), C0 * 9);   b_c1 = u(ks[5], (C1,), C0 * 9)
    w_l0 = u(ks[6], (D, S + feat), S + feat);  b_l0 = u(ks[7], (D,), S + feat)
    w_l1 = u(ks[8], (D, D), D);                b_l1 = u(ks[9], (D,), D)
    w_l2 = u(ks[10], (1, D), D);               b_l2 = u(ks[11], (1,), D)

    torch_params = (w_c0, b_c0, w_c1, b_c1, w_l0, b_l0, w_l1, b_l1, w_l2, b_l2)
    kparams = prepare_params(*torch_params, state_dim=S)   # one-time weight re-layout

    out = jax.block_until_ready(global_discriminator(y, M, kparams))
    ref = global_discriminator_ref(y, M, *torch_params)

    assert out.shape == (N, 1), out.shape
    assert jnp.allclose(out, ref, rtol=1e-3, atol=1e-3), (out, ref)
    print("KERNEL_OK")
</pallas_src>

<mosaic_0001>
module attributes {stable_mosaic.version = 11 : i64} {
  func.func @kernel(%arg0: memref<196x288xf32, #tpu.memory_space<vmem>>, %arg1: memref<100x1xi32, #tpu.memory_space<vmem>>, %arg2: memref<4x50xf32, #tpu.memory_space<vmem>>, %arg3: memref<288x64xf32, #tpu.memory_space<vmem>>, %arg4: memref<1x64xf32, #tpu.memory_space<vmem>>, %arg5: memref<64x288xf32, #tpu.memory_space<vmem>>, %arg6: memref<1x32xf32, #tpu.memory_space<vmem>>, %arg7: memref<50x512xf32, #tpu.memory_space<vmem>>, %arg8: memref<1x512xf32, #tpu.memory_space<vmem>>, %arg9: memref<800x512xf32, #tpu.memory_space<any>>, %arg10: memref<512x512xf32, #tpu.memory_space<any>>, %arg11: memref<1x512xf32, #tpu.memory_space<vmem>>, %arg12: memref<512x1xf32, #tpu.memory_space<vmem>>, %arg13: memref<1x1xf32, #tpu.memory_space<vmem>>, %arg14: memref<4x1xf32, #tpu.memory_space<vmem>>, %arg15: memref<800x512xf32, #tpu.memory_space<vmem>>, %arg16: memref<512x512xf32, #tpu.memory_space<vmem>>, %arg17: memref<196x288xf32, #tpu.memory_space<vmem>>, %arg18: memref<100x32xf32, #tpu.memory_space<vmem>>, %arg19: memref<4x800xf32, #tpu.memory_space<vmem>>, %arg20: memref<2x!tpu.dma_semaphore, #tpu.memory_space<semaphore_mem>>) attributes {dimension_semantics = [], scalar_prefetch = 0 : i64, scratch_operands = 6 : i64, tpu.core_type = #tpu.core_type<tc>} {
    %c0_i32 = arith.constant 0 : i32
    %0 = tpu.memref_slice %arg20[%c0_i32] : memref<2x!tpu.dma_semaphore, #tpu.memory_space<semaphore_mem>> -> memref<1x!tpu.dma_semaphore, #tpu.memory_space<semaphore_mem>>
    %1 = tpu.memref_squeeze %0 : memref<1x!tpu.dma_semaphore, #tpu.memory_space<semaphore_mem>> -> memref<!tpu.dma_semaphore, #tpu.memory_space<semaphore_mem>>
    tpu.enqueue_dma source(%arg9 : memref<800x512xf32, #tpu.memory_space<any>>) target(%arg15 : memref<800x512xf32, #tpu.memory_space<vmem>>) target_semaphore(%1 : memref<!tpu.dma_semaphore, #tpu.memory_space<semaphore_mem>>)
    %c1_i32 = arith.constant 1 : i32
    %2 = tpu.memref_slice %arg20[%c1_i32] : memref<2x!tpu.dma_semaphore, #tpu.memory_space<semaphore_mem>> -> memref<1x!tpu.dma_semaphore, #tpu.memory_space<semaphore_mem>>
    %3 = tpu.memref_squeeze %2 : memref<1x!tpu.dma_semaphore, #tpu.memory_space<semaphore_mem>> -> memref<!tpu.dma_semaphore, #tpu.memory_space<semaphore_mem>>
    tpu.enqueue_dma source(%arg10 : memref<512x512xf32, #tpu.memory_space<any>>) target(%arg16 : memref<512x512xf32, #tpu.memory_space<vmem>>) target_semaphore(%3 : memref<!tpu.dma_semaphore, #tpu.memory_space<semaphore_mem>>)
    %c0 = arith.constant 0 : index
    %c0_0 = arith.constant 0 : index
    %4 = vector.load %arg0[%c0, %c0_0] : memref<196x288xf32, #tpu.memory_space<vmem>>, vector<196x288xf32>
    %c0_1 = arith.constant 0 : index
    %c0_2 = arith.constant 0 : index
    %5 = vector.load %arg3[%c0_1, %c0_2] : memref<288x64xf32, #tpu.memory_space<vmem>>, vector<288x64xf32>
    %cst = arith.constant dense<0.000000e+00> : vector<196x64xf32>
    %6 = tpu.matmul %4, %5, %cst {dimension_numbers = #tpu.dot_dimension_numbers<[1], [0], [0], [1], [0, 0, 1, 1], [], []>} : vector<196x288xf32>, vector<288x64xf32>, vector<196x64xf32> -> vector<196x64xf32>
    %c0_3 = arith.constant 0 : index
    %c0_4 = arith.constant 0 : index
    %7 = vector.load %arg4[%c0_3, %c0_4] : memref<1x64xf32, #tpu.memory_space<vmem>>, vector<1x64xf32>
    %8 = vector.broadcast %7 : vector<1x64xf32> to vector<196x64xf32>
    %9 = arith.addf %6, %8 : vector<196x64xf32>
    %cst_5 = arith.constant 0.000000e+00 : f32
    %10 = vector.broadcast %cst_5 : f32 to vector<196x64xf32>
    %11 = arith.maximumf %9, %10 : vector<196x64xf32>
    %c0_6 = arith.constant 0 : index
    %c0_7 = arith.constant 0 : index
    %12 = vector.load %arg5[%c0_6, %c0_7] : memref<64x288xf32, #tpu.memory_space<vmem>>, vector<64x288xf32>
    %cst_8 = arith.constant dense<0.000000e+00> : vector<196x288xf32>
    %13 = tpu.matmul %11, %12, %cst_8 {dimension_numbers = #tpu.dot_dimension_numbers<[1], [0], [0], [1], [0, 0, 1, 1], [], []>} : vector<196x64xf32>, vector<64x288xf32>, vector<196x288xf32> -> vector<196x288xf32>
    %c0_9 = arith.constant 0 : index
    %c0_10 = arith.constant 0 : index
    %14 = vector.load %arg17[%c0_9, %c0_10] : memref<196x288xf32, #tpu.memory_space<vmem>>, vector<196x288xf32>
    tpu.vector_store %arg17[%c0_9, %c0_10], %13 {strides = array<i32>} : memref<196x288xf32, #tpu.memory_space<vmem>>, vector<196x288xf32>,
    %15 = tpu.iota {dimensions = array<i32: 1>} : vector<100x196xi32>
    %c0_11 = arith.constant 0 : index
    %c0_12 = arith.constant 0 : index
    %16 = vector.load %arg1[%c0_11, %c0_12] : memref<100x1xi32, #tpu.memory_space<vmem>>, vector<100x1xi32>
    %cst_13 = arith.constant 0.000000e+00 : f32
    %17 = vector.broadcast %cst_13 : f32 to vector<100x32xf32>
    %c0_i32_14 = arith.constant 0 : i32
    %18 = vector.broadcast %c0_i32_14 : i32 to vector<100x1xi32>
    %19 = arith.addi %16, %18 : vector<100x1xi32>
    %20 = vector.broadcast %19 : vector<100x1xi32> to vector<100x196xi32>
    %21 = arith.cmpi eq, %15, %20 : vector<100x196xi32>
    %22 = arith.extui %21 : vector<100x196xi1> to vector<100x196xi32>
    %23 = arith.sitofp %22 : vector<100x196xi32> to vector<100x196xf32>
    %c0_15 = arith.constant 0 : index
    %c0_16 = arith.constant 0 : index
    %24 = vector.load %arg17[%c0_15, %c0_16] : memref<196x288xf32, #tpu.memory_space<vmem>>, vector<196x32xf32>
    %cst_17 = arith.constant dense<0.000000e+00> : vector<100x32xf32>
    %25 = tpu.matmul %23, %24, %cst_17 {dimension_numbers = #tpu.dot_dimension_numbers<[1], [0], [0], [1], [0, 0, 1, 1], [], []>} : vector<100x196xf32>, vector<196x32xf32>, vector<100x32xf32> -> vector<100x32xf32>
    %26 = arith.addf %17, %25 : vector<100x32xf32>
    %c1_i32_18 = arith.constant 1 : i32
    %27 = vector.broadcast %c1_i32_18 : i32 to vector<100x1xi32>
    %28 = arith.addi %16, %27 : vector<100x1xi32>
    %29 = vector.broadcast %28 : vector<100x1xi32> to vector<100x196xi32>
    %30 = arith.cmpi eq, %15, %29 : vector<100x196xi32>
    %31 = arith.extui %30 : vector<100x196xi1> to vector<100x196xi32>
    %32 = arith.sitofp %31 : vector<100x196xi32> to vector<100x196xf32>
    %c0_19 = arith.constant 0 : index
    %c32 = arith.constant 32 : index
    %33 = vector.load %arg17[%c0_19, %c32] : memref<196x288xf32, #tpu.memory_space<vmem>>, vector<196x32xf32>
    %cst_20 = arith.constant dense<0.000000e+00> : vector<100x32xf32>
    %34 = tpu.matmul %32, %33, %cst_20 {dimension_numbers = #tpu.dot_dimension_numbers<[1], [0], [0], [1], [0, 0, 1, 1], [], []>} : vector<100x196xf32>, vector<196x32xf32>, vector<100x32xf32> -> vector<100x32xf32>
    %35 = arith.addf %26, %34 : vector<100x32xf32>
    %c2_i32 = arith.constant 2 : i32
    %36 = vector.broadcast %c2_i32 : i32 to vector<100x1xi32>
    %37 = arith.addi %16, %36 : vector<100x1xi32>
    %38 = vector.broadcast %37 : vector<100x1xi32> to vector<100x196xi32>
    %39 = arith.cmpi eq, %15, %38 : vector<100x196xi32>
    %40 = arith.extui %39 : vector<100x196xi1> to vector<100x196xi32>
    %41 = arith.sitofp %40 : vector<100x196xi32> to vector<100x196xf32>
    %c0_21 = arith.constant 0 : index
    %c64 = arith.constant 64 : index
    %42 = vector.load %arg17[%c0_21, %c64] : memref<196x288xf32, #tpu.memory_space<vmem>>, vector<196x32xf32>
    %cst_22 = arith.constant dense<0.000000e+00> : vector<100x32xf32>
    %43 = tpu.matmul %41, %42, %cst_22 {dimension_numbers = #tpu.dot_dimension_numbers<[1], [0], [0], [1], [0, 0, 1, 1], [], []>} : vector<100x196xf32>, vector<196x32xf32>, vector<100x32xf32> -> vector<100x32xf32>
    %44 = arith.addf %35, %43 : vector<100x32xf32>
    %c7_i32 = arith.constant 7 : i32
    %45 = vector.broadcast %c7_i32 : i32 to vector<100x1xi32>
    %46 = arith.addi %16, %45 : vector<100x1xi32>
    %47 = vector.broadcast %46 : vector<100x1xi32> to vector<100x196xi32>
    %48 = arith.cmpi eq, %15, %47 : vector<100x196xi32>
    %49 = arith.extui %48 : vector<100x196xi1> to vector<100x196xi32>
    %50 = arith.sitofp %49 : vector<100x196xi32> to vector<100x196xf32>
    %c0_23 = arith.constant 0 : index
    %c96 = arith.constant 96 : index
    %51 = vector.load %arg17[%c0_23, %c96] : memref<196x288xf32, #tpu.memory_space<vmem>>, vector<196x32xf32>
    %cst_24 = arith.constant dense<0.000000e+00> : vector<100x32xf32>
    %52 = tpu.matmul %50, %51, %cst_24 {dimension_numbers = #tpu.dot_dimension_numbers<[1], [0], [0], [1], [0, 0, 1, 1], [], []>} : vector<100x196xf32>, vector<196x32xf32>, vector<100x32xf32> -> vector<100x32xf32>
    %53 = arith.addf %44, %52 : vector<100x32xf32>
    %c8_i32 = arith.constant 8 : i32
    %54 = vector.broadcast %c8_i32 : i32 to vector<100x1xi32>
    %55 = arith.addi %16, %54 : vector<100x1xi32>
    %56 = vector.broadcast %55 : vector<100x1xi32> to vector<100x196xi32>
    %57 = arith.cmpi eq, %15, %56 : vector<100x196xi32>
    %58 = arith.extui %57 : vector<100x196xi1> to vector<100x196xi32>
    %59 = arith.sitofp %58 : vector<100x196xi32> to vector<100x196xf32>
    %c0_25 = arith.constant 0 : index
    %c128 = arith.constant 128 : index
    %60 = vector.load %arg17[%c0_25, %c128] : memref<196x288xf32, #tpu.memory_space<vmem>>, vector<196x32xf32>
    %cst_26 = arith.constant dense<0.000000e+00> : vector<100x32xf32>
    %61 = tpu.matmul %59, %60, %cst_26 {dimension_numbers = #tpu.dot_dimension_numbers<[1], [0], [0], [1], [0, 0, 1, 1], [], []>} : vector<100x196xf32>, vector<196x32xf32>, vector<100x32xf32> -> vector<100x32xf32>
    %62 = arith.addf %53, %61 : vector<100x32xf32>
    %c9_i32 = arith.constant 9 : i32
    %63 = vector.broadcast %c9_i32 : i32 to vector<100x1xi32>
    %64 = arith.addi %16, %63 : vector<100x1xi32>
    %65 = vector.broadcast %64 : vector<100x1xi32> to vector<100x196xi32>
    %66 = arith.cmpi eq, %15, %65 : vector<100x196xi32>
    %67 = arith.extui %66 : vector<100x196xi1> to vector<100x196xi32>
    %68 = arith.sitofp %67 : vector<100x196xi32> to vector<100x196xf32>
    %c0_27 = arith.constant 0 : index
    %c160 = arith.constant 160 : index
    %69 = vector.load %arg17[%c0_27, %c160] : memref<196x288xf32, #tpu.memory_space<vmem>>, vector<196x32xf32>
    %cst_28 = arith.constant dense<0.000000e+00> : vector<100x32xf32>
    %70 = tpu.matmul %68, %69, %cst_28 {dimension_numbers = #tpu.dot_dimension_numbers<[1], [0], [0], [1], [0, 0, 1, 1], [], []>} : vector<100x196xf32>, vector<196x32xf32>, vector<100x32xf32> -> vector<100x32xf32>
    %71 = arith.addf %62, %70 : vector<100x32xf32>
    %c14_i32 = arith.constant 14 : i32
    %72 = vector.broadcast %c14_i32 : i32 to vector<100x1xi32>
    %73 = arith.addi %16, %72 : vector<100x1xi32>
    %74 = vector.broadcast %73 : vector<100x1xi32> to vector<100x196xi32>
    %75 = arith.cmpi eq, %15, %74 : vector<100x196xi32>
    %76 = arith.extui %75 : vector<100x196xi1> to vector<100x196xi32>
    %77 = arith.sitofp %76 : vector<100x196xi32> to vector<100x196xf32>
    %c0_29 = arith.constant 0 : index
    %c192 = arith.constant 192 : index
    %78 = vector.load %arg17[%c0_29, %c192] : memref<196x288xf32, #tpu.memory_space<vmem>>, vector<196x32xf32>
    %cst_30 = arith.constant dense<0.000000e+00> : vector<100x32xf32>
    %79 = tpu.matmul %77, %78, %cst_30 {dimension_numbers = #tpu.dot_dimension_numbers<[1], [0], [0], [1], [0, 0, 1, 1], [], []>} : vector<100x196xf32>, vector<196x32xf32>, vector<100x32xf32> -> vector<100x32xf32>
    %80 = arith.addf %71, %79 : vector<100x32xf32>
    %c15_i32 = arith.constant 15 : i32
    %81 = vector.broadcast %c15_i32 : i32 to vector<100x1xi32>
    %82 = arith.addi %16, %81 : vector<100x1xi32>
    %83 = vector.broadcast %82 : vector<100x1xi32> to vector<100x196xi32>
    %84 = arith.cmpi eq, %15, %83 : vector<100x196xi32>
    %85 = arith.extui %84 : vector<100x196xi1> to vector<100x196xi32>
    %86 = arith.sitofp %85 : vector<100x196xi32> to vector<100x196xf32>
    %c0_31 = arith.constant 0 : index
    %c224 = arith.constant 224 : index
    %87 = vector.load %arg17[%c0_31, %c224] : memref<196x288xf32, #tpu.memory_space<vmem>>, vector<196x32xf32>
    %cst_32 = arith.constant dense<0.000000e+00> : vector<100x32xf32>
    %88 = tpu.matmul %86, %87, %cst_32 {dimension_numbers = #tpu.dot_dimension_numbers<[1], [0], [0], [1], [0, 0, 1, 1], [], []>} : vector<100x196xf32>, vector<196x32xf32>, vector<100x32xf32> -> vector<100x32xf32>
    %89 = arith.addf %80, %88 : vector<100x32xf32>
    %c16_i32 = arith.constant 16 : i32
    %90 = vector.broadcast %c16_i32 : i32 to vector<100x1xi32>
    %91 = arith.addi %16, %90 : vector<100x1xi32>
    %92 = vector.broadcast %91 : vector<100x1xi32> to vector<100x196xi32>
    %93 = arith.cmpi eq, %15, %92 : vector<100x196xi32>
    %94 = arith.extui %93 : vector<100x196xi1> to vector<100x196xi32>
    %95 = arith.sitofp %94 : vector<100x196xi32> to vector<100x196xf32>
    %c0_33 = arith.constant 0 : index
    %c256 = arith.constant 256 : index
    %96 = vector.load %arg17[%c0_33, %c256] : memref<196x288xf32, #tpu.memory_space<vmem>>, vector<196x32xf32>
    %cst_34 = arith.constant dense<0.000000e+00> : vector<100x32xf32>
    %97 = tpu.matmul %95, %96, %cst_34 {dimension_numbers = #tpu.dot_dimension_numbers<[1], [0], [0], [1], [0, 0, 1, 1], [], []>} : vector<100x196xf32>, vector<196x32xf32>, vector<100x32xf32> -> vector<100x32xf32>
    %98 = arith.addf %89, %97 : vector<100x32xf32>
    %c0_35 = arith.constant 0 : index
    %c0_36 = arith.constant 0 : index
    %99 = vector.load %arg6[%c0_35, %c0_36] : memref<1x32xf32, #tpu.memory_space<vmem>>, vector<1x32xf32>
    %100 = vector.broadcast %99 : vector<1x32xf32> to vector<100x32xf32>
    %101 = arith.addf %98, %100 : vector<100x32xf32>
    %c0_37 = arith.constant 0 : index
    %c0_38 = arith.constant 0 : index
    %102 = vector.load %arg18[%c0_37, %c0_38] : memref<100x32xf32, #tpu.memory_space<vmem>>, vector<100x32xf32>
    tpu.vector_store %arg18[%c0_37, %c0_38], %101 {strides = array<i32>} : memref<100x32xf32, #tpu.memory_space<vmem>>, vector<100x32xf32>,
    %c0_39 = arith.constant 0 : index
    %c0_40 = arith.constant 0 : index
    %103 = vector.load %arg18[%c0_39, %c0_40] : memref<100x32xf32, #tpu.memory_space<vmem>>, vector<4x32xf32>
    %c0_41 = arith.constant 0 : index
    %c0_42 = arith.constant 0 : index
    %104 = vector.load %arg19[%c0_41, %c0_42] : memref<4x800xf32, #tpu.memory_space<vmem>>, vector<4x32xf32>
    tpu.vector_store %arg19[%c0_41, %c0_42], %103 {strides = array<i32>} : memref<4x800xf32, #tpu.memory_space<vmem>>, vector<4x32xf32>,
    %c4 = arith.constant 4 : index
    %c0_43 = arith.constant 0 : index
    %105 = vector.load %arg18[%c4, %c0_43] : memref<100x32xf32, #tpu.memory_space<vmem>>, vector<4x32xf32>
    %c0_44 = arith.constant 0 : index
    %c32_45 = arith.constant 32 : index
    %106 = vector.load %arg19[%c0_44, %c32_45] : memref<4x800xf32, #tpu.memory_space<vmem>>, vector<4x32xf32>
    tpu.vector_store %arg19[%c0_44, %c32_45], %105 {strides = array<i32>} : memref<4x800xf32, #tpu.memory_space<vmem>>, vector<4x32xf32>,
    %c8 = arith.constant 8 : index
    %c0_46 = arith.constant 0 : index
    %107 = vector.load %arg18[%c8, %c0_46] : memref<100x32xf32, #tpu.memory_space<vmem>>, vector<4x32xf32>
    %c0_47 = arith.constant 0 : index
    %c64_48 = arith.constant 64 : index
    %108 = vector.load %arg19[%c0_47, %c64_48] : memref<4x800xf32, #tpu.memory_space<vmem>>, vector<4x32xf32>
    tpu.vector_store %arg19[%c0_47, %c64_48], %107 {strides = array<i32>} : memref<4x800xf32, #tpu.memory_space<vmem>>, vector<4x32xf32>,
    %c12 = arith.constant 12 : index
    %c0_49 = arith.constant 0 : index
    %109 = vector.load %arg18[%c12, %c0_49] : memref<100x32xf32, #tpu.memory_space<vmem>>, vector<4x32xf32>
    %c0_50 = arith.constant 0 : index
    %c96_51 = arith.constant 96 : index
    %110 = vector.load %arg19[%c0_50, %c96_51] : memref<4x800xf32, #tpu.memory_space<vmem>>, vector<4x32xf32>
    tpu.vector_store %arg19[%c0_50, %c96_51], %109 {strides = array<i32>} : memref<4x800xf32, #tpu.memory_space<vmem>>, vector<4x32xf32>,
    %c16 = arith.constant 16 : index
    %c0_52 = arith.constant 0 : index
    %111 = vector.load %arg18[%c16, %c0_52] : memref<100x32xf32, #tpu.memory_space<vmem>>, vector<4x32xf32>
    %c0_53 = arith.constant 0 : index
    %c128_54 = arith.constant 128 : index
    %112 = vector.load %arg19[%c0_53, %c128_54] : memref<4x800xf32, #tpu.memory_space<vmem>>, vector<4x32xf32>
    tpu.vector_store %arg19[%c0_53, %c128_54], %111 {strides = array<i32>} : memref<4x800xf32, #tpu.memory_space<vmem>>, vector<4x32xf32>,
    %c20 = arith.constant 20 : index
    %c0_55 = arith.constant 0 : index
    %113 = vector.load %arg18[%c20, %c0_55] : memref<100x32xf32, #tpu.memory_space<vmem>>, vector<4x32xf32>
    %c0_56 = arith.constant 0 : index
    %c160_57 = arith.constant 160 : index
    %114 = vector.load %arg19[%c0_56, %c160_57] : memref<4x800xf32, #tpu.memory_space<vmem>>, vector<4x32xf32>
    tpu.vector_store %arg19[%c0_56, %c160_57], %113 {strides = array<i32>} : memref<4x800xf32, #tpu.memory_space<vmem>>, vector<4x32xf32>,
    %c24 = arith.constant 24 : index
    %c0_58 = arith.constant 0 : index
    %115 = vector.load %arg18[%c24, %c0_58] : memref<100x32xf32, #tpu.memory_space<vmem>>, vector<4x32xf32>
    %c0_59 = arith.constant 0 : index
    %c192_60 = arith.constant 192 : index
    %116 = vector.load %arg19[%c0_59, %c192_60] : memref<4x800xf32, #tpu.memory_space<vmem>>, vector<4x32xf32>
    tpu.vector_store %arg19[%c0_59, %c192_60], %115 {strides = array<i32>} : memref<4x800xf32, #tpu.memory_space<vmem>>, vector<4x32xf32>,
    %c28 = arith.constant 28 : index
    %c0_61 = arith.constant 0 : index
    %117 = vector.load %arg18[%c28, %c0_61] : memref<100x32xf32, #tpu.memory_space<vmem>>, vector<4x32xf32>
    %c0_62 = arith.constant 0 : index
    %c224_63 = arith.constant 224 : index
    %118 = vector.load %arg19[%c0_62, %c224_63] : memref<4x800xf32, #tpu.memory_space<vmem>>, vector<4x32xf32>
    tpu.vector_store %arg19[%c0_62, %c224_63], %117 {strides = array<i32>} : memref<4x800xf32, #tpu.memory_space<vmem>>, vector<4x32xf32>,
    %c32_64 = arith.constant 32 : index
    %c0_65 = arith.constant 0 : index
    %119 = vector.load %arg18[%c32_64, %c0_65] : memref<100x32xf32, #tpu.memory_space<vmem>>, vector<4x32xf32>
    %c0_66 = arith.constant 0 : index
    %c256_67 = arith.constant 256 : index
    %120 = vector.load %arg19[%c0_66, %c256_67] : memref<4x800xf32, #tpu.memory_space<vmem>>, vector<4x32xf32>
    tpu.vector_store %arg19[%c0_66, %c256_67], %119 {strides = array<i32>} : memref<4x800xf32, #tpu.memory_space<vmem>>, vector<4x32xf32>,
    %c36 = arith.constant 36 : index
    %c0_68 = arith.constant 0 : index
    %121 = vector.load %arg18[%c36, %c0_68] : memref<100x32xf32, #tpu.memory_space<vmem>>, vector<4x32xf32>
    %c0_69 = arith.constant 0 : index
    %c288 = arith.constant 288 : index
    %122 = vector.load %arg19[%c0_69, %c288] : memref<4x800xf32, #tpu.memory_space<vmem>>, vector<4x32xf32>
    tpu.vector_store %arg19[%c0_69, %c288], %121 {strides = array<i32>} : memref<4x800xf32, #tpu.memory_space<vmem>>, vector<4x32xf32>,
    %c40 = arith.constant 40 : index
    %c0_70 = arith.constant 0 : index
    %123 = vector.load %arg18[%c40, %c0_70] : memref<100x32xf32, #tpu.memory_space<vmem>>, vector<4x32xf32>
    %c0_71 = arith.constant 0 : index
    %c320 = arith.constant 320 : index
    %124 = vector.load %arg19[%c0_71, %c320] : memref<4x800xf32, #tpu.memory_space<vmem>>, vector<4x32xf32>
    tpu.vector_store %arg19[%c0_71, %c320], %123 {strides = array<i32>} : memref<4x800xf32, #tpu.memory_space<vmem>>, vector<4x32xf32>,
    %c44 = arith.constant 44 : index
    %c0_72 = arith.constant 0 : index
    %125 = vector.load %arg18[%c44, %c0_72] : memref<100x32xf32, #tpu.memory_space<vmem>>, vector<4x32xf32>
    %c0_73 = arith.constant 0 : index
    %c352 = arith.constant 352 : index
    %126 = vector.load %arg19[%c0_73, %c352] : memref<4x800xf32, #tpu.memory_space<vmem>>, vector<4x32xf32>
    tpu.vector_store %arg19[%c0_73, %c352], %125 {strides = array<i32>} : memref<4x800xf32, #tpu.memory_space<vmem>>, vector<4x32xf32>,
    %c48 = arith.constant 48 : index
    %c0_74 = arith.constant 0 : index
    %127 = vector.load %arg18[%c48, %c0_74] : memref<100x32xf32, #tpu.memory_space<vmem>>, vector<4x32xf32>
    %c0_75 = arith.constant 0 : index
    %c384 = arith.constant 384 : index
    %128 = vector.load %arg19[%c0_75, %c384] : memref<4x800xf32, #tpu.memory_space<vmem>>, vector<4x32xf32>
    tpu.vector_store %arg19[%c0_75, %c384], %127 {strides = array<i32>} : memref<4x800xf32, #tpu.memory_space<vmem>>, vector<4x32xf32>,
    %c52 = arith.constant 52 : index
    %c0_76 = arith.constant 0 : index
    %129 = vector.load %arg18[%c52, %c0_76] : memref<100x32xf32, #tpu.memory_space<vmem>>, vector<4x32xf32>
    %c0_77 = arith.constant 0 : index
    %c416 = arith.constant 416 : index
    %130 = vector.load %arg19[%c0_77, %c416] : memref<4x800xf32, #tpu.memory_space<vmem>>, vector<4x32xf32>
    tpu.vector_store %arg19[%c0_77, %c416], %129 {strides = array<i32>} : memref<4x800xf32, #tpu.memory_space<vmem>>, vector<4x32xf32>,
    %c56 = arith.constant 56 : index
    %c0_78 = arith.constant 0 : index
    %131 = vector.load %arg18[%c56, %c0_78] : memref<100x32xf32, #tpu.memory_space<vmem>>, vector<4x32xf32>
    %c0_79 = arith.constant 0 : index
    %c448 = arith.constant 448 : index
    %132 = vector.load %arg19[%c0_79, %c448] : memref<4x800xf32, #tpu.memory_space<vmem>>, vector<4x32xf32>
    tpu.vector_store %arg19[%c0_79, %c448], %131 {strides = array<i32>} : memref<4x800xf32, #tpu.memory_space<vmem>>, vector<4x32xf32>,
    %c60 = arith.constant 60 : index
    %c0_80 = arith.constant 0 : index
    %133 = vector.load %arg18[%c60, %c0_80] : memref<100x32xf32, #tpu.memory_space<vmem>>, vector<4x32xf32>
    %c0_81 = arith.constant 0 : index
    %c480 = arith.constant 480 : index
    %134 = vector.load %arg19[%c0_81, %c480] : memref<4x800xf32, #tpu.memory_space<vmem>>, vector<4x32xf32>
    tpu.vector_store %arg19[%c0_81, %c480], %133 {strides = array<i32>} : memref<4x800xf32, #tpu.memory_space<vmem>>, vector<4x32xf32>,
    %c64_82 = arith.constant 64 : index
    %c0_83 = arith.constant 0 : index
    %135 = vector.load %arg18[%c64_82, %c0_83] : memref<100x32xf32, #tpu.memory_space<vmem>>, vector<4x32xf32>
    %c0_84 = arith.constant 0 : index
    %c512 = arith.constant 512 : index
    %136 = vector.load %arg19[%c0_84, %c512] : memref<4x800xf32, #tpu.memory_space<vmem>>, vector<4x32xf32>
    tpu.vector_store %arg19[%c0_84, %c512], %135 {strides = array<i32>} : memref<4x800xf32, #tpu.memory_space<vmem>>, vector<4x32xf32>,
    %c68 = arith.constant 68 : index
    %c0_85 = arith.constant 0 : index
    %137 = vector.load %arg18[%c68, %c0_85] : memref<100x32xf32, #tpu.memory_space<vmem>>, vector<4x32xf32>
    %c0_86 = arith.constant 0 : index
    %c544 = arith.constant 544 : index
    %138 = vector.load %arg19[%c0_86, %c544] : memref<4x800xf32, #tpu.memory_space<vmem>>, vector<4x32xf32>
    tpu.vector_store %arg19[%c0_86, %c544], %137 {strides = array<i32>} : memref<4x800xf32, #tpu.memory_space<vmem>>, vector<4x32xf32>,
    %c72 = arith.constant 72 : index
    %c0_87 = arith.constant 0 : index
    %139 = vector.load %arg18[%c72, %c0_87] : memref<100x32xf32, #tpu.memory_space<vmem>>, vector<4x32xf32>
    %c0_88 = arith.constant 0 : index
    %c576 = arith.constant 576 : index
    %140 = vector.load %arg19[%c0_88, %c576] : memref<4x800xf32, #tpu.memory_space<vmem>>, vector<4x32xf32>
    tpu.vector_store %arg19[%c0_88, %c576], %139 {strides = array<i32>} : memref<4x800xf32, #tpu.memory_space<vmem>>, vector<4x32xf32>,
    %c76 = arith.constant 76 : index
    %c0_89 = arith.constant 0 : index
    %141 = vector.load %arg18[%c76, %c0_89] : memref<100x32xf32, #tpu.memory_space<vmem>>, vector<4x32xf32>
    %c0_90 = arith.constant 0 : index
    %c608 = arith.constant 608 : index
    %142 = vector.load %arg19[%c0_90, %c608] : memref<4x800xf32, #tpu.memory_space<vmem>>, vector<4x32xf32>
    tpu.vector_store %arg19[%c0_90, %c608], %141 {strides = array<i32>} : memref<4x800xf32, #tpu.memory_space<vmem>>, vector<4x32xf32>,
    %c80 = arith.constant 80 : index
    %c0_91 = arith.constant 0 : index
    %143 = vector.load %arg18[%c80, %c0_91] : memref<100x32xf32, #tpu.memory_space<vmem>>, vector<4x32xf32>
    %c0_92 = arith.constant 0 : index
    %c640 = arith.constant 640 : index
    %144 = vector.load %arg19[%c0_92, %c640] : memref<4x800xf32, #tpu.memory_space<vmem>>, vector<4x32xf32>
    tpu.vector_store %arg19[%c0_92, %c640], %143 {strides = array<i32>} : memref<4x800xf32, #tpu.memory_space<vmem>>, vector<4x32xf32>,
    %c84 = arith.constant 84 : index
    %c0_93 = arith.constant 0 : index
    %145 = vector.load %arg18[%c84, %c0_93] : memref<100x32xf32, #tpu.memory_space<vmem>>, vector<4x32xf32>
    %c0_94 = arith.constant 0 : index
    %c672 = arith.constant 672 : index
    %146 = vector.load %arg19[%c0_94, %c672] : memref<4x800xf32, #tpu.memory_space<vmem>>, vector<4x32xf32>
    tpu.vector_store %arg19[%c0_94, %c672], %145 {strides = array<i32>} : memref<4x800xf32, #tpu.memory_space<vmem>>, vector<4x32xf32>,
    %c88 = arith.constant 88 : index
    %c0_95 = arith.constant 0 : index
    %147 = vector.load %arg18[%c88, %c0_95] : memref<100x32xf32, #tpu.memory_space<vmem>>, vector<4x32xf32>
    %c0_96 = arith.constant 0 : index
    %c704 = arith.constant 704 : index
    %148 = vector.load %arg19[%c0_96, %c704] : memref<4x800xf32, #tpu.memory_space<vmem>>, vector<4x32xf32>
    tpu.vector_store %arg19[%c0_96, %c704], %147 {strides = array<i32>} : memref<4x800xf32, #tpu.memory_space<vmem>>, vector<4x32xf32>,
    %c92 = arith.constant 92 : index
    %c0_97 = arith.constant 0 : index
    %149 = vector.load %arg18[%c92, %c0_97] : memref<100x32xf32, #tpu.memory_space<vmem>>, vector<4x32xf32>
    %c0_98 = arith.constant 0 : index
    %c736 = arith.constant 736 : index
    %150 = vector.load %arg19[%c0_98, %c736] : memref<4x800xf32, #tpu.memory_space<vmem>>, vector<4x32xf32>
    tpu.vector_store %arg19[%c0_98, %c736], %149 {strides = array<i32>} : memref<4x800xf32, #tpu.memory_space<vmem>>, vector<4x32xf32>,
    %c96_99 = arith.constant 96 : index
    %c0_100 = arith.constant 0 : index
    %151 = vector.load %arg18[%c96_99, %c0_100] : memref<100x32xf32, #tpu.memory_space<vmem>>, vector<4x32xf32>
    %c0_101 = arith.constant 0 : index
    %c768 = arith.constant 768 : index
    %152 = vector.load %arg19[%c0_101, %c768] : memref<4x800xf32, #tpu.memory_space<vmem>>, vector<4x32xf32>
    tpu.vector_store %arg19[%c0_101, %c768], %151 {strides = array<i32>} : memref<4x800xf32, #tpu.memory_space<vmem>>, vector<4x32xf32>,
    %c0_i32_102 = arith.constant 0 : i32
    %153 = tpu.memref_slice %arg20[%c0_i32_102] : memref<2x!tpu.dma_semaphore, #tpu.memory_space<semaphore_mem>> -> memref<1x!tpu.dma_semaphore, #tpu.memory_space<semaphore_mem>>
    %154 = tpu.memref_squeeze %153 : memref<1x!tpu.dma_semaphore, #tpu.memory_space<semaphore_mem>> -> memref<!tpu.dma_semaphore, #tpu.memory_space<semaphore_mem>>
    tpu.wait_dma2 semaphore(%154 : memref<!tpu.dma_semaphore, #tpu.memory_space<semaphore_mem>>) src(%arg9 : memref<800x512xf32, #tpu.memory_space<any>>) dst(%arg15 : memref<800x512xf32, #tpu.memory_space<vmem>>)
    %c0_103 = arith.constant 0 : index
    %c0_104 = arith.constant 0 : index
    %155 = vector.load %arg2[%c0_103, %c0_104] : memref<4x50xf32, #tpu.memory_space<vmem>>, vector<4x50xf32>
    %c0_105 = arith.constant 0 : index
    %c0_106 = arith.constant 0 : index
    %156 = vector.load %arg7[%c0_105, %c0_106] : memref<50x512xf32, #tpu.memory_space<vmem>>, vector<50x512xf32>
    %cst_107 = arith.constant dense<0.000000e+00> : vector<4x512xf32>
    %157 = tpu.matmul %155, %156, %cst_107 {dimension_numbers = #tpu.dot_dimension_numbers<[1], [0], [0], [1], [0, 0, 1, 1], [], []>} : vector<4x50xf32>, vector<50x512xf32>, vector<4x512xf32> -> vector<4x512xf32>
    %c0_108 = arith.constant 0 : index
    %c0_109 = arith.constant 0 : index
    %158 = vector.load %arg8[%c0_108, %c0_109] : memref<1x512xf32, #tpu.memory_space<vmem>>, vector<1x512xf32>
    %159 = vector.broadcast %158 : vector<1x512xf32> to vector<4x512xf32>
    %160 = arith.addf %157, %159 : vector<4x512xf32>
    %c0_110 = arith.constant 0 : index
    %c0_111 = arith.constant 0 : index
    %161 = vector.load %arg19[%c0_110, %c0_111] : memref<4x800xf32, #tpu.memory_space<vmem>>, vector<4x800xf32>
    %c0_112 = arith.constant 0 : index
    %c0_113 = arith.constant 0 : index
    %162 = vector.load %arg15[%c0_112, %c0_113] : memref<800x512xf32, #tpu.memory_space<vmem>>, vector<800x512xf32>
    %cst_114 = arith.constant dense<0.000000e+00> : vector<4x512xf32>
    %163 = tpu.matmul %161, %162, %cst_114 {dimension_numbers = #tpu.dot_dimension_numbers<[1], [0], [0], [1], [0, 0, 1, 1], [], []>} : vector<4x800xf32>, vector<800x512xf32>, vector<4x512xf32> -> vector<4x512xf32>
    %164 = arith.addf %160, %163 : vector<4x512xf32>
    %cst_115 = arith.constant 0.000000e+00 : f32
    %165 = vector.broadcast %cst_115 : f32 to vector<4x512xf32>
    %166 = arith.maximumf %164, %165 : vector<4x512xf32>
    %c1_i32_116 = arith.constant 1 : i32
    %167 = tpu.memref_slice %arg20[%c1_i32_116] : memref<2x!tpu.dma_semaphore, #tpu.memory_space<semaphore_mem>> -> memref<1x!tpu.dma_semaphore, #tpu.memory_space<semaphore_mem>>
    %168 = tpu.memref_squeeze %167 : memref<1x!tpu.dma_semaphore, #tpu.memory_space<semaphore_mem>> -> memref<!tpu.dma_semaphore, #tpu.memory_space<semaphore_mem>>
    tpu.wait_dma2 semaphore(%168 : memref<!tpu.dma_semaphore, #tpu.memory_space<semaphore_mem>>) src(%arg10 : memref<512x512xf32, #tpu.memory_space<any>>) dst(%arg16 : memref<512x512xf32, #tpu.memory_space<vmem>>)
    %c0_117 = arith.constant 0 : index
    %c0_118 = arith.constant 0 : index
    %169 = vector.load %arg16[%c0_117, %c0_118] : memref<512x512xf32, #tpu.memory_space<vmem>>, vector<512x512xf32>
    %cst_119 = arith.constant dense<0.000000e+00> : vector<4x512xf32>
    %170 = tpu.matmul %166, %169, %cst_119 {dimension_numbers = #tpu.dot_dimension_numbers<[1], [0], [0], [1], [0, 0, 1, 1], [], []>} : vector<4x512xf32>, vector<512x512xf32>, vector<4x512xf32> -> vector<4x512xf32>
    %c0_120 = arith.constant 0 : index
    %c0_121 = arith.constant 0 : index
    %171 = vector.load %arg11[%c0_120, %c0_121] : memref<1x512xf32, #tpu.memory_space<vmem>>, vector<1x512xf32>
    %172 = vector.broadcast %171 : vector<1x512xf32> to vector<4x512xf32>
    %173 = arith.addf %170, %172 : vector<4x512xf32>
    %cst_122 = arith.constant 0.000000e+00 : f32
    %174 = vector.broadcast %cst_122 : f32 to vector<4x512xf32>
    %175 = arith.maximumf %173, %174 : vector<4x512xf32>
    %c0_123 = arith.constant 0 : index
    %c0_124 = arith.constant 0 : index
    %176 = vector.load %arg12[%c0_123, %c0_124] : memref<512x1xf32, #tpu.memory_space<vmem>>, vector<512x1xf32>
    %cst_125 = arith.constant dense<0.000000e+00> : vector<4x1xf32>
    %177 = tpu.matmul %175, %176, %cst_125 {dimension_numbers = #tpu.dot_dimension_numbers<[1], [0], [0], [1], [0, 0, 1, 1], [], []>} : vector<4x512xf32>, vector<512x1xf32>, vector<4x1xf32> -> vector<4x1xf32>
    %c0_126 = arith.constant 0 : index
    %c0_127 = arith.constant 0 : index
    %178 = vector.load %arg13[%c0_126, %c0_127] : memref<1x1xf32, #tpu.memory_space<vmem>>, vector<1x1xf32>
    %179 = vector.broadcast %178 : vector<1x1xf32> to vector<4x1xf32>
    %180 = arith.addf %177, %179 : vector<4x1xf32>
    %c0_128 = arith.constant 0 : index
    %c0_129 = arith.constant 0 : index
    %181 = vector.load %arg14[%c0_128, %c0_129] : memref<4x1xf32, #tpu.memory_space<vmem>>, vector<4x1xf32>
    tpu.vector_store %arg14[%c0_128, %c0_129], %180 {strides = array<i32>} : memref<4x1xf32, #tpu.memory_space<vmem>>, vector<4x1xf32>,
    return
  }
}

</mosaic_0001>

<llo_original>
// kernel: global_discriminator.1
$region0: #{global_discriminator.1}
  #allocation0 [shape = 'u32[]', space=smem, size = 0x4, offset = 0x4, fixed_abs, tag = 'smem constant byte address 0x4 - core index']
  #allocation1 [shape = 'u32[72,128]{1,0:T(1,128)}', space=vmem, size = 0x9000, scoped, tag = 'internal scratch']
  #allocation2 [shape = 'f32[800,512]{1,0:T(8,128)}', space=vmem, size = 0x190000, scoped, tag = 'scratch operand']
  #allocation3 [shape = 'f32[512,512]{1,0:T(8,128)}', space=vmem, size = 0x100000, scoped, tag = 'scratch operand']
  #allocation4 [shape = 'f32[196,288]{1,0:T(8,128)}', space=vmem, size = 0x4b000, scoped, tag = 'scratch operand']
  #allocation5 [shape = 'f32[100,32]{1,0:T(8,128)}', space=vmem, size = 0xd000, scoped, tag = 'scratch operand']
  #allocation6 [shape = 'f32[4,800]{1,0:T(4,128)}', space=vmem, size = 0x3800, scoped, tag = 'scratch operand']
  #allocation7 [shape = 's32[2]{0}', space=sflag, size = 0x8, scoped, tag = 'scratch operand']
  #allocation8 [shape = 'f32[1,1]{1,0:T(1,128)S(1)}', space=vmem, size = 0x200, scoped, tag = 'scoped memory for global_discriminator.1']
  #allocation9 [shape = 's32[]', space=sflag, size = 0x4, offset = 0, fixed_abs, tag = 'sflag constant byte address 0x0 - dummy sync flag']
  #allocation10 [shape = 's32[]', space=sflag, size = 0x4, offset = 0, fixed_abs, tag = 'sflag constant byte address 0x0 - dummy sync flag']
  %s0 = inlined_call_operand.vmem [shape: f32[196,288], index: 0, kind: input, shape index: {}]
  %s1 = inlined_call_operand.vmem [shape: s32[100,1], index: 1, kind: input, shape index: {}]
  %s2 = inlined_call_operand.vmem [shape: f32[4,50], index: 2, kind: input, shape index: {}]
  %s3 = inlined_call_operand.vmem [shape: f32[288,64], index: 3, kind: input, shape index: {}]
  %s4 = inlined_call_operand.vmem [shape: f32[1,64], index: 4, kind: input, shape index: {}]
  %s5 = inlined_call_operand.vmem [shape: f32[64,288], index: 5, kind: input, shape index: {}]
  %s6 = inlined_call_operand.vmem [shape: f32[1,32], index: 6, kind: input, shape index: {}]
  %s7 = inlined_call_operand.vmem [shape: f32[50,512], index: 7, kind: input, shape index: {}]
  %s8 = inlined_call_operand.vmem [shape: f32[1,512], index: 8, kind: input, shape index: {}]
  %s9 = inlined_call_operand.vmem [shape: f32[800,512], index: 9, kind: input, shape index: {}]
  %s10 = inlined_call_operand.vmem [shape: f32[512,512], index: 10, kind: input, shape index: {}]
  %s11 = inlined_call_operand.vmem [shape: f32[1,512], index: 11, kind: input, shape index: {}]
  %s12 = inlined_call_operand.vmem [shape: f32[512,1], index: 12, kind: input, shape index: {}]
  %s13 = inlined_call_operand.<no memory space> [shape: f32[1,1], index: 13, kind: input, shape index: {}]
  %s14 = inlined_call_operand.vmem [shape: f32[4,1], index: 14, kind: output, shape index: {}]
  %s15 = sld [smem:[#allocation0]]
  $region96: #{global_discriminator.1} parent=0
    _
  %s17 = ssub.s32 1, %s15
  %s18 = scalar_select 0, %s17, %s15
  %v19 = vstv %s13
  %20 = vst [vmem:[#allocation8] sm:$0x1] %v19
  // Predicated region
  $region2: #{global_discriminator.1} parent=0 // pred_check
    _
  $region3: #{global_discriminator.1} parent=0 // pred_check_branch
    %22 = sbr.rel (0) target = $region5
  $region4: #{global_discriminator.1} parent=0 // pred_region
    _
  $region5: #{global_discriminator.1} parent=0 // pred_fallthru
    _
  // Predicated region
  $region6: #{global_discriminator.1} parent=0 // pred_check
    _
  $region7: #{global_discriminator.1} parent=0 // pred_check_branch
    %24 = sbr.rel (0) target = $region9
  $region8: #{global_discriminator.1} parent=0 // pred_region
    _
  $region9: #{global_discriminator.1} parent=0 // pred_fallthru
    _
  // Predicated region
  $region10: #{global_discriminator.1} parent=0 // pred_check
    _
  $region11: #{global_discriminator.1} parent=0 // pred_check_branch
    %26 = sbr.rel (0) target = $region13
  $region12: #{global_discriminator.1} parent=0 // pred_region
    _
  $region13: #{global_discriminator.1} parent=0 // pred_fallthru
    _
  // Predicated region
  $region14: #{global_discriminator.1} parent=0 // pred_check
    _
  $region15: #{global_discriminator.1} parent=0 // pred_check_branch
    %28 = sbr.rel (0) target = $region17
  $region16: #{global_discriminator.1} parent=0 // pred_region
    _
  $region17: #{global_discriminator.1} parent=0 // pred_fallthru
    _
  // Predicated region
  $region18: #{global_discriminator.1} parent=0 // pred_check
    _
  $region19: #{global_discriminator.1} parent=0 // pred_check_branch
    %30 = sbr.rel (0) target = $region21
  $region20: #{global_discriminator.1} parent=0 // pred_region
    _
  $region21: #{global_discriminator.1} parent=0 // pred_fallthru
    _
  // Predicated region
  $region22: #{global_discriminator.1} parent=0 // pred_check
    _
  $region23: #{global_discriminator.1} parent=0 // pred_check_branch
    %32 = sbr.rel (0) target = $region25
  $region24: #{global_discriminator.1} parent=0 // pred_region
    _
  $region25: #{global_discriminator.1} parent=0 // pred_fallthru
    _
  // Predicated region
  $region26: #{global_discriminator.1} parent=0 // pred_check
    _
  $region27: #{global_discriminator.1} parent=0 // pred_check_branch
    %34 = sbr.rel (0) target = $region29
  $region28: #{global_discriminator.1} parent=0 // pred_region
    _
  $region29: #{global_discriminator.1} parent=0 // pred_fallthru
    _
  // Predicated region
  $region30: #{global_discriminator.1} parent=0 // pred_check
    _
  $region31: #{global_discriminator.1} parent=0 // pred_check_branch
    %36 = sbr.rel (0) target = $region33
  $region32: #{global_discriminator.1} parent=0 // pred_region
    _
  $region33: #{global_discriminator.1} parent=0 // pred_fallthru
    _
  // Predicated region
  $region34: #{global_discriminator.1} parent=0 // pred_check
    _
  $region35: #{global_discriminator.1} parent=0 // pred_check_branch
    %38 = sbr.rel (0) target = $region37
  $region36: #{global_discriminator.1} parent=0 // pred_region
    _
  $region37: #{global_discriminator.1} parent=0 // pred_fallthru
    _
  // Predicated region
  $region38: #{global_discriminator.1} parent=0 // pred_check
    _
  $region39: #{global_discriminator.1} parent=0 // pred_check_branch
    %40 = sbr.rel (0) target = $region41
  $region40: #{global_discriminator.1} parent=0 // pred_region
    _
  $region41: #{global_discriminator.1} parent=0 // pred_fallthru
    _
  // Predicated region
  $region42: #{global_discriminator.1} parent=0 // pred_check
    _
  $region43: #{global_discriminator.1} parent=0 // pred_check_branch
    %42 = sbr.rel (0) target = $region45
  $region44: #{global_discriminator.1} parent=0 // pred_region
    _
  $region45: #{global_discriminator.1} parent=0 // pred_fallthru
    _
  // Predicated region
  $region46: #{global_discriminator.1} parent=0 // pred_check
    _
  $region47: #{global_discriminator.1} parent=0 // pred_check_branch
    %44 = sbr.rel (0) target = $region49
  $region48: #{global_discriminator.1} parent=0 // pred_region
    _
  $region49: #{global_discriminator.1} parent=0 // pred_fallthru
    _
  // Predicated region
  $region50: #{global_discriminator.1} parent=0 // pred_check
    _
  $region51: #{global_discriminator.1} parent=0 // pred_check_branch
    %46 = sbr.rel (0) target = $region53
  $region52: #{global_discriminator.1} parent=0 // pred_region
    loop: start=0, step=1, limit=1
    $region54: #{global_discriminator.1} parent=52 // loop_pre_header
      _
    $region55: #{global_discriminator.1} parent=52 // loop_header
      %s48 = sphi 0, %s52
      %p49 = scmp.ge.s32.totalorder %s48, 1
      %s53 = sphi %s9, %s9
      %s54 = sphi [#allocation2], [#allocation2]
    $region56: #{global_discriminator.1} parent=52 // loop_header_branch
      %51 = sbr.rel (%p49) target = $region60
    $region57: #{global_discriminator.1} parent=52 // loop_body
      %v55 = vld [vmem:[%s53] sm:$0xff]
      %56 = vst [vmem:[%s54] sm:$0xff] %v55
      %v57 = vld [vmem:[%s53 + $0x8] sm:$0xff]
      %58 = vst [vmem:[%s54 + $0x8] sm:$0xff] %v57
      %v59 = vld [vmem:[%s53 + $0x10] sm:$0xff]
      %60 = vst [vmem:[%s54 + $0x10] sm:$0xff] %v59
      %v61 = vld [vmem:[%s53 + $0x18] sm:$0xff]
      %62 = vst [vmem:[%s54 + $0x18] sm:$0xff] %v61
      %v63 = vld [vmem:[%s53 + $0x20] sm:$0xff]
      %64 = vst [vmem:[%s54 + $0x20] sm:$0xff] %v63
      %v65 = vld [vmem:[%s53 + $0x28] sm:$0xff]
      %66 = vst [vmem:[%s54 + $0x28] sm:$0xff] %v65
      %v67 = vld [vmem:[%s53 + $0x30] sm:$0xff]
      %68 = vst [vmem:[%s54 + $0x30] sm:$0xff] %v67
      %v69 = vld [vmem:[%s53 + $0x38] sm:$0xff]
      %70 = vst [vmem:[%s54 + $0x38] sm:$0xff] %v69
      %v71 = vld [vmem:[%s53 + $0x40] sm:$0xff]
      %72 = vst [vmem:[%s54 + $0x40] sm:$0xff] %v71
      %v73 = vld [vmem:[%s53 + $0x48] sm:$0xff]
      %74 = vst [vmem:[%s54 + $0x48] sm:$0xff] %v73
      %v75 = vld [vmem:[%s53 + $0x50] sm:$0xff]
      %76 = vst [vmem:[%s54 + $0x50] sm:$0xff] %v75
      %v77 = vld [vmem:[%s53 + $0x58] sm:$0xff]
      %78 = vst [vmem:[%s54 + $0x58] sm:$0xff] %v77
      %v79 = vld [vmem:[%s53 + $0x60] sm:$0xff]
      %80 = vst [vmem:[%s54 + $0x60] sm:$0xff] %v79
      %v81 = vld [vmem:[%s53 + $0x68] sm:$0xff]
      %82 = vst [vmem:[%s54 + $0x68] sm:$0xff] %v81
      %v83 = vld [vmem:[%s53 + $0x70] sm:$0xff]
      %84 = vst [vmem:[%s54 + $0x70] sm:$0xff] %v83
      %v85 = vld [vmem:[%s53 + $0x78] sm:$0xff]
      %86 = vst [vmem:[%s54 + $0x78] sm:$0xff] %v85
      %v87 = vld [vmem:[%s53 + $0x80] sm:$0xff]
      %88 = vst [vmem:[%s54 + $0x80] sm:$0xff] %v87
      %v89 = vld [vmem:[%s53 + $0x88] sm:$0xff]
      %90 = vst [vmem:[%s54 + $0x88] sm:$0xff] %v89
      %v91 = vld [vmem:[%s53 + $0x90] sm:$0xff]
      %92 = vst [vmem:[%s54 + $0x90] sm:$0xff] %v91
      %v93 = vld [vmem:[%s53 + $0x98] sm:$0xff]
      %94 = vst [vmem:[%s54 + $0x98] sm:$0xff] %v93
      %v95 = vld [vmem:[%s53 + $0xa0] sm:$0xff]
      %96 = vst [vmem:[%s54 + $0xa0] sm:$0xff] %v95
      %v97 = vld [vmem:[%s53 + $0xa8] sm:$0xff]
      %98 = vst [vmem:[%s54 + $0xa8] sm:$0xff] %v97
      %v99 = vld [vmem:[%s53 + $0xb0] sm:$0xff]
      %100 = vst [vmem:[%s54 + $0xb0] sm:$0xff] %v99
      %v101 = vld [vmem:[%s53 + $0xb8] sm:$0xff]
      %102 = vst [vmem:[%s54 + $0xb8] sm:$0xff] %v101
      %v103 = vld [vmem:[%s53 + $0xc0] sm:$0xff]
      %104 = vst [vmem:[%s54 + $0xc0] sm:$0xff] %v103
      %v105 = vld [vmem:[%s53 + $0xc8] sm:$0xff]
      %106 = vst [vmem:[%s54 + $0xc8] sm:$0xff] %v105
      %v107 = vld [vmem:[%s53 + $0xd0] sm:$0xff]
      %108 = vst [vmem:[%s54 + $0xd0] sm:$0xff] %v107
      %v109 = vld [vmem:[%s53 + $0xd8] sm:$0xff]
      %110 = vst [vmem:[%s54 + $0xd8] sm:$0xff] %v109
      %v111 = vld [vmem:[%s53 + $0xe0] sm:$0xff]
      %112 = vst [vmem:[%s54 + $0xe0] sm:$0xff] %v111
      %v113 = vld [vmem:[%s53 + $0xe8] sm:$0xff]
      %114 = vst [vmem:[%s54 + $0xe8] sm:$0xff] %v113
      %v115 = vld [vmem:[%s53 + $0xf0] sm:$0xff]
      %116 = vst [vmem:[%s54 + $0xf0] sm:$0xff] %v115
      %v117 = vld [vmem:[%s53 + $0xf8] sm:$0xff]
      %118 = vst [vmem:[%s54 + $0xf8] sm:$0xff] %v117
      %v119 = vld [vmem:[%s53 + $0x100] sm:$0xff]
      %120 = vst [vmem:[%s54 + $0x100] sm:$0xff] %v119
      %v121 = vld [vmem:[%s53 + $0x108] sm:$0xff]
      %122 = vst [vmem:[%s54 + $0x108] sm:$0xff] %v121
      %v123 = vld [vmem:[%s53 + $0x110] sm:$0xff]
      %124 = vst [vmem:[%s54 + $0x110] sm:$0xff] %v123
      %v125 = vld [vmem:[%s53 + $0x118] sm:$0xff]
      %126 = vst [vmem:[%s54 + $0x118] sm:$0xff] %v125
      %v127 = vld [vmem:[%s53 + $0x120] sm:$0xff]
      %128 = vst [vmem:[%s54 + $0x120] sm:$0xff] %v127
      %v129 = vld [vmem:[%s53 + $0x128] sm:$0xff]
      %130 = vst [vmem:[%s54 + $0x128] sm:$0xff] %v129
      %v131 = vld [vmem:[%s53 + $0x130] sm:$0xff]
      %132 = vst [vmem:[%s54 + $0x130] sm:$0xff] %v131
      %v133 = vld [vmem:[%s53 + $0x138] sm:$0xff]
      %134 = vst [vmem:[%s54 + $0x138] sm:$0xff] %v133
      %v135 = vld [vmem:[%s53 + $0x140] sm:$0xff]
      %136 = vst [vmem:[%s54 + $0x140] sm:$0xff] %v135
      %v137 = vld [vmem:[%s53 + $0x148] sm:$0xff]
      %138 = vst [vmem:[%s54 + $0x148] sm:$0xff] %v137
      %v139 = vld [vmem:[%s53 + $0x150] sm:$0xff]
      %140 = vst [vmem:[%s54 + $0x150] sm:$0xff] %v139
      %v141 = vld [vmem:[%s53 + $0x158] sm:$0xff]
      %142 = vst [vmem:[%s54 + $0x158] sm:$0xff] %v141
      %v143 = vld [vmem:[%s53 + $0x160] sm:$0xff]
      %144 = vst [vmem:[%s54 + $0x160] sm:$0xff] %v143
      %v145 = vld [vmem:[%s53 + $0x168] sm:$0xff]
      %146 = vst [vmem:[%s54 + $0x168] sm:$0xff] %v145
      %v147 = vld [vmem:[%s53 + $0x170] sm:$0xff]
      %148 = vst [vmem:[%s54 + $0x170] sm:$0xff] %v147
      %v149 = vld [vmem:[%s53 + $0x178] sm:$0xff]
      %150 = vst [vmem:[%s54 + $0x178] sm:$0xff] %v149
      %v151 = vld [vmem:[%s53 + $0x180] sm:$0xff]
      %152 = vst [vmem:[%s54 + $0x180] sm:$0xff] %v151
      %v153 = vld [vmem:[%s53 + $0x188] sm:$0xff]
      %154 = vst [vmem:[%s54 + $0x188] sm:$0xff] %v153
      %v155 = vld [vmem:[%s53 + $0x190] sm:$0xff]
      %156 = vst [vmem:[%s54 + $0x190] sm:$0xff] %v155
      %v157 = vld [vmem:[%s53 + $0x198] sm:$0xff]
      %158 = vst [vmem:[%s54 + $0x198] sm:$0xff] %v157
      %v159 = vld [vmem:[%s53 + $0x1a0] sm:$0xff]
      %160 = vst [vmem:[%s54 + $0x1a0] sm:$0xff] %v159
      %v161 = vld [vmem:[%s53 + $0x1a8] sm:$0xff]
      %162 = vst [vmem:[%s54 + $0x1a8] sm:$0xff] %v161
      %v163 = vld [vmem:[%s53 + $0x1b0] sm:$0xff]
      %164 = vst [vmem:[%s54 + $0x1b0] sm:$0xff] %v163
      %v165 = vld [vmem:[%s53 + $0x1b8] sm:$0xff]
      %166 = vst [vmem:[%s54 + $0x1b8] sm:$0xff] %v165
      %v167 = vld [vmem:[%s53 + $0x1c0] sm:$0xff]
      %168 = vst [vmem:[%s54 + $0x1c0] sm:$0xff] %v167
      %v169 = vld [vmem:[%s53 + $0x1c8] sm:$0xff]
      %170 = vst [vmem:[%s54 + $0x1c8] sm:$0xff] %v169
      %v171 = vld [vmem:[%s53 + $0x1d0] sm:$0xff]
      %172 = vst [vmem:[%s54 + $0x1d0] sm:$0xff] %v171
      %v173 = vld [vmem:[%s53 + $0x1d8] sm:$0xff]
      %174 = vst [vmem:[%s54 + $0x1d8] sm:$0xff] %v173
      %v175 = vld [vmem:[%s53 + $0x1e0] sm:$0xff]
      %176 = vst [vmem:[%s54 + $0x1e0] sm:$0xff] %v175
      %v177 = vld [vmem:[%s53 + $0x1e8] sm:$0xff]
      %178 = vst [vmem:[%s54 + $0x1e8] sm:$0xff] %v177
      %v179 = vld [vmem:[%s53 + $0x1f0] sm:$0xff]
      %180 = vst [vmem:[%s54 + $0x1f0] sm:$0xff] %v179
      %v181 = vld [vmem:[%s53 + $0x1f8] sm:$0xff]
      %182 = vst [vmem:[%s54 + $0x1f8] sm:$0xff] %v181
      %v183 = vld [vmem:[%s53 + $0x200] sm:$0xff]
      %184 = vst [vmem:[%s54 + $0x200] sm:$0xff] %v183
      %v185 = vld [vmem:[%s53 + $0x208] sm:$0xff]
      %186 = vst [vmem:[%s54 + $0x208] sm:$0xff] %v185
      %v187 = vld [vmem:[%s53 + $0x210] sm:$0xff]
      %188 = vst [vmem:[%s54 + $0x210] sm:$0xff] %v187
      %v189 = vld [vmem:[%s53 + $0x218] sm:$0xff]
      %190 = vst [vmem:[%s54 + $0x218] sm:$0xff] %v189
      %v191 = vld [vmem:[%s53 + $0x220] sm:$0xff]
      %192 = vst [vmem:[%s54 + $0x220] sm:$0xff] %v191
      %v193 = vld [vmem:[%s53 + $0x228] sm:$0xff]
      %194 = vst [vmem:[%s54 + $0x228] sm:$0xff] %v193
      %v195 = vld [vmem:[%s53 + $0x230] sm:$0xff]
      %196 = vst [vmem:[%s54 + $0x230] sm:$0xff] %v195
      %v197 = vld [vmem:[%s53 + $0x238] sm:$0xff]
      %198 = vst [vmem:[%s54 + $0x238] sm:$0xff] %v197
      %v199 = vld [vmem:[%s53 + $0x240] sm:$0xff]
      %200 = vst [vmem:[%s54 + $0x240] sm:$0xff] %v199
      %v201 = vld [vmem:[%s53 + $0x248] sm:$0xff]
      %202 = vst [vmem:[%s54 + $0x248] sm:$0xff] %v201
      %v203 = vld [vmem:[%s53 + $0x250] sm:$0xff]
      %204 = vst [vmem:[%s54 + $0x250] sm:$0xff] %v203
      %v205 = vld [vmem:[%s53 + $0x258] sm:$0xff]
      %206 = vst [vmem:[%s54 + $0x258] sm:$0xff] %v205
      %v207 = vld [vmem:[%s53 + $0x260] sm:$0xff]
      %208 = vst [vmem:[%s54 + $0x260] sm:$0xff] %v207
      %v209 = vld [vmem:[%s53 + $0x268] sm:$0xff]
      %210 = vst [vmem:[%s54 + $0x268] sm:$0xff] %v209
      %v211 = vld [vmem:[%s53 + $0x270] sm:$0xff]
      %212 = vst [vmem:[%s54 + $0x270] sm:$0xff] %v211
      %v213 = vld [vmem:[%s53 + $0x278] sm:$0xff]
      %214 = vst [vmem:[%s54 + $0x278] sm:$0xff] %v213
      %v215 = vld [vmem:[%s53 + $0x280] sm:$0xff]
      %216 = vst [vmem:[%s54 + $0x280] sm:$0xff] %v215
      %v217 = vld [vmem:[%s53 + $0x288] sm:$0xff]
      %218 = vst [vmem:[%s54 + $0x288] sm:$0xff] %v217
      %v219 = vld [vmem:[%s53 + $0x290] sm:$0xff]
      %220 = vst [vmem:[%s54 + $0x290] sm:$0xff] %v219
      %v221 = vld [vmem:[%s53 + $0x298] sm:$0xff]
      %222 = vst [vmem:[%s54 + $0x298] sm:$0xff] %v221
      %v223 = vld [vmem:[%s53 + $0x2a0] sm:$0xff]
      %224 = vst [vmem:[%s54 + $0x2a0] sm:$0xff] %v223
      %v225 = vld [vmem:[%s53 + $0x2a8] sm:$0xff]
      %226 = vst [vmem:[%s54 + $0x2a8] sm:$0xff] %v225
      %v227 = vld [vmem:[%s53 + $0x2b0] sm:$0xff]
      %228 = vst [vmem:[%s54 + $0x2b0] sm:$0xff] %v227
      %v229 = vld [vmem:[%s53 + $0x2b8] sm:$0xff]
      %230 = vst [vmem:[%s54 + $0x2b8] sm:$0xff] %v229
      %v231 = vld [vmem:[%s53 + $0x2c0] sm:$0xff]
      %232 = vst [vmem:[%s54 + $0x2c0] sm:$0xff] %v231
      %v233 = vld [vmem:[%s53 + $0x2c8] sm:$0xff]
      %234 = vst [vmem:[%s54 + $0x2c8] sm:$0xff] %v233
      %v235 = vld [vmem:[%s53 + $0x2d0] sm:$0xff]
      %236 = vst [vmem:[%s54 + $0x2d0] sm:$0xff] %v235
      %v237 = vld [vmem:[%s53 + $0x2d8] sm:$0xff]
      %238 = vst [vmem:[%s54 + $0x2d8] sm:$0xff] %v237
      %v239 = vld [vmem:[%s53 + $0x2e0] sm:$0xff]
      %240 = vst [vmem:[%s54 + $0x2e0] sm:$0xff] %v239
      %v241 = vld [vmem:[%s53 + $0x2e8] sm:$0xff]
      %242 = vst [vmem:[%s54 + $0x2e8] sm:$0xff] %v241
      %v243 = vld [vmem:[%s53 + $0x2f0] sm:$0xff]
      %244 = vst [vmem:[%s54 + $0x2f0] sm:$0xff] %v243
      %v245 = vld [vmem:[%s53 + $0x2f8] sm:$0xff]
      %246 = vst [vmem:[%s54 + $0x2f8] sm:$0xff] %v245
      %v247 = vld [vmem:[%s53 + $0x300] sm:$0xff]
      %248 = vst [vmem:[%s54 + $0x300] sm:$0xff] %v247
      %v249 = vld [vmem:[%s53 + $0x308] sm:$0xff]
      %250 = vst [vmem:[%s54 + $0x308] sm:$0xff] %v249
      %v251 = vld [vmem:[%s53 + $0x310] sm:$0xff]
      %252 = vst [vmem:[%s54 + $0x310] sm:$0xff] %v251
      %v253 = vld [vmem:[%s53 + $0x318] sm:$0xff]
      %254 = vst [vmem:[%s54 + $0x318] sm:$0xff] %v253
      %v255 = vld [vmem:[%s53 + $0x320] sm:$0xff]
      %256 = vst [vmem:[%s54 + $0x320] sm:$0xff] %v255
      %v257 = vld [vmem:[%s53 + $0x328] sm:$0xff]
      %258 = vst [vmem:[%s54 + $0x328] sm:$0xff] %v257
      %v259 = vld [vmem:[%s53 + $0x330] sm:$0xff]
      %260 = vst [vmem:[%s54 + $0x330] sm:$0xff] %v259
      %v261 = vld [vmem:[%s53 + $0x338] sm:$0xff]
      %262 = vst [vmem:[%s54 + $0x338] sm:$0xff] %v261
      %v263 = vld [vmem:[%s53 + $0x340] sm:$0xff]
      %264 = vst [vmem:[%s54 + $0x340] sm:$0xff] %v263
      %v265 = vld [vmem:[%s53 + $0x348] sm:$0xff]
      %266 = vst [vmem:[%s54 + $0x348] sm:$0xff] %v265
      %v267 = vld [vmem:[%s53 + $0x350] sm:$0xff]
      %268 = vst [vmem:[%s54 + $0x350] sm:$0xff] %v267
      %v269 = vld [vmem:[%s53 + $0x358] sm:$0xff]
      %270 = vst [vmem:[%s54 + $0x358] sm:$0xff] %v269
      %v271 = vld [vmem:[%s53 + $0x360] sm:$0xff]
      %272 = vst [vmem:[%s54 + $0x360] sm:$0xff] %v271
      %v273 = vld [vmem:[%s53 + $0x368] sm:$0xff]
      %274 = vst [vmem:[%s54 + $0x368] sm:$0xff] %v273
      %v275 = vld [vmem:[%s53 + $0x370] sm:$0xff]
      %276 = vst [vmem:[%s54 + $0x370] sm:$0xff] %v275
      %v277 = vld [vmem:[%s53 + $0x378] sm:$0xff]
      %278 = vst [vmem:[%s54 + $0x378] sm:$0xff] %v277
      %v279 = vld [vmem:[%s53 + $0x380] sm:$0xff]
      %280 = vst [vmem:[%s54 + $0x380] sm:$0xff] %v279
      %v281 = vld [vmem:[%s53 + $0x388] sm:$0xff]
      %282 = vst [vmem:[%s54 + $0x388] sm:$0xff] %v281
      %v283 = vld [vmem:[%s53 + $0x390] sm:$0xff]
      %284 = vst [vmem:[%s54 + $0x390] sm:$0xff] %v283
      %v285 = vld [vmem:[%s53 + $0x398] sm:$0xff]
      %286 = vst [vmem:[%s54 + $0x398] sm:$0xff] %v285
      %v287 = vld [vmem:[%s53 + $0x3a0] sm:$0xff]
      %288 = vst [vmem:[%s54 + $0x3a0] sm:$0xff] %v287
      %v289 = vld [vmem:[%s53 + $0x3a8] sm:$0xff]
      %290 = vst [vmem:[%s54 + $0x3a8] sm:$0xff] %v289
      %v291 = vld [vmem:[%s53 + $0x3b0] sm:$0xff]
      %292 = vst [vmem:[%s54 + $0x3b0] sm:$0xff] %v291
      %v293 = vld [vmem:[%s53 + $0x3b8] sm:$0xff]
      %294 = vst [vmem:[%s54 + $0x3b8] sm:$0xff] %v293
      %v295 = vld [vmem:[%s53 + $0x3c0] sm:$0xff]
      %296 = vst [vmem:[%s54 + $0x3c0] sm:$0xff] %v295
      %v297 = vld [vmem:[%s53 + $0x3c8] sm:$0xff]
      %298 = vst [vmem:[%s54 + $0x3c8] sm:$0xff] %v297
      %v299 = vld [vmem:[%s53 + $0x3d0] sm:$0xff]
      %300 = vst [vmem:[%s54 + $0x3d0] sm:$0xff] %v299
      %v301 = vld [vmem:[%s53 + $0x3d8] sm:$0xff]
      %302 = vst [vmem:[%s54 + $0x3d8] sm:$0xff] %v301
      %v303 = vld [vmem:[%s53 + $0x3e0] sm:$0xff]
      %304 = vst [vmem:[%s54 + $0x3e0] sm:$0xff] %v303
      %v305 = vld [vmem:[%s53 + $0x3e8] sm:$0xff]
      %306 = vst [vmem:[%s54 + $0x3e8] sm:$0xff] %v305
      %v307 = vld [vmem:[%s53 + $0x3f0] sm:$0xff]
      %308 = vst [vmem:[%s54 + $0x3f0] sm:$0xff] %v307
      %v309 = vld [vmem:[%s53 + $0x3f8] sm:$0xff]
      %310 = vst [vmem:[%s54 + $0x3f8] sm:$0xff] %v309
      %v311 = vld [vmem:[%s53 + $0x400] sm:$0xff]
      %312 = vst [vmem:[%s54 + $0x400] sm:$0xff] %v311
      %v313 = vld [vmem:[%s53 + $0x408] sm:$0xff]
      %314 = vst [vmem:[%s54 + $0x408] sm:$0xff] %v313
      %v315 = vld [vmem:[%s53 + $0x410] sm:$0xff]
      %316 = vst [vmem:[%s54 + $0x410] sm:$0xff] %v315
      %v317 = vld [vmem:[%s53 + $0x418] sm:$0xff]
      %318 = vst [vmem:[%s54 + $0x418] sm:$0xff] %v317
      %v319 = vld [vmem:[%s53 + $0x420] sm:$0xff]
      %320 = vst [vmem:[%s54 + $0x420] sm:$0xff] %v319
      %v321 = vld [vmem:[%s53 + $0x428] sm:$0xff]
      %322 = vst [vmem:[%s54 + $0x428] sm:$0xff] %v321
      %v323 = vld [vmem:[%s53 + $0x430] sm:$0xff]
      %324 = vst [vmem:[%s54 + $0x430] sm:$0xff] %v323
      %v325 = vld [vmem:[%s53 + $0x438] sm:$0xff]
      %326 = vst [vmem:[%s54 + $0x438] sm:$0xff] %v325
      %v327 = vld [vmem:[%s53 + $0x440] sm:$0xff]
      %328 = vst [vmem:[%s54 + $0x440] sm:$0xff] %v327
      %v329 = vld [vmem:[%s53 + $0x448] sm:$0xff]
      %330 = vst [vmem:[%s54 + $0x448] sm:$0xff] %v329
      %v331 = vld [vmem:[%s53 + $0x450] sm:$0xff]
      %332 = vst [vmem:[%s54 + $0x450] sm:$0xff] %v331
      %v333 = vld [vmem:[%s53 + $0x458] sm:$0xff]
      %334 = vst [vmem:[%s54 + $0x458] sm:$0xff] %v333
      %v335 = vld [vmem:[%s53 + $0x460] sm:$0xff]
      %336 = vst [vmem:[%s54 + $0x460] sm:$0xff] %v335
      %v337 = vld [vmem:[%s53 + $0x468] sm:$0xff]
      %338 = vst [vmem:[%s54 + $0x468] sm:$0xff] %v337
      %v339 = vld [vmem:[%s53 + $0x470] sm:$0xff]
      %340 = vst [vmem:[%s54 + $0x470] sm:$0xff] %v339
      %v341 = vld [vmem:[%s53 + $0x478] sm:$0xff]
      %342 = vst [vmem:[%s54 + $0x478] sm:$0xff] %v341
      %v343 = vld [vmem:[%s53 + $0x480] sm:$0xff]
      %344 = vst [vmem:[%s54 + $0x480] sm:$0xff] %v343
      %v345 = vld [vmem:[%s53 + $0x488] sm:$0xff]
      %346 = vst [vmem:[%s54 + $0x488] sm:$0xff] %v345
      %v347 = vld [vmem:[%s53 + $0x490] sm:$0xff]
      %348 = vst [vmem:[%s54 + $0x490] sm:$0xff] %v347
      %v349 = vld [vmem:[%s53 + $0x498] sm:$0xff]
      %350 = vst [vmem:[%s54 + $0x498] sm:$0xff] %v349
      %v351 = vld [vmem:[%s53 + $0x4a0] sm:$0xff]
      %352 = vst [vmem:[%s54 + $0x4a0] sm:$0xff] %v351
      %v353 = vld [vmem:[%s53 + $0x4a8] sm:$0xff]
      %354 = vst [vmem:[%s54 + $0x4a8] sm:$0xff] %v353
      %v355 = vld [vmem:[%s53 + $0x4b0] sm:$0xff]
      %356 = vst [vmem:[%s54 + $0x4b0] sm:$0xff] %v355
      %v357 = vld [vmem:[%s53 + $0x4b8] sm:$0xff]
      %358 = vst [vmem:[%s54 + $0x4b8] sm:$0xff] %v357
      %v359 = vld [vmem:[%s53 + $0x4c0] sm:$0xff]
      %360 = vst [vmem:[%s54 + $0x4c0] sm:$0xff] %v359
      %v361 = vld [vmem:[%s53 + $0x4c8] sm:$0xff]
      %362 = vst [vmem:[%s54 + $0x4c8] sm:$0xff] %v361
      %v363 = vld [vmem:[%s53 + $0x4d0] sm:$0xff]
      %364 = vst [vmem:[%s54 + $0x4d0] sm:$0xff] %v363
      %v365 = vld [vmem:[%s53 + $0x4d8] sm:$0xff]
      %366 = vst [vmem:[%s54 + $0x4d8] sm:$0xff] %v365
      %v367 = vld [vmem:[%s53 + $0x4e0] sm:$0xff]
      %368 = vst [vmem:[%s54 + $0x4e0] sm:$0xff] %v367
      %v369 = vld [vmem:[%s53 + $0x4e8] sm:$0xff]
      %370 = vst [vmem:[%s54 + $0x4e8] sm:$0xff] %v369
      %v371 = vld [vmem:[%s53 + $0x4f0] sm:$0xff]
      %372 = vst [vmem:[%s54 + $0x4f0] sm:$0xff] %v371
      %v373 = vld [vmem:[%s53 + $0x4f8] sm:$0xff]
      %374 = vst [vmem:[%s54 + $0x4f8] sm:$0xff] %v373
      %v375 = vld [vmem:[%s53 + $0x500] sm:$0xff]
      %376 = vst [vmem:[%s54 + $0x500] sm:$0xff] %v375
      %v377 = vld [vmem:[%s53 + $0x508] sm:$0xff]
      %378 = vst [vmem:[%s54 + $0x508] sm:$0xff] %v377
      %v379 = vld [vmem:[%s53 + $0x510] sm:$0xff]
      %380 = vst [vmem:[%s54 + $0x510] sm:$0xff] %v379
      %v381 = vld [vmem:[%s53 + $0x518] sm:$0xff]
      %382 = vst [vmem:[%s54 + $0x518] sm:$0xff] %v381
      %v383 = vld [vmem:[%s53 + $0x520] sm:$0xff]
      %384 = vst [vmem:[%s54 + $0x520] sm:$0xff] %v383
      %v385 = vld [vmem:[%s53 + $0x528] sm:$0xff]
      %386 = vst [vmem:[%s54 + $0x528] sm:$0xff] %v385
      %v387 = vld [vmem:[%s53 + $0x530] sm:$0xff]
      %388 = vst [vmem:[%s54 + $0x530] sm:$0xff] %v387
      %v389 = vld [vmem:[%s53 + $0x538] sm:$0xff]
      %390 = vst [vmem:[%s54 + $0x538] sm:$0xff] %v389
      %v391 = vld [vmem:[%s53 + $0x540] sm:$0xff]
      %392 = vst [vmem:[%s54 + $0x540] sm:$0xff] %v391
      %v393 = vld [vmem:[%s53 + $0x548] sm:$0xff]
      %394 = vst [vmem:[%s54 + $0x548] sm:$0xff] %v393
      %v395 = vld [vmem:[%s53 + $0x550] sm:$0xff]
      %396 = vst [vmem:[%s54 + $0x550] sm:$0xff] %v395
      %v397 = vld [vmem:[%s53 + $0x558] sm:$0xff]
      %398 = vst [vmem:[%s54 + $0x558] sm:$0xff] %v397
      %v399 = vld [vmem:[%s53 + $0x560] sm:$0xff]
      %400 = vst [vmem:[%s54 + $0x560] sm:$0xff] %v399
      %v401 = vld [vmem:[%s53 + $0x568] sm:$0xff]
      %402 = vst [vmem:[%s54 + $0x568] sm:$0xff] %v401
      %v403 = vld [vmem:[%s53 + $0x570] sm:$0xff]
      %404 = vst [vmem:[%s54 + $0x570] sm:$0xff] %v403
      %v405 = vld [vmem:[%s53 + $0x578] sm:$0xff]
      %406 = vst [vmem:[%s54 + $0x578] sm:$0xff] %v405
      %v407 = vld [vmem:[%s53 + $0x580] sm:$0xff]
      %408 = vst [vmem:[%s54 + $0x580] sm:$0xff] %v407
      %v409 = vld [vmem:[%s53 + $0x588] sm:$0xff]
      %410 = vst [vmem:[%s54 + $0x588] sm:$0xff] %v409
      %v411 = vld [vmem:[%s53 + $0x590] sm:$0xff]
      %412 = vst [vmem:[%s54 + $0x590] sm:$0xff] %v411
      %v413 = vld [vmem:[%s53 + $0x598] sm:$0xff]
      %414 = vst [vmem:[%s54 + $0x598] sm:$0xff] %v413
      %v415 = vld [vmem:[%s53 + $0x5a0] sm:$0xff]
      %416 = vst [vmem:[%s54 + $0x5a0] sm:$0xff] %v415
      %v417 = vld [vmem:[%s53 + $0x5a8] sm:$0xff]
      %418 = vst [vmem:[%s54 + $0x5a8] sm:$0xff] %v417
      %v419 = vld [vmem:[%s53 + $0x5b0] sm:$0xff]
      %420 = vst [vmem:[%s54 + $0x5b0] sm:$0xff] %v419
      %v421 = vld [vmem:[%s53 + $0x5b8] sm:$0xff]
      %422 = vst [vmem:[%s54 + $0x5b8] sm:$0xff] %v421
      %v423 = vld [vmem:[%s53 + $0x5c0] sm:$0xff]
      %424 = vst [vmem:[%s54 + $0x5c0] sm:$0xff] %v423
      %v425 = vld [vmem:[%s53 + $0x5c8] sm:$0xff]
      %426 = vst [vmem:[%s54 + $0x5c8] sm:$0xff] %v425
      %v427 = vld [vmem:[%s53 + $0x5d0] sm:$0xff]
      %428 = vst [vmem:[%s54 + $0x5d0] sm:$0xff] %v427
      %v429 = vld [vmem:[%s53 + $0x5d8] sm:$0xff]
      %430 = vst [vmem:[%s54 + $0x5d8] sm:$0xff] %v429
      %v431 = vld [vmem:[%s53 + $0x5e0] sm:$0xff]
      %432 = vst [vmem:[%s54 + $0x5e0] sm:$0xff] %v431
      %v433 = vld [vmem:[%s53 + $0x5e8] sm:$0xff]
      %434 = vst [vmem:[%s54 + $0x5e8] sm:$0xff] %v433
      %v435 = vld [vmem:[%s53 + $0x5f0] sm:$0xff]
      %436 = vst [vmem:[%s54 + $0x5f0] sm:$0xff] %v435
      %v437 = vld [vmem:[%s53 + $0x5f8] sm:$0xff]
      %438 = vst [vmem:[%s54 + $0x5f8] sm:$0xff] %v437
      %v439 = vld [vmem:[%s53 + $0x600] sm:$0xff]
      %440 = vst [vmem:[%s54 + $0x600] sm:$0xff] %v439
      %v441 = vld [vmem:[%s53 + $0x608] sm:$0xff]
      %442 = vst [vmem:[%s54 + $0x608] sm:$0xff] %v441
      %v443 = vld [vmem:[%s53 + $0x610] sm:$0xff]
      %444 = vst [vmem:[%s54 + $0x610] sm:$0xff] %v443
      %v445 = vld [vmem:[%s53 + $0x618] sm:$0xff]
      %446 = vst [vmem:[%s54 + $0x618] sm:$0xff] %v445
      %v447 = vld [vmem:[%s53 + $0x620] sm:$0xff]
      %448 = vst [vmem:[%s54 + $0x620] sm:$0xff] %v447
      %v449 = vld [vmem:[%s53 + $0x628] sm:$0xff]
      %450 = vst [vmem:[%s54 + $0x628] sm:$0xff] %v449
      %v451 = vld [vmem:[%s53 + $0x630] sm:$0xff]
      %452 = vst [vmem:[%s54 + $0x630] sm:$0xff] %v451
      %v453 = vld [vmem:[%s53 + $0x638] sm:$0xff]
      %454 = vst [vmem:[%s54 + $0x638] sm:$0xff] %v453
      %v455 = vld [vmem:[%s53 + $0x640] sm:$0xff]
      %456 = vst [vmem:[%s54 + $0x640] sm:$0xff] %v455
      %v457 = vld [vmem:[%s53 + $0x648] sm:$0xff]
      %458 = vst [vmem:[%s54 + $0x648] sm:$0xff] %v457
      %v459 = vld [vmem:[%s53 + $0x650] sm:$0xff]
      %460 = vst [vmem:[%s54 + $0x650] sm:$0xff] %v459
      %v461 = vld [vmem:[%s53 + $0x658] sm:$0xff]
      %462 = vst [vmem:[%s54 + $0x658] sm:$0xff] %v461
      %v463 = vld [vmem:[%s53 + $0x660] sm:$0xff]
      %464 = vst [vmem:[%s54 + $0x660] sm:$0xff] %v463
      %v465 = vld [vmem:[%s53 + $0x668] sm:$0xff]
      %466 = vst [vmem:[%s54 + $0x668] sm:$0xff] %v465
      %v467 = vld [vmem:[%s53 + $0x670] sm:$0xff]
      %468 = vst [vmem:[%s54 + $0x670] sm:$0xff] %v467
      %v469 = vld [vmem:[%s53 + $0x678] sm:$0xff]
      %470 = vst [vmem:[%s54 + $0x678] sm:$0xff] %v469
      %v471 = vld [vmem:[%s53 + $0x680] sm:$0xff]
      %472 = vst [vmem:[%s54 + $0x680] sm:$0xff] %v471
      %v473 = vld [vmem:[%s53 + $0x688] sm:$0xff]
      %474 = vst [vmem:[%s54 + $0x688] sm:$0xff] %v473
      %v475 = vld [vmem:[%s53 + $0x690] sm:$0xff]
      %476 = vst [vmem:[%s54 + $0x690] sm:$0xff] %v475
      %v477 = vld [vmem:[%s53 + $0x698] sm:$0xff]
      %478 = vst [vmem:[%s54 + $0x698] sm:$0xff] %v477
      %v479 = vld [vmem:[%s53 + $0x6a0] sm:$0xff]
      %480 = vst [vmem:[%s54 + $0x6a0] sm:$0xff] %v479
      %v481 = vld [vmem:[%s53 + $0x6a8] sm:$0xff]
      %482 = vst [vmem:[%s54 + $0x6a8] sm:$0xff] %v481
      %v483 = vld [vmem:[%s53 + $0x6b0] sm:$0xff]
      %484 = vst [vmem:[%s54 + $0x6b0] sm:$0xff] %v483
      %v485 = vld [vmem:[%s53 + $0x6b8] sm:$0xff]
      %486 = vst [vmem:[%s54 + $0x6b8] sm:$0xff] %v485
      %v487 = vld [vmem:[%s53 + $0x6c0] sm:$0xff]
      %488 = vst [vmem:[%s54 + $0x6c0] sm:$0xff] %v487
      %v489 = vld [vmem:[%s53 + $0x6c8] sm:$0xff]
      %490 = vst [vmem:[%s54 + $0x6c8] sm:$0xff] %v489
      %v491 = vld [vmem:[%s53 + $0x6d0] sm:$0xff]
      %492 = vst [vmem:[%s54 + $0x6d0] sm:$0xff] %v491
      %v493 = vld [vmem:[%s53 + $0x6d8] sm:$0xff]
      %494 = vst [vmem:[%s54 + $0x6d8] sm:$0xff] %v493
      %v495 = vld [vmem:[%s53 + $0x6e0] sm:$0xff]
      %496 = vst [vmem:[%s54 + $0x6e0] sm:$0xff] %v495
      %v497 = vld [vmem:[%s53 + $0x6e8] sm:$0xff]
      %498 = vst [vmem:[%s54 + $0x6e8] sm:$0xff] %v497
      %v499 = vld [vmem:[%s53 + $0x6f0] sm:$0xff]
      %500 = vst [vmem:[%s54 + $0x6f0] sm:$0xff] %v499
      %v501 = vld [vmem:[%s53 + $0x6f8] sm:$0xff]
      %502 = vst [vmem:[%s54 + $0x6f8] sm:$0xff] %v501
      %v503 = vld [vmem:[%s53 + $0x700] sm:$0xff]
      %504 = vst [vmem:[%s54 + $0x700] sm:$0xff] %v503
      %v505 = vld [vmem:[%s53 + $0x708] sm:$0xff]
      %506 = vst [vmem:[%s54 + $0x708] sm:$0xff] %v505
      %v507 = vld [vmem:[%s53 + $0x710] sm:$0xff]
      %508 = vst [vmem:[%s54 + $0x710] sm:$0xff] %v507
      %v509 = vld [vmem:[%s53 + $0x718] sm:$0xff]
      %510 = vst [vmem:[%s54 + $0x718] sm:$0xff] %v509
      %v511 = vld [vmem:[%s53 + $0x720] sm:$0xff]
      %512 = vst [vmem:[%s54 + $0x720] sm:$0xff] %v511
      %v513 = vld [vmem:[%s53 + $0x728] sm:$0xff]
      %514 = vst [vmem:[%s54 + $0x728] sm:$0xff] %v513
      %v515 = vld [vmem:[%s53 + $0x730] sm:$0xff]
      %516 = vst [vmem:[%s54 + $0x730] sm:$0xff] %v515
      %v517 = vld [vmem:[%s53 + $0x738] sm:$0xff]
      %518 = vst [vmem:[%s54 + $0x738] sm:$0xff] %v517
      %v519 = vld [vmem:[%s53 + $0x740] sm:$0xff]
      %520 = vst [vmem:[%s54 + $0x740] sm:$0xff] %v519
      %v521 = vld [vmem:[%s53 + $0x748] sm:$0xff]
      %522 = vst [vmem:[%s54 + $0x748] sm:$0xff] %v521
      %v523 = vld [vmem:[%s53 + $0x750] sm:$0xff]
      %524 = vst [vmem:[%s54 + $0x750] sm:$0xff] %v523
      %v525 = vld [vmem:[%s53 + $0x758] sm:$0xff]
      %526 = vst [vmem:[%s54 + $0x758] sm:$0xff] %v525
      %v527 = vld [vmem:[%s53 + $0x760] sm:$0xff]
      %528 = vst [vmem:[%s54 + $0x760] sm:$0xff] %v527
      %v529 = vld [vmem:[%s53 + $0x768] sm:$0xff]
      %530 = vst [vmem:[%s54 + $0x768] sm:$0xff] %v529
      %v531 = vld [vmem:[%s53 + $0x770] sm:$0xff]
      %532 = vst [vmem:[%s54 + $0x770] sm:$0xff] %v531
      %v533 = vld [vmem:[%s53 + $0x778] sm:$0xff]
      %534 = vst [vmem:[%s54 + $0x778] sm:$0xff] %v533
      %v535 = vld [vmem:[%s53 + $0x780] sm:$0xff]
      %536 = vst [vmem:[%s54 + $0x780] sm:$0xff] %v535
      %v537 = vld [vmem:[%s53 + $0x788] sm:$0xff]
      %538 = vst [vmem:[%s54 + $0x788] sm:$0xff] %v537
      %v539 = vld [vmem:[%s53 + $0x790] sm:$0xff]
      %540 = vst [vmem:[%s54 + $0x790] sm:$0xff] %v539
      %v541 = vld [vmem:[%s53 + $0x798] sm:$0xff]
      %542 = vst [vmem:[%s54 + $0x798] sm:$0xff] %v541
      %v543 = vld [vmem:[%s53 + $0x7a0] sm:$0xff]
      %544 = vst [vmem:[%s54 + $0x7a0] sm:$0xff] %v543
      %v545 = vld [vmem:[%s53 + $0x7a8] sm:$0xff]
      %546 = vst [vmem:[%s54 + $0x7a8] sm:$0xff] %v545
      %v547 = vld [vmem:[%s53 + $0x7b0] sm:$0xff]
      %548 = vst [vmem:[%s54 + $0x7b0] sm:$0xff] %v547
      %v549 = vld [vmem:[%s53 + $0x7b8] sm:$0xff]
      %550 = vst [vmem:[%s54 + $0x7b8] sm:$0xff] %v549
      %v551 = vld [vmem:[%s53 + $0x7c0] sm:$0xff]
      %552 = vst [vmem:[%s54 + $0x7c0] sm:$0xff] %v551
      %v553 = vld [vmem:[%s53 + $0x7c8] sm:$0xff]
      %554 = vst [vmem:[%s54 + $0x7c8] sm:$0xff] %v553
      %v555 = vld [vmem:[%s53 + $0x7d0] sm:$0xff]
      %556 = vst [vmem:[%s54 + $0x7d0] sm:$0xff] %v555
      %v557 = vld [vmem:[%s53 + $0x7d8] sm:$0xff]
      %558 = vst [vmem:[%s54 + $0x7d8] sm:$0xff] %v557
      %v559 = vld [vmem:[%s53 + $0x7e0] sm:$0xff]
      %560 = vst [vmem:[%s54 + $0x7e0] sm:$0xff] %v559
      %v561 = vld [vmem:[%s53 + $0x7e8] sm:$0xff]
      %562 = vst [vmem:[%s54 + $0x7e8] sm:$0xff] %v561
      %v563 = vld [vmem:[%s53 + $0x7f0] sm:$0xff]
      %564 = vst [vmem:[%s54 + $0x7f0] sm:$0xff] %v563
      %v565 = vld [vmem:[%s53 + $0x7f8] sm:$0xff]
      %566 = vst [vmem:[%s54 + $0x7f8] sm:$0xff] %v565
      %v567 = vld [vmem:[%s53 + $0x800] sm:$0xff]
      %568 = vst [vmem:[%s54 + $0x800] sm:$0xff] %v567
      %v569 = vld [vmem:[%s53 + $0x808] sm:$0xff]
      %570 = vst [vmem:[%s54 + $0x808] sm:$0xff] %v569
      %v571 = vld [vmem:[%s53 + $0x810] sm:$0xff]
      %572 = vst [vmem:[%s54 + $0x810] sm:$0xff] %v571
      %v573 = vld [vmem:[%s53 + $0x818] sm:$0xff]
      %574 = vst [vmem:[%s54 + $0x818] sm:$0xff] %v573
      %v575 = vld [vmem:[%s53 + $0x820] sm:$0xff]
      %576 = vst [vmem:[%s54 + $0x820] sm:$0xff] %v575
      %v577 = vld [vmem:[%s53 + $0x828] sm:$0xff]
      %578 = vst [vmem:[%s54 + $0x828] sm:$0xff] %v577
      %v579 = vld [vmem:[%s53 + $0x830] sm:$0xff]
      %580 = vst [vmem:[%s54 + $0x830] sm:$0xff] %v579
      %v581 = vld [vmem:[%s53 + $0x838] sm:$0xff]
      %582 = vst [vmem:[%s54 + $0x838] sm:$0xff] %v581
      %v583 = vld [vmem:[%s53 + $0x840] sm:$0xff]
      %584 = vst [vmem:[%s54 + $0x840] sm:$0xff] %v583
      %v585 = vld [vmem:[%s53 + $0x848] sm:$0xff]
      %586 = vst [vmem:[%s54 + $0x848] sm:$0xff] %v585
      %v587 = vld [vmem:[%s53 + $0x850] sm:$0xff]
      %588 = vst [vmem:[%s54 + $0x850] sm:$0xff] %v587
      %v589 = vld [vmem:[%s53 + $0x858] sm:$0xff]
      %590 = vst [vmem:[%s54 + $0x858] sm:$0xff] %v589
      %v591 = vld [vmem:[%s53 + $0x860] sm:$0xff]
      %592 = vst [vmem:[%s54 + $0x860] sm:$0xff] %v591
      %v593 = vld [vmem:[%s53 + $0x868] sm:$0xff]
      %594 = vst [vmem:[%s54 + $0x868] sm:$0xff] %v593
      %v595 = vld [vmem:[%s53 + $0x870] sm:$0xff]
      %596 = vst [vmem:[%s54 + $0x870] sm:$0xff] %v595
      %v597 = vld [vmem:[%s53 + $0x878] sm:$0xff]
      %598 = vst [vmem:[%s54 + $0x878] sm:$0xff] %v597
      %v599 = vld [vmem:[%s53 + $0x880] sm:$0xff]
      %600 = vst [vmem:[%s54 + $0x880] sm:$0xff] %v599
      %v601 = vld [vmem:[%s53 + $0x888] sm:$0xff]
      %602 = vst [vmem:[%s54 + $0x888] sm:$0xff] %v601
      %v603 = vld [vmem:[%s53 + $0x890] sm:$0xff]
      %604 = vst [vmem:[%s54 + $0x890] sm:$0xff] %v603
      %v605 = vld [vmem:[%s53 + $0x898] sm:$0xff]
      %606 = vst [vmem:[%s54 + $0x898] sm:$0xff] %v605
      %v607 = vld [vmem:[%s53 + $0x8a0] sm:$0xff]
      %608 = vst [vmem:[%s54 + $0x8a0] sm:$0xff] %v607
      %v609 = vld [vmem:[%s53 + $0x8a8] sm:$0xff]
      %610 = vst [vmem:[%s54 + $0x8a8] sm:$0xff] %v609
      %v611 = vld [vmem:[%s53 + $0x8b0] sm:$0xff]
      %612 = vst [vmem:[%s54 + $0x8b0] sm:$0xff] %v611
      %v613 = vld [vmem:[%s53 + $0x8b8] sm:$0xff]
      %614 = vst [vmem:[%s54 + $0x8b8] sm:$0xff] %v613
      %v615 = vld [vmem:[%s53 + $0x8c0] sm:$0xff]
      %616 = vst [vmem:[%s54 + $0x8c0] sm:$0xff] %v615
      %v617 = vld [vmem:[%s53 + $0x8c8] sm:$0xff]
      %618 = vst [vmem:[%s54 + $0x8c8] sm:$0xff] %v617
      %v619 = vld [vmem:[%s53 + $0x8d0] sm:$0xff]
      %620 = vst [vmem:[%s54 + $0x8d0] sm:$0xff] %v619
      %v621 = vld [vmem:[%s53 + $0x8d8] sm:$0xff]
      %622 = vst [vmem:[%s54 + $0x8d8] sm:$0xff] %v621
      %v623 = vld [vmem:[%s53 + $0x8e0] sm:$0xff]
      %624 = vst [vmem:[%s54 + $0x8e0] sm:$0xff] %v623
      %v625 = vld [vmem:[%s53 + $0x8e8] sm:$0xff]
      %626 = vst [vmem:[%s54 + $0x8e8] sm:$0xff] %v625
      %v627 = vld [vmem:[%s53 + $0x8f0] sm:$0xff]
      %628 = vst [vmem:[%s54 + $0x8f0] sm:$0xff] %v627
      %v629 = vld [vmem:[%s53 + $0x8f8] sm:$0xff]
      %630 = vst [vmem:[%s54 + $0x8f8] sm:$0xff] %v629
      %v631 = vld [vmem:[%s53 + $0x900] sm:$0xff]
      %632 = vst [vmem:[%s54 + $0x900] sm:$0xff] %v631
      %v633 = vld [vmem:[%s53 + $0x908] sm:$0xff]
      %634 = vst [vmem:[%s54 + $0x908] sm:$0xff] %v633
      %v635 = vld [vmem:[%s53 + $0x910] sm:$0xff]
      %636 = vst [vmem:[%s54 + $0x910] sm:$0xff] %v635
      %v637 = vld [vmem:[%s53 + $0x918] sm:$0xff]
      %638 = vst [vmem:[%s54 + $0x918] sm:$0xff] %v637
      %v639 = vld [vmem:[%s53 + $0x920] sm:$0xff]
      %640 = vst [vmem:[%s54 + $0x920] sm:$0xff] %v639
      %v641 = vld [vmem:[%s53 + $0x928] sm:$0xff]
      %642 = vst [vmem:[%s54 + $0x928] sm:$0xff] %v641
      %v643 = vld [vmem:[%s53 + $0x930] sm:$0xff]
      %644 = vst [vmem:[%s54 + $0x930] sm:$0xff] %v643
      %v645 = vld [vmem:[%s53 + $0x938] sm:$0xff]
      %646 = vst [vmem:[%s54 + $0x938] sm:$0xff] %v645
      %v647 = vld [vmem:[%s53 + $0x940] sm:$0xff]
      %648 = vst [vmem:[%s54 + $0x940] sm:$0xff] %v647
      %v649 = vld [vmem:[%s53 + $0x948] sm:$0xff]
      %650 = vst [vmem:[%s54 + $0x948] sm:$0xff] %v649
      %v651 = vld [vmem:[%s53 + $0x950] sm:$0xff]
      %652 = vst [vmem:[%s54 + $0x950] sm:$0xff] %v651
      %v653 = vld [vmem:[%s53 + $0x958] sm:$0xff]
      %654 = vst [vmem:[%s54 + $0x958] sm:$0xff] %v653
      %v655 = vld [vmem:[%s53 + $0x960] sm:$0xff]
      %656 = vst [vmem:[%s54 + $0x960] sm:$0xff] %v655
      %v657 = vld [vmem:[%s53 + $0x968] sm:$0xff]
      %658 = vst [vmem:[%s54 + $0x968] sm:$0xff] %v657
      %v659 = vld [vmem:[%s53 + $0x970] sm:$0xff]
      %660 = vst [vmem:[%s54 + $0x970] sm:$0xff] %v659
      %v661 = vld [vmem:[%s53 + $0x978] sm:$0xff]
      %662 = vst [vmem:[%s54 + $0x978] sm:$0xff] %v661
      %v663 = vld [vmem:[%s53 + $0x980] sm:$0xff]
      %664 = vst [vmem:[%s54 + $0x980] sm:$0xff] %v663
      %v665 = vld [vmem:[%s53 + $0x988] sm:$0xff]
      %666 = vst [vmem:[%s54 + $0x988] sm:$0xff] %v665
      %v667 = vld [vmem:[%s53 + $0x990] sm:$0xff]
      %668 = vst [vmem:[%s54 + $0x990] sm:$0xff] %v667
      %v669 = vld [vmem:[%s53 + $0x998] sm:$0xff]
      %670 = vst [vmem:[%s54 + $0x998] sm:$0xff] %v669
      %v671 = vld [vmem:[%s53 + $0x9a0] sm:$0xff]
      %672 = vst [vmem:[%s54 + $0x9a0] sm:$0xff] %v671
      %v673 = vld [vmem:[%s53 + $0x9a8] sm:$0xff]
      %674 = vst [vmem:[%s54 + $0x9a8] sm:$0xff] %v673
      %v675 = vld [vmem:[%s53 + $0x9b0] sm:$0xff]
      %676 = vst [vmem:[%s54 + $0x9b0] sm:$0xff] %v675
      %v677 = vld [vmem:[%s53 + $0x9b8] sm:$0xff]
      %678 = vst [vmem:[%s54 + $0x9b8] sm:$0xff] %v677
      %v679 = vld [vmem:[%s53 + $0x9c0] sm:$0xff]
      %680 = vst [vmem:[%s54 + $0x9c0] sm:$0xff] %v679
      %v681 = vld [vmem:[%s53 + $0x9c8] sm:$0xff]
      %682 = vst [vmem:[%s54 + $0x9c8] sm:$0xff] %v681
      %v683 = vld [vmem:[%s53 + $0x9d0] sm:$0xff]
      %684 = vst [vmem:[%s54 + $0x9d0] sm:$0xff] %v683
      %v685 = vld [vmem:[%s53 + $0x9d8] sm:$0xff]
      %686 = vst [vmem:[%s54 + $0x9d8] sm:$0xff] %v685
      %v687 = vld [vmem:[%s53 + $0x9e0] sm:$0xff]
      %688 = vst [vmem:[%s54 + $0x9e0] sm:$0xff] %v687
      %v689 = vld [vmem:[%s53 + $0x9e8] sm:$0xff]
      %690 = vst [vmem:[%s54 + $0x9e8] sm:$0xff] %v689
      %v691 = vld [vmem:[%s53 + $0x9f0] sm:$0xff]
      %692 = vst [vmem:[%s54 + $0x9f0] sm:$0xff] %v691
      %v693 = vld [vmem:[%s53 + $0x9f8] sm:$0xff]
      %694 = vst [vmem:[%s54 + $0x9f8] sm:$0xff] %v693
      %v695 = vld [vmem:[%s53 + $0xa00] sm:$0xff]
      %696 = vst [vmem:[%s54 + $0xa00] sm:$0xff] %v695
      %v697 = vld [vmem:[%s53 + $0xa08] sm:$0xff]
      %698 = vst [vmem:[%s54 + $0xa08] sm:$0xff] %v697
      %v699 = vld [vmem:[%s53 + $0xa10] sm:$0xff]
      %700 = vst [vmem:[%s54 + $0xa10] sm:$0xff] %v699
      %v701 = vld [vmem:[%s53 + $0xa18] sm:$0xff]
      %702 = vst [vmem:[%s54 + $0xa18] sm:$0xff] %v701
      %v703 = vld [vmem:[%s53 + $0xa20] sm:$0xff]
      %704 = vst [vmem:[%s54 + $0xa20] sm:$0xff] %v703
      %v705 = vld [vmem:[%s53 + $0xa28] sm:$0xff]
      %706 = vst [vmem:[%s54 + $0xa28] sm:$0xff] %v705
      %v707 = vld [vmem:[%s53 + $0xa30] sm:$0xff]
      %708 = vst [vmem:[%s54 + $0xa30] sm:$0xff] %v707
      %v709 = vld [vmem:[%s53 + $0xa38] sm:$0xff]
      %710 = vst [vmem:[%s54 + $0xa38] sm:$0xff] %v709
      %v711 = vld [vmem:[%s53 + $0xa40] sm:$0xff]
      %712 = vst [vmem:[%s54 + $0xa40] sm:$0xff] %v711
      %v713 = vld [vmem:[%s53 + $0xa48] sm:$0xff]
      %714 = vst [vmem:[%s54 + $0xa48] sm:$0xff] %v713
      %v715 = vld [vmem:[%s53 + $0xa50] sm:$0xff]
      %716 = vst [vmem:[%s54 + $0xa50] sm:$0xff] %v715
      %v717 = vld [vmem:[%s53 + $0xa58] sm:$0xff]
      %718 = vst [vmem:[%s54 + $0xa58] sm:$0xff] %v717
      %v719 = vld [vmem:[%s53 + $0xa60] sm:$0xff]
      %720 = vst [vmem:[%s54 + $0xa60] sm:$0xff] %v719
      %v721 = vld [vmem:[%s53 + $0xa68] sm:$0xff]
      %722 = vst [vmem:[%s54 + $0xa68] sm:$0xff] %v721
      %v723 = vld [vmem:[%s53 + $0xa70] sm:$0xff]
      %724 = vst [vmem:[%s54 + $0xa70] sm:$0xff] %v723
      %v725 = vld [vmem:[%s53 + $0xa78] sm:$0xff]
      %726 = vst [vmem:[%s54 + $0xa78] sm:$0xff] %v725
      %v727 = vld [vmem:[%s53 + $0xa80] sm:$0xff]
      %728 = vst [vmem:[%s54 + $0xa80] sm:$0xff] %v727
      %v729 = vld [vmem:[%s53 + $0xa88] sm:$0xff]
      %730 = vst [vmem:[%s54 + $0xa88] sm:$0xff] %v729
      %v731 = vld [vmem:[%s53 + $0xa90] sm:$0xff]
      %732 = vst [vmem:[%s54 + $0xa90] sm:$0xff] %v731
      %v733 = vld [vmem:[%s53 + $0xa98] sm:$0xff]
      %734 = vst [vmem:[%s54 + $0xa98] sm:$0xff] %v733
      %v735 = vld [vmem:[%s53 + $0xaa0] sm:$0xff]
      %736 = vst [vmem:[%s54 + $0xaa0] sm:$0xff] %v735
      %v737 = vld [vmem:[%s53 + $0xaa8] sm:$0xff]
      %738 = vst [vmem:[%s54 + $0xaa8] sm:$0xff] %v737
      %v739 = vld [vmem:[%s53 + $0xab0] sm:$0xff]
      %740 = vst [vmem:[%s54 + $0xab0] sm:$0xff] %v739
      %v741 = vld [vmem:[%s53 + $0xab8] sm:$0xff]
      %742 = vst [vmem:[%s54 + $0xab8] sm:$0xff] %v741
      %v743 = vld [vmem:[%s53 + $0xac0] sm:$0xff]
      %744 = vst [vmem:[%s54 + $0xac0] sm:$0xff] %v743
      %v745 = vld [vmem:[%s53 + $0xac8] sm:$0xff]
      %746 = vst [vmem:[%s54 + $0xac8] sm:$0xff] %v745
      %v747 = vld [vmem:[%s53 + $0xad0] sm:$0xff]
      %748 = vst [vmem:[%s54 + $0xad0] sm:$0xff] %v747
      %v749 = vld [vmem:[%s53 + $0xad8] sm:$0xff]
      %750 = vst [vmem:[%s54 + $0xad8] sm:$0xff] %v749
      %v751 = vld [vmem:[%s53 + $0xae0] sm:$0xff]
      %752 = vst [vmem:[%s54 + $0xae0] sm:$0xff] %v751
      %v753 = vld [vmem:[%s53 + $0xae8] sm:$0xff]
      %754 = vst [vmem:[%s54 + $0xae8] sm:$0xff] %v753
      %v755 = vld [vmem:[%s53 + $0xaf0] sm:$0xff]
      %756 = vst [vmem:[%s54 + $0xaf0] sm:$0xff] %v755
      %v757 = vld [vmem:[%s53 + $0xaf8] sm:$0xff]
      %758 = vst [vmem:[%s54 + $0xaf8] sm:$0xff] %v757
      %v759 = vld [vmem:[%s53 + $0xb00] sm:$0xff]
      %760 = vst [vmem:[%s54 + $0xb00] sm:$0xff] %v759
      %v761 = vld [vmem:[%s53 + $0xb08] sm:$0xff]
      %762 = vst [vmem:[%s54 + $0xb08] sm:$0xff] %v761
      %v763 = vld [vmem:[%s53 + $0xb10] sm:$0xff]
      %764 = vst [vmem:[%s54 + $0xb10] sm:$0xff] %v763
      %v765 = vld [vmem:[%s53 + $0xb18] sm:$0xff]
      %766 = vst [vmem:[%s54 + $0xb18] sm:$0xff] %v765
      %v767 = vld [vmem:[%s53 + $0xb20] sm:$0xff]
      %768 = vst [vmem:[%s54 + $0xb20] sm:$0xff] %v767
      %v769 = vld [vmem:[%s53 + $0xb28] sm:$0xff]
      %770 = vst [vmem:[%s54 + $0xb28] sm:$0xff] %v769
      %v771 = vld [vmem:[%s53 + $0xb30] sm:$0xff]
      %772 = vst [vmem:[%s54 + $0xb30] sm:$0xff] %v771
      %v773 = vld [vmem:[%s53 + $0xb38] sm:$0xff]
      %774 = vst [vmem:[%s54 + $0xb38] sm:$0xff] %v773
      %v775 = vld [vmem:[%s53 + $0xb40] sm:$0xff]
      %776 = vst [vmem:[%s54 + $0xb40] sm:$0xff] %v775
      %v777 = vld [vmem:[%s53 + $0xb48] sm:$0xff]
      %778 = vst [vmem:[%s54 + $0xb48] sm:$0xff] %v777
      %v779 = vld [vmem:[%s53 + $0xb50] sm:$0xff]
      %780 = vst [vmem:[%s54 + $0xb50] sm:$0xff] %v779
      %v781 = vld [vmem:[%s53 + $0xb58] sm:$0xff]
      %782 = vst [vmem:[%s54 + $0xb58] sm:$0xff] %v781
      %v783 = vld [vmem:[%s53 + $0xb60] sm:$0xff]
      %784 = vst [vmem:[%s54 + $0xb60] sm:$0xff] %v783
      %v785 = vld [vmem:[%s53 + $0xb68] sm:$0xff]
      %786 = vst [vmem:[%s54 + $0xb68] sm:$0xff] %v785
      %v787 = vld [vmem:[%s53 + $0xb70] sm:$0xff]
      %788 = vst [vmem:[%s54 + $0xb70] sm:$0xff] %v787
      %v789 = vld [vmem:[%s53 + $0xb78] sm:$0xff]
      %790 = vst [vmem:[%s54 + $0xb78] sm:$0xff] %v789
      %v791 = vld [vmem:[%s53 + $0xb80] sm:$0xff]
      %792 = vst [vmem:[%s54 + $0xb80] sm:$0xff] %v791
      %v793 = vld [vmem:[%s53 + $0xb88] sm:$0xff]
      %794 = vst [vmem:[%s54 + $0xb88] sm:$0xff] %v793
      %v795 = vld [vmem:[%s53 + $0xb90] sm:$0xff]
      %796 = vst [vmem:[%s54 + $0xb90] sm:$0xff] %v795
      %v797 = vld [vmem:[%s53 + $0xb98] sm:$0xff]
      %798 = vst [vmem:[%s54 + $0xb98] sm:$0xff] %v797
      %v799 = vld [vmem:[%s53 + $0xba0] sm:$0xff]
      %800 = vst [vmem:[%s54 + $0xba0] sm:$0xff] %v799
      %v801 = vld [vmem:[%s53 + $0xba8] sm:$0xff]
      %802 = vst [vmem:[%s54 + $0xba8] sm:$0xff] %v801
      %v803 = vld [vmem:[%s53 + $0xbb0] sm:$0xff]
      %804 = vst [vmem:[%s54 + $0xbb0] sm:$0xff] %v803
      %v805 = vld [vmem:[%s53 + $0xbb8] sm:$0xff]
      %806 = vst [vmem:[%s54 + $0xbb8] sm:$0xff] %v805
      %v807 = vld [vmem:[%s53 + $0xbc0] sm:$0xff]
      %808 = vst [vmem:[%s54 + $0xbc0] sm:$0xff] %v807
      %v809 = vld [vmem:[%s53 + $0xbc8] sm:$0xff]
      %810 = vst [vmem:[%s54 + $0xbc8] sm:$0xff] %v809
      %v811 = vld [vmem:[%s53 + $0xbd0] sm:$0xff]
      %812 = vst [vmem:[%s54 + $0xbd0] sm:$0xff] %v811
      %v813 = vld [vmem:[%s53 + $0xbd8] sm:$0xff]
      %814 = vst [vmem:[%s54 + $0xbd8] sm:$0xff] %v813
      %v815 = vld [vmem:[%s53 + $0xbe0] sm:$0xff]
      %816 = vst [vmem:[%s54 + $0xbe0] sm:$0xff] %v815
      %v817 = vld [vmem:[%s53 + $0xbe8] sm:$0xff]
      %818 = vst [vmem:[%s54 + $0xbe8] sm:$0xff] %v817
      %v819 = vld [vmem:[%s53 + $0xbf0] sm:$0xff]
      %820 = vst [vmem:[%s54 + $0xbf0] sm:$0xff] %v819
      %v821 = vld [vmem:[%s53 + $0xbf8] sm:$0xff]
      %822 = vst [vmem:[%s54 + $0xbf8] sm:$0xff] %v821
      %v823 = vld [vmem:[%s53 + $0xc00] sm:$0xff]
      %824 = vst [vmem:[%s54 + $0xc00] sm:$0xff] %v823
      %v825 = vld [vmem:[%s53 + $0xc08] sm:$0xff]
      %826 = vst [vmem:[%s54 + $0xc08] sm:$0xff] %v825
      %v827 = vld [vmem:[%s53 + $0xc10] sm:$0xff]
      %828 = vst [vmem:[%s54 + $0xc10] sm:$0xff] %v827
      %v829 = vld [vmem:[%s53 + $0xc18] sm:$0xff]
      %830 = vst [vmem:[%s54 + $0xc18] sm:$0xff] %v829
      %v831 = vld [vmem:[%s53 + $0xc20] sm:$0xff]
      %832 = vst [vmem:[%s54 + $0xc20] sm:$0xff] %v831
      %v833 = vld [vmem:[%s53 + $0xc28] sm:$0xff]
      %834 = vst [vmem:[%s54 + $0xc28] sm:$0xff] %v833
      %v835 = vld [vmem:[%s53 + $0xc30] sm:$0xff]
      %836 = vst [vmem:[%s54 + $0xc30] sm:$0xff] %v835
      %v837 = vld [vmem:[%s53 + $0xc38] sm:$0xff]
      %838 = vst [vmem:[%s54 + $0xc38] sm:$0xff] %v837
      %v839 = vld [vmem:[%s53 + $0xc40] sm:$0xff]
      %840 = vst [vmem:[%s54 + $0xc40] sm:$0xff] %v839
      %v841 = vld [vmem:[%s53 + $0xc48] sm:$0xff]
      %842 = vst [vmem:[%s54 + $0xc48] sm:$0xff] %v841
      %v843 = vld [vmem:[%s53 + $0xc50] sm:$0xff]
      %844 = vst [vmem:[%s54 + $0xc50] sm:$0xff] %v843
      %v845 = vld [vmem:[%s53 + $0xc58] sm:$0xff]
      %846 = vst [vmem:[%s54 + $0xc58] sm:$0xff] %v845
      %v847 = vld [vmem:[%s53 + $0xc60] sm:$0xff]
      %848 = vst [vmem:[%s54 + $0xc60] sm:$0xff] %v847
      %v849 = vld [vmem:[%s53 + $0xc68] sm:$0xff]
      %850 = vst [vmem:[%s54 + $0xc68] sm:$0xff] %v849
      %v851 = vld [vmem:[%s53 + $0xc70] sm:$0xff]
      %852 = vst [vmem:[%s54 + $0xc70] sm:$0xff] %v851
      %v853 = vld [vmem:[%s53 + $0xc78] sm:$0xff]
      %854 = vst [vmem:[%s54 + $0xc78] sm:$0xff] %v853
    $region58: #{global_discriminator.1} parent=52 // loop_footer
      %s52 = sadd.s32 1, %s48
    $region59: #{global_discriminator.1} parent=52 // loop_footer_branch
      %47 = sbr.rel target = $region55
    $region60: #{global_discriminator.1} parent=52 // loop_exit
      _
  $region53: #{global_discriminator.1} parent=0 // pred_fallthru
    _
  // Predicated region
  $region61: #{global_discriminator.1} parent=0 // pred_check
    _
  $region62: #{global_discriminator.1} parent=0 // pred_check_branch
    %856 = sbr.rel target = $region64
  $region63: #{global_discriminator.1} parent=0 // pred_region
    _
  $region64: #{global_discriminator.1} parent=0 // pred_fallthru
    _
  // Predicated region
  $region65: #{global_discriminator.1} parent=0 // pred_check
    _
  $region66: #{global_discriminator.1} parent=0 // pred_check_branch
    %859 = sbr.rel (0) target = $region68
  $region67: #{global_discriminator.1} parent=0 // pred_region
    %860 = vsyncadd [#allocation7], 51200
  $region68: #{global_discriminator.1} parent=0 // pred_fallthru
    _
  %s861 = scalar_lea.sflag [#allocation7], 1
  // Predicated region
  $region69: #{global_discriminator.1} parent=0 // pred_check
    _
  $region70: #{global_discriminator.1} parent=0 // pred_check_branch
    %863 = sbr.rel (0) target = $region72
  $region71: #{global_discriminator.1} parent=0 // pred_region
    loop: start=0, step=1, limit=1
    $region73: #{global_discriminator.1} parent=71 // loop_pre_header
      _
    $region74: #{global_discriminator.1} parent=71 // loop_header
      %s865 = sphi 0, %s869
      %p866 = scmp.ge.s32.totalorder %s865, 1
      %s870 = sphi %s10, %s10
      %s871 = sphi [#allocation3], [#allocation3]
    $region75: #{global_discriminator.1} parent=71 // loop_header_branch
      %868 = sbr.rel (%p866) target = $region79
    $region76: #{global_discriminator.1} parent=71 // loop_body
      %v872 = vld [vmem:[%s870] sm:$0xff]
      %873 = vst [vmem:[%s871] sm:$0xff] %v872
      %v874 = vld [vmem:[%s870 + $0x8] sm:$0xff]
      %875 = vst [vmem:[%s871 + $0x8] sm:$0xff] %v874
      %v876 = vld [vmem:[%s870 + $0x10] sm:$0xff]
      %877 = vst [vmem:[%s871 + $0x10] sm:$0xff] %v876
      %v878 = vld [vmem:[%s870 + $0x18] sm:$0xff]
      %879 = vst [vmem:[%s871 + $0x18] sm:$0xff] %v878
      %v880 = vld [vmem:[%s870 + $0x20] sm:$0xff]
      %881 = vst [vmem:[%s871 + $0x20] sm:$0xff] %v880
      %v882 = vld [vmem:[%s870 + $0x28] sm:$0xff]
      %883 = vst [vmem:[%s871 + $0x28] sm:$0xff] %v882
      %v884 = vld [vmem:[%s870 + $0x30] sm:$0xff]
      %885 = vst [vmem:[%s871 + $0x30] sm:$0xff] %v884
      %v886 = vld [vmem:[%s870 + $0x38] sm:$0xff]
      %887 = vst [vmem:[%s871 + $0x38] sm:$0xff] %v886
      %v888 = vld [vmem:[%s870 + $0x40] sm:$0xff]
      %889 = vst [vmem:[%s871 + $0x40] sm:$0xff] %v888
      %v890 = vld [vmem:[%s870 + $0x48] sm:$0xff]
      %891 = vst [vmem:[%s871 + $0x48] sm:$0xff] %v890
      %v892 = vld [vmem:[%s870 + $0x50] sm:$0xff]
      %893 = vst [vmem:[%s871 + $0x50] sm:$0xff] %v892
      %v894 = vld [vmem:[%s870 + $0x58] sm:$0xff]
      %895 = vst [vmem:[%s871 + $0x58] sm:$0xff] %v894
      %v896 = vld [vmem:[%s870 + $0x60] sm:$0xff]
      %897 = vst [vmem:[%s871 + $0x60] sm:$0xff] %v896
      %v898 = vld [vmem:[%s870 + $0x68] sm:$0xff]
      %899 = vst [vmem:[%s871 + $0x68] sm:$0xff] %v898
      %v900 = vld [vmem:[%s870 + $0x70] sm:$0xff]
      %901 = vst [vmem:[%s871 + $0x70] sm:$0xff] %v900
      %v902 = vld [vmem:[%s870 + $0x78] sm:$0xff]
      %903 = vst [vmem:[%s871 + $0x78] sm:$0xff] %v902
      %v904 = vld [vmem:[%s870 + $0x80] sm:$0xff]
      %905 = vst [vmem:[%s871 + $0x80] sm:$0xff] %v904
      %v906 = vld [vmem:[%s870 + $0x88] sm:$0xff]
      %907 = vst [vmem:[%s871 + $0x88] sm:$0xff] %v906
      %v908 = vld [vmem:[%s870 + $0x90] sm:$0xff]
      %909 = vst [vmem:[%s871 + $0x90] sm:$0xff] %v908
      %v910 = vld [vmem:[%s870 + $0x98] sm:$0xff]
      %911 = vst [vmem:[%s871 + $0x98] sm:$0xff] %v910
      %v912 = vld [vmem:[%s870 + $0xa0] sm:$0xff]
      %913 = vst [vmem:[%s871 + $0xa0] sm:$0xff] %v912
      %v914 = vld [vmem:[%s870 + $0xa8] sm:$0xff]
      %915 = vst [vmem:[%s871 + $0xa8] sm:$0xff] %v914
      %v916 = vld [vmem:[%s870 + $0xb0] sm:$0xff]
      %917 = vst [vmem:[%s871 + $0xb0] sm:$0xff] %v916
      %v918 = vld [vmem:[%s870 + $0xb8] sm:$0xff]
      %919 = vst [vmem:[%s871 + $0xb8] sm:$0xff] %v918
      %v920 = vld [vmem:[%s870 + $0xc0] sm:$0xff]
      %921 = vst [vmem:[%s871 + $0xc0] sm:$0xff] %v920
      %v922 = vld [vmem:[%s870 + $0xc8] sm:$0xff]
      %923 = vst [vmem:[%s871 + $0xc8] sm:$0xff] %v922
      %v924 = vld [vmem:[%s870 + $0xd0] sm:$0xff]
      %925 = vst [vmem:[%s871 + $0xd0] sm:$0xff] %v924
      %v926 = vld [vmem:[%s870 + $0xd8] sm:$0xff]
      %927 = vst [vmem:[%s871 + $0xd8] sm:$0xff] %v926
      %v928 = vld [vmem:[%s870 + $0xe0] sm:$0xff]
      %929 = vst [vmem:[%s871 + $0xe0] sm:$0xff] %v928
      %v930 = vld [vmem:[%s870 + $0xe8] sm:$0xff]
      %931 = vst [vmem:[%s871 + $0xe8] sm:$0xff] %v930
      %v932 = vld [vmem:[%s870 + $0xf0] sm:$0xff]
      %933 = vst [vmem:[%s871 + $0xf0] sm:$0xff] %v932
      %v934 = vld [vmem:[%s870 + $0xf8] sm:$0xff]
      %935 = vst [vmem:[%s871 + $0xf8] sm:$0xff] %v934
      %v936 = vld [vmem:[%s870 + $0x100] sm:$0xff]
      %937 = vst [vmem:[%s871 + $0x100] sm:$0xff] %v936
      %v938 = vld [vmem:[%s870 + $0x108] sm:$0xff]
      %939 = vst [vmem:[%s871 + $0x108] sm:$0xff] %v938
      %v940 = vld [vmem:[%s870 + $0x110] sm:$0xff]
      %941 = vst [vmem:[%s871 + $0x110] sm:$0xff] %v940
      %v942 = vld [vmem:[%s870 + $0x118] sm:$0xff]
      %943 = vst [vmem:[%s871 + $0x118] sm:$0xff] %v942
      %v944 = vld [vmem:[%s870 + $0x120] sm:$0xff]
      %945 = vst [vmem:[%s871 + $0x120] sm:$0xff] %v944
      %v946 = vld [vmem:[%s870 + $0x128] sm:$0xff]
      %947 = vst [vmem:[%s871 + $0x128] sm:$0xff] %v946
      %v948 = vld [vmem:[%s870 + $0x130] sm:$0xff]
      %949 = vst [vmem:[%s871 + $0x130] sm:$0xff] %v948
      %v950 = vld [vmem:[%s870 + $0x138] sm:$0xff]
      %951 = vst [vmem:[%s871 + $0x138] sm:$0xff] %v950
      %v952 = vld [vmem:[%s870 + $0x140] sm:$0xff]
      %953 = vst [vmem:[%s871 + $0x140] sm:$0xff] %v952
      %v954 = vld [vmem:[%s870 + $0x148] sm:$0xff]
      %955 = vst [vmem:[%s871 + $0x148] sm:$0xff] %v954
      %v956 = vld [vmem:[%s870 + $0x150] sm:$0xff]
      %957 = vst [vmem:[%s871 + $0x150] sm:$0xff] %v956
      %v958 = vld [vmem:[%s870 + $0x158] sm:$0xff]
      %959 = vst [vmem:[%s871 + $0x158] sm:$0xff] %v958
      %v960 = vld [vmem:[%s870 + $0x160] sm:$0xff]
      %961 = vst [vmem:[%s871 + $0x160] sm:$0xff] %v960
      %v962 = vld [vmem:[%s870 + $0x168] sm:$0xff]
      %963 = vst [vmem:[%s871 + $0x168] sm:$0xff] %v962
      %v964 = vld [vmem:[%s870 + $0x170] sm:$0xff]
      %965 = vst [vmem:[%s871 + $0x170] sm:$0xff] %v964
      %v966 = vld [vmem:[%s870 + $0x178] sm:$0xff]
      %967 = vst [vmem:[%s871 + $0x178] sm:$0xff] %v966
      %v968 = vld [vmem:[%s870 + $0x180] sm:$0xff]
      %969 = vst [vmem:[%s871 + $0x180] sm:$0xff] %v968
      %v970 = vld [vmem:[%s870 + $0x188] sm:$0xff]
      %971 = vst [vmem:[%s871 + $0x188] sm:$0xff] %v970
      %v972 = vld [vmem:[%s870 + $0x190] sm:$0xff]
      %973 = vst [vmem:[%s871 + $0x190] sm:$0xff] %v972
      %v974 = vld [vmem:[%s870 + $0x198] sm:$0xff]
      %975 = vst [vmem:[%s871 + $0x198] sm:$0xff] %v974
      %v976 = vld [vmem:[%s870 + $0x1a0] sm:$0xff]
      %977 = vst [vmem:[%s871 + $0x1a0] sm:$0xff] %v976
      %v978 = vld [vmem:[%s870 + $0x1a8] sm:$0xff]
      %979 = vst [vmem:[%s871 + $0x1a8] sm:$0xff] %v978
      %v980 = vld [vmem:[%s870 + $0x1b0] sm:$0xff]
      %981 = vst [vmem:[%s871 + $0x1b0] sm:$0xff] %v980
      %v982 = vld [vmem:[%s870 + $0x1b8] sm:$0xff]
      %983 = vst [vmem:[%s871 + $0x1b8] sm:$0xff] %v982
      %v984 = vld [vmem:[%s870 + $0x1c0] sm:$0xff]
      %985 = vst [vmem:[%s871 + $0x1c0] sm:$0xff] %v984
      %v986 = vld [vmem:[%s870 + $0x1c8] sm:$0xff]
      %987 = vst [vmem:[%s871 + $0x1c8] sm:$0xff] %v986
      %v988 = vld [vmem:[%s870 + $0x1d0] sm:$0xff]
      %989 = vst [vmem:[%s871 + $0x1d0] sm:$0xff] %v988
      %v990 = vld [vmem:[%s870 + $0x1d8] sm:$0xff]
      %991 = vst [vmem:[%s871 + $0x1d8] sm:$0xff] %v990
      %v992 = vld [vmem:[%s870 + $0x1e0] sm:$0xff]
      %993 = vst [vmem:[%s871 + $0x1e0] sm:$0xff] %v992
      %v994 = vld [vmem:[%s870 + $0x1e8] sm:$0xff]
      %995 = vst [vmem:[%s871 + $0x1e8] sm:$0xff] %v994
      %v996 = vld [vmem:[%s870 + $0x1f0] sm:$0xff]
      %997 = vst [vmem:[%s871 + $0x1f0] sm:$0xff] %v996
      %v998 = vld [vmem:[%s870 + $0x1f8] sm:$0xff]
      %999 = vst [vmem:[%s871 + $0x1f8] sm:$0xff] %v998
      %v1000 = vld [vmem:[%s870 + $0x200] sm:$0xff]
      %1001 = vst [vmem:[%s871 + $0x200] sm:$0xff] %v1000
      %v1002 = vld [vmem:[%s870 + $0x208] sm:$0xff]
      %1003 = vst [vmem:[%s871 + $0x208] sm:$0xff] %v1002
      %v1004 = vld [vmem:[%s870 + $0x210] sm:$0xff]
      %1005 = vst [vmem:[%s871 + $0x210] sm:$0xff] %v1004
      %v1006 = vld [vmem:[%s870 + $0x218] sm:$0xff]
      %1007 = vst [vmem:[%s871 + $0x218] sm:$0xff] %v1006
      %v1008 = vld [vmem:[%s870 + $0x220] sm:$0xff]
      %1009 = vst [vmem:[%s871 + $0x220] sm:$0xff] %v1008
      %v1010 = vld [vmem:[%s870 + $0x228] sm:$0xff]
      %1011 = vst [vmem:[%s871 + $0x228] sm:$0xff] %v1010
      %v1012 = vld [vmem:[%s870 + $0x230] sm:$0xff]
      %1013 = vst [vmem:[%s871 + $0x230] sm:$0xff] %v1012
      %v1014 = vld [vmem:[%s870 + $0x238] sm:$0xff]
      %1015 = vst [vmem:[%s871 + $0x238] sm:$0xff] %v1014
      %v1016 = vld [vmem:[%s870 + $0x240] sm:$0xff]
      %1017 = vst [vmem:[%s871 + $0x240] sm:$0xff] %v1016
      %v1018 = vld [vmem:[%s870 + $0x248] sm:$0xff]
      %1019 = vst [vmem:[%s871 + $0x248] sm:$0xff] %v1018
      %v1020 = vld [vmem:[%s870 + $0x250] sm:$0xff]
      %1021 = vst [vmem:[%s871 + $0x250] sm:$0xff] %v1020
      %v1022 = vld [vmem:[%s870 + $0x258] sm:$0xff]
      %1023 = vst [vmem:[%s871 + $0x258] sm:$0xff] %v1022
      %v1024 = vld [vmem:[%s870 + $0x260] sm:$0xff]
      %1025 = vst [vmem:[%s871 + $0x260] sm:$0xff] %v1024
      %v1026 = vld [vmem:[%s870 + $0x268] sm:$0xff]
      %1027 = vst [vmem:[%s871 + $0x268] sm:$0xff] %v1026
      %v1028 = vld [vmem:[%s870 + $0x270] sm:$0xff]
      %1029 = vst [vmem:[%s871 + $0x270] sm:$0xff] %v1028
      %v1030 = vld [vmem:[%s870 + $0x278] sm:$0xff]
      %1031 = vst [vmem:[%s871 + $0x278] sm:$0xff] %v1030
      %v1032 = vld [vmem:[%s870 + $0x280] sm:$0xff]
      %1033 = vst [vmem:[%s871 + $0x280] sm:$0xff] %v1032
      %v1034 = vld [vmem:[%s870 + $0x288] sm:$0xff]
      %1035 = vst [vmem:[%s871 + $0x288] sm:$0xff] %v1034
      %v1036 = vld [vmem:[%s870 + $0x290] sm:$0xff]
      %1037 = vst [vmem:[%s871 + $0x290] sm:$0xff] %v1036
      %v1038 = vld [vmem:[%s870 + $0x298] sm:$0xff]
      %1039 = vst [vmem:[%s871 + $0x298] sm:$0xff] %v1038
      %v1040 = vld [vmem:[%s870 + $0x2a0] sm:$0xff]
      %1041 = vst [vmem:[%s871 + $0x2a0] sm:$0xff] %v1040
      %v1042 = vld [vmem:[%s870 + $0x2a8] sm:$0xff]
      %1043 = vst [vmem:[%s871 + $0x2a8] sm:$0xff] %v1042
      %v1044 = vld [vmem:[%s870 + $0x2b0] sm:$0xff]
      %1045 = vst [vmem:[%s871 + $0x2b0] sm:$0xff] %v1044
      %v1046 = vld [vmem:[%s870 + $0x2b8] sm:$0xff]
      %1047 = vst [vmem:[%s871 + $0x2b8] sm:$0xff] %v1046
      %v1048 = vld [vmem:[%s870 + $0x2c0] sm:$0xff]
      %1049 = vst [vmem:[%s871 + $0x2c0] sm:$0xff] %v1048
      %v1050 = vld [vmem:[%s870 + $0x2c8] sm:$0xff]
      %1051 = vst [vmem:[%s871 + $0x2c8] sm:$0xff] %v1050
      %v1052 = vld [vmem:[%s870 + $0x2d0] sm:$0xff]
      %1053 = vst [vmem:[%s871 + $0x2d0] sm:$0xff] %v1052
      %v1054 = vld [vmem:[%s870 + $0x2d8] sm:$0xff]
      %1055 = vst [vmem:[%s871 + $0x2d8] sm:$0xff] %v1054
      %v1056 = vld [vmem:[%s870 + $0x2e0] sm:$0xff]
      %1057 = vst [vmem:[%s871 + $0x2e0] sm:$0xff] %v1056
      %v1058 = vld [vmem:[%s870 + $0x2e8] sm:$0xff]
      %1059 = vst [vmem:[%s871 + $0x2e8] sm:$0xff] %v1058
      %v1060 = vld [vmem:[%s870 + $0x2f0] sm:$0xff]
      %1061 = vst [vmem:[%s871 + $0x2f0] sm:$0xff] %v1060
      %v1062 = vld [vmem:[%s870 + $0x2f8] sm:$0xff]
      %1063 = vst [vmem:[%s871 + $0x2f8] sm:$0xff] %v1062
      %v1064 = vld [vmem:[%s870 + $0x300] sm:$0xff]
      %1065 = vst [vmem:[%s871 + $0x300] sm:$0xff] %v1064
      %v1066 = vld [vmem:[%s870 + $0x308] sm:$0xff]
      %1067 = vst [vmem:[%s871 + $0x308] sm:$0xff] %v1066
      %v1068 = vld [vmem:[%s870 + $0x310] sm:$0xff]
      %1069 = vst [vmem:[%s871 + $0x310] sm:$0xff] %v1068
      %v1070 = vld [vmem:[%s870 + $0x318] sm:$0xff]
      %1071 = vst [vmem:[%s871 + $0x318] sm:$0xff] %v1070
      %v1072 = vld [vmem:[%s870 + $0x320] sm:$0xff]
      %1073 = vst [vmem:[%s871 + $0x320] sm:$0xff] %v1072
      %v1074 = vld [vmem:[%s870 + $0x328] sm:$0xff]
      %1075 = vst [vmem:[%s871 + $0x328] sm:$0xff] %v1074
      %v1076 = vld [vmem:[%s870 + $0x330] sm:$0xff]
      %1077 = vst [vmem:[%s871 + $0x330] sm:$0xff] %v1076
      %v1078 = vld [vmem:[%s870 + $0x338] sm:$0xff]
      %1079 = vst [vmem:[%s871 + $0x338] sm:$0xff] %v1078
      %v1080 = vld [vmem:[%s870 + $0x340] sm:$0xff]
      %1081 = vst [vmem:[%s871 + $0x340] sm:$0xff] %v1080
      %v1082 = vld [vmem:[%s870 + $0x348] sm:$0xff]
      %1083 = vst [vmem:[%s871 + $0x348] sm:$0xff] %v1082
      %v1084 = vld [vmem:[%s870 + $0x350] sm:$0xff]
      %1085 = vst [vmem:[%s871 + $0x350] sm:$0xff] %v1084
      %v1086 = vld [vmem:[%s870 + $0x358] sm:$0xff]
      %1087 = vst [vmem:[%s871 + $0x358] sm:$0xff] %v1086
      %v1088 = vld [vmem:[%s870 + $0x360] sm:$0xff]
      %1089 = vst [vmem:[%s871 + $0x360] sm:$0xff] %v1088
      %v1090 = vld [vmem:[%s870 + $0x368] sm:$0xff]
      %1091 = vst [vmem:[%s871 + $0x368] sm:$0xff] %v1090
      %v1092 = vld [vmem:[%s870 + $0x370] sm:$0xff]
      %1093 = vst [vmem:[%s871 + $0x370] sm:$0xff] %v1092
      %v1094 = vld [vmem:[%s870 + $0x378] sm:$0xff]
      %1095 = vst [vmem:[%s871 + $0x378] sm:$0xff] %v1094
      %v1096 = vld [vmem:[%s870 + $0x380] sm:$0xff]
      %1097 = vst [vmem:[%s871 + $0x380] sm:$0xff] %v1096
      %v1098 = vld [vmem:[%s870 + $0x388] sm:$0xff]
      %1099 = vst [vmem:[%s871 + $0x388] sm:$0xff] %v1098
      %v1100 = vld [vmem:[%s870 + $0x390] sm:$0xff]
      %1101 = vst [vmem:[%s871 + $0x390] sm:$0xff] %v1100
      %v1102 = vld [vmem:[%s870 + $0x398] sm:$0xff]
      %1103 = vst [vmem:[%s871 + $0x398] sm:$0xff] %v1102
      %v1104 = vld [vmem:[%s870 + $0x3a0] sm:$0xff]
      %1105 = vst [vmem:[%s871 + $0x3a0] sm:$0xff] %v1104
      %v1106 = vld [vmem:[%s870 + $0x3a8] sm:$0xff]
      %1107 = vst [vmem:[%s871 + $0x3a8] sm:$0xff] %v1106
      %v1108 = vld [vmem:[%s870 + $0x3b0] sm:$0xff]
      %1109 = vst [vmem:[%s871 + $0x3b0] sm:$0xff] %v1108
      %v1110 = vld [vmem:[%s870 + $0x3b8] sm:$0xff]
      %1111 = vst [vmem:[%s871 + $0x3b8] sm:$0xff] %v1110
      %v1112 = vld [vmem:[%s870 + $0x3c0] sm:$0xff]
      %1113 = vst [vmem:[%s871 + $0x3c0] sm:$0xff] %v1112
      %v1114 = vld [vmem:[%s870 + $0x3c8] sm:$0xff]
      %1115 = vst [vmem:[%s871 + $0x3c8] sm:$0xff] %v1114
      %v1116 = vld [vmem:[%s870 + $0x3d0] sm:$0xff]
      %1117 = vst [vmem:[%s871 + $0x3d0] sm:$0xff] %v1116
      %v1118 = vld [vmem:[%s870 + $0x3d8] sm:$0xff]
      %1119 = vst [vmem:[%s871 + $0x3d8] sm:$0xff] %v1118
      %v1120 = vld [vmem:[%s870 + $0x3e0] sm:$0xff]
      %1121 = vst [vmem:[%s871 + $0x3e0] sm:$0xff] %v1120
      %v1122 = vld [vmem:[%s870 + $0x3e8] sm:$0xff]
      %1123 = vst [vmem:[%s871 + $0x3e8] sm:$0xff] %v1122
      %v1124 = vld [vmem:[%s870 + $0x3f0] sm:$0xff]
      %1125 = vst [vmem:[%s871 + $0x3f0] sm:$0xff] %v1124
      %v1126 = vld [vmem:[%s870 + $0x3f8] sm:$0xff]
      %1127 = vst [vmem:[%s871 + $0x3f8] sm:$0xff] %v1126
      %v1128 = vld [vmem:[%s870 + $0x400] sm:$0xff]
      %1129 = vst [vmem:[%s871 + $0x400] sm:$0xff] %v1128
      %v1130 = vld [vmem:[%s870 + $0x408] sm:$0xff]
      %1131 = vst [vmem:[%s871 + $0x408] sm:$0xff] %v1130
      %v1132 = vld [vmem:[%s870 + $0x410] sm:$0xff]
      %1133 = vst [vmem:[%s871 + $0x410] sm:$0xff] %v1132
      %v1134 = vld [vmem:[%s870 + $0x418] sm:$0xff]
      %1135 = vst [vmem:[%s871 + $0x418] sm:$0xff] %v1134
      %v1136 = vld [vmem:[%s870 + $0x420] sm:$0xff]
      %1137 = vst [vmem:[%s871 + $0x420] sm:$0xff] %v1136
      %v1138 = vld [vmem:[%s870 + $0x428] sm:$0xff]
      %1139 = vst [vmem:[%s871 + $0x428] sm:$0xff] %v1138
      %v1140 = vld [vmem:[%s870 + $0x430] sm:$0xff]
      %1141 = vst [vmem:[%s871 + $0x430] sm:$0xff] %v1140
      %v1142 = vld [vmem:[%s870 + $0x438] sm:$0xff]
      %1143 = vst [vmem:[%s871 + $0x438] sm:$0xff] %v1142
      %v1144 = vld [vmem:[%s870 + $0x440] sm:$0xff]
      %1145 = vst [vmem:[%s871 + $0x440] sm:$0xff] %v1144
      %v1146 = vld [vmem:[%s870 + $0x448] sm:$0xff]
      %1147 = vst [vmem:[%s871 + $0x448] sm:$0xff] %v1146
      %v1148 = vld [vmem:[%s870 + $0x450] sm:$0xff]
      %1149 = vst [vmem:[%s871 + $0x450] sm:$0xff] %v1148
      %v1150 = vld [vmem:[%s870 + $0x458] sm:$0xff]
      %1151 = vst [vmem:[%s871 + $0x458] sm:$0xff] %v1150
      %v1152 = vld [vmem:[%s870 + $0x460] sm:$0xff]
      %1153 = vst [vmem:[%s871 + $0x460] sm:$0xff] %v1152
      %v1154 = vld [vmem:[%s870 + $0x468] sm:$0xff]
      %1155 = vst [vmem:[%s871 + $0x468] sm:$0xff] %v1154
      %v1156 = vld [vmem:[%s870 + $0x470] sm:$0xff]
      %1157 = vst [vmem:[%s871 + $0x470] sm:$0xff] %v1156
      %v1158 = vld [vmem:[%s870 + $0x478] sm:$0xff]
      %1159 = vst [vmem:[%s871 + $0x478] sm:$0xff] %v1158
      %v1160 = vld [vmem:[%s870 + $0x480] sm:$0xff]
      %1161 = vst [vmem:[%s871 + $0x480] sm:$0xff] %v1160
      %v1162 = vld [vmem:[%s870 + $0x488] sm:$0xff]
      %1163 = vst [vmem:[%s871 + $0x488] sm:$0xff] %v1162
      %v1164 = vld [vmem:[%s870 + $0x490] sm:$0xff]
      %1165 = vst [vmem:[%s871 + $0x490] sm:$0xff] %v1164
      %v1166 = vld [vmem:[%s870 + $0x498] sm:$0xff]
      %1167 = vst [vmem:[%s871 + $0x498] sm:$0xff] %v1166
      %v1168 = vld [vmem:[%s870 + $0x4a0] sm:$0xff]
      %1169 = vst [vmem:[%s871 + $0x4a0] sm:$0xff] %v1168
      %v1170 = vld [vmem:[%s870 + $0x4a8] sm:$0xff]
      %1171 = vst [vmem:[%s871 + $0x4a8] sm:$0xff] %v1170
      %v1172 = vld [vmem:[%s870 + $0x4b0] sm:$0xff]
      %1173 = vst [vmem:[%s871 + $0x4b0] sm:$0xff] %v1172
      %v1174 = vld [vmem:[%s870 + $0x4b8] sm:$0xff]
      %1175 = vst [vmem:[%s871 + $0x4b8] sm:$0xff] %v1174
      %v1176 = vld [vmem:[%s870 + $0x4c0] sm:$0xff]
      %1177 = vst [vmem:[%s871 + $0x4c0] sm:$0xff] %v1176
      %v1178 = vld [vmem:[%s870 + $0x4c8] sm:$0xff]
      %1179 = vst [vmem:[%s871 + $0x4c8] sm:$0xff] %v1178
      %v1180 = vld [vmem:[%s870 + $0x4d0] sm:$0xff]
      %1181 = vst [vmem:[%s871 + $0x4d0] sm:$0xff] %v1180
      %v1182 = vld [vmem:[%s870 + $0x4d8] sm:$0xff]
      %1183 = vst [vmem:[%s871 + $0x4d8] sm:$0xff] %v1182
      %v1184 = vld [vmem:[%s870 + $0x4e0] sm:$0xff]
      %1185 = vst [vmem:[%s871 + $0x4e0] sm:$0xff] %v1184
      %v1186 = vld [vmem:[%s870 + $0x4e8] sm:$0xff]
      %1187 = vst [vmem:[%s871 + $0x4e8] sm:$0xff] %v1186
      %v1188 = vld [vmem:[%s870 + $0x4f0] sm:$0xff]
      %1189 = vst [vmem:[%s871 + $0x4f0] sm:$0xff] %v1188
      %v1190 = vld [vmem:[%s870 + $0x4f8] sm:$0xff]
      %1191 = vst [vmem:[%s871 + $0x4f8] sm:$0xff] %v1190
      %v1192 = vld [vmem:[%s870 + $0x500] sm:$0xff]
      %1193 = vst [vmem:[%s871 + $0x500] sm:$0xff] %v1192
      %v1194 = vld [vmem:[%s870 + $0x508] sm:$0xff]
      %1195 = vst [vmem:[%s871 + $0x508] sm:$0xff] %v1194
      %v1196 = vld [vmem:[%s870 + $0x510] sm:$0xff]
      %1197 = vst [vmem:[%s871 + $0x510] sm:$0xff] %v1196
      %v1198 = vld [vmem:[%s870 + $0x518] sm:$0xff]
      %1199 = vst [vmem:[%s871 + $0x518] sm:$0xff] %v1198
      %v1200 = vld [vmem:[%s870 + $0x520] sm:$0xff]
      %1201 = vst [vmem:[%s871 + $0x520] sm:$0xff] %v1200
      %v1202 = vld [vmem:[%s870 + $0x528] sm:$0xff]
      %1203 = vst [vmem:[%s871 + $0x528] sm:$0xff] %v1202
      %v1204 = vld [vmem:[%s870 + $0x530] sm:$0xff]
      %1205 = vst [vmem:[%s871 + $0x530] sm:$0xff] %v1204
      %v1206 = vld [vmem:[%s870 + $0x538] sm:$0xff]
      %1207 = vst [vmem:[%s871 + $0x538] sm:$0xff] %v1206
      %v1208 = vld [vmem:[%s870 + $0x540] sm:$0xff]
      %1209 = vst [vmem:[%s871 + $0x540] sm:$0xff] %v1208
      %v1210 = vld [vmem:[%s870 + $0x548] sm:$0xff]
      %1211 = vst [vmem:[%s871 + $0x548] sm:$0xff] %v1210
      %v1212 = vld [vmem:[%s870 + $0x550] sm:$0xff]
      %1213 = vst [vmem:[%s871 + $0x550] sm:$0xff] %v1212
      %v1214 = vld [vmem:[%s870 + $0x558] sm:$0xff]
      %1215 = vst [vmem:[%s871 + $0x558] sm:$0xff] %v1214
      %v1216 = vld [vmem:[%s870 + $0x560] sm:$0xff]
      %1217 = vst [vmem:[%s871 + $0x560] sm:$0xff] %v1216
      %v1218 = vld [vmem:[%s870 + $0x568] sm:$0xff]
      %1219 = vst [vmem:[%s871 + $0x568] sm:$0xff] %v1218
      %v1220 = vld [vmem:[%s870 + $0x570] sm:$0xff]
      %1221 = vst [vmem:[%s871 + $0x570] sm:$0xff] %v1220
      %v1222 = vld [vmem:[%s870 + $0x578] sm:$0xff]
      %1223 = vst [vmem:[%s871 + $0x578] sm:$0xff] %v1222
      %v1224 = vld [vmem:[%s870 + $0x580] sm:$0xff]
      %1225 = vst [vmem:[%s871 + $0x580] sm:$0xff] %v1224
      %v1226 = vld [vmem:[%s870 + $0x588] sm:$0xff]
      %1227 = vst [vmem:[%s871 + $0x588] sm:$0xff] %v1226
      %v1228 = vld [vmem:[%s870 + $0x590] sm:$0xff]
      %1229 = vst [vmem:[%s871 + $0x590] sm:$0xff] %v1228
      %v1230 = vld [vmem:[%s870 + $0x598] sm:$0xff]
      %1231 = vst [vmem:[%s871 + $0x598] sm:$0xff] %v1230
      %v1232 = vld [vmem:[%s870 + $0x5a0] sm:$0xff]
      %1233 = vst [vmem:[%s871 + $0x5a0] sm:$0xff] %v1232
      %v1234 = vld [vmem:[%s870 + $0x5a8] sm:$0xff]
      %1235 = vst [vmem:[%s871 + $0x5a8] sm:$0xff] %v1234
      %v1236 = vld [vmem:[%s870 + $0x5b0] sm:$0xff]
      %1237 = vst [vmem:[%s871 + $0x5b0] sm:$0xff] %v1236
      %v1238 = vld [vmem:[%s870 + $0x5b8] sm:$0xff]
      %1239 = vst [vmem:[%s871 + $0x5b8] sm:$0xff] %v1238
      %v1240 = vld [vmem:[%s870 + $0x5c0] sm:$0xff]
      %1241 = vst [vmem:[%s871 + $0x5c0] sm:$0xff] %v1240
      %v1242 = vld [vmem:[%s870 + $0x5c8] sm:$0xff]
      %1243 = vst [vmem:[%s871 + $0x5c8] sm:$0xff] %v1242
      %v1244 = vld [vmem:[%s870 + $0x5d0] sm:$0xff]
      %1245 = vst [vmem:[%s871 + $0x5d0] sm:$0xff] %v1244
      %v1246 = vld [vmem:[%s870 + $0x5d8] sm:$0xff]
      %1247 = vst [vmem:[%s871 + $0x5d8] sm:$0xff] %v1246
      %v1248 = vld [vmem:[%s870 + $0x5e0] sm:$0xff]
      %1249 = vst [vmem:[%s871 + $0x5e0] sm:$0xff] %v1248
      %v1250 = vld [vmem:[%s870 + $0x5e8] sm:$0xff]
      %1251 = vst [vmem:[%s871 + $0x5e8] sm:$0xff] %v1250
      %v1252 = vld [vmem:[%s870 + $0x5f0] sm:$0xff]
      %1253 = vst [vmem:[%s871 + $0x5f0] sm:$0xff] %v1252
      %v1254 = vld [vmem:[%s870 + $0x5f8] sm:$0xff]
      %1255 = vst [vmem:[%s871 + $0x5f8] sm:$0xff] %v1254
      %v1256 = vld [vmem:[%s870 + $0x600] sm:$0xff]
      %1257 = vst [vmem:[%s871 + $0x600] sm:$0xff] %v1256
      %v1258 = vld [vmem:[%s870 + $0x608] sm:$0xff]
      %1259 = vst [vmem:[%s871 + $0x608] sm:$0xff] %v1258
      %v1260 = vld [vmem:[%s870 + $0x610] sm:$0xff]
      %1261 = vst [vmem:[%s871 + $0x610] sm:$0xff] %v1260
      %v1262 = vld [vmem:[%s870 + $0x618] sm:$0xff]
      %1263 = vst [vmem:[%s871 + $0x618] sm:$0xff] %v1262
      %v1264 = vld [vmem:[%s870 + $0x620] sm:$0xff]
      %1265 = vst [vmem:[%s871 + $0x620] sm:$0xff] %v1264
      %v1266 = vld [vmem:[%s870 + $0x628] sm:$0xff]
      %1267 = vst [vmem:[%s871 + $0x628] sm:$0xff] %v1266
      %v1268 = vld [vmem:[%s870 + $0x630] sm:$0xff]
      %1269 = vst [vmem:[%s871 + $0x630] sm:$0xff] %v1268
      %v1270 = vld [vmem:[%s870 + $0x638] sm:$0xff]
      %1271 = vst [vmem:[%s871 + $0x638] sm:$0xff] %v1270
      %v1272 = vld [vmem:[%s870 + $0x640] sm:$0xff]
      %1273 = vst [vmem:[%s871 + $0x640] sm:$0xff] %v1272
      %v1274 = vld [vmem:[%s870 + $0x648] sm:$0xff]
      %1275 = vst [vmem:[%s871 + $0x648] sm:$0xff] %v1274
      %v1276 = vld [vmem:[%s870 + $0x650] sm:$0xff]
      %1277 = vst [vmem:[%s871 + $0x650] sm:$0xff] %v1276
      %v1278 = vld [vmem:[%s870 + $0x658] sm:$0xff]
      %1279 = vst [vmem:[%s871 + $0x658] sm:$0xff] %v1278
      %v1280 = vld [vmem:[%s870 + $0x660] sm:$0xff]
      %1281 = vst [vmem:[%s871 + $0x660] sm:$0xff] %v1280
      %v1282 = vld [vmem:[%s870 + $0x668] sm:$0xff]
      %1283 = vst [vmem:[%s871 + $0x668] sm:$0xff] %v1282
      %v1284 = vld [vmem:[%s870 + $0x670] sm:$0xff]
      %1285 = vst [vmem:[%s871 + $0x670] sm:$0xff] %v1284
      %v1286 = vld [vmem:[%s870 + $0x678] sm:$0xff]
      %1287 = vst [vmem:[%s871 + $0x678] sm:$0xff] %v1286
      %v1288 = vld [vmem:[%s870 + $0x680] sm:$0xff]
      %1289 = vst [vmem:[%s871 + $0x680] sm:$0xff] %v1288
      %v1290 = vld [vmem:[%s870 + $0x688] sm:$0xff]
      %1291 = vst [vmem:[%s871 + $0x688] sm:$0xff] %v1290
      %v1292 = vld [vmem:[%s870 + $0x690] sm:$0xff]
      %1293 = vst [vmem:[%s871 + $0x690] sm:$0xff] %v1292
      %v1294 = vld [vmem:[%s870 + $0x698] sm:$0xff]
      %1295 = vst [vmem:[%s871 + $0x698] sm:$0xff] %v1294
      %v1296 = vld [vmem:[%s870 + $0x6a0] sm:$0xff]
      %1297 = vst [vmem:[%s871 + $0x6a0] sm:$0xff] %v1296
      %v1298 = vld [vmem:[%s870 + $0x6a8] sm:$0xff]
      %1299 = vst [vmem:[%s871 + $0x6a8] sm:$0xff] %v1298
      %v1300 = vld [vmem:[%s870 + $0x6b0] sm:$0xff]
      %1301 = vst [vmem:[%s871 + $0x6b0] sm:$0xff] %v1300
      %v1302 = vld [vmem:[%s870 + $0x6b8] sm:$0xff]
      %1303 = vst [vmem:[%s871 + $0x6b8] sm:$0xff] %v1302
      %v1304 = vld [vmem:[%s870 + $0x6c0] sm:$0xff]
      %1305 = vst [vmem:[%s871 + $0x6c0] sm:$0xff] %v1304
      %v1306 = vld [vmem:[%s870 + $0x6c8] sm:$0xff]
      %1307 = vst [vmem:[%s871 + $0x6c8] sm:$0xff] %v1306
      %v1308 = vld [vmem:[%s870 + $0x6d0] sm:$0xff]
      %1309 = vst [vmem:[%s871 + $0x6d0] sm:$0xff] %v1308
      %v1310 = vld [vmem:[%s870 + $0x6d8] sm:$0xff]
      %1311 = vst [vmem:[%s871 + $0x6d8] sm:$0xff] %v1310
      %v1312 = vld [vmem:[%s870 + $0x6e0] sm:$0xff]
      %1313 = vst [vmem:[%s871 + $0x6e0] sm:$0xff] %v1312
      %v1314 = vld [vmem:[%s870 + $0x6e8] sm:$0xff]
      %1315 = vst [vmem:[%s871 + $0x6e8] sm:$0xff] %v1314
      %v1316 = vld [vmem:[%s870 + $0x6f0] sm:$0xff]
      %1317 = vst [vmem:[%s871 + $0x6f0] sm:$0xff] %v1316
      %v1318 = vld [vmem:[%s870 + $0x6f8] sm:$0xff]
      %1319 = vst [vmem:[%s871 + $0x6f8] sm:$0xff] %v1318
      %v1320 = vld [vmem:[%s870 + $0x700] sm:$0xff]
      %1321 = vst [vmem:[%s871 + $0x700] sm:$0xff] %v1320
      %v1322 = vld [vmem:[%s870 + $0x708] sm:$0xff]
      %1323 = vst [vmem:[%s871 + $0x708] sm:$0xff] %v1322
      %v1324 = vld [vmem:[%s870 + $0x710] sm:$0xff]
      %1325 = vst [vmem:[%s871 + $0x710] sm:$0xff] %v1324
      %v1326 = vld [vmem:[%s870 + $0x718] sm:$0xff]
      %1327 = vst [vmem:[%s871 + $0x718] sm:$0xff] %v1326
      %v1328 = vld [vmem:[%s870 + $0x720] sm:$0xff]
      %1329 = vst [vmem:[%s871 + $0x720] sm:$0xff] %v1328
      %v1330 = vld [vmem:[%s870 + $0x728] sm:$0xff]
      %1331 = vst [vmem:[%s871 + $0x728] sm:$0xff] %v1330
      %v1332 = vld [vmem:[%s870 + $0x730] sm:$0xff]
      %1333 = vst [vmem:[%s871 + $0x730] sm:$0xff] %v1332
      %v1334 = vld [vmem:[%s870 + $0x738] sm:$0xff]
      %1335 = vst [vmem:[%s871 + $0x738] sm:$0xff] %v1334
      %v1336 = vld [vmem:[%s870 + $0x740] sm:$0xff]
      %1337 = vst [vmem:[%s871 + $0x740] sm:$0xff] %v1336
      %v1338 = vld [vmem:[%s870 + $0x748] sm:$0xff]
      %1339 = vst [vmem:[%s871 + $0x748] sm:$0xff] %v1338
      %v1340 = vld [vmem:[%s870 + $0x750] sm:$0xff]
      %1341 = vst [vmem:[%s871 + $0x750] sm:$0xff] %v1340
      %v1342 = vld [vmem:[%s870 + $0x758] sm:$0xff]
      %1343 = vst [vmem:[%s871 + $0x758] sm:$0xff] %v1342
      %v1344 = vld [vmem:[%s870 + $0x760] sm:$0xff]
      %1345 = vst [vmem:[%s871 + $0x760] sm:$0xff] %v1344
      %v1346 = vld [vmem:[%s870 + $0x768] sm:$0xff]
      %1347 = vst [vmem:[%s871 + $0x768] sm:$0xff] %v1346
      %v1348 = vld [vmem:[%s870 + $0x770] sm:$0xff]
      %1349 = vst [vmem:[%s871 + $0x770] sm:$0xff] %v1348
      %v1350 = vld [vmem:[%s870 + $0x778] sm:$0xff]
      %1351 = vst [vmem:[%s871 + $0x778] sm:$0xff] %v1350
      %v1352 = vld [vmem:[%s870 + $0x780] sm:$0xff]
      %1353 = vst [vmem:[%s871 + $0x780] sm:$0xff] %v1352
      %v1354 = vld [vmem:[%s870 + $0x788] sm:$0xff]
      %1355 = vst [vmem:[%s871 + $0x788] sm:$0xff] %v1354
      %v1356 = vld [vmem:[%s870 + $0x790] sm:$0xff]
      %1357 = vst [vmem:[%s871 + $0x790] sm:$0xff] %v1356
      %v1358 = vld [vmem:[%s870 + $0x798] sm:$0xff]
      %1359 = vst [vmem:[%s871 + $0x798] sm:$0xff] %v1358
      %v1360 = vld [vmem:[%s870 + $0x7a0] sm:$0xff]
      %1361 = vst [vmem:[%s871 + $0x7a0] sm:$0xff] %v1360
      %v1362 = vld [vmem:[%s870 + $0x7a8] sm:$0xff]
      %1363 = vst [vmem:[%s871 + $0x7a8] sm:$0xff] %v1362
      %v1364 = vld [vmem:[%s870 + $0x7b0] sm:$0xff]
      %1365 = vst [vmem:[%s871 + $0x7b0] sm:$0xff] %v1364
      %v1366 = vld [vmem:[%s870 + $0x7b8] sm:$0xff]
      %1367 = vst [vmem:[%s871 + $0x7b8] sm:$0xff] %v1366
      %v1368 = vld [vmem:[%s870 + $0x7c0] sm:$0xff]
      %1369 = vst [vmem:[%s871 + $0x7c0] sm:$0xff] %v1368
      %v1370 = vld [vmem:[%s870 + $0x7c8] sm:$0xff]
      %1371 = vst [vmem:[%s871 + $0x7c8] sm:$0xff] %v1370
      %v1372 = vld [vmem:[%s870 + $0x7d0] sm:$0xff]
      %1373 = vst [vmem:[%s871 + $0x7d0] sm:$0xff] %v1372
      %v1374 = vld [vmem:[%s870 + $0x7d8] sm:$0xff]
      %1375 = vst [vmem:[%s871 + $0x7d8] sm:$0xff] %v1374
      %v1376 = vld [vmem:[%s870 + $0x7e0] sm:$0xff]
      %1377 = vst [vmem:[%s871 + $0x7e0] sm:$0xff] %v1376
      %v1378 = vld [vmem:[%s870 + $0x7e8] sm:$0xff]
      %1379 = vst [vmem:[%s871 + $0x7e8] sm:$0xff] %v1378
      %v1380 = vld [vmem:[%s870 + $0x7f0] sm:$0xff]
      %1381 = vst [vmem:[%s871 + $0x7f0] sm:$0xff] %v1380
      %v1382 = vld [vmem:[%s870 + $0x7f8] sm:$0xff]
      %1383 = vst [vmem:[%s871 + $0x7f8] sm:$0xff] %v1382
    $region77: #{global_discriminator.1} parent=71 // loop_footer
      %s869 = sadd.s32 1, %s865
    $region78: #{global_discriminator.1} parent=71 // loop_footer_branch
      %864 = sbr.rel target = $region74
    $region79: #{global_discriminator.1} parent=71 // loop_exit
      _
  $region72: #{global_discriminator.1} parent=0 // pred_fallthru
    _
  // Predicated region
  $region80: #{global_discriminator.1} parent=0 // pred_check
    _
  $region81: #{global_discriminator.1} parent=0 // pred_check_branch
    %1385 = sbr.rel target = $region83
  $region82: #{global_discriminator.1} parent=0 // pred_region
    _
  $region83: #{global_discriminator.1} parent=0 // pred_fallthru
    _
  // Predicated region
  $region84: #{global_discriminator.1} parent=0 // pred_check
    _
  $region85: #{global_discriminator.1} parent=0 // pred_check_branch
    %1388 = sbr.rel (0) target = $region87
  $region86: #{global_discriminator.1} parent=0 // pred_region
    %1389 = vsyncadd %s861, 32768
  $region87: #{global_discriminator.1} parent=0 // pred_fallthru
    _
  %v1390 = vld [vmem:[%s0] sm:$0xff]
  %v1391 = vld [vmem:[%s0 + $0x8] sm:$0xff]
  %v1392 = vld [vmem:[%s0 + $0x10] sm:$0xff]
  %v1393 = vld [vmem:[%s0 + $0x18] sm:$0xff]
  %v1394 = vld [vmem:[%s0 + $0x20] sm:$0xff]
  %v1395 = vld [vmem:[%s0 + $0x28] sm:$0xff]
  %v1396 = vld [vmem:[%s0 + $0x30] sm:$0xff]
  %v1397 = vld [vmem:[%s0 + $0x38] sm:$0xff]
  %v1398 = vld [vmem:[%s0 + $0x40] sm:$0xff]
  %v1399 = vld [vmem:[%s0 + $0x48] sm:$0xff]
  %v1400 = vld [vmem:[%s0 + $0x50] sm:$0xff]
  %v1401 = vld [vmem:[%s0 + $0x58] sm:$0xff]
  %v1402 = vld [vmem:[%s0 + $0x60] sm:$0xff]
  %v1403 = vld [vmem:[%s0 + $0x68] sm:$0xff]
  %v1404 = vld [vmem:[%s0 + $0x70] sm:$0xff]
  %v1405 = vld [vmem:[%s0 + $0x78] sm:$0xff]
  %v1406 = vld [vmem:[%s0 + $0x80] sm:$0xff]
  %v1407 = vld [vmem:[%s0 + $0x88] sm:$0xff]
  %v1408 = vld [vmem:[%s0 + $0x90] sm:$0xff]
  %v1409 = vld [vmem:[%s0 + $0x98] sm:$0xff]
  %v1410 = vld [vmem:[%s0 + $0xa0] sm:$0xff]
  %v1411 = vld [vmem:[%s0 + $0xa8] sm:$0xff]
  %v1412 = vld [vmem:[%s0 + $0xb0] sm:$0xff]
  %v1413 = vld [vmem:[%s0 + $0xb8] sm:$0xff]
  %v1414 = vld [vmem:[%s0 + $0xc0] sm:$0xff]
  %v1415 = vld [vmem:[%s0 + $0xc8] sm:$0xff]
  %v1416 = vld [vmem:[%s0 + $0xd0] sm:$0xff]
  %v1417 = vld [vmem:[%s0 + $0xd8] sm:$0xff]
  %v1418 = vld [vmem:[%s0 + $0xe0] sm:$0xff]
  %v1419 = vld [vmem:[%s0 + $0xe8] sm:$0xff]
  %v1420 = vld [vmem:[%s0 + $0xf0] sm:$0xff]
  %v1421 = vld [vmem:[%s0 + $0xf8] sm:$0xff]
  %v1422 = vld [vmem:[%s0 + $0x100] sm:$0xff]
  %v1423 = vld [vmem:[%s0 + $0x108] sm:$0xff]
  %v1424 = vld [vmem:[%s0 + $0x110] sm:$0xff]
  %v1425 = vld [vmem:[%s0 + $0x118] sm:$0xff]
  %v1426 = vld [vmem:[%s0 + $0x120] sm:$0xff]
  %v1427 = vld [vmem:[%s0 + $0x128] sm:$0xff]
  %v1428 = vld [vmem:[%s0 + $0x130] sm:$0xff]
  %v1429 = vld [vmem:[%s0 + $0x138] sm:$0xff]
  %v1430 = vld [vmem:[%s0 + $0x140] sm:$0xff]
  %v1431 = vld [vmem:[%s0 + $0x148] sm:$0xff]
  %v1432 = vld [vmem:[%s0 + $0x150] sm:$0xff]
  %v1433 = vld [vmem:[%s0 + $0x158] sm:$0xff]
  %v1434 = vld [vmem:[%s0 + $0x160] sm:$0xff]
  %v1435 = vld [vmem:[%s0 + $0x168] sm:$0xff]
  %v1436 = vld [vmem:[%s0 + $0x170] sm:$0xff]
  %v1437 = vld [vmem:[%s0 + $0x178] sm:$0xff]
  %v1438 = vld [vmem:[%s0 + $0x180] sm:$0xff]
  %v1439 = vld [vmem:[%s0 + $0x188] sm:$0xff]
  %v1440 = vld [vmem:[%s0 + $0x190] sm:$0xff]
  %v1441 = vld [vmem:[%s0 + $0x198] sm:$0xff]
  %v1442 = vld [vmem:[%s0 + $0x1a0] sm:$0xff]
  %v1443 = vld [vmem:[%s0 + $0x1a8] sm:$0xff]
  %v1444 = vld [vmem:[%s0 + $0x1b0] sm:$0xff]
  %v1445 = vld [vmem:[%s0 + $0x1b8] sm:$0xff]
  %v1446 = vld [vmem:[%s0 + $0x1c0] sm:$0xff]
  %v1447 = vld [vmem:[%s0 + $0x1c8] sm:$0xff]
  %v1448 = vld [vmem:[%s0 + $0x1d0] sm:$0xff]
  %v1449 = vld [vmem:[%s0 + $0x1d8] sm:$0xff]
  %v1450 = vld [vmem:[%s0 + $0x1e0] sm:$0xff]
  %v1451 = vld [vmem:[%s0 + $0x1e8] sm:$0xff]
  %v1452 = vld [vmem:[%s0 + $0x1f0] sm:$0xff]
  %v1453 = vld [vmem:[%s0 + $0x1f8] sm:$0xff]
  %v1454 = vld [vmem:[%s0 + $0x200] sm:$0xff]
  %v1455 = vld [vmem:[%s0 + $0x208] sm:$0xff]
  %v1456 = vld [vmem:[%s0 + $0x210] sm:$0xff]
  %v1457 = vld [vmem:[%s0 + $0x218] sm:$0xff]
  %v1458 = vld [vmem:[%s0 + $0x220] sm:$0xff]
  %v1459 = vld [vmem:[%s0 + $0x228] sm:$0xff]
  %v1460 = vld [vmem:[%s0 + $0x230] sm:$0xff]
  %v1461 = vld [vmem:[%s0 + $0x238] sm:$0xff]
  %v1462 = vld [vmem:[%s0 + $0x240] sm:$0xf]
  %v1463 = vld [vmem:[%s0 + $0x248] sm:$0xf]
  %v1464 = vld [vmem:[%s0 + $0x250] sm:$0xf]
  %v1465 = vld [vmem:[%s3] sm:$0xff]
  %v1466 = vld [vmem:[%s3 + $0x8] sm:$0xff]
  %v1467 = vld [vmem:[%s3 + $0x10] sm:$0xff]
  %v1468 = vld [vmem:[%s3 + $0x18] sm:$0xff]
  %v1469 = vld [vmem:[%s3 + $0x20] sm:$0xff]
  %v1470 = vld [vmem:[%s3 + $0x28] sm:$0xff]
  %v1471 = vld [vmem:[%s3 + $0x30] sm:$0xff]
  %v1472 = vld [vmem:[%s3 + $0x38] sm:$0xff]
  %v1473 = vld [vmem:[%s3 + $0x40] sm:$0xff]
  %v1474 = vld [vmem:[%s3 + $0x48] sm:$0xff]
  %v1475 = vld [vmem:[%s3 + $0x50] sm:$0xff]
  %v1476 = vld [vmem:[%s3 + $0x58] sm:$0xff]
  %v1477 = vld [vmem:[%s3 + $0x60] sm:$0xff]
  %v1478 = vld [vmem:[%s3 + $0x68] sm:$0xff]
  %v1479 = vld [vmem:[%s3 + $0x70] sm:$0xff]
  %v1480 = vld [vmem:[%s3 + $0x78] sm:$0xff]
  %v1481 = vld [vmem:[%s3 + $0x80] sm:$0xff]
  %v1482 = vld [vmem:[%s3 + $0x88] sm:$0xff]
  %v1483 = vld [vmem:[%s3 + $0x90] sm:$0xff]
  %v1484 = vld [vmem:[%s3 + $0x98] sm:$0xff]
  %v1485 = vld [vmem:[%s3 + $0xa0] sm:$0xff]
  %v1486 = vld [vmem:[%s3 + $0xa8] sm:$0xff]
  %v1487 = vld [vmem:[%s3 + $0xb0] sm:$0xff]
  %v1488 = vld [vmem:[%s3 + $0xb8] sm:$0xff]
  %v1489 = vld [vmem:[%s3 + $0xc0] sm:$0xff]
  %v1490 = vld [vmem:[%s3 + $0xc8] sm:$0xff]
  %v1491 = vld [vmem:[%s3 + $0xd0] sm:$0xff]
  %v1492 = vld [vmem:[%s3 + $0xd8] sm:$0xff]
  %v1493 = vld [vmem:[%s3 + $0xe0] sm:$0xff]
  %v1494 = vld [vmem:[%s3 + $0xe8] sm:$0xff]
  %v1495 = vld [vmem:[%s3 + $0xf0] sm:$0xff]
  %v1496 = vld [vmem:[%s3 + $0xf8] sm:$0xff]
  %v1497 = vld [vmem:[%s3 + $0x100] sm:$0xff]
  %v1498 = vld [vmem:[%s3 + $0x108] sm:$0xff]
  %v1499 = vld [vmem:[%s3 + $0x110] sm:$0xff]
  %v1500 = vld [vmem:[%s3 + $0x118] sm:$0xff]
  %v1501 = vld [vmem:[%s4] sm:$0x1]
  %v1503 = vperm.slane %v1501, 0
  %vm1505 = vcmask 261120
  %v1507 = vsel %vm1505, %v1392, 0
  %v1510 = vsel %vm1505, %v1395, 0
  %v1513 = vsel %vm1505, %v1398, 0
  %v1516 = vsel %vm1505, %v1401, 0
  %v1519 = vsel %vm1505, %v1404, 0
  %v1522 = vsel %vm1505, %v1407, 0
  %v1525 = vsel %vm1505, %v1410, 0
  %v1528 = vsel %vm1505, %v1413, 0
  %v1531 = vsel %vm1505, %v1416, 0
  %v1534 = vsel %vm1505, %v1419, 0
  %v1537 = vsel %vm1505, %v1422, 0
  %v1540 = vsel %vm1505, %v1425, 0
  %v1543 = vsel %vm1505, %v1428, 0
  %v1546 = vsel %vm1505, %v1431, 0
  %v1549 = vsel %vm1505, %v1434, 0
  %v1552 = vsel %vm1505, %v1437, 0
  %v1555 = vsel %vm1505, %v1440, 0
  %v1558 = vsel %vm1505, %v1443, 0
  %v1561 = vsel %vm1505, %v1446, 0
  %v1564 = vsel %vm1505, %v1449, 0
  %v1567 = vsel %vm1505, %v1452, 0
  %v1570 = vsel %vm1505, %v1455, 0
  %v1573 = vsel %vm1505, %v1458, 0
  %v1576 = vsel %vm1505, %v1461, 0
  %v1579 = vsel %vm1505, %v1464, 0
  %1581 = vmatpush.msra.mxu0 %v1480
  %1582 = vmatpush.msra.mxu0 %v1479
  %1583 = vmatpush.msra.mxu0 %v1478
  %1584 = vmatpush.msra.mxu0 %v1477
  %1585 = vmatpush.msra.mxu0 %v1476
  %1586 = vmatpush.msra.mxu0 %v1475
  %1587 = vmatpush.msra.mxu0 %v1474
  %1588 = vmatpush.msra.mxu0 %v1473
  %1589 = vmatpush.msra.mxu0 %v1472
  %1590 = vmatpush.msra.mxu0 %v1471
  %1591 = vmatpush.msra.mxu0 %v1470
  %1592 = vmatpush.msra.mxu0 %v1469
  %1593 = vmatpush.msra.mxu0 %v1468
  %1594 = vmatpush.msra.mxu0 %v1467
  %1595 = vmatpush.msra.mxu0 %v1466
  %1596 = vmatpush.msra.mxu0 %v1465
  %1597 = vmatmul.f32.gmra.mxu0 %v1390
  %v1598 = vpop.f32.mrf.mxu0
  %v1599 = vadd.f32 %v1503, %v1598
  %1600 = vmatmul.f32.gmra.mxu0 %v1393
  %v1601 = vpop.f32.mrf.mxu0
  %v1602 = vadd.f32 %v1503, %v1601
  %1603 = vmatmul.f32.gmra.mxu0 %v1396
  %v1604 = vpop.f32.mrf.mxu0
  %v1605 = vadd.f32 %v1503, %v1604
  %1606 = vmatmul.f32.gmra.mxu0 %v1399
  %v1607 = vpop.f32.mrf.mxu0
  %v1608 = vadd.f32 %v1503, %v1607
  %1609 = vmatmul.f32.gmra.mxu0 %v1402
  %v1610 = vpop.f32.mrf.mxu0
  %v1611 = vadd.f32 %v1503, %v1610
  %1612 = vmatmul.f32.gmra.mxu0 %v1405
  %v1613 = vpop.f32.mrf.mxu0
  %v1614 = vadd.f32 %v1503, %v1613
  %1615 = vmatmul.f32.gmra.mxu0 %v1408
  %v1616 = vpop.f32.mrf.mxu0
  %v1617 = vadd.f32 %v1503, %v1616
  %1618 = vmatmul.f32.gmra.mxu0 %v1411
  %v1619 = vpop.f32.mrf.mxu0
  %v1620 = vadd.f32 %v1503, %v1619
  %1621 = vmatmul.f32.gmra.mxu0 %v1414
  %v1622 = vpop.f32.mrf.mxu0
  %v1623 = vadd.f32 %v1503, %v1622
  %1624 = vmatmul.f32.gmra.mxu0 %v1417
  %v1625 = vpop.f32.mrf.mxu0
  %v1626 = vadd.f32 %v1503, %v1625
  %1627 = vmatmul.f32.gmra.mxu0 %v1420
  %v1628 = vpop.f32.mrf.mxu0
  %v1629 = vadd.f32 %v1503, %v1628
  %1630 = vmatmul.f32.gmra.mxu0 %v1423
  %v1631 = vpop.f32.mrf.mxu0
  %v1632 = vadd.f32 %v1503, %v1631
  %1633 = vmatmul.f32.gmra.mxu0 %v1426
  %v1634 = vpop.f32.mrf.mxu0
  %v1635 = vadd.f32 %v1503, %v1634
  %1636 = vmatmul.f32.gmra.mxu0 %v1429
  %v1637 = vpop.f32.mrf.mxu0
  %v1638 = vadd.f32 %v1503, %v1637
  %1639 = vmatmul.f32.gmra.mxu0 %v1432
  %v1640 = vpop.f32.mrf.mxu0
  %v1641 = vadd.f32 %v1503, %v1640
  %1642 = vmatmul.f32.gmra.mxu0 %v1435
  %v1643 = vpop.f32.mrf.mxu0
  %v1644 = vadd.f32 %v1503, %v1643
  %1645 = vmatmul.f32.gmra.mxu0 %v1438
  %v1646 = vpop.f32.mrf.mxu0
  %v1647 = vadd.f32 %v1503, %v1646
  %1648 = vmatmul.f32.gmra.mxu0 %v1441
  %v1649 = vpop.f32.mrf.mxu0
  %v1650 = vadd.f32 %v1503, %v1649
  %1651 = vmatmul.f32.gmra.mxu0 %v1444
  %v1652 = vpop.f32.mrf.mxu0
  %v1653 = vadd.f32 %v1503, %v1652
  %1654 = vmatmul.f32.gmra.mxu0 %v1447
  %v1655 = vpop.f32.mrf.mxu0
  %v1656 = vadd.f32 %v1503, %v1655
  %1657 = vmatmul.f32.gmra.mxu0 %v1450
  %v1658 = vpop.f32.mrf.mxu0
  %v1659 = vadd.f32 %v1503, %v1658
  %1660 = vmatmul.f32.gmra.mxu0 %v1453
  %v1661 = vpop.f32.mrf.mxu0
  %v1662 = vadd.f32 %v1503, %v1661
  %1663 = vmatmul.f32.gmra.mxu0 %v1456
  %v1664 = vpop.f32.mrf.mxu0
  %v1665 = vadd.f32 %v1503, %v1664
  %1666 = vmatmul.f32.gmra.mxu0 %v1459
  %v1667 = vpop.f32.mrf.mxu0
  %v1668 = vadd.f32 %v1503, %v1667
  %1669 = vmatmul.f32.gmra.mxu0 %v1462
  %v1670 = vpop.f32.mrf.mxu0
  %v1671 = vadd.f32 %v1503, %v1670
  %1672 = vdwg.mxu0
  %1673 = vmatpush.msra.mxu0 %v1496
  %1674 = vmatpush.msra.mxu0 %v1495
  %1675 = vmatpush.msra.mxu0 %v1494
  %1676 = vmatpush.msra.mxu0 %v1493
  %1677 = vmatpush.msra.mxu0 %v1492
  %1678 = vmatpush.msra.mxu0 %v1491
  %1679 = vmatpush.msra.mxu0 %v1490
  %1680 = vmatpush.msra.mxu0 %v1489
  %1681 = vmatpush.msra.mxu0 %v1488
  %1682 = vmatpush.msra.mxu0 %v1487
  %1683 = vmatpush.msra.mxu0 %v1486
  %1684 = vmatpush.msra.mxu0 %v1485
  %1685 = vmatpush.msra.mxu0 %v1484
  %1686 = vmatpush.msra.mxu0 %v1483
  %1687 = vmatpush.msra.mxu0 %v1482
  %1688 = vmatpush.msra.mxu0 %v1481
  %1689 = vmatmul.f32.gmra.mxu0 %v1391
  %v1690 = vpop.f32.mrf.mxu0
  %v1691 = vadd.f32 %v1599, %v1690
  %1692 = vmatmul.f32.gmra.mxu0 %v1394
  %v1693 = vpop.f32.mrf.mxu0
  %v1694 = vadd.f32 %v1602, %v1693
  %1695 = vmatmul.f32.gmra.mxu0 %v1397
  %v1696 = vpop.f32.mrf.mxu0
  %v1697 = vadd.f32 %v1605, %v1696
  %1698 = vmatmul.f32.gmra.mxu0 %v1400
  %v1699 = vpop.f32.mrf.mxu0
  %v1700 = vadd.f32 %v1608, %v1699
  %1701 = vmatmul.f32.gmra.mxu0 %v1403
  %v1702 = vpop.f32.mrf.mxu0
  %v1703 = vadd.f32 %v1611, %v1702
  %1704 = vmatmul.f32.gmra.mxu0 %v1406
  %v1705 = vpop.f32.mrf.mxu0
  %v1706 = vadd.f32 %v1614, %v1705
  %1707 = vmatmul.f32.gmra.mxu0 %v1409
  %v1708 = vpop.f32.mrf.mxu0
  %v1709 = vadd.f32 %v1617, %v1708
  %1710 = vmatmul.f32.gmra.mxu0 %v1412
  %v1711 = vpop.f32.mrf.mxu0
  %v1712 = vadd.f32 %v1620, %v1711
  %1713 = vmatmul.f32.gmra.mxu0 %v1415
  %v1714 = vpop.f32.mrf.mxu0
  %v1715 = vadd.f32 %v1623, %v1714
  %1716 = vmatmul.f32.gmra.mxu0 %v1418
  %v1717 = vpop.f32.mrf.mxu0
  %v1718 = vadd.f32 %v1626, %v1717
  %1719 = vmatmul.f32.gmra.mxu0 %v1421
  %v1720 = vpop.f32.mrf.mxu0
  %v1721 = vadd.f32 %v1629, %v1720
  %1722 = vmatmul.f32.gmra.mxu0 %v1424
  %v1723 = vpop.f32.mrf.mxu0
  %v1724 = vadd.f32 %v1632, %v1723
  %1725 = vmatmul.f32.gmra.mxu0 %v1427
  %v1726 = vpop.f32.mrf.mxu0
  %v1727 = vadd.f32 %v1635, %v1726
  %1728 = vmatmul.f32.gmra.mxu0 %v1430
  %v1729 = vpop.f32.mrf.mxu0
  %v1730 = vadd.f32 %v1638, %v1729
  %1731 = vmatmul.f32.gmra.mxu0 %v1433
  %v1732 = vpop.f32.mrf.mxu0
  %v1733 = vadd.f32 %v1641, %v1732
  %1734 = vmatmul.f32.gmra.mxu0 %v1436
  %v1735 = vpop.f32.mrf.mxu0
  %v1736 = vadd.f32 %v1644, %v1735
  %1737 = vmatmul.f32.gmra.mxu0 %v1439
  %v1738 = vpop.f32.mrf.mxu0
  %v1739 = vadd.f32 %v1647, %v1738
  %1740 = vmatmul.f32.gmra.mxu0 %v1442
  %v1741 = vpop.f32.mrf.mxu0
  %v1742 = vadd.f32 %v1650, %v1741
  %1743 = vmatmul.f32.gmra.mxu0 %v1445
  %v1744 = vpop.f32.mrf.mxu0
  %v1745 = vadd.f32 %v1653, %v1744
  %1746 = vmatmul.f32.gmra.mxu0 %v1448
  %v1747 = vpop.f32.mrf.mxu0
  %v1748 = vadd.f32 %v1656, %v1747
  %1749 = vmatmul.f32.gmra.mxu0 %v1451
  %v1750 = vpop.f32.mrf.mxu0
  %v1751 = vadd.f32 %v1659, %v1750
  %1752 = vmatmul.f32.gmra.mxu0 %v1454
  %v1753 = vpop.f32.mrf.mxu0
  %v1754 = vadd.f32 %v1662, %v1753
  %1755 = vmatmul.f32.gmra.mxu0 %v1457
  %v1756 = vpop.f32.mrf.mxu0
  %v1757 = vadd.f32 %v1665, %v1756
  %1758 = vmatmul.f32.gmra.mxu0 %v1460
  %v1759 = vpop.f32.mrf.mxu0
  %v1760 = vadd.f32 %v1668, %v1759
  %1761 = vmatmul.f32.gmra.mxu0 %v1463
  %v1762 = vpop.f32.mrf.mxu0
  %v1763 = vadd.f32 %v1671, %v1762
  %1764 = vdwg.mxu0
  %1765 = vmatpush.msra.mxu0 0.0
  %1766 = vmatpush.msra.mxu0 0.0
  %1767 = vmatpush.msra.mxu0 0.0
  %1768 = vmatpush.msra.mxu0 0.0
  %1769 = vmatpush.msra.mxu0 0.0
  %1770 = vmatpush.msra.mxu0 0.0
  %1771 = vmatpush.msra.mxu0 0.0
  %1772 = vmatpush.msra.mxu0 0.0
  %1773 = vmatpush.msra.mxu0 0.0
  %1774 = vmatpush.msra.mxu0 0.0
  %1775 = vmatpush.msra.mxu0 0.0
  %1776 = vmatpush.msra.mxu0 0.0
  %1777 = vmatpush.msra.mxu0 %v1500
  %1778 = vmatpush.msra.mxu0 %v1499
  %1779 = vmatpush.msra.mxu0 %v1498
  %1780 = vmatpush.msra.mxu0 %v1497
  %1781 = vmatmul.f32.gmra.mxu0 %v1507
  %v1782 = vpop.f32.mrf.mxu0
  %v1783 = vadd.f32 %v1691, %v1782
  %1784 = vmatmul.f32.gmra.mxu0 %v1510
  %v1785 = vpop.f32.mrf.mxu0
  %v1786 = vadd.f32 %v1694, %v1785
  %1787 = vmatmul.f32.gmra.mxu0 %v1513
  %v1788 = vpop.f32.mrf.mxu0
  %v1789 = vadd.f32 %v1697, %v1788
  %1790 = vmatmul.f32.gmra.mxu0 %v1516
  %v1791 = vpop.f32.mrf.mxu0
  %v1792 = vadd.f32 %v1700, %v1791
  %1793 = vmatmul.f32.gmra.mxu0 %v1519
  %v1794 = vpop.f32.mrf.mxu0
  %v1795 = vadd.f32 %v1703, %v1794
  %1796 = vmatmul.f32.gmra.mxu0 %v1522
  %v1797 = vpop.f32.mrf.mxu0
  %v1798 = vadd.f32 %v1706, %v1797
  %1799 = vmatmul.f32.gmra.mxu0 %v1525
  %v1800 = vpop.f32.mrf.mxu0
  %v1801 = vadd.f32 %v1709, %v1800
  %1802 = vmatmul.f32.gmra.mxu0 %v1528
  %v1803 = vpop.f32.mrf.mxu0
  %v1804 = vadd.f32 %v1712, %v1803
  %1805 = vmatmul.f32.gmra.mxu0 %v1531
  %v1806 = vpop.f32.mrf.mxu0
  %v1807 = vadd.f32 %v1715, %v1806
  %1808 = vmatmul.f32.gmra.mxu0 %v1534
  %v1809 = vpop.f32.mrf.mxu0
  %v1810 = vadd.f32 %v1718, %v1809
  %1811 = vmatmul.f32.gmra.mxu0 %v1537
  %v1812 = vpop.f32.mrf.mxu0
  %v1813 = vadd.f32 %v1721, %v1812
  %1814 = vmatmul.f32.gmra.mxu0 %v1540
  %v1815 = vpop.f32.mrf.mxu0
  %v1816 = vadd.f32 %v1724, %v1815
  %1817 = vmatmul.f32.gmra.mxu0 %v1543
  %v1818 = vpop.f32.mrf.mxu0
  %v1819 = vadd.f32 %v1727, %v1818
  %1820 = vmatmul.f32.gmra.mxu0 %v1546
  %v1821 = vpop.f32.mrf.mxu0
  %v1822 = vadd.f32 %v1730, %v1821
  %1823 = vmatmul.f32.gmra.mxu0 %v1549
  %v1824 = vpop.f32.mrf.mxu0
  %v1825 = vadd.f32 %v1733, %v1824
  %1826 = vmatmul.f32.gmra.mxu0 %v1552
  %v1827 = vpop.f32.mrf.mxu0
  %v1828 = vadd.f32 %v1736, %v1827
  %1829 = vmatmul.f32.gmra.mxu0 %v1555
  %v1830 = vpop.f32.mrf.mxu0
  %v1831 = vadd.f32 %v1739, %v1830
  %1832 = vmatmul.f32.gmra.mxu0 %v1558
  %v1833 = vpop.f32.mrf.mxu0
  %v1834 = vadd.f32 %v1742, %v1833
  %1835 = vmatmul.f32.gmra.mxu0 %v1561
  %v1836 = vpop.f32.mrf.mxu0
  %v1837 = vadd.f32 %v1745, %v1836
  %1838 = vmatmul.f32.gmra.mxu0 %v1564
  %v1839 = vpop.f32.mrf.mxu0
  %v1840 = vadd.f32 %v1748, %v1839
  %1841 = vmatmul.f32.gmra.mxu0 %v1567
  %v1842 = vpop.f32.mrf.mxu0
  %v1843 = vadd.f32 %v1751, %v1842
  %1844 = vmatmul.f32.gmra.mxu0 %v1570
  %v1845 = vpop.f32.mrf.mxu0
  %v1846 = vadd.f32 %v1754, %v1845
  %1847 = vmatmul.f32.gmra.mxu0 %v1573
  %v1848 = vpop.f32.mrf.mxu0
  %v1849 = vadd.f32 %v1757, %v1848
  %1850 = vmatmul.f32.gmra.mxu0 %v1576
  %v1851 = vpop.f32.mrf.mxu0
  %v1852 = vadd.f32 %v1760, %v1851
  %1853 = vmatmul.f32.gmra.mxu0 %v1579
  %v1854 = vpop.f32.mrf.mxu0
  %v1855 = vadd.f32 %v1763, %v1854
  %1856 = vdwg.mxu0
  %v1857 = vmax.f32 %v1783, 0.0
  %v1858 = vmax.f32 %v1786, 0.0
  %v1859 = vmax.f32 %v1789, 0.0
  %v1860 = vmax.f32 %v1792, 0.0
  %v1861 = vmax.f32 %v1795, 0.0
  %v1862 = vmax.f32 %v1798, 0.0
  %v1863 = vmax.f32 %v1801, 0.0
  %v1864 = vmax.f32 %v1804, 0.0
  %v1865 = vmax.f32 %v1807, 0.0
  %v1866 = vmax.f32 %v1810, 0.0
  %v1867 = vmax.f32 %v1813, 0.0
  %v1868 = vmax.f32 %v1816, 0.0
  %v1869 = vmax.f32 %v1819, 0.0
  %v1870 = vmax.f32 %v1822, 0.0
  %v1871 = vmax.f32 %v1825, 0.0
  %v1872 = vmax.f32 %v1828, 0.0
  %v1873 = vmax.f32 %v1831, 0.0
  %v1874 = vmax.f32 %v1834, 0.0
  %v1875 = vmax.f32 %v1837, 0.0
  %v1876 = vmax.f32 %v1840, 0.0
  %v1877 = vmax.f32 %v1843, 0.0
  %v1878 = vmax.f32 %v1846, 0.0
  %v1879 = vmax.f32 %v1849, 0.0
  %v1880 = vmax.f32 %v1852, 0.0
  %v1881 = vmax.f32 %v1855, 0.0
  %v1882 = vld [vmem:[%s5] sm:$0xff]
  %v1883 = vld [vmem:[%s5 + $0x8] sm:$0xff]
  %v1884 = vld [vmem:[%s5 + $0x10] sm:$0xff]
  %v1885 = vld [vmem:[%s5 + $0x18] sm:$0xff]
  %v1886 = vld [vmem:[%s5 + $0x20] sm:$0xff]
  %v1887 = vld [vmem:[%s5 + $0x28] sm:$0xff]
  %v1888 = vld [vmem:[%s5 + $0x30] sm:$0xff]
  %v1889 = vld [vmem:[%s5 + $0x38] sm:$0xff]
  %v1890 = vld [vmem:[%s5 + $0x40] sm:$0xff]
  %v1891 = vld [vmem:[%s5 + $0x48] sm:$0xff]
  %v1892 = vld [vmem:[%s5 + $0x50] sm:$0xff]
  %v1893 = vld [vmem:[%s5 + $0x58] sm:$0xff]
  %v1894 = vld [vmem:[%s5 + $0x60] sm:$0xff]
  %v1895 = vld [vmem:[%s5 + $0x68] sm:$0xff]
  %v1896 = vld [vmem:[%s5 + $0x70] sm:$0xff]
  %v1897 = vld [vmem:[%s5 + $0x78] sm:$0xff]
  %v1898 = vld [vmem:[%s5 + $0x80] sm:$0xff]
  %v1899 = vld [vmem:[%s5 + $0x88] sm:$0xff]
  %v1900 = vld [vmem:[%s5 + $0x90] sm:$0xff]
  %v1901 = vld [vmem:[%s5 + $0x98] sm:$0xff]
  %v1902 = vld [vmem:[%s5 + $0xa0] sm:$0xff]
  %v1903 = vld [vmem:[%s5 + $0xa8] sm:$0xff]
  %v1904 = vld [vmem:[%s5 + $0xb0] sm:$0xff]
  %v1905 = vld [vmem:[%s5 + $0xb8] sm:$0xff]
  %vm1906 = vcmask 523264
  %v1908 = vsel %vm1906, %v1857, 0
  %v1911 = vsel %vm1906, %v1858, 0
  %v1914 = vsel %vm1906, %v1859, 0
  %v1917 = vsel %vm1906, %v1860, 0
  %v1920 = vsel %vm1906, %v1861, 0
  %v1923 = vsel %vm1906, %v1862, 0
  %v1926 = vsel %vm1906, %v1863, 0
  %v1929 = vsel %vm1906, %v1864, 0
  %v1932 = vsel %vm1906, %v1865, 0
  %v1935 = vsel %vm1906, %v1866, 0
  %v1938 = vsel %vm1906, %v1867, 0
  %v1941 = vsel %vm1906, %v1868, 0
  %v1944 = vsel %vm1906, %v1869, 0
  %v1947 = vsel %vm1906, %v1870, 0
  %v1950 = vsel %vm1906, %v1871, 0
  %v1953 = vsel %vm1906, %v1872, 0
  %v1956 = vsel %vm1906, %v1873, 0
  %v1959 = vsel %vm1906, %v1874, 0
  %v1962 = vsel %vm1906, %v1875, 0
  %v1965 = vsel %vm1906, %v1876, 0
  %v1968 = vsel %vm1906, %v1877, 0
  %v1971 = vsel %vm1906, %v1878, 0
  %v1974 = vsel %vm1906, %v1879, 0
  %v1977 = vsel %vm1906, %v1880, 0
  %v1980 = vsel %vm1906, %v1881, 0
  %1982 = vmatpush.msra.mxu0 0.0
  %1983 = vmatpush.msra.mxu0 0.0
  %1984 = vmatpush.msra.mxu0 0.0
  %1985 = vmatpush.msra.mxu0 0.0
  %1986 = vmatpush.msra.mxu0 0.0
  %1987 = vmatpush.msra.mxu0 0.0
  %1988 = vmatpush.msra.mxu0 0.0
  %1989 = vmatpush.msra.mxu0 0.0
  %1990 = vmatpush.msra.mxu0 %v1903
  %1991 = vmatpush.msra.mxu0 %v1900
  %1992 = vmatpush.msra.mxu0 %v1897
  %1993 = vmatpush.msra.mxu0 %v1894
  %1994 = vmatpush.msra.mxu0 %v1891
  %1995 = vmatpush.msra.mxu0 %v1888
  %1996 = vmatpush.msra.mxu0 %v1885
  %1997 = vmatpush.msra.mxu0 %v1882
  %1998 = vmatmul.f32.gmra.mxu0 %v1908
  %v1999 = vpop.f32.mrf.mxu0
  %v2000 = vadd.f32 0.0, %v1999
  %2001 = vmatmul.f32.gmra.mxu0 %v1911
  %v2002 = vpop.f32.mrf.mxu0
  %v2003 = vadd.f32 0.0, %v2002
  %2004 = vmatmul.f32.gmra.mxu0 %v1914
  %v2005 = vpop.f32.mrf.mxu0
  %v2006 = vadd.f32 0.0, %v2005
  %2007 = vmatmul.f32.gmra.mxu0 %v1917
  %v2008 = vpop.f32.mrf.mxu0
  %v2009 = vadd.f32 0.0, %v2008
  %2010 = vmatmul.f32.gmra.mxu0 %v1920
  %v2011 = vpop.f32.mrf.mxu0
  %v2012 = vadd.f32 0.0, %v2011
  %2013 = vmatmul.f32.gmra.mxu0 %v1923
  %v2014 = vpop.f32.mrf.mxu0
  %v2015 = vadd.f32 0.0, %v2014
  %2016 = vmatmul.f32.gmra.mxu0 %v1926
  %v2017 = vpop.f32.mrf.mxu0
  %v2018 = vadd.f32 0.0, %v2017
  %2019 = vmatmul.f32.gmra.mxu0 %v1929
  %v2020 = vpop.f32.mrf.mxu0
  %v2021 = vadd.f32 0.0, %v2020
  %2022 = vmatmul.f32.gmra.mxu0 %v1932
  %v2023 = vpop.f32.mrf.mxu0
  %v2024 = vadd.f32 0.0, %v2023
  %2025 = vmatmul.f32.gmra.mxu0 %v1935
  %v2026 = vpop.f32.mrf.mxu0
  %v2027 = vadd.f32 0.0, %v2026
  %2028 = vmatmul.f32.gmra.mxu0 %v1938
  %v2029 = vpop.f32.mrf.mxu0
  %v2030 = vadd.f32 0.0, %v2029
  %2031 = vmatmul.f32.gmra.mxu0 %v1941
  %v2032 = vpop.f32.mrf.mxu0
  %v2033 = vadd.f32 0.0, %v2032
  %2034 = vmatmul.f32.gmra.mxu0 %v1944
  %v2035 = vpop.f32.mrf.mxu0
  %v2036 = vadd.f32 0.0, %v2035
  %2037 = vmatmul.f32.gmra.mxu0 %v1947
  %v2038 = vpop.f32.mrf.mxu0
  %v2039 = vadd.f32 0.0, %v2038
  %2040 = vmatmul.f32.gmra.mxu0 %v1950
  %v2041 = vpop.f32.mrf.mxu0
  %v2042 = vadd.f32 0.0, %v2041
  %2043 = vmatmul.f32.gmra.mxu0 %v1953
  %v2044 = vpop.f32.mrf.mxu0
  %v2045 = vadd.f32 0.0, %v2044
  %2046 = vmatmul.f32.gmra.mxu0 %v1956
  %v2047 = vpop.f32.mrf.mxu0
  %v2048 = vadd.f32 0.0, %v2047
  %2049 = vmatmul.f32.gmra.mxu0 %v1959
  %v2050 = vpop.f32.mrf.mxu0
  %v2051 = vadd.f32 0.0, %v2050
  %2052 = vmatmul.f32.gmra.mxu0 %v1962
  %v2053 = vpop.f32.mrf.mxu0
  %v2054 = vadd.f32 0.0, %v2053
  %2055 = vmatmul.f32.gmra.mxu0 %v1965
  %v2056 = vpop.f32.mrf.mxu0
  %v2057 = vadd.f32 0.0, %v2056
  %2058 = vmatmul.f32.gmra.mxu0 %v1968
  %v2059 = vpop.f32.mrf.mxu0
  %v2060 = vadd.f32 0.0, %v2059
  %2061 = vmatmul.f32.gmra.mxu0 %v1971
  %v2062 = vpop.f32.mrf.mxu0
  %v2063 = vadd.f32 0.0, %v2062
  %2064 = vmatmul.f32.gmra.mxu0 %v1974
  %v2065 = vpop.f32.mrf.mxu0
  %v2066 = vadd.f32 0.0, %v2065
  %2067 = vmatmul.f32.gmra.mxu0 %v1977
  %v2068 = vpop.f32.mrf.mxu0
  %v2069 = vadd.f32 0.0, %v2068
  %2070 = vmatmul.f32.gmra.mxu0 %v1980
  %v2071 = vpop.f32.mrf.mxu0
  %v2072 = vadd.f32 0.0, %v2071
  %2073 = vdwg.mxu0
  %2074 = vmatpush.msra.mxu0 0.0
  %2075 = vmatpush.msra.mxu0 0.0
  %2076 = vmatpush.msra.mxu0 0.0
  %2077 = vmatpush.msra.mxu0 0.0
  %2078 = vmatpush.msra.mxu0 0.0
  %2079 = vmatpush.msra.mxu0 0.0
  %2080 = vmatpush.msra.mxu0 0.0
  %2081 = vmatpush.msra.mxu0 0.0
  %2082 = vmatpush.msra.mxu0 %v1904
  %2083 = vmatpush.msra.mxu0 %v1901
  %2084 = vmatpush.msra.mxu0 %v1898
  %2085 = vmatpush.msra.mxu0 %v1895
  %2086 = vmatpush.msra.mxu0 %v1892
  %2087 = vmatpush.msra.mxu0 %v1889
  %2088 = vmatpush.msra.mxu0 %v1886
  %2089 = vmatpush.msra.mxu0 %v1883
  %2090 = vmatmul.f32.gmra.mxu0 %v1908
  %v2091 = vpop.f32.mrf.mxu0
  %v2092 = vadd.f32 0.0, %v2091
  %2093 = vmatmul.f32.gmra.mxu0 %v1911
  %v2094 = vpop.f32.mrf.mxu0
  %v2095 = vadd.f32 0.0, %v2094
  %2096 = vmatmul.f32.gmra.mxu0 %v1914
  %v2097 = vpop.f32.mrf.mxu0
  %v2098 = vadd.f32 0.0, %v2097
  %2099 = vmatmul.f32.gmra.mxu0 %v1917
  %v2100 = vpop.f32.mrf.mxu0
  %v2101 = vadd.f32 0.0, %v2100
  %2102 = vmatmul.f32.gmra.mxu0 %v1920
  %v2103 = vpop.f32.mrf.mxu0
  %v2104 = vadd.f32 0.0, %v2103
  %2105 = vmatmul.f32.gmra.mxu0 %v1923
  %v2106 = vpop.f32.mrf.mxu0
  %v2107 = vadd.f32 0.0, %v2106
  %2108 = vmatmul.f32.gmra.mxu0 %v1926
  %v2109 = vpop.f32.mrf.mxu0
  %v2110 = vadd.f32 0.0, %v2109
  %2111 = vmatmul.f32.gmra.mxu0 %v1929
  %v2112 = vpop.f32.mrf.mxu0
  %v2113 = vadd.f32 0.0, %v2112
  %2114 = vmatmul.f32.gmra.mxu0 %v1932
  %v2115 = vpop.f32.mrf.mxu0
  %v2116 = vadd.f32 0.0, %v2115
  %2117 = vmatmul.f32.gmra.mxu0 %v1935
  %v2118 = vpop.f32.mrf.mxu0
  %v2119 = vadd.f32 0.0, %v2118
  %2120 = vmatmul.f32.gmra.mxu0 %v1938
  %v2121 = vpop.f32.mrf.mxu0
  %v2122 = vadd.f32 0.0, %v2121
  %2123 = vmatmul.f32.gmra.mxu0 %v1941
  %v2124 = vpop.f32.mrf.mxu0
  %v2125 = vadd.f32 0.0, %v2124
  %2126 = vmatmul.f32.gmra.mxu0 %v1944
  %v2127 = vpop.f32.mrf.mxu0
  %v2128 = vadd.f32 0.0, %v2127
  %2129 = vmatmul.f32.gmra.mxu0 %v1947
  %v2130 = vpop.f32.mrf.mxu0
  %v2131 = vadd.f32 0.0, %v2130
  %2132 = vmatmul.f32.gmra.mxu0 %v1950
  %v2133 = vpop.f32.mrf.mxu0
  %v2134 = vadd.f32 0.0, %v2133
  %2135 = vmatmul.f32.gmra.mxu0 %v1953
  %v2136 = vpop.f32.mrf.mxu0
  %v2137 = vadd.f32 0.0, %v2136
  %2138 = vmatmul.f32.gmra.mxu0 %v1956
  %v2139 = vpop.f32.mrf.mxu0
  %v2140 = vadd.f32 0.0, %v2139
  %2141 = vmatmul.f32.gmra.mxu0 %v1959
  %v2142 = vpop.f32.mrf.mxu0
  %v2143 = vadd.f32 0.0, %v2142
  %2144 = vmatmul.f32.gmra.mxu0 %v1962
  %v2145 = vpop.f32.mrf.mxu0
  %v2146 = vadd.f32 0.0, %v2145
  %2147 = vmatmul.f32.gmra.mxu0 %v1965
  %v2148 = vpop.f32.mrf.mxu0
  %v2149 = vadd.f32 0.0, %v2148
  %2150 = vmatmul.f32.gmra.mxu0 %v1968
  %v2151 = vpop.f32.mrf.mxu0
  %v2152 = vadd.f32 0.0, %v2151
  %2153 = vmatmul.f32.gmra.mxu0 %v1971
  %v2154 = vpop.f32.mrf.mxu0
  %v2155 = vadd.f32 0.0, %v2154
  %2156 = vmatmul.f32.gmra.mxu0 %v1974
  %v2157 = vpop.f32.mrf.mxu0
  %v2158 = vadd.f32 0.0, %v2157
  %2159 = vmatmul.f32.gmra.mxu0 %v1977
  %v2160 = vpop.f32.mrf.mxu0
  %v2161 = vadd.f32 0.0, %v2160
  %2162 = vmatmul.f32.gmra.mxu0 %v1980
  %v2163 = vpop.f32.mrf.mxu0
  %v2164 = vadd.f32 0.0, %v2163
  %2165 = vdwg.mxu0
  %2166 = vmatpush.msra.mxu0 0.0
  %2167 = vmatpush.msra.mxu0 0.0
  %2168 = vmatpush.msra.mxu0 0.0
  %2169 = vmatpush.msra.mxu0 0.0
  %2170 = vmatpush.msra.mxu0 0.0
  %2171 = vmatpush.msra.mxu0 0.0
  %2172 = vmatpush.msra.mxu0 0.0
  %2173 = vmatpush.msra.mxu0 0.0
  %2174 = vmatpush.msra.mxu0 %v1905
  %2175 = vmatpush.msra.mxu0 %v1902
  %2176 = vmatpush.msra.mxu0 %v1899
  %2177 = vmatpush.msra.mxu0 %v1896
  %2178 = vmatpush.msra.mxu0 %v1893
  %2179 = vmatpush.msra.mxu0 %v1890
  %2180 = vmatpush.msra.mxu0 %v1887
  %2181 = vmatpush.msra.mxu0 %v1884
  %2182 = vmatmul.f32.gmra.mxu0 %v1908
  %v2183 = vpop.f32.mrf.mxu0
  %v2184 = vadd.f32 0.0, %v2183
  %2185 = vmatmul.f32.gmra.mxu0 %v1911
  %v2186 = vpop.f32.mrf.mxu0
  %v2187 = vadd.f32 0.0, %v2186
  %2188 = vmatmul.f32.gmra.mxu0 %v1914
  %v2189 = vpop.f32.mrf.mxu0
  %v2190 = vadd.f32 0.0, %v2189
  %2191 = vmatmul.f32.gmra.mxu0 %v1917
  %v2192 = vpop.f32.mrf.mxu0
  %v2193 = vadd.f32 0.0, %v2192
  %2194 = vmatmul.f32.gmra.mxu0 %v1920
  %v2195 = vpop.f32.mrf.mxu0
  %v2196 = vadd.f32 0.0, %v2195
  %2197 = vmatmul.f32.gmra.mxu0 %v1923
  %v2198 = vpop.f32.mrf.mxu0
  %v2199 = vadd.f32 0.0, %v2198
  %2200 = vmatmul.f32.gmra.mxu0 %v1926
  %v2201 = vpop.f32.mrf.mxu0
  %v2202 = vadd.f32 0.0, %v2201
  %2203 = vmatmul.f32.gmra.mxu0 %v1929
  %v2204 = vpop.f32.mrf.mxu0
  %v2205 = vadd.f32 0.0, %v2204
  %2206 = vmatmul.f32.gmra.mxu0 %v1932
  %v2207 = vpop.f32.mrf.mxu0
  %v2208 = vadd.f32 0.0, %v2207
  %2209 = vmatmul.f32.gmra.mxu0 %v1935
  %v2210 = vpop.f32.mrf.mxu0
  %v2211 = vadd.f32 0.0, %v2210
  %2212 = vmatmul.f32.gmra.mxu0 %v1938
  %v2213 = vpop.f32.mrf.mxu0
  %v2214 = vadd.f32 0.0, %v2213
  %2215 = vmatmul.f32.gmra.mxu0 %v1941
  %v2216 = vpop.f32.mrf.mxu0
  %v2217 = vadd.f32 0.0, %v2216
  %2218 = vmatmul.f32.gmra.mxu0 %v1944
  %v2219 = vpop.f32.mrf.mxu0
  %v2220 = vadd.f32 0.0, %v2219
  %2221 = vmatmul.f32.gmra.mxu0 %v1947
  %v2222 = vpop.f32.mrf.mxu0
  %v2223 = vadd.f32 0.0, %v2222
  %2224 = vmatmul.f32.gmra.mxu0 %v1950
  %v2225 = vpop.f32.mrf.mxu0
  %v2226 = vadd.f32 0.0, %v2225
  %2227 = vmatmul.f32.gmra.mxu0 %v1953
  %v2228 = vpop.f32.mrf.mxu0
  %v2229 = vadd.f32 0.0, %v2228
  %2230 = vmatmul.f32.gmra.mxu0 %v1956
  %v2231 = vpop.f32.mrf.mxu0
  %v2232 = vadd.f32 0.0, %v2231
  %2233 = vmatmul.f32.gmra.mxu0 %v1959
  %v2234 = vpop.f32.mrf.mxu0
  %v2235 = vadd.f32 0.0, %v2234
  %2236 = vmatmul.f32.gmra.mxu0 %v1962
  %v2237 = vpop.f32.mrf.mxu0
  %v2238 = vadd.f32 0.0, %v2237
  %2239 = vmatmul.f32.gmra.mxu0 %v1965
  %v2240 = vpop.f32.mrf.mxu0
  %v2241 = vadd.f32 0.0, %v2240
  %2242 = vmatmul.f32.gmra.mxu0 %v1968
  %v2243 = vpop.f32.mrf.mxu0
  %v2244 = vadd.f32 0.0, %v2243
  %2245 = vmatmul.f32.gmra.mxu0 %v1971
  %v2246 = vpop.f32.mrf.mxu0
  %v2247 = vadd.f32 0.0, %v2246
  %2248 = vmatmul.f32.gmra.mxu0 %v1974
  %v2249 = vpop.f32.mrf.mxu0
  %v2250 = vadd.f32 0.0, %v2249
  %2251 = vmatmul.f32.gmra.mxu0 %v1977
  %v2252 = vpop.f32.mrf.mxu0
  %v2253 = vadd.f32 0.0, %v2252
  %2254 = vmatmul.f32.gmra.mxu0 %v1980
  %v2255 = vpop.f32.mrf.mxu0
  %v2256 = vadd.f32 0.0, %v2255
  %2257 = vdwg.mxu0
  %2258 = vst [vmem:[#allocation4] sm:$0xff] %v2000
  %2259 = vst [vmem:[#allocation4 + $0x8] sm:$0xff] %v2092
  %2260 = vst.msk [vmem:[#allocation4 + $0x10] sm:$0xff] %vm1505, %v2184
  %2261 = vst [vmem:[#allocation4 + $0x18] sm:$0xff] %v2003
  %2262 = vst [vmem:[#allocation4 + $0x20] sm:$0xff] %v2095
  %2263 = vst.msk [vmem:[#allocation4 + $0x28] sm:$0xff] %vm1505, %v2187
  %2264 = vst [vmem:[#allocation4 + $0x30] sm:$0xff] %v2006
  %2265 = vst [vmem:[#allocation4 + $0x38] sm:$0xff] %v2098
  %2266 = vst.msk [vmem:[#allocation4 + $0x40] sm:$0xff] %vm1505, %v2190
  %2267 = vst [vmem:[#allocation4 + $0x48] sm:$0xff] %v2009
  %2268 = vst [vmem:[#allocation4 + $0x50] sm:$0xff] %v2101
  %2269 = vst.msk [vmem:[#allocation4 + $0x58] sm:$0xff] %vm1505, %v2193
  %2270 = vst [vmem:[#allocation4 + $0x60] sm:$0xff] %v2012
  %2271 = vst [vmem:[#allocation4 + $0x68] sm:$0xff] %v2104
  %2272 = vst.msk [vmem:[#allocation4 + $0x70] sm:$0xff] %vm1505, %v2196
  %2273 = vst [vmem:[#allocation4 + $0x78] sm:$0xff] %v2015
  %2274 = vst [vmem:[#allocation4 + $0x80] sm:$0xff] %v2107
  %2275 = vst.msk [vmem:[#allocation4 + $0x88] sm:$0xff] %vm1505, %v2199
  %2276 = vst [vmem:[#allocation4 + $0x90] sm:$0xff] %v2018
  %2277 = vst [vmem:[#allocation4 + $0x98] sm:$0xff] %v2110
  %2278 = vst.msk [vmem:[#allocation4 + $0xa0] sm:$0xff] %vm1505, %v2202
  %2279 = vst [vmem:[#allocation4 + $0xa8] sm:$0xff] %v2021
  %2280 = vst [vmem:[#allocation4 + $0xb0] sm:$0xff] %v2113
  %2281 = vst.msk [vmem:[#allocation4 + $0xb8] sm:$0xff] %vm1505, %v2205
  %2282 = vst [vmem:[#allocation4 + $0xc0] sm:$0xff] %v2024
  %2283 = vst [vmem:[#allocation4 + $0xc8] sm:$0xff] %v2116
  %2284 = vst.msk [vmem:[#allocation4 + $0xd0] sm:$0xff] %vm1505, %v2208
  %2285 = vst [vmem:[#allocation4 + $0xd8] sm:$0xff] %v2027
  %2286 = vst [vmem:[#allocation4 + $0xe0] sm:$0xff] %v2119
  %2287 = vst.msk [vmem:[#allocation4 + $0xe8] sm:$0xff] %vm1505, %v2211
  %2288 = vst [vmem:[#allocation4 + $0xf0] sm:$0xff] %v2030
  %2289 = vst [vmem:[#allocation4 + $0xf8] sm:$0xff] %v2122
  %2290 = vst.msk [vmem:[#allocation4 + $0x100] sm:$0xff] %vm1505, %v2214
  %2291 = vst [vmem:[#allocation4 + $0x108] sm:$0xff] %v2033
  %2292 = vst [vmem:[#allocation4 + $0x110] sm:$0xff] %v2125
  %2293 = vst.msk [vmem:[#allocation4 + $0x118] sm:$0xff] %vm1505, %v2217
  %2294 = vst [vmem:[#allocation4 + $0x120] sm:$0xff] %v2036
  %2295 = vst [vmem:[#allocation4 + $0x128] sm:$0xff] %v2128
  %2296 = vst.msk [vmem:[#allocation4 + $0x130] sm:$0xff] %vm1505, %v2220
  %2297 = vst [vmem:[#allocation4 + $0x138] sm:$0xff] %v2039
  %2298 = vst [vmem:[#allocation4 + $0x140] sm:$0xff] %v2131
  %2299 = vst.msk [vmem:[#allocation4 + $0x148] sm:$0xff] %vm1505, %v2223
  %2300 = vst [vmem:[#allocation4 + $0x150] sm:$0xff] %v2042
  %2301 = vst [vmem:[#allocation4 + $0x158] sm:$0xff] %v2134
  %2302 = vst.msk [vmem:[#allocation4 + $0x160] sm:$0xff] %vm1505, %v2226
  %2303 = vst [vmem:[#allocation4 + $0x168] sm:$0xff] %v2045
  %2304 = vst [vmem:[#allocation4 + $0x170] sm:$0xff] %v2137
  %2305 = vst.msk [vmem:[#allocation4 + $0x178] sm:$0xff] %vm1505, %v2229
  %2306 = vst [vmem:[#allocation4 + $0x180] sm:$0xff] %v2048
  %2307 = vst [vmem:[#allocation4 + $0x188] sm:$0xff] %v2140
  %2308 = vst.msk [vmem:[#allocation4 + $0x190] sm:$0xff] %vm1505, %v2232
  %2309 = vst [vmem:[#allocation4 + $0x198] sm:$0xff] %v2051
  %2310 = vst [vmem:[#allocation4 + $0x1a0] sm:$0xff] %v2143
  %2311 = vst.msk [vmem:[#allocation4 + $0x1a8] sm:$0xff] %vm1505, %v2235
  %2312 = vst [vmem:[#allocation4 + $0x1b0] sm:$0xff] %v2054
  %2313 = vst [vmem:[#allocation4 + $0x1b8] sm:$0xff] %v2146
  %2314 = vst.msk [vmem:[#allocation4 + $0x1c0] sm:$0xff] %vm1505, %v2238
  %2315 = vst [vmem:[#allocation4 + $0x1c8] sm:$0xff] %v2057
  %2316 = vst [vmem:[#allocation4 + $0x1d0] sm:$0xff] %v2149
  %2317 = vst.msk [vmem:[#allocation4 + $0x1d8] sm:$0xff] %vm1505, %v2241
  %2318 = vst [vmem:[#allocation4 + $0x1e0] sm:$0xff] %v2060
  %2319 = vst [vmem:[#allocation4 + $0x1e8] sm:$0xff] %v2152
  %2320 = vst.msk [vmem:[#allocation4 + $0x1f0] sm:$0xff] %vm1505, %v2244
  %2321 = vst [vmem:[#allocation4 + $0x1f8] sm:$0xff] %v2063
  %2322 = vst [vmem:[#allocation4 + $0x200] sm:$0xff] %v2155
  %2323 = vst.msk [vmem:[#allocation4 + $0x208] sm:$0xff] %vm1505, %v2247
  %2324 = vst [vmem:[#allocation4 + $0x210] sm:$0xff] %v2066
  %2325 = vst [vmem:[#allocation4 + $0x218] sm:$0xff] %v2158
  %2326 = vst.msk [vmem:[#allocation4 + $0x220] sm:$0xff] %vm1505, %v2250
  %2327 = vst [vmem:[#allocation4 + $0x228] sm:$0xff] %v2069
  %2328 = vst [vmem:[#allocation4 + $0x230] sm:$0xff] %v2161
  %2329 = vst.msk [vmem:[#allocation4 + $0x238] sm:$0xff] %vm1505, %v2253
  %2330 = vst [vmem:[#allocation4 + $0x240] sm:$0xf] %v2072
  %2331 = vst [vmem:[#allocation4 + $0x248] sm:$0xf] %v2164
  %vm2332 = vcmask 257024
  %2333 = vst.msk [vmem:[#allocation4 + $0x250] sm:$0xf] %vm2332, %v2256
  %v2334 = vlaneseq
  %v2335 = vand.u32 %v2334, 127
  %v2336 = vadd.s32 %v2335, 128
  %v2337 = vld [vmem:[%s1] sm:$0xff]
  %v2338 = vld [vmem:[%s1 + $0x8] sm:$0xff]
  %v2339 = vld [vmem:[%s1 + $0x10] sm:$0xff]
  %v2340 = vld [vmem:[%s1 + $0x18] sm:$0xff]
  %v2341 = vld [vmem:[%s1 + $0x20] sm:$0xff]
  %v2342 = vld [vmem:[%s1 + $0x28] sm:$0xff]
  %v2343 = vld [vmem:[%s1 + $0x30] sm:$0xff]
  %v2344 = vld [vmem:[%s1 + $0x38] sm:$0xff]
  %v2345 = vld [vmem:[%s1 + $0x40] sm:$0xff]
  %v2346 = vld [vmem:[%s1 + $0x48] sm:$0xff]
  %v2347 = vld [vmem:[%s1 + $0x50] sm:$0xff]
  %v2348 = vld [vmem:[%s1 + $0x58] sm:$0xff]
  %v2349 = vld [vmem:[%s1 + $0x60] sm:$0xf]
  %2350 = vset.pattern.permute.xlu0 0
  %2351 = vperm.xlu0 %2350, %v2337
  %v2352 = vpop.permute.xlu0 %2351
  %2353 = vset.pattern.permute.xlu0 0
  %2354 = vperm.xlu0 %2353, %v2338
  %v2355 = vpop.permute.xlu0 %2354
  %2356 = vset.pattern.permute.xlu0 0
  %2357 = vperm.xlu0 %2356, %v2339
  %v2358 = vpop.permute.xlu0 %2357
  %2359 = vset.pattern.permute.xlu0 0
  %2360 = vperm.xlu0 %2359, %v2340
  %v2361 = vpop.permute.xlu0 %2360
  %2362 = vset.pattern.permute.xlu0 0
  %2363 = vperm.xlu0 %2362, %v2341
  %v2364 = vpop.permute.xlu0 %2363
  %2365 = vset.pattern.permute.xlu0 0
  %2366 = vperm.xlu0 %2365, %v2342
  %v2367 = vpop.permute.xlu0 %2366
  %2368 = vset.pattern.permute.xlu0 0
  %2369 = vperm.xlu0 %2368, %v2343
  %v2370 = vpop.permute.xlu0 %2369
  %2371 = vset.pattern.permute.xlu0 0
  %2372 = vperm.xlu0 %2371, %v2344
  %v2373 = vpop.permute.xlu0 %2372
  %2374 = vset.pattern.permute.xlu0 0
  %2375 = vperm.xlu0 %2374, %v2345
  %v2376 = vpop.permute.xlu0 %2375
  %2377 = vset.pattern.permute.xlu0 0
  %2378 = vperm.xlu0 %2377, %v2346
  %v2379 = vpop.permute.xlu0 %2378
  %2380 = vset.pattern.permute.xlu0 0
  %2381 = vperm.xlu0 %2380, %v2347
  %v2382 = vpop.permute.xlu0 %2381
  %2383 = vset.pattern.permute.xlu0 0
  %2384 = vperm.xlu0 %2383, %v2348
  %v2385 = vpop.permute.xlu0 %2384
  %2386 = vset.pattern.permute.xlu0 0
  %2387 = vperm.xlu0 %2386, %v2349
  %v2388 = vpop.permute.xlu0 %2387
  %vm2389 = vcmp.eq.s32.totalorder %v2335, %v2352
  %vm2390 = vcmp.eq.s32.totalorder %v2336, %v2352
  %vm2391 = vcmp.eq.s32.totalorder %v2335, %v2355
  %vm2392 = vcmp.eq.s32.totalorder %v2336, %v2355
  %vm2393 = vcmp.eq.s32.totalorder %v2335, %v2358
  %vm2394 = vcmp.eq.s32.totalorder %v2336, %v2358
  %vm2395 = vcmp.eq.s32.totalorder %v2335, %v2361
  %vm2396 = vcmp.eq.s32.totalorder %v2336, %v2361
  %vm2397 = vcmp.eq.s32.totalorder %v2335, %v2364
  %vm2398 = vcmp.eq.s32.totalorder %v2336, %v2364
  %vm2399 = vcmp.eq.s32.totalorder %v2335, %v2367
  %vm2400 = vcmp.eq.s32.totalorder %v2336, %v2367
  %vm2401 = vcmp.eq.s32.totalorder %v2335, %v2370
  %vm2402 = vcmp.eq.s32.totalorder %v2336, %v2370
  %vm2403 = vcmp.eq.s32.totalorder %v2335, %v2373
  %vm2404 = vcmp.eq.s32.totalorder %v2336, %v2373
  %vm2405 = vcmp.eq.s32.totalorder %v2335, %v2376
  %vm2406 = vcmp.eq.s32.totalorder %v2336, %v2376
  %vm2407 = vcmp.eq.s32.totalorder %v2335, %v2379
  %vm2408 = vcmp.eq.s32.totalorder %v2336, %v2379
  %vm2409 = vcmp.eq.s32.totalorder %v2335, %v2382
  %vm2410 = vcmp.eq.s32.totalorder %v2336, %v2382
  %vm2411 = vcmp.eq.s32.totalorder %v2335, %v2385
  %vm2412 = vcmp.eq.s32.totalorder %v2336, %v2385
  %vm2413 = vcmp.eq.s32.totalorder %v2335, %v2388
  %vm2414 = vcmp.eq.s32.totalorder %v2336, %v2388
  %v2415 = vsel %vm2389, 1, 0
  %v2416 = vsel %vm2390, 1, 0
  %v2417 = vsel %vm2391, 1, 0
  %v2418 = vsel %vm2392, 1, 0
  %v2419 = vsel %vm2393, 1, 0
  %v2420 = vsel %vm2394, 1, 0
  %v2421 = vsel %vm2395, 1, 0
  %v2422 = vsel %vm2396, 1, 0
  %v2423 = vsel %vm2397, 1, 0
  %v2424 = vsel %vm2398, 1, 0
  %v2425 = vsel %vm2399, 1, 0
  %v2426 = vsel %vm2400, 1, 0
  %v2427 = vsel %vm2401, 1, 0
  %v2428 = vsel %vm2402, 1, 0
  %v2429 = vsel %vm2403, 1, 0
  %v2430 = vsel %vm2404, 1, 0
  %v2431 = vsel %vm2405, 1, 0
  %v2432 = vsel %vm2406, 1, 0
  %v2433 = vsel %vm2407, 1, 0
  %v2434 = vsel %vm2408, 1, 0
  %v2435 = vsel %vm2409, 1, 0
  %v2436 = vsel %vm2410, 1, 0
  %v2437 = vsel %vm2411, 1, 0
  %v2438 = vsel %vm2412, 1, 0
  %v2439 = vsel %vm2413, 1, 0
  %v2440 = vsel %vm2414, 1, 0
  %v2441 = vcvt.s32.f32 %v2415
  %v2442 = vcvt.s32.f32 %v2416
  %v2443 = vcvt.s32.f32 %v2417
  %v2444 = vcvt.s32.f32 %v2418
  %v2445 = vcvt.s32.f32 %v2419
  %v2446 = vcvt.s32.f32 %v2420
  %v2447 = vcvt.s32.f32 %v2421
  %v2448 = vcvt.s32.f32 %v2422
  %v2449 = vcvt.s32.f32 %v2423
  %v2450 = vcvt.s32.f32 %v2424
  %v2451 = vcvt.s32.f32 %v2425
  %v2452 = vcvt.s32.f32 %v2426
  %v2453 = vcvt.s32.f32 %v2427
  %v2454 = vcvt.s32.f32 %v2428
  %v2455 = vcvt.s32.f32 %v2429
  %v2456 = vcvt.s32.f32 %v2430
  %v2457 = vcvt.s32.f32 %v2431
  %v2458 = vcvt.s32.f32 %v2432
  %v2459 = vcvt.s32.f32 %v2433
  %v2460 = vcvt.s32.f32 %v2434
  %v2461 = vcvt.s32.f32 %v2435
  %v2462 = vcvt.s32.f32 %v2436
  %v2463 = vcvt.s32.f32 %v2437
  %v2464 = vcvt.s32.f32 %v2438
  %v2465 = vcvt.s32.f32 %v2439
  %v2466 = vcvt.s32.f32 %v2440
  %v2467 = vld [vmem:[#allocation4] sm:$0xff]
  %v2468 = vld [vmem:[#allocation4 + $0x18] sm:$0xff]
  %v2469 = vld [vmem:[#allocation4 + $0x30] sm:$0xff]
  %v2470 = vld [vmem:[#allocation4 + $0x48] sm:$0xff]
  %v2471 = vld [vmem:[#allocation4 + $0x60] sm:$0xff]
  %v2472 = vld [vmem:[#allocation4 + $0x78] sm:$0xff]
  %v2473 = vld [vmem:[#allocation4 + $0x90] sm:$0xff]
  %v2474 = vld [vmem:[#allocation4 + $0xa8] sm:$0xff]
  %v2475 = vld [vmem:[#allocation4 + $0xc0] sm:$0xff]
  %v2476 = vld [vmem:[#allocation4 + $0xd8] sm:$0xff]
  %v2477 = vld [vmem:[#allocation4 + $0xf0] sm:$0xff]
  %v2478 = vld [vmem:[#allocation4 + $0x108] sm:$0xff]
  %v2479 = vld [vmem:[#allocation4 + $0x120] sm:$0xff]
  %v2480 = vld [vmem:[#allocation4 + $0x138] sm:$0xff]
  %v2481 = vld [vmem:[#allocation4 + $0x150] sm:$0xff]
  %v2482 = vld [vmem:[#allocation4 + $0x168] sm:$0xff]
  %v2483 = vld [vmem:[#allocation4 + $0x180] sm:$0xff]
  %v2484 = vld [vmem:[#allocation4 + $0x198] sm:$0xff]
  %v2485 = vld [vmem:[#allocation4 + $0x1b0] sm:$0xff]
  %v2486 = vld [vmem:[#allocation4 + $0x1c8] sm:$0xff]
  %v2487 = vld [vmem:[#allocation4 + $0x1e0] sm:$0xff]
  %v2488 = vld [vmem:[#allocation4 + $0x1f8] sm:$0xff]
  %v2489 = vld [vmem:[#allocation4 + $0x210] sm:$0xff]
  %v2490 = vld [vmem:[#allocation4 + $0x228] sm:$0xff]
  %v2491 = vld [vmem:[#allocation4 + $0x240] sm:$0xf]
  %v2492 = vadd.s32 %v2337, 1
  %v2493 = vadd.s32 %v2338, 1
  %v2494 = vadd.s32 %v2339, 1
  %v2495 = vadd.s32 %v2340, 1
  %v2496 = vadd.s32 %v2341, 1
  %v2497 = vadd.s32 %v2342, 1
  %v2498 = vadd.s32 %v2343, 1
  %v2499 = vadd.s32 %v2344, 1
  %v2500 = vadd.s32 %v2345, 1
  %v2501 = vadd.s32 %v2346, 1
  %v2502 = vadd.s32 %v2347, 1
  %v2503 = vadd.s32 %v2348, 1
  %v2504 = vadd.s32 %v2349, 1
  %2505 = vset.pattern.permute.xlu0 0
  %2506 = vperm.xlu0 %2505, %v2492
  %v2507 = vpop.permute.xlu0 %2506
  %2508 = vset.pattern.permute.xlu0 0
  %2509 = vperm.xlu0 %2508, %v2493
  %v2510 = vpop.permute.xlu0 %2509
  %2511 = vset.pattern.permute.xlu0 0
  %2512 = vperm.xlu0 %2511, %v2494
  %v2513 = vpop.permute.xlu0 %2512
  %2514 = vset.pattern.permute.xlu0 0
  %2515 = vperm.xlu0 %2514, %v2495
  %v2516 = vpop.permute.xlu0 %2515
  %2517 = vset.pattern.permute.xlu0 0
  %2518 = vperm.xlu0 %2517, %v2496
  %v2519 = vpop.permute.xlu0 %2518
  %2520 = vset.pattern.permute.xlu0 0
  %2521 = vperm.xlu0 %2520, %v2497
  %v2522 = vpop.permute.xlu0 %2521
  %2523 = vset.pattern.permute.xlu0 0
  %2524 = vperm.xlu0 %2523, %v2498
  %v2525 = vpop.permute.xlu0 %2524
  %2526 = vset.pattern.permute.xlu0 0
  %2527 = vperm.xlu0 %2526, %v2499
  %v2528 = vpop.permute.xlu0 %2527
  %2529 = vset.pattern.permute.xlu0 0
  %2530 = vperm.xlu0 %2529, %v2500
  %v2531 = vpop.permute.xlu0 %2530
  %2532 = vset.pattern.permute.xlu0 0
  %2533 = vperm.xlu0 %2532, %v2501
  %v2534 = vpop.permute.xlu0 %2533
  %2535 = vset.pattern.permute.xlu0 0
  %2536 = vperm.xlu0 %2535, %v2502
  %v2537 = vpop.permute.xlu0 %2536
  %2538 = vset.pattern.permute.xlu0 0
  %2539 = vperm.xlu0 %2538, %v2503
  %v2540 = vpop.permute.xlu0 %2539
  %2541 = vset.pattern.permute.xlu0 0
  %2542 = vperm.xlu0 %2541, %v2504
  %v2543 = vpop.permute.xlu0 %2542
  %vm2544 = vcmp.eq.s32.totalorder %v2335, %v2507
  %vm2545 = vcmp.eq.s32.totalorder %v2336, %v2507
  %vm2546 = vcmp.eq.s32.totalorder %v2335, %v2510
  %vm2547 = vcmp.eq.s32.totalorder %v2336, %v2510
  %vm2548 = vcmp.eq.s32.totalorder %v2335, %v2513
  %vm2549 = vcmp.eq.s32.totalorder %v2336, %v2513
  %vm2550 = vcmp.eq.s32.totalorder %v2335, %v2516
  %vm2551 = vcmp.eq.s32.totalorder %v2336, %v2516
  %vm2552 = vcmp.eq.s32.totalorder %v2335, %v2519
  %vm2553 = vcmp.eq.s32.totalorder %v2336, %v2519
  %vm2554 = vcmp.eq.s32.totalorder %v2335, %v2522
  %vm2555 = vcmp.eq.s32.totalorder %v2336, %v2522
  %vm2556 = vcmp.eq.s32.totalorder %v2335, %v2525
  %vm2557 = vcmp.eq.s32.totalorder %v2336, %v2525
  %vm2558 = vcmp.eq.s32.totalorder %v2335, %v2528
  %vm2559 = vcmp.eq.s32.totalorder %v2336, %v2528
  %vm2560 = vcmp.eq.s32.totalorder %v2335, %v2531
  %vm2561 = vcmp.eq.s32.totalorder %v2336, %v2531
  %vm2562 = vcmp.eq.s32.totalorder %v2335, %v2534
  %vm2563 = vcmp.eq.s32.totalorder %v2336, %v2534
  %vm2564 = vcmp.eq.s32.totalorder %v2335, %v2537
  %vm2565 = vcmp.eq.s32.totalorder %v2336, %v2537
  %vm2566 = vcmp.eq.s32.totalorder %v2335, %v2540
  %vm2567 = vcmp.eq.s32.totalorder %v2336, %v2540
  %vm2568 = vcmp.eq.s32.totalorder %v2335, %v2543
  %vm2569 = vcmp.eq.s32.totalorder %v2336, %v2543
  %v2570 = vsel %vm2544, 1, 0
  %v2571 = vsel %vm2545, 1, 0
  %v2572 = vsel %vm2546, 1, 0
  %v2573 = vsel %vm2547, 1, 0
  %v2574 = vsel %vm2548, 1, 0
  %v2575 = vsel %vm2549, 1, 0
  %v2576 = vsel %vm2550, 1, 0
  %v2577 = vsel %vm2551, 1, 0
  %v2578 = vsel %vm2552, 1, 0
  %v2579 = vsel %vm2553, 1, 0
  %v2580 = vsel %vm2554, 1, 0
  %v2581 = vsel %vm2555, 1, 0
  %v2582 = vsel %vm2556, 1, 0
  %v2583 = vsel %vm2557, 1, 0
  %v2584 = vsel %vm2558, 1, 0
  %v2585 = vsel %vm2559, 1, 0
  %v2586 = vsel %vm2560, 1, 0
  %v2587 = vsel %vm2561, 1, 0
  %v2588 = vsel %vm2562, 1, 0
  %v2589 = vsel %vm2563, 1, 0
  %v2590 = vsel %vm2564, 1, 0
  %v2591 = vsel %vm2565, 1, 0
  %v2592 = vsel %vm2566, 1, 0
  %v2593 = vsel %vm2567, 1, 0
  %v2594 = vsel %vm2568, 1, 0
  %v2595 = vsel %vm2569, 1, 0
  %v2596 = vcvt.s32.f32 %v2570
  %v2597 = vcvt.s32.f32 %v2571
  %v2598 = vcvt.s32.f32 %v2572
  %v2599 = vcvt.s32.f32 %v2573
  %v2600 = vcvt.s32.f32 %v2574
  %v2601 = vcvt.s32.f32 %v2575
  %v2602 = vcvt.s32.f32 %v2576
  %v2603 = vcvt.s32.f32 %v2577
  %v2604 = vcvt.s32.f32 %v2578
  %v2605 = vcvt.s32.f32 %v2579
  %v2606 = vcvt.s32.f32 %v2580
  %v2607 = vcvt.s32.f32 %v2581
  %v2608 = vcvt.s32.f32 %v2582
  %v2609 = vcvt.s32.f32 %v2583
  %v2610 = vcvt.s32.f32 %v2584
  %v2611 = vcvt.s32.f32 %v2585
  %v2612 = vcvt.s32.f32 %v2586
  %v2613 = vcvt.s32.f32 %v2587
  %v2614 = vcvt.s32.f32 %v2588
  %v2615 = vcvt.s32.f32 %v2589
  %v2616 = vcvt.s32.f32 %v2590
  %v2617 = vcvt.s32.f32 %v2591
  %v2618 = vcvt.s32.f32 %v2592
  %v2619 = vcvt.s32.f32 %v2593
  %v2620 = vcvt.s32.f32 %v2594
  %v2621 = vcvt.s32.f32 %v2595
  %2647 = vrot.lane.b32.xlu0 %v2467, 96
  %v2648 = vpop.permute.xlu0 %2647
  %2649 = vrot.lane.b32.xlu0 %v2468, 96
  %v2650 = vpop.permute.xlu0 %2649
  %2651 = vrot.lane.b32.xlu0 %v2469, 96
  %v2652 = vpop.permute.xlu0 %2651
  %2653 = vrot.lane.b32.xlu0 %v2470, 96
  %v2654 = vpop.permute.xlu0 %2653
  %2655 = vrot.lane.b32.xlu0 %v2471, 96
  %v2656 = vpop.permute.xlu0 %2655
  %2657 = vrot.lane.b32.xlu0 %v2472, 96
  %v2658 = vpop.permute.xlu0 %2657
  %2659 = vrot.lane.b32.xlu0 %v2473, 96
  %v2660 = vpop.permute.xlu0 %2659
  %2661 = vrot.lane.b32.xlu0 %v2474, 96
  %v2662 = vpop.permute.xlu0 %2661
  %2663 = vrot.lane.b32.xlu0 %v2475, 96
  %v2664 = vpop.permute.xlu0 %2663
  %2665 = vrot.lane.b32.xlu0 %v2476, 96
  %v2666 = vpop.permute.xlu0 %2665
  %2667 = vrot.lane.b32.xlu0 %v2477, 96
  %v2668 = vpop.permute.xlu0 %2667
  %2669 = vrot.lane.b32.xlu0 %v2478, 96
  %v2670 = vpop.permute.xlu0 %2669
  %2671 = vrot.lane.b32.xlu0 %v2479, 96
  %v2672 = vpop.permute.xlu0 %2671
  %2673 = vrot.lane.b32.xlu0 %v2480, 96
  %v2674 = vpop.permute.xlu0 %2673
  %2675 = vrot.lane.b32.xlu0 %v2481, 96
  %v2676 = vpop.permute.xlu0 %2675
  %2677 = vrot.lane.b32.xlu0 %v2482, 96
  %v2678 = vpop.permute.xlu0 %2677
  %2679 = vrot.lane.b32.xlu0 %v2483, 96
  %v2680 = vpop.permute.xlu0 %2679
  %2681 = vrot.lane.b32.xlu0 %v2484, 96
  %v2682 = vpop.permute.xlu0 %2681
  %2683 = vrot.lane.b32.xlu0 %v2485, 96
  %v2684 = vpop.permute.xlu0 %2683
  %2685 = vrot.lane.b32.xlu0 %v2486, 96
  %v2686 = vpop.permute.xlu0 %2685
  %2687 = vrot.lane.b32.xlu0 %v2487, 96
  %v2688 = vpop.permute.xlu0 %2687
  %2689 = vrot.lane.b32.xlu0 %v2488, 96
  %v2690 = vpop.permute.xlu0 %2689
  %2691 = vrot.lane.b32.xlu0 %v2489, 96
  %v2692 = vpop.permute.xlu0 %2691
  %2693 = vrot.lane.b32.xlu0 %v2490, 96
  %v2694 = vpop.permute.xlu0 %2693
  %2695 = vrot.lane.b32.xlu0 %v2491, 96
  %v2696 = vpop.permute.xlu0 %2695
  %vm2721 = vcmask 556032
  %v2723 = vsel %vm2721, %v2597, 0
  %v2726 = vsel %vm2721, %v2599, 0
  %v2729 = vsel %vm2721, %v2601, 0
  %v2732 = vsel %vm2721, %v2603, 0
  %v2735 = vsel %vm2721, %v2605, 0
  %v2738 = vsel %vm2721, %v2607, 0
  %v2741 = vsel %vm2721, %v2609, 0
  %v2744 = vsel %vm2721, %v2611, 0
  %v2747 = vsel %vm2721, %v2613, 0
  %v2750 = vsel %vm2721, %v2615, 0
  %v2753 = vsel %vm2721, %v2617, 0
  %v2756 = vsel %vm2721, %v2619, 0
  %v2759 = vsel %vm2721, %v2621, 0
  %vm2761 = vcmask 1043456
  %v2762 = vsel %vm2761, %v2696, 0
  %2764 = vmatpush.msra.mxu0 %v2678
  %2765 = vmatpush.msra.mxu0 %v2676
  %2766 = vmatpush.msra.mxu0 %v2674
  %2767 = vmatpush.msra.mxu0 %v2672
  %2768 = vmatpush.msra.mxu0 %v2670
  %2769 = vmatpush.msra.mxu0 %v2668
  %2770 = vmatpush.msra.mxu0 %v2666
  %2771 = vmatpush.msra.mxu0 %v2664
  %2772 = vmatpush.msra.mxu0 %v2662
  %2773 = vmatpush.msra.mxu0 %v2660
  %2774 = vmatpush.msra.mxu0 %v2658
  %2775 = vmatpush.msra.mxu0 %v2656
  %2776 = vmatpush.msra.mxu0 %v2654
  %2777 = vmatpush.msra.mxu0 %v2652
  %2778 = vmatpush.msra.mxu0 %v2650
  %2779 = vmatpush.msra.mxu0 %v2648
  %2780 = vmatmul.f32.gmra.mxu0 %v2596
  %v2781 = vpop.f32.mrf.mxu0
  %v2782 = vadd.f32 0.0, %v2781
  %2783 = vmatmul.f32.gmra.mxu0 %v2598
  %v2784 = vpop.f32.mrf.mxu0
  %v2785 = vadd.f32 0.0, %v2784
  %2786 = vmatmul.f32.gmra.mxu0 %v2600
  %v2787 = vpop.f32.mrf.mxu0
  %v2788 = vadd.f32 0.0, %v2787
  %2789 = vmatmul.f32.gmra.mxu0 %v2602
  %v2790 = vpop.f32.mrf.mxu0
  %v2791 = vadd.f32 0.0, %v2790
  %2792 = vmatmul.f32.gmra.mxu0 %v2604
  %v2793 = vpop.f32.mrf.mxu0
  %v2794 = vadd.f32 0.0, %v2793
  %2795 = vmatmul.f32.gmra.mxu0 %v2606
  %v2796 = vpop.f32.mrf.mxu0
  %v2797 = vadd.f32 0.0, %v2796
  %2798 = vmatmul.f32.gmra.mxu0 %v2608
  %v2799 = vpop.f32.mrf.mxu0
  %v2800 = vadd.f32 0.0, %v2799
  %2801 = vmatmul.f32.gmra.mxu0 %v2610
  %v2802 = vpop.f32.mrf.mxu0
  %v2803 = vadd.f32 0.0, %v2802
  %2804 = vmatmul.f32.gmra.mxu0 %v2612
  %v2805 = vpop.f32.mrf.mxu0
  %v2806 = vadd.f32 0.0, %v2805
  %2807 = vmatmul.f32.gmra.mxu0 %v2614
  %v2808 = vpop.f32.mrf.mxu0
  %v2809 = vadd.f32 0.0, %v2808
  %2810 = vmatmul.f32.gmra.mxu0 %v2616
  %v2811 = vpop.f32.mrf.mxu0
  %v2812 = vadd.f32 0.0, %v2811
  %2813 = vmatmul.f32.gmra.mxu0 %v2618
  %v2814 = vpop.f32.mrf.mxu0
  %v2815 = vadd.f32 0.0, %v2814
  %2816 = vmatmul.f32.gmra.mxu0 %v2620
  %v2817 = vpop.f32.mrf.mxu0
  %v2818 = vadd.f32 0.0, %v2817
  %2819 = vdwg.mxu0
  %2820 = vmatpush.msra.mxu0 0.0
  %2821 = vmatpush.msra.mxu0 0.0
  %2822 = vmatpush.msra.mxu0 0.0
  %2823 = vmatpush.msra.mxu0 0.0
  %2824 = vmatpush.msra.mxu0 0.0
  %2825 = vmatpush.msra.mxu0 0.0
  %2826 = vmatpush.msra.mxu0 0.0
  %2827 = vmatpush.msra.mxu0 %v2762
  %2828 = vmatpush.msra.mxu0 %v2694
  %2829 = vmatpush.msra.mxu0 %v2692
  %2830 = vmatpush.msra.mxu0 %v2690
  %2831 = vmatpush.msra.mxu0 %v2688
  %2832 = vmatpush.msra.mxu0 %v2686
  %2833 = vmatpush.msra.mxu0 %v2684
  %2834 = vmatpush.msra.mxu0 %v2682
  %2835 = vmatpush.msra.mxu0 %v2680
  %2836 = vmatmul.f32.gmra.mxu0 %v2723
  %v2837 = vpop.f32.mrf.mxu0
  %v2838 = vadd.f32 %v2782, %v2837
  %2839 = vmatmul.f32.gmra.mxu0 %v2726
  %v2840 = vpop.f32.mrf.mxu0
  %v2841 = vadd.f32 %v2785, %v2840
  %2842 = vmatmul.f32.gmra.mxu0 %v2729
  %v2843 = vpop.f32.mrf.mxu0
  %v2844 = vadd.f32 %v2788, %v2843
  %2845 = vmatmul.f32.gmra.mxu0 %v2732
  %v2846 = vpop.f32.mrf.mxu0
  %v2847 = vadd.f32 %v2791, %v2846
  %2848 = vmatmul.f32.gmra.mxu0 %v2735
  %v2849 = vpop.f32.mrf.mxu0
  %v2850 = vadd.f32 %v2794, %v2849
  %2851 = vmatmul.f32.gmra.mxu0 %v2738
  %v2852 = vpop.f32.mrf.mxu0
  %v2853 = vadd.f32 %v2797, %v2852
  %2854 = vmatmul.f32.gmra.mxu0 %v2741
  %v2855 = vpop.f32.mrf.mxu0
  %v2856 = vadd.f32 %v2800, %v2855
  %2857 = vmatmul.f32.gmra.mxu0 %v2744
  %v2858 = vpop.f32.mrf.mxu0
  %v2859 = vadd.f32 %v2803, %v2858
  %2860 = vmatmul.f32.gmra.mxu0 %v2747
  %v2861 = vpop.f32.mrf.mxu0
  %v2862 = vadd.f32 %v2806, %v2861
  %2863 = vmatmul.f32.gmra.mxu0 %v2750
  %v2864 = vpop.f32.mrf.mxu0
  %v2865 = vadd.f32 %v2809, %v2864
  %2866 = vmatmul.f32.gmra.mxu0 %v2753
  %v2867 = vpop.f32.mrf.mxu0
  %v2868 = vadd.f32 %v2812, %v2867
  %2869 = vmatmul.f32.gmra.mxu0 %v2756
  %v2870 = vpop.f32.mrf.mxu0
  %v2871 = vadd.f32 %v2815, %v2870
  %2872 = vmatmul.f32.gmra.mxu0 %v2759
  %v2873 = vpop.f32.mrf.mxu0
  %v2874 = vadd.f32 %v2818, %v2873
  %2875 = vdwg.mxu0
  %v2877 = vsel %vm2721, %v2442, 0
  %v2880 = vsel %vm2721, %v2444, 0
  %v2883 = vsel %vm2721, %v2446, 0
  %v2886 = vsel %vm2721, %v2448, 0
  %v2889 = vsel %vm2721, %v2450, 0
  %v2892 = vsel %vm2721, %v2452, 0
  %v2895 = vsel %vm2721, %v2454, 0
  %v2898 = vsel %vm2721, %v2456, 0
  %v2901 = vsel %vm2721, %v2458, 0
  %v2904 = vsel %vm2721, %v2460, 0
  %v2907 = vsel %vm2721, %v2462, 0
  %v2910 = vsel %vm2721, %v2464, 0
  %v2913 = vsel %vm2721, %v2466, 0
  %v2915 = vsel %vm2761, %v2491, 0
  %2917 = vmatpush.msra.mxu0 %v2482
  %2918 = vmatpush.msra.mxu0 %v2481
  %2919 = vmatpush.msra.mxu0 %v2480
  %2920 = vmatpush.msra.mxu0 %v2479
  %2921 = vmatpush.msra.mxu0 %v2478
  %2922 = vmatpush.msra.mxu0 %v2477
  %2923 = vmatpush.msra.mxu0 %v2476
  %2924 = vmatpush.msra.mxu0 %v2475
  %2925 = vmatpush.msra.mxu0 %v2474
  %2926 = vmatpush.msra.mxu0 %v2473
  %2927 = vmatpush.msra.mxu0 %v2472
  %2928 = vmatpush.msra.mxu0 %v2471
  %2929 = vmatpush.msra.mxu0 %v2470
  %2930 = vmatpush.msra.mxu0 %v2469
  %2931 = vmatpush.msra.mxu0 %v2468
  %2932 = vmatpush.msra.mxu0 %v2467
  %2933 = vmatmul.f32.gmra.mxu0 %v2441
  %v2934 = vpop.f32.mrf.mxu0
  %v2935 = vadd.f32 %v2838, %v2934
  %2936 = vmatmul.f32.gmra.mxu0 %v2443
  %v2937 = vpop.f32.mrf.mxu0
  %v2938 = vadd.f32 %v2841, %v2937
  %2939 = vmatmul.f32.gmra.mxu0 %v2445
  %v2940 = vpop.f32.mrf.mxu0
  %v2941 = vadd.f32 %v2844, %v2940
  %2942 = vmatmul.f32.gmra.mxu0 %v2447
  %v2943 = vpop.f32.mrf.mxu0
  %v2944 = vadd.f32 %v2847, %v2943
  %2945 = vmatmul.f32.gmra.mxu0 %v2449
  %v2946 = vpop.f32.mrf.mxu0
  %v2947 = vadd.f32 %v2850, %v2946
  %2948 = vmatmul.f32.gmra.mxu0 %v2451
  %v2949 = vpop.f32.mrf.mxu0
  %v2950 = vadd.f32 %v2853, %v2949
  %2951 = vmatmul.f32.gmra.mxu0 %v2453
  %v2952 = vpop.f32.mrf.mxu0
  %v2953 = vadd.f32 %v2856, %v2952
  %2954 = vmatmul.f32.gmra.mxu0 %v2455
  %v2955 = vpop.f32.mrf.mxu0
  %v2956 = vadd.f32 %v2859, %v2955
  %2957 = vmatmul.f32.gmra.mxu0 %v2457
  %v2958 = vpop.f32.mrf.mxu0
  %v2959 = vadd.f32 %v2862, %v2958
  %2960 = vmatmul.f32.gmra.mxu0 %v2459
  %v2961 = vpop.f32.mrf.mxu0
  %v2962 = vadd.f32 %v2865, %v2961
  %2963 = vmatmul.f32.gmra.mxu0 %v2461
  %v2964 = vpop.f32.mrf.mxu0
  %v2965 = vadd.f32 %v2868, %v2964
  %2966 = vmatmul.f32.gmra.mxu0 %v2463
  %v2967 = vpop.f32.mrf.mxu0
  %v2968 = vadd.f32 %v2871, %v2967
  %2969 = vmatmul.f32.gmra.mxu0 %v2465
  %v2970 = vpop.f32.mrf.mxu0
  %v2971 = vadd.f32 %v2874, %v2970
  %2972 = vdwg.mxu0
  %2973 = vmatpush.msra.mxu0 0.0
  %2974 = vmatpush.msra.mxu0 0.0
  %2975 = vmatpush.msra.mxu0 0.0
  %2976 = vmatpush.msra.mxu0 0.0
  %2977 = vmatpush.msra.mxu0 0.0
  %2978 = vmatpush.msra.mxu0 0.0
  %2979 = vmatpush.msra.mxu0 0.0
  %2980 = vmatpush.msra.mxu0 %v2915
  %2981 = vmatpush.msra.mxu0 %v2490
  %2982 = vmatpush.msra.mxu0 %v2489
  %2983 = vmatpush.msra.mxu0 %v2488
  %2984 = vmatpush.msra.mxu0 %v2487
  %2985 = vmatpush.msra.mxu0 %v2486
  %2986 = vmatpush.msra.mxu0 %v2485
  %2987 = vmatpush.msra.mxu0 %v2484
  %2988 = vmatpush.msra.mxu0 %v2483
  %2989 = vmatmul.f32.gmra.mxu0 %v2877
  %v2990 = vpop.f32.mrf.mxu0
  %v2991 = vadd.f32 %v2935, %v2990
  %2992 = vmatmul.f32.gmra.mxu0 %v2880
  %v2993 = vpop.f32.mrf.mxu0
  %v2994 = vadd.f32 %v2938, %v2993
  %2995 = vmatmul.f32.gmra.mxu0 %v2883
  %v2996 = vpop.f32.mrf.mxu0
  %v2997 = vadd.f32 %v2941, %v2996
  %2998 = vmatmul.f32.gmra.mxu0 %v2886
  %v2999 = vpop.f32.mrf.mxu0
  %v3000 = vadd.f32 %v2944, %v2999
  %3001 = vmatmul.f32.gmra.mxu0 %v2889
  %v3002 = vpop.f32.mrf.mxu0
  %v3003 = vadd.f32 %v2947, %v3002
  %3004 = vmatmul.f32.gmra.mxu0 %v2892
  %v3005 = vpop.f32.mrf.mxu0
  %v3006 = vadd.f32 %v2950, %v3005
  %3007 = vmatmul.f32.gmra.mxu0 %v2895
  %v3008 = vpop.f32.mrf.mxu0
  %v3009 = vadd.f32 %v2953, %v3008
  %3010 = vmatmul.f32.gmra.mxu0 %v2898
  %v3011 = vpop.f32.mrf.mxu0
  %v3012 = vadd.f32 %v2956, %v3011
  %3013 = vmatmul.f32.gmra.mxu0 %v2901
  %v3014 = vpop.f32.mrf.mxu0
  %v3015 = vadd.f32 %v2959, %v3014
  %3016 = vmatmul.f32.gmra.mxu0 %v2904
  %v3017 = vpop.f32.mrf.mxu0
  %v3018 = vadd.f32 %v2962, %v3017
  %3019 = vmatmul.f32.gmra.mxu0 %v2907
  %v3020 = vpop.f32.mrf.mxu0
  %v3021 = vadd.f32 %v2965, %v3020
  %3022 = vmatmul.f32.gmra.mxu0 %v2910
  %v3023 = vpop.f32.mrf.mxu0
  %v3024 = vadd.f32 %v2968, %v3023
  %3025 = vmatmul.f32.gmra.mxu0 %v2913
  %v3026 = vpop.f32.mrf.mxu0
  %v3027 = vadd.f32 %v2971, %v3026
  %3028 = vdwg.mxu0
  %v3029 = vadd.s32 %v2337, 2
  %v3030 = vadd.s32 %v2338, 2
  %v3031 = vadd.s32 %v2339, 2
  %v3032 = vadd.s32 %v2340, 2
  %v3033 = vadd.s32 %v2341, 2
  %v3034 = vadd.s32 %v2342, 2
  %v3035 = vadd.s32 %v2343, 2
  %v3036 = vadd.s32 %v2344, 2
  %v3037 = vadd.s32 %v2345, 2
  %v3038 = vadd.s32 %v2346, 2
  %v3039 = vadd.s32 %v2347, 2
  %v3040 = vadd.s32 %v2348, 2
  %v3041 = vadd.s32 %v2349, 2
  %3042 = vset.pattern.permute.xlu0 0
  %3043 = vperm.xlu0 %3042, %v3029
  %v3044 = vpop.permute.xlu0 %3043
  %3045 = vset.pattern.permute.xlu0 0
  %3046 = vperm.xlu0 %3045, %v3030
  %v3047 = vpop.permute.xlu0 %3046
  %3048 = vset.pattern.permute.xlu0 0
  %3049 = vperm.xlu0 %3048, %v3031
  %v3050 = vpop.permute.xlu0 %3049
  %3051 = vset.pattern.permute.xlu0 0
  %3052 = vperm.xlu0 %3051, %v3032
  %v3053 = vpop.permute.xlu0 %3052
  %3054 = vset.pattern.permute.xlu0 0
  %3055 = vperm.xlu0 %3054, %v3033
  %v3056 = vpop.permute.xlu0 %3055
  %3057 = vset.pattern.permute.xlu0 0
  %3058 = vperm.xlu0 %3057, %v3034
  %v3059 = vpop.permute.xlu0 %3058
  %3060 = vset.pattern.permute.xlu0 0
  %3061 = vperm.xlu0 %3060, %v3035
  %v3062 = vpop.permute.xlu0 %3061
  %3063 = vset.pattern.permute.xlu0 0
  %3064 = vperm.xlu0 %3063, %v3036
  %v3065 = vpop.permute.xlu0 %3064
  %3066 = vset.pattern.permute.xlu0 0
  %3067 = vperm.xlu0 %3066, %v3037
  %v3068 = vpop.permute.xlu0 %3067
  %3069 = vset.pattern.permute.xlu0 0
  %3070 = vperm.xlu0 %3069, %v3038
  %v3071 = vpop.permute.xlu0 %3070
  %3072 = vset.pattern.permute.xlu0 0
  %3073 = vperm.xlu0 %3072, %v3039
  %v3074 = vpop.permute.xlu0 %3073
  %3075 = vset.pattern.permute.xlu0 0
  %3076 = vperm.xlu0 %3075, %v3040
  %v3077 = vpop.permute.xlu0 %3076
  %3078 = vset.pattern.permute.xlu0 0
  %3079 = vperm.xlu0 %3078, %v3041
  %v3080 = vpop.permute.xlu0 %3079
  %vm3081 = vcmp.eq.s32.totalorder %v2335, %v3044
  %vm3082 = vcmp.eq.s32.totalorder %v2336, %v3044
  %vm3083 = vcmp.eq.s32.totalorder %v2335, %v3047
  %vm3084 = vcmp.eq.s32.totalorder %v2336, %v3047
  %vm3085 = vcmp.eq.s32.totalorder %v2335, %v3050
  %vm3086 = vcmp.eq.s32.totalorder %v2336, %v3050
  %vm3087 = vcmp.eq.s32.totalorder %v2335, %v3053
  %vm3088 = vcmp.eq.s32.totalorder %v2336, %v3053
  %vm3089 = vcmp.eq.s32.totalorder %v2335, %v3056
  %vm3090 = vcmp.eq.s32.totalorder %v2336, %v3056
  %vm3091 = vcmp.eq.s32.totalorder %v2335, %v3059
  %vm3092 = vcmp.eq.s32.totalorder %v2336, %v3059
  %vm3093 = vcmp.eq.s32.totalorder %v2335, %v3062
  %vm3094 = vcmp.eq.s32.totalorder %v2336, %v3062
  %vm3095 = vcmp.eq.s32.totalorder %v2335, %v3065
  %vm3096 = vcmp.eq.s32.totalorder %v2336, %v3065
  %vm3097 = vcmp.eq.s32.totalorder %v2335, %v3068
  %vm3098 = vcmp.eq.s32.totalorder %v2336, %v3068
  %vm3099 = vcmp.eq.s32.totalorder %v2335, %v3071
  %vm3100 = vcmp.eq.s32.totalorder %v2336, %v3071
  %vm3101 = vcmp.eq.s32.totalorder %v2335, %v3074
  %vm3102 = vcmp.eq.s32.totalorder %v2336, %v3074
  %vm3103 = vcmp.eq.s32.totalorder %v2335, %v3077
  %vm3104 = vcmp.eq.s32.totalorder %v2336, %v3077
  %vm3105 = vcmp.eq.s32.totalorder %v2335, %v3080
  %vm3106 = vcmp.eq.s32.totalorder %v2336, %v3080
  %v3107 = vsel %vm3081, 1, 0
  %v3108 = vsel %vm3082, 1, 0
  %v3109 = vsel %vm3083, 1, 0
  %v3110 = vsel %vm3084, 1, 0
  %v3111 = vsel %vm3085, 1, 0
  %v3112 = vsel %vm3086, 1, 0
  %v3113 = vsel %vm3087, 1, 0
  %v3114 = vsel %vm3088, 1, 0
  %v3115 = vsel %vm3089, 1, 0
  %v3116 = vsel %vm3090, 1, 0
  %v3117 = vsel %vm3091, 1, 0
  %v3118 = vsel %vm3092, 1, 0
  %v3119 = vsel %vm3093, 1, 0
  %v3120 = vsel %vm3094, 1, 0
  %v3121 = vsel %vm3095, 1, 0
  %v3122 = vsel %vm3096, 1, 0
  %v3123 = vsel %vm3097, 1, 0
  %v3124 = vsel %vm3098, 1, 0
  %v3125 = vsel %vm3099, 1, 0
  %v3126 = vsel %vm3100, 1, 0
  %v3127 = vsel %vm3101, 1, 0
  %v3128 = vsel %vm3102, 1, 0
  %v3129 = vsel %vm3103, 1, 0
  %v3130 = vsel %vm3104, 1, 0
  %v3131 = vsel %vm3105, 1, 0
  %v3132 = vsel %vm3106, 1, 0
  %v3133 = vcvt.s32.f32 %v3107
  %v3134 = vcvt.s32.f32 %v3108
  %v3135 = vcvt.s32.f32 %v3109
  %v3136 = vcvt.s32.f32 %v3110
  %v3137 = vcvt.s32.f32 %v3111
  %v3138 = vcvt.s32.f32 %v3112
  %v3139 = vcvt.s32.f32 %v3113
  %v3140 = vcvt.s32.f32 %v3114
  %v3141 = vcvt.s32.f32 %v3115
  %v3142 = vcvt.s32.f32 %v3116
  %v3143 = vcvt.s32.f32 %v3117
  %v3144 = vcvt.s32.f32 %v3118
  %v3145 = vcvt.s32.f32 %v3119
  %v3146 = vcvt.s32.f32 %v3120
  %v3147 = vcvt.s32.f32 %v3121
  %v3148 = vcvt.s32.f32 %v3122
  %v3149 = vcvt.s32.f32 %v3123
  %v3150 = vcvt.s32.f32 %v3124
  %v3151 = vcvt.s32.f32 %v3125
  %v3152 = vcvt.s32.f32 %v3126
  %v3153 = vcvt.s32.f32 %v3127
  %v3154 = vcvt.s32.f32 %v3128
  %v3155 = vcvt.s32.f32 %v3129
  %v3156 = vcvt.s32.f32 %v3130
  %v3157 = vcvt.s32.f32 %v3131
  %v3158 = vcvt.s32.f32 %v3132
  %3159 = vrot.lane.b32.xlu0 %v2467, 64
  %v3160 = vpop.permute.xlu0 %3159
  %3161 = vrot.lane.b32.xlu0 %v2468, 64
  %v3162 = vpop.permute.xlu0 %3161
  %3163 = vrot.lane.b32.xlu0 %v2469, 64
  %v3164 = vpop.permute.xlu0 %3163
  %3165 = vrot.lane.b32.xlu0 %v2470, 64
  %v3166 = vpop.permute.xlu0 %3165
  %3167 = vrot.lane.b32.xlu0 %v2471, 64
  %v3168 = vpop.permute.xlu0 %3167
  %3169 = vrot.lane.b32.xlu0 %v2472, 64
  %v3170 = vpop.permute.xlu0 %3169
  %3171 = vrot.lane.b32.xlu0 %v2473, 64
  %v3172 = vpop.permute.xlu0 %3171
  %3173 = vrot.lane.b32.xlu0 %v2474, 64
  %v3174 = vpop.permute.xlu0 %3173
  %3175 = vrot.lane.b32.xlu0 %v2475, 64
  %v3176 = vpop.permute.xlu0 %3175
  %3177 = vrot.lane.b32.xlu0 %v2476, 64
  %v3178 = vpop.permute.xlu0 %3177
  %3179 = vrot.lane.b32.xlu0 %v2477, 64
  %v3180 = vpop.permute.xlu0 %3179
  %3181 = vrot.lane.b32.xlu0 %v2478, 64
  %v3182 = vpop.permute.xlu0 %3181
  %3183 = vrot.lane.b32.xlu0 %v2479, 64
  %v3184 = vpop.permute.xlu0 %3183
  %3185 = vrot.lane.b32.xlu0 %v2480, 64
  %v3186 = vpop.permute.xlu0 %3185
  %3187 = vrot.lane.b32.xlu0 %v2481, 64
  %v3188 = vpop.permute.xlu0 %3187
  %3189 = vrot.lane.b32.xlu0 %v2482, 64
  %v3190 = vpop.permute.xlu0 %3189
  %3191 = vrot.lane.b32.xlu0 %v2483, 64
  %v3192 = vpop.permute.xlu0 %3191
  %3193 = vrot.lane.b32.xlu0 %v2484, 64
  %v3194 = vpop.permute.xlu0 %3193
  %3195 = vrot.lane.b32.xlu0 %v2485, 64
  %v3196 = vpop.permute.xlu0 %3195
  %3197 = vrot.lane.b32.xlu0 %v2486, 64
  %v3198 = vpop.permute.xlu0 %3197
  %3199 = vrot.lane.b32.xlu0 %v2487, 64
  %v3200 = vpop.permute.xlu0 %3199
  %3201 = vrot.lane.b32.xlu0 %v2488, 64
  %v3202 = vpop.permute.xlu0 %3201
  %3203 = vrot.lane.b32.xlu0 %v2489, 64
  %v3204 = vpop.permute.xlu0 %3203
  %3205 = vrot.lane.b32.xlu0 %v2490, 64
  %v3206 = vpop.permute.xlu0 %3205
  %3207 = vrot.lane.b32.xlu0 %v2491, 64
  %v3208 = vpop.permute.xlu0 %3207
  %v3234 = vsel %vm2721, %v3134, 0
  %v3237 = vsel %vm2721, %v3136, 0
  %v3240 = vsel %vm2721, %v3138, 0
  %v3243 = vsel %vm2721, %v3140, 0
  %v3246 = vsel %vm2721, %v3142, 0
  %v3249 = vsel %vm2721, %v3144, 0
  %v3252 = vsel %vm2721, %v3146, 0
  %v3255 = vsel %vm2721, %v3148, 0
  %v3258 = vsel %vm2721, %v3150, 0
  %v3261 = vsel %vm2721, %v3152, 0
  %v3264 = vsel %vm2721, %v3154, 0
  %v3267 = vsel %vm2721, %v3156, 0
  %v3270 = vsel %vm2721, %v3158, 0
  %v3272 = vsel %vm2761, %v3208, 0
  %3274 = vmatpush.msra.mxu0 %v3190
  %3275 = vmatpush.msra.mxu0 %v3188
  %3276 = vmatpush.msra.mxu0 %v3186
  %3277 = vmatpush.msra.mxu0 %v3184
  %3278 = vmatpush.msra.mxu0 %v3182
  %3279 = vmatpush.msra.mxu0 %v3180
  %3280 = vmatpush.msra.mxu0 %v3178
  %3281 = vmatpush.msra.mxu0 %v3176
  %3282 = vmatpush.msra.mxu0 %v3174
  %3283 = vmatpush.msra.mxu0 %v3172
  %3284 = vmatpush.msra.mxu0 %v3170
  %3285 = vmatpush.msra.mxu0 %v3168
  %3286 = vmatpush.msra.mxu0 %v3166
  %3287 = vmatpush.msra.mxu0 %v3164
  %3288 = vmatpush.msra.mxu0 %v3162
  %3289 = vmatpush.msra.mxu0 %v3160
  %3290 = vmatmul.f32.gmra.mxu0 %v3133
  %v3291 = vpop.f32.mrf.mxu0
  %v3292 = vadd.f32 0.0, %v3291
  %3293 = vmatmul.f32.gmra.mxu0 %v3135
  %v3294 = vpop.f32.mrf.mxu0
  %v3295 = vadd.f32 0.0, %v3294
  %3296 = vmatmul.f32.gmra.mxu0 %v3137
  %v3297 = vpop.f32.mrf.mxu0
  %v3298 = vadd.f32 0.0, %v3297
  %3299 = vmatmul.f32.gmra.mxu0 %v3139
  %v3300 = vpop.f32.mrf.mxu0
  %v3301 = vadd.f32 0.0, %v3300
  %3302 = vmatmul.f32.gmra.mxu0 %v3141
  %v3303 = vpop.f32.mrf.mxu0
  %v3304 = vadd.f32 0.0, %v3303
  %3305 = vmatmul.f32.gmra.mxu0 %v3143
  %v3306 = vpop.f32.mrf.mxu0
  %v3307 = vadd.f32 0.0, %v3306
  %3308 = vmatmul.f32.gmra.mxu0 %v3145
  %v3309 = vpop.f32.mrf.mxu0
  %v3310 = vadd.f32 0.0, %v3309
  %3311 = vmatmul.f32.gmra.mxu0 %v3147
  %v3312 = vpop.f32.mrf.mxu0
  %v3313 = vadd.f32 0.0, %v3312
  %3314 = vmatmul.f32.gmra.mxu0 %v3149
  %v3315 = vpop.f32.mrf.mxu0
  %v3316 = vadd.f32 0.0, %v3315
  %3317 = vmatmul.f32.gmra.mxu0 %v3151
  %v3318 = vpop.f32.mrf.mxu0
  %v3319 = vadd.f32 0.0, %v3318
  %3320 = vmatmul.f32.gmra.mxu0 %v3153
  %v3321 = vpop.f32.mrf.mxu0
  %v3322 = vadd.f32 0.0, %v3321
  %3323 = vmatmul.f32.gmra.mxu0 %v3155
  %v3324 = vpop.f32.mrf.mxu0
  %v3325 = vadd.f32 0.0, %v3324
  %3326 = vmatmul.f32.gmra.mxu0 %v3157
  %v3327 = vpop.f32.mrf.mxu0
  %v3328 = vadd.f32 0.0, %v3327
  %3329 = vdwg.mxu0
  %3330 = vmatpush.msra.mxu0 0.0
  %3331 = vmatpush.msra.mxu0 0.0
  %3332 = vmatpush.msra.mxu0 0.0
  %3333 = vmatpush.msra.mxu0 0.0
  %3334 = vmatpush.msra.mxu0 0.0
  %3335 = vmatpush.msra.mxu0 0.0
  %3336 = vmatpush.msra.mxu0 0.0
  %3337 = vmatpush.msra.mxu0 %v3272
  %3338 = vmatpush.msra.mxu0 %v3206
  %3339 = vmatpush.msra.mxu0 %v3204
  %3340 = vmatpush.msra.mxu0 %v3202
  %3341 = vmatpush.msra.mxu0 %v3200
  %3342 = vmatpush.msra.mxu0 %v3198
  %3343 = vmatpush.msra.mxu0 %v3196
  %3344 = vmatpush.msra.mxu0 %v3194
  %3345 = vmatpush.msra.mxu0 %v3192
  %3346 = vmatmul.f32.gmra.mxu0 %v3234
  %v3347 = vpop.f32.mrf.mxu0
  %v3348 = vadd.f32 %v3292, %v3347
  %3349 = vmatmul.f32.gmra.mxu0 %v3237
  %v3350 = vpop.f32.mrf.mxu0
  %v3351 = vadd.f32 %v3295, %v3350
  %3352 = vmatmul.f32.gmra.mxu0 %v3240
  %v3353 = vpop.f32.mrf.mxu0
  %v3354 = vadd.f32 %v3298, %v3353
  %3355 = vmatmul.f32.gmra.mxu0 %v3243
  %v3356 = vpop.f32.mrf.mxu0
  %v3357 = vadd.f32 %v3301, %v3356
  %3358 = vmatmul.f32.gmra.mxu0 %v3246
  %v3359 = vpop.f32.mrf.mxu0
  %v3360 = vadd.f32 %v3304, %v3359
  %3361 = vmatmul.f32.gmra.mxu0 %v3249
  %v3362 = vpop.f32.mrf.mxu0
  %v3363 = vadd.f32 %v3307, %v3362
  %3364 = vmatmul.f32.gmra.mxu0 %v3252
  %v3365 = vpop.f32.mrf.mxu0
  %v3366 = vadd.f32 %v3310, %v3365
  %3367 = vmatmul.f32.gmra.mxu0 %v3255
  %v3368 = vpop.f32.mrf.mxu0
  %v3369 = vadd.f32 %v3313, %v3368
  %3370 = vmatmul.f32.gmra.mxu0 %v3258
  %v3371 = vpop.f32.mrf.mxu0
  %v3372 = vadd.f32 %v3316, %v3371
  %3373 = vmatmul.f32.gmra.mxu0 %v3261
  %v3374 = vpop.f32.mrf.mxu0
  %v3375 = vadd.f32 %v3319, %v3374
  %3376 = vmatmul.f32.gmra.mxu0 %v3264
  %v3377 = vpop.f32.mrf.mxu0
  %v3378 = vadd.f32 %v3322, %v3377
  %3379 = vmatmul.f32.gmra.mxu0 %v3267
  %v3380 = vpop.f32.mrf.mxu0
  %v3381 = vadd.f32 %v3325, %v3380
  %3382 = vmatmul.f32.gmra.mxu0 %v3270
  %v3383 = vpop.f32.mrf.mxu0
  %v3384 = vadd.f32 %v3328, %v3383
  %3385 = vdwg.mxu0
  %v3386 = vadd.f32 %v2991, %v3348
  %v3387 = vadd.f32 %v2994, %v3351
  %v3388 = vadd.f32 %v2997, %v3354
  %v3389 = vadd.f32 %v3000, %v3357
  %v3390 = vadd.f32 %v3003, %v3360
  %v3391 = vadd.f32 %v3006, %v3363
  %v3392 = vadd.f32 %v3009, %v3366
  %v3393 = vadd.f32 %v3012, %v3369
  %v3394 = vadd.f32 %v3015, %v3372
  %v3395 = vadd.f32 %v3018, %v3375
  %v3396 = vadd.f32 %v3021, %v3378
  %v3397 = vadd.f32 %v3024, %v3381
  %v3398 = vadd.f32 %v3027, %v3384
  %v3399 = vadd.s32 %v2337, 7
  %v3400 = vadd.s32 %v2338, 7
  %v3401 = vadd.s32 %v2339, 7
  %v3402 = vadd.s32 %v2340, 7
  %v3403 = vadd.s32 %v2341, 7
  %v3404 = vadd.s32 %v2342, 7
  %v3405 = vadd.s32 %v2343, 7
  %v3406 = vadd.s32 %v2344, 7
  %v3407 = vadd.s32 %v2345, 7
  %v3408 = vadd.s32 %v2346, 7
  %v3409 = vadd.s32 %v2347, 7
  %v3410 = vadd.s32 %v2348, 7
  %v3411 = vadd.s32 %v2349, 7
  %3412 = vset.pattern.permute.xlu0 0
  %3413 = vperm.xlu0 %3412, %v3399
  %v3414 = vpop.permute.xlu0 %3413
  %3415 = vset.pattern.permute.xlu0 0
  %3416 = vperm.xlu0 %3415, %v3400
  %v3417 = vpop.permute.xlu0 %3416
  %3418 = vset.pattern.permute.xlu0 0
  %3419 = vperm.xlu0 %3418, %v3401
  %v3420 = vpop.permute.xlu0 %3419
  %3421 = vset.pattern.permute.xlu0 0
  %3422 = vperm.xlu0 %3421, %v3402
  %v3423 = vpop.permute.xlu0 %3422
  %3424 = vset.pattern.permute.xlu0 0
  %3425 = vperm.xlu0 %3424, %v3403
  %v3426 = vpop.permute.xlu0 %3425
  %3427 = vset.pattern.permute.xlu0 0
  %3428 = vperm.xlu0 %3427, %v3404
  %v3429 = vpop.permute.xlu0 %3428
  %3430 = vset.pattern.permute.xlu0 0
  %3431 = vperm.xlu0 %3430, %v3405
  %v3432 = vpop.permute.xlu0 %3431
  %3433 = vset.pattern.permute.xlu0 0
  %3434 = vperm.xlu0 %3433, %v3406
  %v3435 = vpop.permute.xlu0 %3434
  %3436 = vset.pattern.permute.xlu0 0
  %3437 = vperm.xlu0 %3436, %v3407
  %v3438 = vpop.permute.xlu0 %3437
  %3439 = vset.pattern.permute.xlu0 0
  %3440 = vperm.xlu0 %3439, %v3408
  %v3441 = vpop.permute.xlu0 %3440
  %3442 = vset.pattern.permute.xlu0 0
  %3443 = vperm.xlu0 %3442, %v3409
  %v3444 = vpop.permute.xlu0 %3443
  %3445 = vset.pattern.permute.xlu0 0
  %3446 = vperm.xlu0 %3445, %v3410
  %v3447 = vpop.permute.xlu0 %3446
  %3448 = vset.pattern.permute.xlu0 0
  %3449 = vperm.xlu0 %3448, %v3411
  %v3450 = vpop.permute.xlu0 %3449
  %vm3451 = vcmp.eq.s32.totalorder %v2335, %v3414
  %vm3452 = vcmp.eq.s32.totalorder %v2336, %v3414
  %vm3453 = vcmp.eq.s32.totalorder %v2335, %v3417
  %vm3454 = vcmp.eq.s32.totalorder %v2336, %v3417
  %vm3455 = vcmp.eq.s32.totalorder %v2335, %v3420
  %vm3456 = vcmp.eq.s32.totalorder %v2336, %v3420
  %vm3457 = vcmp.eq.s32.totalorder %v2335, %v3423
  %vm3458 = vcmp.eq.s32.totalorder %v2336, %v3423
  %vm3459 = vcmp.eq.s32.totalorder %v2335, %v3426
  %vm3460 = vcmp.eq.s32.totalorder %v2336, %v3426
  %vm3461 = vcmp.eq.s32.totalorder %v2335, %v3429
  %vm3462 = vcmp.eq.s32.totalorder %v2336, %v3429
  %vm3463 = vcmp.eq.s32.totalorder %v2335, %v3432
  %vm3464 = vcmp.eq.s32.totalorder %v2336, %v3432
  %vm3465 = vcmp.eq.s32.totalorder %v2335, %v3435
  %vm3466 = vcmp.eq.s32.totalorder %v2336, %v3435
  %vm3467 = vcmp.eq.s32.totalorder %v2335, %v3438
  %vm3468 = vcmp.eq.s32.totalorder %v2336, %v3438
  %vm3469 = vcmp.eq.s32.totalorder %v2335, %v3441
  %vm3470 = vcmp.eq.s32.totalorder %v2336, %v3441
  %vm3471 = vcmp.eq.s32.totalorder %v2335, %v3444
  %vm3472 = vcmp.eq.s32.totalorder %v2336, %v3444
  %vm3473 = vcmp.eq.s32.totalorder %v2335, %v3447
  %vm3474 = vcmp.eq.s32.totalorder %v2336, %v3447
  %vm3475 = vcmp.eq.s32.totalorder %v2335, %v3450
  %vm3476 = vcmp.eq.s32.totalorder %v2336, %v3450
  %v3477 = vsel %vm3451, 1, 0
  %v3478 = vsel %vm3452, 1, 0
  %v3479 = vsel %vm3453, 1, 0
  %v3480 = vsel %vm3454, 1, 0
  %v3481 = vsel %vm3455, 1, 0
  %v3482 = vsel %vm3456, 1, 0
  %v3483 = vsel %vm3457, 1, 0
  %v3484 = vsel %vm3458, 1, 0
  %v3485 = vsel %vm3459, 1, 0
  %v3486 = vsel %vm3460, 1, 0
  %v3487 = vsel %vm3461, 1, 0
  %v3488 = vsel %vm3462, 1, 0
  %v3489 = vsel %vm3463, 1, 0
  %v3490 = vsel %vm3464, 1, 0
  %v3491 = vsel %vm3465, 1, 0
  %v3492 = vsel %vm3466, 1, 0
  %v3493 = vsel %vm3467, 1, 0
  %v3494 = vsel %vm3468, 1, 0
  %v3495 = vsel %vm3469, 1, 0
  %v3496 = vsel %vm3470, 1, 0
  %v3497 = vsel %vm3471, 1, 0
  %v3498 = vsel %vm3472, 1, 0
  %v3499 = vsel %vm3473, 1, 0
  %v3500 = vsel %vm3474, 1, 0
  %v3501 = vsel %vm3475, 1, 0
  %v3502 = vsel %vm3476, 1, 0
  %v3503 = vcvt.s32.f32 %v3477
  %v3504 = vcvt.s32.f32 %v3478
  %v3505 = vcvt.s32.f32 %v3479
  %v3506 = vcvt.s32.f32 %v3480
  %v3507 = vcvt.s32.f32 %v3481
  %v3508 = vcvt.s32.f32 %v3482
  %v3509 = vcvt.s32.f32 %v3483
  %v3510 = vcvt.s32.f32 %v3484
  %v3511 = vcvt.s32.f32 %v3485
  %v3512 = vcvt.s32.f32 %v3486
  %v3513 = vcvt.s32.f32 %v3487
  %v3514 = vcvt.s32.f32 %v3488
  %v3515 = vcvt.s32.f32 %v3489
  %v3516 = vcvt.s32.f32 %v3490
  %v3517 = vcvt.s32.f32 %v3491
  %v3518 = vcvt.s32.f32 %v3492
  %v3519 = vcvt.s32.f32 %v3493
  %v3520 = vcvt.s32.f32 %v3494
  %v3521 = vcvt.s32.f32 %v3495
  %v3522 = vcvt.s32.f32 %v3496
  %v3523 = vcvt.s32.f32 %v3497
  %v3524 = vcvt.s32.f32 %v3498
  %v3525 = vcvt.s32.f32 %v3499
  %v3526 = vcvt.s32.f32 %v3500
  %v3527 = vcvt.s32.f32 %v3501
  %v3528 = vcvt.s32.f32 %v3502
  %3529 = vrot.lane.b32.xlu0 %v2467, 32
  %v3530 = vpop.permute.xlu0 %3529
  %3531 = vrot.lane.b32.xlu0 %v2468, 32
  %v3532 = vpop.permute.xlu0 %3531
  %3533 = vrot.lane.b32.xlu0 %v2469, 32
  %v3534 = vpop.permute.xlu0 %3533
  %3535 = vrot.lane.b32.xlu0 %v2470, 32
  %v3536 = vpop.permute.xlu0 %3535
  %3537 = vrot.lane.b32.xlu0 %v2471, 32
  %v3538 = vpop.permute.xlu0 %3537
  %3539 = vrot.lane.b32.xlu0 %v2472, 32
  %v3540 = vpop.permute.xlu0 %3539
  %3541 = vrot.lane.b32.xlu0 %v2473, 32
  %v3542 = vpop.permute.xlu0 %3541
  %3543 = vrot.lane.b32.xlu0 %v2474, 32
  %v3544 = vpop.permute.xlu0 %3543
  %3545 = vrot.lane.b32.xlu0 %v2475, 32
  %v3546 = vpop.permute.xlu0 %3545
  %3547 = vrot.lane.b32.xlu0 %v2476, 32
  %v3548 = vpop.permute.xlu0 %3547
  %3549 = vrot.lane.b32.xlu0 %v2477, 32
  %v3550 = vpop.permute.xlu0 %3549
  %3551 = vrot.lane.b32.xlu0 %v2478, 32
  %v3552 = vpop.permute.xlu0 %3551
  %3553 = vrot.lane.b32.xlu0 %v2479, 32
  %v3554 = vpop.permute.xlu0 %3553
  %3555 = vrot.lane.b32.xlu0 %v2480, 32
  %v3556 = vpop.permute.xlu0 %3555
  %3557 = vrot.lane.b32.xlu0 %v2481, 32
  %v3558 = vpop.permute.xlu0 %3557
  %3559 = vrot.lane.b32.xlu0 %v2482, 32
  %v3560 = vpop.permute.xlu0 %3559
  %3561 = vrot.lane.b32.xlu0 %v2483, 32
  %v3562 = vpop.permute.xlu0 %3561
  %3563 = vrot.lane.b32.xlu0 %v2484, 32
  %v3564 = vpop.permute.xlu0 %3563
  %3565 = vrot.lane.b32.xlu0 %v2485, 32
  %v3566 = vpop.permute.xlu0 %3565
  %3567 = vrot.lane.b32.xlu0 %v2486, 32
  %v3568 = vpop.permute.xlu0 %3567
  %3569 = vrot.lane.b32.xlu0 %v2487, 32
  %v3570 = vpop.permute.xlu0 %3569
  %3571 = vrot.lane.b32.xlu0 %v2488, 32
  %v3572 = vpop.permute.xlu0 %3571
  %3573 = vrot.lane.b32.xlu0 %v2489, 32
  %v3574 = vpop.permute.xlu0 %3573
  %3575 = vrot.lane.b32.xlu0 %v2490, 32
  %v3576 = vpop.permute.xlu0 %3575
  %3577 = vrot.lane.b32.xlu0 %v2491, 32
  %v3578 = vpop.permute.xlu0 %3577
  %v3604 = vsel %vm2721, %v3504, 0
  %v3607 = vsel %vm2721, %v3506, 0
  %v3610 = vsel %vm2721, %v3508, 0
  %v3613 = vsel %vm2721, %v3510, 0
  %v3616 = vsel %vm2721, %v3512, 0
  %v3619 = vsel %vm2721, %v3514, 0
  %v3622 = vsel %vm2721, %v3516, 0
  %v3625 = vsel %vm2721, %v3518, 0
  %v3628 = vsel %vm2721, %v3520, 0
  %v3631 = vsel %vm2721, %v3522, 0
  %v3634 = vsel %vm2721, %v3524, 0
  %v3637 = vsel %vm2721, %v3526, 0
  %v3640 = vsel %vm2721, %v3528, 0
  %v3642 = vsel %vm2761, %v3578, 0
  %3644 = vmatpush.msra.mxu0 %v3560
  %3645 = vmatpush.msra.mxu0 %v3558
  %3646 = vmatpush.msra.mxu0 %v3556
  %3647 = vmatpush.msra.mxu0 %v3554
  %3648 = vmatpush.msra.mxu0 %v3552
  %3649 = vmatpush.msra.mxu0 %v3550
  %3650 = vmatpush.msra.mxu0 %v3548
  %3651 = vmatpush.msra.mxu0 %v3546
  %3652 = vmatpush.msra.mxu0 %v3544
  %3653 = vmatpush.msra.mxu0 %v3542
  %3654 = vmatpush.msra.mxu0 %v3540
  %3655 = vmatpush.msra.mxu0 %v3538
  %3656 = vmatpush.msra.mxu0 %v3536
  %3657 = vmatpush.msra.mxu0 %v3534
  %3658 = vmatpush.msra.mxu0 %v3532
  %3659 = vmatpush.msra.mxu0 %v3530
  %3660 = vmatmul.f32.gmra.mxu0 %v3503
  %v3661 = vpop.f32.mrf.mxu0
  %v3662 = vadd.f32 0.0, %v3661
  %3663 = vmatmul.f32.gmra.mxu0 %v3505
  %v3664 = vpop.f32.mrf.mxu0
  %v3665 = vadd.f32 0.0, %v3664
  %3666 = vmatmul.f32.gmra.mxu0 %v3507
  %v3667 = vpop.f32.mrf.mxu0
  %v3668 = vadd.f32 0.0, %v3667
  %3669 = vmatmul.f32.gmra.mxu0 %v3509
  %v3670 = vpop.f32.mrf.mxu0
  %v3671 = vadd.f32 0.0, %v3670
  %3672 = vmatmul.f32.gmra.mxu0 %v3511
  %v3673 = vpop.f32.mrf.mxu0
  %v3674 = vadd.f32 0.0, %v3673
  %3675 = vmatmul.f32.gmra.mxu0 %v3513
  %v3676 = vpop.f32.mrf.mxu0
  %v3677 = vadd.f32 0.0, %v3676
  %3678 = vmatmul.f32.gmra.mxu0 %v3515
  %v3679 = vpop.f32.mrf.mxu0
  %v3680 = vadd.f32 0.0, %v3679
  %3681 = vmatmul.f32.gmra.mxu0 %v3517
  %v3682 = vpop.f32.mrf.mxu0
  %v3683 = vadd.f32 0.0, %v3682
  %3684 = vmatmul.f32.gmra.mxu0 %v3519
  %v3685 = vpop.f32.mrf.mxu0
  %v3686 = vadd.f32 0.0, %v3685
  %3687 = vmatmul.f32.gmra.mxu0 %v3521
  %v3688 = vpop.f32.mrf.mxu0
  %v3689 = vadd.f32 0.0, %v3688
  %3690 = vmatmul.f32.gmra.mxu0 %v3523
  %v3691 = vpop.f32.mrf.mxu0
  %v3692 = vadd.f32 0.0, %v3691
  %3693 = vmatmul.f32.gmra.mxu0 %v3525
  %v3694 = vpop.f32.mrf.mxu0
  %v3695 = vadd.f32 0.0, %v3694
  %3696 = vmatmul.f32.gmra.mxu0 %v3527
  %v3697 = vpop.f32.mrf.mxu0
  %v3698 = vadd.f32 0.0, %v3697
  %3699 = vdwg.mxu0
  %3700 = vmatpush.msra.mxu0 0.0
  %3701 = vmatpush.msra.mxu0 0.0
  %3702 = vmatpush.msra.mxu0 0.0
  %3703 = vmatpush.msra.mxu0 0.0
  %3704 = vmatpush.msra.mxu0 0.0
  %3705 = vmatpush.msra.mxu0 0.0
  %3706 = vmatpush.msra.mxu0 0.0
  %3707 = vmatpush.msra.mxu0 %v3642
  %3708 = vmatpush.msra.mxu0 %v3576
  %3709 = vmatpush.msra.mxu0 %v3574
  %3710 = vmatpush.msra.mxu0 %v3572
  %3711 = vmatpush.msra.mxu0 %v3570
  %3712 = vmatpush.msra.mxu0 %v3568
  %3713 = vmatpush.msra.mxu0 %v3566
  %3714 = vmatpush.msra.mxu0 %v3564
  %3715 = vmatpush.msra.mxu0 %v3562
  %3716 = vmatmul.f32.gmra.mxu0 %v3604
  %v3717 = vpop.f32.mrf.mxu0
  %v3718 = vadd.f32 %v3662, %v3717
  %3719 = vmatmul.f32.gmra.mxu0 %v3607
  %v3720 = vpop.f32.mrf.mxu0
  %v3721 = vadd.f32 %v3665, %v3720
  %3722 = vmatmul.f32.gmra.mxu0 %v3610
  %v3723 = vpop.f32.mrf.mxu0
  %v3724 = vadd.f32 %v3668, %v3723
  %3725 = vmatmul.f32.gmra.mxu0 %v3613
  %v3726 = vpop.f32.mrf.mxu0
  %v3727 = vadd.f32 %v3671, %v3726
  %3728 = vmatmul.f32.gmra.mxu0 %v3616
  %v3729 = vpop.f32.mrf.mxu0
  %v3730 = vadd.f32 %v3674, %v3729
  %3731 = vmatmul.f32.gmra.mxu0 %v3619
  %v3732 = vpop.f32.mrf.mxu0
  %v3733 = vadd.f32 %v3677, %v3732
  %3734 = vmatmul.f32.gmra.mxu0 %v3622
  %v3735 = vpop.f32.mrf.mxu0
  %v3736 = vadd.f32 %v3680, %v3735
  %3737 = vmatmul.f32.gmra.mxu0 %v3625
  %v3738 = vpop.f32.mrf.mxu0
  %v3739 = vadd.f32 %v3683, %v3738
  %3740 = vmatmul.f32.gmra.mxu0 %v3628
  %v3741 = vpop.f32.mrf.mxu0
  %v3742 = vadd.f32 %v3686, %v3741
  %3743 = vmatmul.f32.gmra.mxu0 %v3631
  %v3744 = vpop.f32.mrf.mxu0
  %v3745 = vadd.f32 %v3689, %v3744
  %3746 = vmatmul.f32.gmra.mxu0 %v3634
  %v3747 = vpop.f32.mrf.mxu0
  %v3748 = vadd.f32 %v3692, %v3747
  %3749 = vmatmul.f32.gmra.mxu0 %v3637
  %v3750 = vpop.f32.mrf.mxu0
  %v3751 = vadd.f32 %v3695, %v3750
  %3752 = vmatmul.f32.gmra.mxu0 %v3640
  %v3753 = vpop.f32.mrf.mxu0
  %v3754 = vadd.f32 %v3698, %v3753
  %3755 = vdwg.mxu0
  %v3756 = vadd.f32 %v3386, %v3718
  %v3757 = vadd.f32 %v3387, %v3721
  %v3758 = vadd.f32 %v3388, %v3724
  %v3759 = vadd.f32 %v3389, %v3727
  %v3760 = vadd.f32 %v3390, %v3730
  %v3761 = vadd.f32 %v3391, %v3733
  %v3762 = vadd.f32 %v3392, %v3736
  %v3763 = vadd.f32 %v3393, %v3739
  %v3764 = vadd.f32 %v3394, %v3742
  %v3765 = vadd.f32 %v3395, %v3745
  %v3766 = vadd.f32 %v3396, %v3748
  %v3767 = vadd.f32 %v3397, %v3751
  %v3768 = vadd.f32 %v3398, %v3754
  %v3769 = vadd.s32 %v2337, 8
  %v3770 = vadd.s32 %v2338, 8
  %v3771 = vadd.s32 %v2339, 8
  %v3772 = vadd.s32 %v2340, 8
  %v3773 = vadd.s32 %v2341, 8
  %v3774 = vadd.s32 %v2342, 8
  %v3775 = vadd.s32 %v2343, 8
  %v3776 = vadd.s32 %v2344, 8
  %v3777 = vadd.s32 %v2345, 8
  %v3778 = vadd.s32 %v2346, 8
  %v3779 = vadd.s32 %v2347, 8
  %v3780 = vadd.s32 %v2348, 8
  %v3781 = vadd.s32 %v2349, 8
  %3782 = vset.pattern.permute.xlu0 0
  %3783 = vperm.xlu0 %3782, %v3769
  %v3784 = vpop.permute.xlu0 %3783
  %3785 = vset.pattern.permute.xlu0 0
  %3786 = vperm.xlu0 %3785, %v3770
  %v3787 = vpop.permute.xlu0 %3786
  %3788 = vset.pattern.permute.xlu0 0
  %3789 = vperm.xlu0 %3788, %v3771
  %v3790 = vpop.permute.xlu0 %3789
  %3791 = vset.pattern.permute.xlu0 0
  %3792 = vperm.xlu0 %3791, %v3772
  %v3793 = vpop.permute.xlu0 %3792
  %3794 = vset.pattern.permute.xlu0 0
  %3795 = vperm.xlu0 %3794, %v3773
  %v3796 = vpop.permute.xlu0 %3795
  %3797 = vset.pattern.permute.xlu0 0
  %3798 = vperm.xlu0 %3797, %v3774
  %v3799 = vpop.permute.xlu0 %3798
  %3800 = vset.pattern.permute.xlu0 0
  %3801 = vperm.xlu0 %3800, %v3775
  %v3802 = vpop.permute.xlu0 %3801
  %3803 = vset.pattern.permute.xlu0 0
  %3804 = vperm.xlu0 %3803, %v3776
  %v3805 = vpop.permute.xlu0 %3804
  %3806 = vset.pattern.permute.xlu0 0
  %3807 = vperm.xlu0 %3806, %v3777
  %v3808 = vpop.permute.xlu0 %3807
  %3809 = vset.pattern.permute.xlu0 0
  %3810 = vperm.xlu0 %3809, %v3778
  %v3811 = vpop.permute.xlu0 %3810
  %3812 = vset.pattern.permute.xlu0 0
  %3813 = vperm.xlu0 %3812, %v3779
  %v3814 = vpop.permute.xlu0 %3813
  %3815 = vset.pattern.permute.xlu0 0
  %3816 = vperm.xlu0 %3815, %v3780
  %v3817 = vpop.permute.xlu0 %3816
  %3818 = vset.pattern.permute.xlu0 0
  %3819 = vperm.xlu0 %3818, %v3781
  %v3820 = vpop.permute.xlu0 %3819
  %vm3821 = vcmp.eq.s32.totalorder %v2335, %v3784
  %vm3822 = vcmp.eq.s32.totalorder %v2336, %v3784
  %vm3823 = vcmp.eq.s32.totalorder %v2335, %v3787
  %vm3824 = vcmp.eq.s32.totalorder %v2336, %v3787
  %vm3825 = vcmp.eq.s32.totalorder %v2335, %v3790
  %vm3826 = vcmp.eq.s32.totalorder %v2336, %v3790
  %vm3827 = vcmp.eq.s32.totalorder %v2335, %v3793
  %vm3828 = vcmp.eq.s32.totalorder %v2336, %v3793
  %vm3829 = vcmp.eq.s32.totalorder %v2335, %v3796
  %vm3830 = vcmp.eq.s32.totalorder %v2336, %v3796
  %vm3831 = vcmp.eq.s32.totalorder %v2335, %v3799
  %vm3832 = vcmp.eq.s32.totalorder %v2336, %v3799
  %vm3833 = vcmp.eq.s32.totalorder %v2335, %v3802
  %vm3834 = vcmp.eq.s32.totalorder %v2336, %v3802
  %vm3835 = vcmp.eq.s32.totalorder %v2335, %v3805
  %vm3836 = vcmp.eq.s32.totalorder %v2336, %v3805
  %vm3837 = vcmp.eq.s32.totalorder %v2335, %v3808
  %vm3838 = vcmp.eq.s32.totalorder %v2336, %v3808
  %vm3839 = vcmp.eq.s32.totalorder %v2335, %v3811
  %vm3840 = vcmp.eq.s32.totalorder %v2336, %v3811
  %vm3841 = vcmp.eq.s32.totalorder %v2335, %v3814
  %vm3842 = vcmp.eq.s32.totalorder %v2336, %v3814
  %vm3843 = vcmp.eq.s32.totalorder %v2335, %v3817
  %vm3844 = vcmp.eq.s32.totalorder %v2336, %v3817
  %vm3845 = vcmp.eq.s32.totalorder %v2335, %v3820
  %vm3846 = vcmp.eq.s32.totalorder %v2336, %v3820
  %v3847 = vsel %vm3821, 1, 0
  %v3848 = vsel %vm3822, 1, 0
  %v3849 = vsel %vm3823, 1, 0
  %v3850 = vsel %vm3824, 1, 0
  %v3851 = vsel %vm3825, 1, 0
  %v3852 = vsel %vm3826, 1, 0
  %v3853 = vsel %vm3827, 1, 0
  %v3854 = vsel %vm3828, 1, 0
  %v3855 = vsel %vm3829, 1, 0
  %v3856 = vsel %vm3830, 1, 0
  %v3857 = vsel %vm3831, 1, 0
  %v3858 = vsel %vm3832, 1, 0
  %v3859 = vsel %vm3833, 1, 0
  %v3860 = vsel %vm3834, 1, 0
  %v3861 = vsel %vm3835, 1, 0
  %v3862 = vsel %vm3836, 1, 0
  %v3863 = vsel %vm3837, 1, 0
  %v3864 = vsel %vm3838, 1, 0
  %v3865 = vsel %vm3839, 1, 0
  %v3866 = vsel %vm3840, 1, 0
  %v3867 = vsel %vm3841, 1, 0
  %v3868 = vsel %vm3842, 1, 0
  %v3869 = vsel %vm3843, 1, 0
  %v3870 = vsel %vm3844, 1, 0
  %v3871 = vsel %vm3845, 1, 0
  %v3872 = vsel %vm3846, 1, 0
  %v3873 = vcvt.s32.f32 %v3847
  %v3874 = vcvt.s32.f32 %v3848
  %v3875 = vcvt.s32.f32 %v3849
  %v3876 = vcvt.s32.f32 %v3850
  %v3877 = vcvt.s32.f32 %v3851
  %v3878 = vcvt.s32.f32 %v3852
  %v3879 = vcvt.s32.f32 %v3853
  %v3880 = vcvt.s32.f32 %v3854
  %v3881 = vcvt.s32.f32 %v3855
  %v3882 = vcvt.s32.f32 %v3856
  %v3883 = vcvt.s32.f32 %v3857
  %v3884 = vcvt.s32.f32 %v3858
  %v3885 = vcvt.s32.f32 %v3859
  %v3886 = vcvt.s32.f32 %v3860
  %v3887 = vcvt.s32.f32 %v3861
  %v3888 = vcvt.s32.f32 %v3862
  %v3889 = vcvt.s32.f32 %v3863
  %v3890 = vcvt.s32.f32 %v3864
  %v3891 = vcvt.s32.f32 %v3865
  %v3892 = vcvt.s32.f32 %v3866
  %v3893 = vcvt.s32.f32 %v3867
  %v3894 = vcvt.s32.f32 %v3868
  %v3895 = vcvt.s32.f32 %v3869
  %v3896 = vcvt.s32.f32 %v3870
  %v3897 = vcvt.s32.f32 %v3871
  %v3898 = vcvt.s32.f32 %v3872
  %v3899 = vld [vmem:[#allocation4 + $0x8] sm:$0xff]
  %v3900 = vld [vmem:[#allocation4 + $0x20] sm:$0xff]
  %v3901 = vld [vmem:[#allocation4 + $0x38] sm:$0xff]
  %v3902 = vld [vmem:[#allocation4 + $0x50] sm:$0xff]
  %v3903 = vld [vmem:[#allocation4 + $0x68] sm:$0xff]
  %v3904 = vld [vmem:[#allocation4 + $0x80] sm:$0xff]
  %v3905 = vld [vmem:[#allocation4 + $0x98] sm:$0xff]
  %v3906 = vld [vmem:[#allocation4 + $0xb0] sm:$0xff]
  %v3907 = vld [vmem:[#allocation4 + $0xc8] sm:$0xff]
  %v3908 = vld [vmem:[#allocation4 + $0xe0] sm:$0xff]
  %v3909 = vld [vmem:[#allocation4 + $0xf8] sm:$0xff]
  %v3910 = vld [vmem:[#allocation4 + $0x110] sm:$0xff]
  %v3911 = vld [vmem:[#allocation4 + $0x128] sm:$0xff]
  %v3912 = vld [vmem:[#allocation4 + $0x140] sm:$0xff]
  %v3913 = vld [vmem:[#allocation4 + $0x158] sm:$0xff]
  %v3914 = vld [vmem:[#allocation4 + $0x170] sm:$0xff]
  %v3915 = vld [vmem:[#allocation4 + $0x188] sm:$0xff]
  %v3916 = vld [vmem:[#allocation4 + $0x1a0] sm:$0xff]
  %v3917 = vld [vmem:[#allocation4 + $0x1b8] sm:$0xff]
  %v3918 = vld [vmem:[#allocation4 + $0x1d0] sm:$0xff]
  %v3919 = vld [vmem:[#allocation4 + $0x1e8] sm:$0xff]
  %v3920 = vld [vmem:[#allocation4 + $0x200] sm:$0xff]
  %v3921 = vld [vmem:[#allocation4 + $0x218] sm:$0xff]
  %v3922 = vld [vmem:[#allocation4 + $0x230] sm:$0xff]
  %v3923 = vld [vmem:[#allocation4 + $0x248] sm:$0xf]
  %v3925 = vsel %vm2721, %v3874, 0
  %v3928 = vsel %vm2721, %v3876, 0
  %v3931 = vsel %vm2721, %v3878, 0
  %v3934 = vsel %vm2721, %v3880, 0
  %v3937 = vsel %vm2721, %v3882, 0
  %v3940 = vsel %vm2721, %v3884, 0
  %v3943 = vsel %vm2721, %v3886, 0
  %v3946 = vsel %vm2721, %v3888, 0
  %v3949 = vsel %vm2721, %v3890, 0
  %v3952 = vsel %vm2721, %v3892, 0
  %v3955 = vsel %vm2721, %v3894, 0
  %v3958 = vsel %vm2721, %v3896, 0
  %v3961 = vsel %vm2721, %v3898, 0
  %v3964 = vsel %vm2761, %v3923, 0
  %3966 = vmatpush.msra.mxu0 %v3914
  %3967 = vmatpush.msra.mxu0 %v3913
  %3968 = vmatpush.msra.mxu0 %v3912
  %3969 = vmatpush.msra.mxu0 %v3911
  %3970 = vmatpush.msra.mxu0 %v3910
  %3971 = vmatpush.msra.mxu0 %v3909
  %3972 = vmatpush.msra.mxu0 %v3908
  %3973 = vmatpush.msra.mxu0 %v3907
  %3974 = vmatpush.msra.mxu0 %v3906
  %3975 = vmatpush.msra.mxu0 %v3905
  %3976 = vmatpush.msra.mxu0 %v3904
  %3977 = vmatpush.msra.mxu0 %v3903
  %3978 = vmatpush.msra.mxu0 %v3902
  %3979 = vmatpush.msra.mxu0 %v3901
  %3980 = vmatpush.msra.mxu0 %v3900
  %3981 = vmatpush.msra.mxu0 %v3899
  %3982 = vmatmul.f32.gmra.mxu0 %v3873
  %v3983 = vpop.f32.mrf.mxu0
  %v3984 = vadd.f32 0.0, %v3983
  %3985 = vmatmul.f32.gmra.mxu0 %v3875
  %v3986 = vpop.f32.mrf.mxu0
  %v3987 = vadd.f32 0.0, %v3986
  %3988 = vmatmul.f32.gmra.mxu0 %v3877
  %v3989 = vpop.f32.mrf.mxu0
  %v3990 = vadd.f32 0.0, %v3989
  %3991 = vmatmul.f32.gmra.mxu0 %v3879
  %v3992 = vpop.f32.mrf.mxu0
  %v3993 = vadd.f32 0.0, %v3992
  %3994 = vmatmul.f32.gmra.mxu0 %v3881
  %v3995 = vpop.f32.mrf.mxu0
  %v3996 = vadd.f32 0.0, %v3995
  %3997 = vmatmul.f32.gmra.mxu0 %v3883
  %v3998 = vpop.f32.mrf.mxu0
  %v3999 = vadd.f32 0.0, %v3998
  %4000 = vmatmul.f32.gmra.mxu0 %v3885
  %v4001 = vpop.f32.mrf.mxu0
  %v4002 = vadd.f32 0.0, %v4001
  %4003 = vmatmul.f32.gmra.mxu0 %v3887
  %v4004 = vpop.f32.mrf.mxu0
  %v4005 = vadd.f32 0.0, %v4004
  %4006 = vmatmul.f32.gmra.mxu0 %v3889
  %v4007 = vpop.f32.mrf.mxu0
  %v4008 = vadd.f32 0.0, %v4007
  %4009 = vmatmul.f32.gmra.mxu0 %v3891
  %v4010 = vpop.f32.mrf.mxu0
  %v4011 = vadd.f32 0.0, %v4010
  %4012 = vmatmul.f32.gmra.mxu0 %v3893
  %v4013 = vpop.f32.mrf.mxu0
  %v4014 = vadd.f32 0.0, %v4013
  %4015 = vmatmul.f32.gmra.mxu0 %v3895
  %v4016 = vpop.f32.mrf.mxu0
  %v4017 = vadd.f32 0.0, %v4016
  %4018 = vmatmul.f32.gmra.mxu0 %v3897
  %v4019 = vpop.f32.mrf.mxu0
  %v4020 = vadd.f32 0.0, %v4019
  %4021 = vdwg.mxu0
  %4022 = vmatpush.msra.mxu0 0.0
  %4023 = vmatpush.msra.mxu0 0.0
  %4024 = vmatpush.msra.mxu0 0.0
  %4025 = vmatpush.msra.mxu0 0.0
  %4026 = vmatpush.msra.mxu0 0.0
  %4027 = vmatpush.msra.mxu0 0.0
  %4028 = vmatpush.msra.mxu0 0.0
  %4029 = vmatpush.msra.mxu0 %v3964
  %4030 = vmatpush.msra.mxu0 %v3922
  %4031 = vmatpush.msra.mxu0 %v3921
  %4032 = vmatpush.msra.mxu0 %v3920
  %4033 = vmatpush.msra.mxu0 %v3919
  %4034 = vmatpush.msra.mxu0 %v3918
  %4035 = vmatpush.msra.mxu0 %v3917
  %4036 = vmatpush.msra.mxu0 %v3916
  %4037 = vmatpush.msra.mxu0 %v3915
  %4038 = vmatmul.f32.gmra.mxu0 %v3925
  %v4039 = vpop.f32.mrf.mxu0
  %v4040 = vadd.f32 %v3984, %v4039
  %4041 = vmatmul.f32.gmra.mxu0 %v3928
  %v4042 = vpop.f32.mrf.mxu0
  %v4043 = vadd.f32 %v3987, %v4042
  %4044 = vmatmul.f32.gmra.mxu0 %v3931
  %v4045 = vpop.f32.mrf.mxu0
  %v4046 = vadd.f32 %v3990, %v4045
  %4047 = vmatmul.f32.gmra.mxu0 %v3934
  %v4048 = vpop.f32.mrf.mxu0
  %v4049 = vadd.f32 %v3993, %v4048
  %4050 = vmatmul.f32.gmra.mxu0 %v3937
  %v4051 = vpop.f32.mrf.mxu0
  %v4052 = vadd.f32 %v3996, %v4051
  %4053 = vmatmul.f32.gmra.mxu0 %v3940
  %v4054 = vpop.f32.mrf.mxu0
  %v4055 = vadd.f32 %v3999, %v4054
  %4056 = vmatmul.f32.gmra.mxu0 %v3943
  %v4057 = vpop.f32.mrf.mxu0
  %v4058 = vadd.f32 %v4002, %v4057
  %4059 = vmatmul.f32.gmra.mxu0 %v3946
  %v4060 = vpop.f32.mrf.mxu0
  %v4061 = vadd.f32 %v4005, %v4060
  %4062 = vmatmul.f32.gmra.mxu0 %v3949
  %v4063 = vpop.f32.mrf.mxu0
  %v4064 = vadd.f32 %v4008, %v4063
  %4065 = vmatmul.f32.gmra.mxu0 %v3952
  %v4066 = vpop.f32.mrf.mxu0
  %v4067 = vadd.f32 %v4011, %v4066
  %4068 = vmatmul.f32.gmra.mxu0 %v3955
  %v4069 = vpop.f32.mrf.mxu0
  %v4070 = vadd.f32 %v4014, %v4069
  %4071 = vmatmul.f32.gmra.mxu0 %v3958
  %v4072 = vpop.f32.mrf.mxu0
  %v4073 = vadd.f32 %v4017, %v4072
  %4074 = vmatmul.f32.gmra.mxu0 %v3961
  %v4075 = vpop.f32.mrf.mxu0
  %v4076 = vadd.f32 %v4020, %v4075
  %4077 = vdwg.mxu0
  %v4078 = vadd.f32 %v3756, %v4040
  %v4079 = vadd.f32 %v3757, %v4043
  %v4080 = vadd.f32 %v3758, %v4046
  %v4081 = vadd.f32 %v3759, %v4049
  %v4082 = vadd.f32 %v3760, %v4052
  %v4083 = vadd.f32 %v3761, %v4055
  %v4084 = vadd.f32 %v3762, %v4058
  %v4085 = vadd.f32 %v3763, %v4061
  %v4086 = vadd.f32 %v3764, %v4064
  %v4087 = vadd.f32 %v3765, %v4067
  %v4088 = vadd.f32 %v3766, %v4070
  %v4089 = vadd.f32 %v3767, %v4073
  %v4090 = vadd.f32 %v3768, %v4076
  %v4091 = vadd.s32 %v2337, 9
  %v4092 = vadd.s32 %v2338, 9
  %v4093 = vadd.s32 %v2339, 9
  %v4094 = vadd.s32 %v2340, 9
  %v4095 = vadd.s32 %v2341, 9
  %v4096 = vadd.s32 %v2342, 9
  %v4097 = vadd.s32 %v2343, 9
  %v4098 = vadd.s32 %v2344, 9
  %v4099 = vadd.s32 %v2345, 9
  %v4100 = vadd.s32 %v2346, 9
  %v4101 = vadd.s32 %v2347, 9
  %v4102 = vadd.s32 %v2348, 9
  %v4103 = vadd.s32 %v2349, 9
  %4104 = vset.pattern.permute.xlu0 0
  %4105 = vperm.xlu0 %4104, %v4091
  %v4106 = vpop.permute.xlu0 %4105
  %4107 = vset.pattern.permute.xlu0 0
  %4108 = vperm.xlu0 %4107, %v4092
  %v4109 = vpop.permute.xlu0 %4108
  %4110 = vset.pattern.permute.xlu0 0
  %4111 = vperm.xlu0 %4110, %v4093
  %v4112 = vpop.permute.xlu0 %4111
  %4113 = vset.pattern.permute.xlu0 0
  %4114 = vperm.xlu0 %4113, %v4094
  %v4115 = vpop.permute.xlu0 %4114
  %4116 = vset.pattern.permute.xlu0 0
  %4117 = vperm.xlu0 %4116, %v4095
  %v4118 = vpop.permute.xlu0 %4117
  %4119 = vset.pattern.permute.xlu0 0
  %4120 = vperm.xlu0 %4119, %v4096
  %v4121 = vpop.permute.xlu0 %4120
  %4122 = vset.pattern.permute.xlu0 0
  %4123 = vperm.xlu0 %4122, %v4097
  %v4124 = vpop.permute.xlu0 %4123
  %4125 = vset.pattern.permute.xlu0 0
  %4126 = vperm.xlu0 %4125, %v4098
  %v4127 = vpop.permute.xlu0 %4126
  %4128 = vset.pattern.permute.xlu0 0
  %4129 = vperm.xlu0 %4128, %v4099
  %v4130 = vpop.permute.xlu0 %4129
  %4131 = vset.pattern.permute.xlu0 0
  %4132 = vperm.xlu0 %4131, %v4100
  %v4133 = vpop.permute.xlu0 %4132
  %4134 = vset.pattern.permute.xlu0 0
  %4135 = vperm.xlu0 %4134, %v4101
  %v4136 = vpop.permute.xlu0 %4135
  %4137 = vset.pattern.permute.xlu0 0
  %4138 = vperm.xlu0 %4137, %v4102
  %v4139 = vpop.permute.xlu0 %4138
  %4140 = vset.pattern.permute.xlu0 0
  %4141 = vperm.xlu0 %4140, %v4103
  %v4142 = vpop.permute.xlu0 %4141
  %vm4143 = vcmp.eq.s32.totalorder %v2335, %v4106
  %vm4144 = vcmp.eq.s32.totalorder %v2336, %v4106
  %vm4145 = vcmp.eq.s32.totalorder %v2335, %v4109
  %vm4146 = vcmp.eq.s32.totalorder %v2336, %v4109
  %vm4147 = vcmp.eq.s32.totalorder %v2335, %v4112
  %vm4148 = vcmp.eq.s32.totalorder %v2336, %v4112
  %vm4149 = vcmp.eq.s32.totalorder %v2335, %v4115
  %vm4150 = vcmp.eq.s32.totalorder %v2336, %v4115
  %vm4151 = vcmp.eq.s32.totalorder %v2335, %v4118
  %vm4152 = vcmp.eq.s32.totalorder %v2336, %v4118
  %vm4153 = vcmp.eq.s32.totalorder %v2335, %v4121
  %vm4154 = vcmp.eq.s32.totalorder %v2336, %v4121
  %vm4155 = vcmp.eq.s32.totalorder %v2335, %v4124
  %vm4156 = vcmp.eq.s32.totalorder %v2336, %v4124
  %vm4157 = vcmp.eq.s32.totalorder %v2335, %v4127
  %vm4158 = vcmp.eq.s32.totalorder %v2336, %v4127
  %vm4159 = vcmp.eq.s32.totalorder %v2335, %v4130
  %vm4160 = vcmp.eq.s32.totalorder %v2336, %v4130
  %vm4161 = vcmp.eq.s32.totalorder %v2335, %v4133
  %vm4162 = vcmp.eq.s32.totalorder %v2336, %v4133
  %vm4163 = vcmp.eq.s32.totalorder %v2335, %v4136
  %vm4164 = vcmp.eq.s32.totalorder %v2336, %v4136
  %vm4165 = vcmp.eq.s32.totalorder %v2335, %v4139
  %vm4166 = vcmp.eq.s32.totalorder %v2336, %v4139
  %vm4167 = vcmp.eq.s32.totalorder %v2335, %v4142
  %vm4168 = vcmp.eq.s32.totalorder %v2336, %v4142
  %v4169 = vsel %vm4143, 1, 0
  %v4170 = vsel %vm4144, 1, 0
  %v4171 = vsel %vm4145, 1, 0
  %v4172 = vsel %vm4146, 1, 0
  %v4173 = vsel %vm4147, 1, 0
  %v4174 = vsel %vm4148, 1, 0
  %v4175 = vsel %vm4149, 1, 0
  %v4176 = vsel %vm4150, 1, 0
  %v4177 = vsel %vm4151, 1, 0
  %v4178 = vsel %vm4152, 1, 0
  %v4179 = vsel %vm4153, 1, 0
  %v4180 = vsel %vm4154, 1, 0
  %v4181 = vsel %vm4155, 1, 0
  %v4182 = vsel %vm4156, 1, 0
  %v4183 = vsel %vm4157, 1, 0
  %v4184 = vsel %vm4158, 1, 0
  %v4185 = vsel %vm4159, 1, 0
  %v4186 = vsel %vm4160, 1, 0
  %v4187 = vsel %vm4161, 1, 0
  %v4188 = vsel %vm4162, 1, 0
  %v4189 = vsel %vm4163, 1, 0
  %v4190 = vsel %vm4164, 1, 0
  %v4191 = vsel %vm4165, 1, 0
  %v4192 = vsel %vm4166, 1, 0
  %v4193 = vsel %vm4167, 1, 0
  %v4194 = vsel %vm4168, 1, 0
  %v4195 = vcvt.s32.f32 %v4169
  %v4196 = vcvt.s32.f32 %v4170
  %v4197 = vcvt.s32.f32 %v4171
  %v4198 = vcvt.s32.f32 %v4172
  %v4199 = vcvt.s32.f32 %v4173
  %v4200 = vcvt.s32.f32 %v4174
  %v4201 = vcvt.s32.f32 %v4175
  %v4202 = vcvt.s32.f32 %v4176
  %v4203 = vcvt.s32.f32 %v4177
  %v4204 = vcvt.s32.f32 %v4178
  %v4205 = vcvt.s32.f32 %v4179
  %v4206 = vcvt.s32.f32 %v4180
  %v4207 = vcvt.s32.f32 %v4181
  %v4208 = vcvt.s32.f32 %v4182
  %v4209 = vcvt.s32.f32 %v4183
  %v4210 = vcvt.s32.f32 %v4184
  %v4211 = vcvt.s32.f32 %v4185
  %v4212 = vcvt.s32.f32 %v4186
  %v4213 = vcvt.s32.f32 %v4187
  %v4214 = vcvt.s32.f32 %v4188
  %v4215 = vcvt.s32.f32 %v4189
  %v4216 = vcvt.s32.f32 %v4190
  %v4217 = vcvt.s32.f32 %v4191
  %v4218 = vcvt.s32.f32 %v4192
  %v4219 = vcvt.s32.f32 %v4193
  %v4220 = vcvt.s32.f32 %v4194
  %4245 = vrot.lane.b32.xlu0 %v3899, 96
  %v4246 = vpop.permute.xlu0 %4245
  %4247 = vrot.lane.b32.xlu0 %v3900, 96
  %v4248 = vpop.permute.xlu0 %4247
  %4249 = vrot.lane.b32.xlu0 %v3901, 96
  %v4250 = vpop.permute.xlu0 %4249
  %4251 = vrot.lane.b32.xlu0 %v3902, 96
  %v4252 = vpop.permute.xlu0 %4251
  %4253 = vrot.lane.b32.xlu0 %v3903, 96
  %v4254 = vpop.permute.xlu0 %4253
  %4255 = vrot.lane.b32.xlu0 %v3904, 96
  %v4256 = vpop.permute.xlu0 %4255
  %4257 = vrot.lane.b32.xlu0 %v3905, 96
  %v4258 = vpop.permute.xlu0 %4257
  %4259 = vrot.lane.b32.xlu0 %v3906, 96
  %v4260 = vpop.permute.xlu0 %4259
  %4261 = vrot.lane.b32.xlu0 %v3907, 96
  %v4262 = vpop.permute.xlu0 %4261
  %4263 = vrot.lane.b32.xlu0 %v3908, 96
  %v4264 = vpop.permute.xlu0 %4263
  %4265 = vrot.lane.b32.xlu0 %v3909, 96
  %v4266 = vpop.permute.xlu0 %4265
  %4267 = vrot.lane.b32.xlu0 %v3910, 96
  %v4268 = vpop.permute.xlu0 %4267
  %4269 = vrot.lane.b32.xlu0 %v3911, 96
  %v4270 = vpop.permute.xlu0 %4269
  %4271 = vrot.lane.b32.xlu0 %v3912, 96
  %v4272 = vpop.permute.xlu0 %4271
  %4273 = vrot.lane.b32.xlu0 %v3913, 96
  %v4274 = vpop.permute.xlu0 %4273
  %4275 = vrot.lane.b32.xlu0 %v3914, 96
  %v4276 = vpop.permute.xlu0 %4275
  %4277 = vrot.lane.b32.xlu0 %v3915, 96
  %v4278 = vpop.permute.xlu0 %4277
  %4279 = vrot.lane.b32.xlu0 %v3916, 96
  %v4280 = vpop.permute.xlu0 %4279
  %4281 = vrot.lane.b32.xlu0 %v3917, 96
  %v4282 = vpop.permute.xlu0 %4281
  %4283 = vrot.lane.b32.xlu0 %v3918, 96
  %v4284 = vpop.permute.xlu0 %4283
  %4285 = vrot.lane.b32.xlu0 %v3919, 96
  %v4286 = vpop.permute.xlu0 %4285
  %4287 = vrot.lane.b32.xlu0 %v3920, 96
  %v4288 = vpop.permute.xlu0 %4287
  %4289 = vrot.lane.b32.xlu0 %v3921, 96
  %v4290 = vpop.permute.xlu0 %4289
  %4291 = vrot.lane.b32.xlu0 %v3922, 96
  %v4292 = vpop.permute.xlu0 %4291
  %4293 = vrot.lane.b32.xlu0 %v3923, 96
  %v4294 = vpop.permute.xlu0 %4293
  %v4320 = vsel %vm2721, %v4196, 0
  %v4323 = vsel %vm2721, %v4198, 0
  %v4326 = vsel %vm2721, %v4200, 0
  %v4329 = vsel %vm2721, %v4202, 0
  %v4332 = vsel %vm2721, %v4204, 0
  %v4335 = vsel %vm2721, %v4206, 0
  %v4338 = vsel %vm2721, %v4208, 0
  %v4341 = vsel %vm2721, %v4210, 0
  %v4344 = vsel %vm2721, %v4212, 0
  %v4347 = vsel %vm2721, %v4214, 0
  %v4350 = vsel %vm2721, %v4216, 0
  %v4353 = vsel %vm2721, %v4218, 0
  %v4356 = vsel %vm2721, %v4220, 0
  %v4358 = vsel %vm2761, %v4294, 0
  %4360 = vmatpush.msra.mxu0 %v4276
  %4361 = vmatpush.msra.mxu0 %v4274
  %4362 = vmatpush.msra.mxu0 %v4272
  %4363 = vmatpush.msra.mxu0 %v4270
  %4364 = vmatpush.msra.mxu0 %v4268
  %4365 = vmatpush.msra.mxu0 %v4266
  %4366 = vmatpush.msra.mxu0 %v4264
  %4367 = vmatpush.msra.mxu0 %v4262
  %4368 = vmatpush.msra.mxu0 %v4260
  %4369 = vmatpush.msra.mxu0 %v4258
  %4370 = vmatpush.msra.mxu0 %v4256
  %4371 = vmatpush.msra.mxu0 %v4254
  %4372 = vmatpush.msra.mxu0 %v4252
  %4373 = vmatpush.msra.mxu0 %v4250
  %4374 = vmatpush.msra.mxu0 %v4248
  %4375 = vmatpush.msra.mxu0 %v4246
  %4376 = vmatmul.f32.gmra.mxu0 %v4195
  %v4377 = vpop.f32.mrf.mxu0
  %v4378 = vadd.f32 0.0, %v4377
  %4379 = vmatmul.f32.gmra.mxu0 %v4197
  %v4380 = vpop.f32.mrf.mxu0
  %v4381 = vadd.f32 0.0, %v4380
  %4382 = vmatmul.f32.gmra.mxu0 %v4199
  %v4383 = vpop.f32.mrf.mxu0
  %v4384 = vadd.f32 0.0, %v4383
  %4385 = vmatmul.f32.gmra.mxu0 %v4201
  %v4386 = vpop.f32.mrf.mxu0
  %v4387 = vadd.f32 0.0, %v4386
  %4388 = vmatmul.f32.gmra.mxu0 %v4203
  %v4389 = vpop.f32.mrf.mxu0
  %v4390 = vadd.f32 0.0, %v4389
  %4391 = vmatmul.f32.gmra.mxu0 %v4205
  %v4392 = vpop.f32.mrf.mxu0
  %v4393 = vadd.f32 0.0, %v4392
  %4394 = vmatmul.f32.gmra.mxu0 %v4207
  %v4395 = vpop.f32.mrf.mxu0
  %v4396 = vadd.f32 0.0, %v4395
  %4397 = vmatmul.f32.gmra.mxu0 %v4209
  %v4398 = vpop.f32.mrf.mxu0
  %v4399 = vadd.f32 0.0, %v4398
  %4400 = vmatmul.f32.gmra.mxu0 %v4211
  %v4401 = vpop.f32.mrf.mxu0
  %v4402 = vadd.f32 0.0, %v4401
  %4403 = vmatmul.f32.gmra.mxu0 %v4213
  %v4404 = vpop.f32.mrf.mxu0
  %v4405 = vadd.f32 0.0, %v4404
  %4406 = vmatmul.f32.gmra.mxu0 %v4215
  %v4407 = vpop.f32.mrf.mxu0
  %v4408 = vadd.f32 0.0, %v4407
  %4409 = vmatmul.f32.gmra.mxu0 %v4217
  %v4410 = vpop.f32.mrf.mxu0
  %v4411 = vadd.f32 0.0, %v4410
  %4412 = vmatmul.f32.gmra.mxu0 %v4219
  %v4413 = vpop.f32.mrf.mxu0
  %v4414 = vadd.f32 0.0, %v4413
  %4415 = vdwg.mxu0
  %4416 = vmatpush.msra.mxu0 0.0
  %4417 = vmatpush.msra.mxu0 0.0
  %4418 = vmatpush.msra.mxu0 0.0
  %4419 = vmatpush.msra.mxu0 0.0
  %4420 = vmatpush.msra.mxu0 0.0
  %4421 = vmatpush.msra.mxu0 0.0
  %4422 = vmatpush.msra.mxu0 0.0
  %4423 = vmatpush.msra.mxu0 %v4358
  %4424 = vmatpush.msra.mxu0 %v4292
  %4425 = vmatpush.msra.mxu0 %v4290
  %4426 = vmatpush.msra.mxu0 %v4288
  %4427 = vmatpush.msra.mxu0 %v4286
  %4428 = vmatpush.msra.mxu0 %v4284
  %4429 = vmatpush.msra.mxu0 %v4282
  %4430 = vmatpush.msra.mxu0 %v4280
  %4431 = vmatpush.msra.mxu0 %v4278
  %4432 = vmatmul.f32.gmra.mxu0 %v4320
  %v4433 = vpop.f32.mrf.mxu0
  %v4434 = vadd.f32 %v4378, %v4433
  %4435 = vmatmul.f32.gmra.mxu0 %v4323
  %v4436 = vpop.f32.mrf.mxu0
  %v4437 = vadd.f32 %v4381, %v4436
  %4438 = vmatmul.f32.gmra.mxu0 %v4326
  %v4439 = vpop.f32.mrf.mxu0
  %v4440 = vadd.f32 %v4384, %v4439
  %4441 = vmatmul.f32.gmra.mxu0 %v4329
  %v4442 = vpop.f32.mrf.mxu0
  %v4443 = vadd.f32 %v4387, %v4442
  %4444 = vmatmul.f32.gmra.mxu0 %v4332
  %v4445 = vpop.f32.mrf.mxu0
  %v4446 = vadd.f32 %v4390, %v4445
  %4447 = vmatmul.f32.gmra.mxu0 %v4335
  %v4448 = vpop.f32.mrf.mxu0
  %v4449 = vadd.f32 %v4393, %v4448
  %4450 = vmatmul.f32.gmra.mxu0 %v4338
  %v4451 = vpop.f32.mrf.mxu0
  %v4452 = vadd.f32 %v4396, %v4451
  %4453 = vmatmul.f32.gmra.mxu0 %v4341
  %v4454 = vpop.f32.mrf.mxu0
  %v4455 = vadd.f32 %v4399, %v4454
  %4456 = vmatmul.f32.gmra.mxu0 %v4344
  %v4457 = vpop.f32.mrf.mxu0
  %v4458 = vadd.f32 %v4402, %v4457
  %4459 = vmatmul.f32.gmra.mxu0 %v4347
  %v4460 = vpop.f32.mrf.mxu0
  %v4461 = vadd.f32 %v4405, %v4460
  %4462 = vmatmul.f32.gmra.mxu0 %v4350
  %v4463 = vpop.f32.mrf.mxu0
  %v4464 = vadd.f32 %v4408, %v4463
  %4465 = vmatmul.f32.gmra.mxu0 %v4353
  %v4466 = vpop.f32.mrf.mxu0
  %v4467 = vadd.f32 %v4411, %v4466
  %4468 = vmatmul.f32.gmra.mxu0 %v4356
  %v4469 = vpop.f32.mrf.mxu0
  %v4470 = vadd.f32 %v4414, %v4469
  %4471 = vdwg.mxu0
  %v4472 = vadd.f32 %v4078, %v4434
  %v4473 = vadd.f32 %v4079, %v4437
  %v4474 = vadd.f32 %v4080, %v4440
  %v4475 = vadd.f32 %v4081, %v4443
  %v4476 = vadd.f32 %v4082, %v4446
  %v4477 = vadd.f32 %v4083, %v4449
  %v4478 = vadd.f32 %v4084, %v4452
  %v4479 = vadd.f32 %v4085, %v4455
  %v4480 = vadd.f32 %v4086, %v4458
  %v4481 = vadd.f32 %v4087, %v4461
  %v4482 = vadd.f32 %v4088, %v4464
  %v4483 = vadd.f32 %v4089, %v4467
  %v4484 = vadd.f32 %v4090, %v4470
  %v4485 = vadd.s32 %v2337, 14
  %v4486 = vadd.s32 %v2338, 14
  %v4487 = vadd.s32 %v2339, 14
  %v4488 = vadd.s32 %v2340, 14
  %v4489 = vadd.s32 %v2341, 14
  %v4490 = vadd.s32 %v2342, 14
  %v4491 = vadd.s32 %v2343, 14
  %v4492 = vadd.s32 %v2344, 14
  %v4493 = vadd.s32 %v2345, 14
  %v4494 = vadd.s32 %v2346, 14
  %v4495 = vadd.s32 %v2347, 14
  %v4496 = vadd.s32 %v2348, 14
  %v4497 = vadd.s32 %v2349, 14
  %4498 = vset.pattern.permute.xlu0 0
  %4499 = vperm.xlu0 %4498, %v4485
  %v4500 = vpop.permute.xlu0 %4499
  %4501 = vset.pattern.permute.xlu0 0
  %4502 = vperm.xlu0 %4501, %v4486
  %v4503 = vpop.permute.xlu0 %4502
  %4504 = vset.pattern.permute.xlu0 0
  %4505 = vperm.xlu0 %4504, %v4487
  %v4506 = vpop.permute.xlu0 %4505
  %4507 = vset.pattern.permute.xlu0 0
  %4508 = vperm.xlu0 %4507, %v4488
  %v4509 = vpop.permute.xlu0 %4508
  %4510 = vset.pattern.permute.xlu0 0
  %4511 = vperm.xlu0 %4510, %v4489
  %v4512 = vpop.permute.xlu0 %4511
  %4513 = vset.pattern.permute.xlu0 0
  %4514 = vperm.xlu0 %4513, %v4490
  %v4515 = vpop.permute.xlu0 %4514
  %4516 = vset.pattern.permute.xlu0 0
  %4517 = vperm.xlu0 %4516, %v4491
  %v4518 = vpop.permute.xlu0 %4517
  %4519 = vset.pattern.permute.xlu0 0
  %4520 = vperm.xlu0 %4519, %v4492
  %v4521 = vpop.permute.xlu0 %4520
  %4522 = vset.pattern.permute.xlu0 0
  %4523 = vperm.xlu0 %4522, %v4493
  %v4524 = vpop.permute.xlu0 %4523
  %4525 = vset.pattern.permute.xlu0 0
  %4526 = vperm.xlu0 %4525, %v4494
  %v4527 = vpop.permute.xlu0 %4526
  %4528 = vset.pattern.permute.xlu0 0
  %4529 = vperm.xlu0 %4528, %v4495
  %v4530 = vpop.permute.xlu0 %4529
  %4531 = vset.pattern.permute.xlu0 0
  %4532 = vperm.xlu0 %4531, %v4496
  %v4533 = vpop.permute.xlu0 %4532
  %4534 = vset.pattern.permute.xlu0 0
  %4535 = vperm.xlu0 %4534, %v4497
  %v4536 = vpop.permute.xlu0 %4535
  %vm4537 = vcmp.eq.s32.totalorder %v2335, %v4500
  %vm4538 = vcmp.eq.s32.totalorder %v2336, %v4500
  %vm4539 = vcmp.eq.s32.totalorder %v2335, %v4503
  %vm4540 = vcmp.eq.s32.totalorder %v2336, %v4503
  %vm4541 = vcmp.eq.s32.totalorder %v2335, %v4506
  %vm4542 = vcmp.eq.s32.totalorder %v2336, %v4506
  %vm4543 = vcmp.eq.s32.totalorder %v2335, %v4509
  %vm4544 = vcmp.eq.s32.totalorder %v2336, %v4509
  %vm4545 = vcmp.eq.s32.totalorder %v2335, %v4512
  %vm4546 = vcmp.eq.s32.totalorder %v2336, %v4512
  %vm4547 = vcmp.eq.s32.totalorder %v2335, %v4515
  %vm4548 = vcmp.eq.s32.totalorder %v2336, %v4515
  %vm4549 = vcmp.eq.s32.totalorder %v2335, %v4518
  %vm4550 = vcmp.eq.s32.totalorder %v2336, %v4518
  %vm4551 = vcmp.eq.s32.totalorder %v2335, %v4521
  %vm4552 = vcmp.eq.s32.totalorder %v2336, %v4521
  %vm4553 = vcmp.eq.s32.totalorder %v2335, %v4524
  %vm4554 = vcmp.eq.s32.totalorder %v2336, %v4524
  %vm4555 = vcmp.eq.s32.totalorder %v2335, %v4527
  %vm4556 = vcmp.eq.s32.totalorder %v2336, %v4527
  %vm4557 = vcmp.eq.s32.totalorder %v2335, %v4530
  %vm4558 = vcmp.eq.s32.totalorder %v2336, %v4530
  %vm4559 = vcmp.eq.s32.totalorder %v2335, %v4533
  %vm4560 = vcmp.eq.s32.totalorder %v2336, %v4533
  %vm4561 = vcmp.eq.s32.totalorder %v2335, %v4536
  %vm4562 = vcmp.eq.s32.totalorder %v2336, %v4536
  %v4563 = vsel %vm4537, 1, 0
  %v4564 = vsel %vm4538, 1, 0
  %v4565 = vsel %vm4539, 1, 0
  %v4566 = vsel %vm4540, 1, 0
  %v4567 = vsel %vm4541, 1, 0
  %v4568 = vsel %vm4542, 1, 0
  %v4569 = vsel %vm4543, 1, 0
  %v4570 = vsel %vm4544, 1, 0
  %v4571 = vsel %vm4545, 1, 0
  %v4572 = vsel %vm4546, 1, 0
  %v4573 = vsel %vm4547, 1, 0
  %v4574 = vsel %vm4548, 1, 0
  %v4575 = vsel %vm4549, 1, 0
  %v4576 = vsel %vm4550, 1, 0
  %v4577 = vsel %vm4551, 1, 0
  %v4578 = vsel %vm4552, 1, 0
  %v4579 = vsel %vm4553, 1, 0
  %v4580 = vsel %vm4554, 1, 0
  %v4581 = vsel %vm4555, 1, 0
  %v4582 = vsel %vm4556, 1, 0
  %v4583 = vsel %vm4557, 1, 0
  %v4584 = vsel %vm4558, 1, 0
  %v4585 = vsel %vm4559, 1, 0
  %v4586 = vsel %vm4560, 1, 0
  %v4587 = vsel %vm4561, 1, 0
  %v4588 = vsel %vm4562, 1, 0
  %v4589 = vcvt.s32.f32 %v4563
  %v4590 = vcvt.s32.f32 %v4564
  %v4591 = vcvt.s32.f32 %v4565
  %v4592 = vcvt.s32.f32 %v4566
  %v4593 = vcvt.s32.f32 %v4567
  %v4594 = vcvt.s32.f32 %v4568
  %v4595 = vcvt.s32.f32 %v4569
  %v4596 = vcvt.s32.f32 %v4570
  %v4597 = vcvt.s32.f32 %v4571
  %v4598 = vcvt.s32.f32 %v4572
  %v4599 = vcvt.s32.f32 %v4573
  %v4600 = vcvt.s32.f32 %v4574
  %v4601 = vcvt.s32.f32 %v4575
  %v4602 = vcvt.s32.f32 %v4576
  %v4603 = vcvt.s32.f32 %v4577
  %v4604 = vcvt.s32.f32 %v4578
  %v4605 = vcvt.s32.f32 %v4579
  %v4606 = vcvt.s32.f32 %v4580
  %v4607 = vcvt.s32.f32 %v4581
  %v4608 = vcvt.s32.f32 %v4582
  %v4609 = vcvt.s32.f32 %v4583
  %v4610 = vcvt.s32.f32 %v4584
  %v4611 = vcvt.s32.f32 %v4585
  %v4612 = vcvt.s32.f32 %v4586
  %v4613 = vcvt.s32.f32 %v4587
  %v4614 = vcvt.s32.f32 %v4588
  %4615 = vrot.lane.b32.xlu0 %v3899, 64
  %v4616 = vpop.permute.xlu0 %4615
  %4617 = vrot.lane.b32.xlu0 %v3900, 64
  %v4618 = vpop.permute.xlu0 %4617
  %4619 = vrot.lane.b32.xlu0 %v3901, 64
  %v4620 = vpop.permute.xlu0 %4619
  %4621 = vrot.lane.b32.xlu0 %v3902, 64
  %v4622 = vpop.permute.xlu0 %4621
  %4623 = vrot.lane.b32.xlu0 %v3903, 64
  %v4624 = vpop.permute.xlu0 %4623
  %4625 = vrot.lane.b32.xlu0 %v3904, 64
  %v4626 = vpop.permute.xlu0 %4625
  %4627 = vrot.lane.b32.xlu0 %v3905, 64
  %v4628 = vpop.permute.xlu0 %4627
  %4629 = vrot.lane.b32.xlu0 %v3906, 64
  %v4630 = vpop.permute.xlu0 %4629
  %4631 = vrot.lane.b32.xlu0 %v3907, 64
  %v4632 = vpop.permute.xlu0 %4631
  %4633 = vrot.lane.b32.xlu0 %v3908, 64
  %v4634 = vpop.permute.xlu0 %4633
  %4635 = vrot.lane.b32.xlu0 %v3909, 64
  %v4636 = vpop.permute.xlu0 %4635
  %4637 = vrot.lane.b32.xlu0 %v3910, 64
  %v4638 = vpop.permute.xlu0 %4637
  %4639 = vrot.lane.b32.xlu0 %v3911, 64
  %v4640 = vpop.permute.xlu0 %4639
  %4641 = vrot.lane.b32.xlu0 %v3912, 64
  %v4642 = vpop.permute.xlu0 %4641
  %4643 = vrot.lane.b32.xlu0 %v3913, 64
  %v4644 = vpop.permute.xlu0 %4643
  %4645 = vrot.lane.b32.xlu0 %v3914, 64
  %v4646 = vpop.permute.xlu0 %4645
  %4647 = vrot.lane.b32.xlu0 %v3915, 64
  %v4648 = vpop.permute.xlu0 %4647
  %4649 = vrot.lane.b32.xlu0 %v3916, 64
  %v4650 = vpop.permute.xlu0 %4649
  %4651 = vrot.lane.b32.xlu0 %v3917, 64
  %v4652 = vpop.permute.xlu0 %4651
  %4653 = vrot.lane.b32.xlu0 %v3918, 64
  %v4654 = vpop.permute.xlu0 %4653
  %4655 = vrot.lane.b32.xlu0 %v3919, 64
  %v4656 = vpop.permute.xlu0 %4655
  %4657 = vrot.lane.b32.xlu0 %v3920, 64
  %v4658 = vpop.permute.xlu0 %4657
  %4659 = vrot.lane.b32.xlu0 %v3921, 64
  %v4660 = vpop.permute.xlu0 %4659
  %4661 = vrot.lane.b32.xlu0 %v3922, 64
  %v4662 = vpop.permute.xlu0 %4661
  %4663 = vrot.lane.b32.xlu0 %v3923, 64
  %v4664 = vpop.permute.xlu0 %4663
  %v4690 = vsel %vm2721, %v4590, 0
  %v4693 = vsel %vm2721, %v4592, 0
  %v4696 = vsel %vm2721, %v4594, 0
  %v4699 = vsel %vm2721, %v4596, 0
  %v4702 = vsel %vm2721, %v4598, 0
  %v4705 = vsel %vm2721, %v4600, 0
  %v4708 = vsel %vm2721, %v4602, 0
  %v4711 = vsel %vm2721, %v4604, 0
  %v4714 = vsel %vm2721, %v4606, 0
  %v4717 = vsel %vm2721, %v4608, 0
  %v4720 = vsel %vm2721, %v4610, 0
  %v4723 = vsel %vm2721, %v4612, 0
  %v4726 = vsel %vm2721, %v4614, 0
  %v4728 = vsel %vm2761, %v4664, 0
  %4730 = vmatpush.msra.mxu0 %v4646
  %4731 = vmatpush.msra.mxu0 %v4644
  %4732 = vmatpush.msra.mxu0 %v4642
  %4733 = vmatpush.msra.mxu0 %v4640
  %4734 = vmatpush.msra.mxu0 %v4638
  %4735 = vmatpush.msra.mxu0 %v4636
  %4736 = vmatpush.msra.mxu0 %v4634
  %4737 = vmatpush.msra.mxu0 %v4632
  %4738 = vmatpush.msra.mxu0 %v4630
  %4739 = vmatpush.msra.mxu0 %v4628
  %4740 = vmatpush.msra.mxu0 %v4626
  %4741 = vmatpush.msra.mxu0 %v4624
  %4742 = vmatpush.msra.mxu0 %v4622
  %4743 = vmatpush.msra.mxu0 %v4620
  %4744 = vmatpush.msra.mxu0 %v4618
  %4745 = vmatpush.msra.mxu0 %v4616
  %4746 = vmatmul.f32.gmra.mxu0 %v4589
  %v4747 = vpop.f32.mrf.mxu0
  %v4748 = vadd.f32 0.0, %v4747
  %4749 = vmatmul.f32.gmra.mxu0 %v4591
  %v4750 = vpop.f32.mrf.mxu0
  %v4751 = vadd.f32 0.0, %v4750
  %4752 = vmatmul.f32.gmra.mxu0 %v4593
  %v4753 = vpop.f32.mrf.mxu0
  %v4754 = vadd.f32 0.0, %v4753
  %4755 = vmatmul.f32.gmra.mxu0 %v4595
  %v4756 = vpop.f32.mrf.mxu0
  %v4757 = vadd.f32 0.0, %v4756
  %4758 = vmatmul.f32.gmra.mxu0 %v4597
  %v4759 = vpop.f32.mrf.mxu0
  %v4760 = vadd.f32 0.0, %v4759
  %4761 = vmatmul.f32.gmra.mxu0 %v4599
  %v4762 = vpop.f32.mrf.mxu0
  %v4763 = vadd.f32 0.0, %v4762
  %4764 = vmatmul.f32.gmra.mxu0 %v4601
  %v4765 = vpop.f32.mrf.mxu0
  %v4766 = vadd.f32 0.0, %v4765
  %4767 = vmatmul.f32.gmra.mxu0 %v4603
  %v4768 = vpop.f32.mrf.mxu0
  %v4769 = vadd.f32 0.0, %v4768
  %4770 = vmatmul.f32.gmra.mxu0 %v4605
  %v4771 = vpop.f32.mrf.mxu0
  %v4772 = vadd.f32 0.0, %v4771
  %4773 = vmatmul.f32.gmra.mxu0 %v4607
  %v4774 = vpop.f32.mrf.mxu0
  %v4775 = vadd.f32 0.0, %v4774
  %4776 = vmatmul.f32.gmra.mxu0 %v4609
  %v4777 = vpop.f32.mrf.mxu0
  %v4778 = vadd.f32 0.0, %v4777
  %4779 = vmatmul.f32.gmra.mxu0 %v4611
  %v4780 = vpop.f32.mrf.mxu0
  %v4781 = vadd.f32 0.0, %v4780
  %4782 = vmatmul.f32.gmra.mxu0 %v4613
  %v4783 = vpop.f32.mrf.mxu0
  %v4784 = vadd.f32 0.0, %v4783
  %4785 = vdwg.mxu0
  %4786 = vmatpush.msra.mxu0 0.0
  %4787 = vmatpush.msra.mxu0 0.0
  %4788 = vmatpush.msra.mxu0 0.0
  %4789 = vmatpush.msra.mxu0 0.0
  %4790 = vmatpush.msra.mxu0 0.0
  %4791 = vmatpush.msra.mxu0 0.0
  %4792 = vmatpush.msra.mxu0 0.0
  %4793 = vmatpush.msra.mxu0 %v4728
  %4794 = vmatpush.msra.mxu0 %v4662
  %4795 = vmatpush.msra.mxu0 %v4660
  %4796 = vmatpush.msra.mxu0 %v4658
  %4797 = vmatpush.msra.mxu0 %v4656
  %4798 = vmatpush.msra.mxu0 %v4654
  %4799 = vmatpush.msra.mxu0 %v4652
  %4800 = vmatpush.msra.mxu0 %v4650
  %4801 = vmatpush.msra.mxu0 %v4648
  %4802 = vmatmul.f32.gmra.mxu0 %v4690
  %v4803 = vpop.f32.mrf.mxu0
  %v4804 = vadd.f32 %v4748, %v4803
  %4805 = vmatmul.f32.gmra.mxu0 %v4693
  %v4806 = vpop.f32.mrf.mxu0
  %v4807 = vadd.f32 %v4751, %v4806
  %4808 = vmatmul.f32.gmra.mxu0 %v4696
  %v4809 = vpop.f32.mrf.mxu0
  %v4810 = vadd.f32 %v4754, %v4809
  %4811 = vmatmul.f32.gmra.mxu0 %v4699
  %v4812 = vpop.f32.mrf.mxu0
  %v4813 = vadd.f32 %v4757, %v4812
  %4814 = vmatmul.f32.gmra.mxu0 %v4702
  %v4815 = vpop.f32.mrf.mxu0
  %v4816 = vadd.f32 %v4760, %v4815
  %4817 = vmatmul.f32.gmra.mxu0 %v4705
  %v4818 = vpop.f32.mrf.mxu0
  %v4819 = vadd.f32 %v4763, %v4818
  %4820 = vmatmul.f32.gmra.mxu0 %v4708
  %v4821 = vpop.f32.mrf.mxu0
  %v4822 = vadd.f32 %v4766, %v4821
  %4823 = vmatmul.f32.gmra.mxu0 %v4711
  %v4824 = vpop.f32.mrf.mxu0
  %v4825 = vadd.f32 %v4769, %v4824
  %4826 = vmatmul.f32.gmra.mxu0 %v4714
  %v4827 = vpop.f32.mrf.mxu0
  %v4828 = vadd.f32 %v4772, %v4827
  %4829 = vmatmul.f32.gmra.mxu0 %v4717
  %v4830 = vpop.f32.mrf.mxu0
  %v4831 = vadd.f32 %v4775, %v4830
  %4832 = vmatmul.f32.gmra.mxu0 %v4720
  %v4833 = vpop.f32.mrf.mxu0
  %v4834 = vadd.f32 %v4778, %v4833
  %4835 = vmatmul.f32.gmra.mxu0 %v4723
  %v4836 = vpop.f32.mrf.mxu0
  %v4837 = vadd.f32 %v4781, %v4836
  %4838 = vmatmul.f32.gmra.mxu0 %v4726
  %v4839 = vpop.f32.mrf.mxu0
  %v4840 = vadd.f32 %v4784, %v4839
  %4841 = vdwg.mxu0
  %v4842 = vadd.f32 %v4472, %v4804
  %v4843 = vadd.f32 %v4473, %v4807
  %v4844 = vadd.f32 %v4474, %v4810
  %v4845 = vadd.f32 %v4475, %v4813
  %v4846 = vadd.f32 %v4476, %v4816
  %v4847 = vadd.f32 %v4477, %v4819
  %v4848 = vadd.f32 %v4478, %v4822
  %v4849 = vadd.f32 %v4479, %v4825
  %v4850 = vadd.f32 %v4480, %v4828
  %v4851 = vadd.f32 %v4481, %v4831
  %v4852 = vadd.f32 %v4482, %v4834
  %v4853 = vadd.f32 %v4483, %v4837
  %v4854 = vadd.f32 %v4484, %v4840
  %v4855 = vadd.s32 %v2337, 15
  %v4856 = vadd.s32 %v2338, 15
  %v4857 = vadd.s32 %v2339, 15
  %v4858 = vadd.s32 %v2340, 15
  %v4859 = vadd.s32 %v2341, 15
  %v4860 = vadd.s32 %v2342, 15
  %v4861 = vadd.s32 %v2343, 15
  %v4862 = vadd.s32 %v2344, 15
  %v4863 = vadd.s32 %v2345, 15
  %v4864 = vadd.s32 %v2346, 15
  %v4865 = vadd.s32 %v2347, 15
  %v4866 = vadd.s32 %v2348, 15
  %v4867 = vadd.s32 %v2349, 15
  %4868 = vset.pattern.permute.xlu0 0
  %4869 = vperm.xlu0 %4868, %v4855
  %v4870 = vpop.permute.xlu0 %4869
  %4871 = vset.pattern.permute.xlu0 0
  %4872 = vperm.xlu0 %4871, %v4856
  %v4873 = vpop.permute.xlu0 %4872
  %4874 = vset.pattern.permute.xlu0 0
  %4875 = vperm.xlu0 %4874, %v4857
  %v4876 = vpop.permute.xlu0 %4875
  %4877 = vset.pattern.permute.xlu0 0
  %4878 = vperm.xlu0 %4877, %v4858
  %v4879 = vpop.permute.xlu0 %4878
  %4880 = vset.pattern.permute.xlu0 0
  %4881 = vperm.xlu0 %4880, %v4859
  %v4882 = vpop.permute.xlu0 %4881
  %4883 = vset.pattern.permute.xlu0 0
  %4884 = vperm.xlu0 %4883, %v4860
  %v4885 = vpop.permute.xlu0 %4884
  %4886 = vset.pattern.permute.xlu0 0
  %4887 = vperm.xlu0 %4886, %v4861
  %v4888 = vpop.permute.xlu0 %4887
  %4889 = vset.pattern.permute.xlu0 0
  %4890 = vperm.xlu0 %4889, %v4862
  %v4891 = vpop.permute.xlu0 %4890
  %4892 = vset.pattern.permute.xlu0 0
  %4893 = vperm.xlu0 %4892, %v4863
  %v4894 = vpop.permute.xlu0 %4893
  %4895 = vset.pattern.permute.xlu0 0
  %4896 = vperm.xlu0 %4895, %v4864
  %v4897 = vpop.permute.xlu0 %4896
  %4898 = vset.pattern.permute.xlu0 0
  %4899 = vperm.xlu0 %4898, %v4865
  %v4900 = vpop.permute.xlu0 %4899
  %4901 = vset.pattern.permute.xlu0 0
  %4902 = vperm.xlu0 %4901, %v4866
  %v4903 = vpop.permute.xlu0 %4902
  %4904 = vset.pattern.permute.xlu0 0
  %4905 = vperm.xlu0 %4904, %v4867
  %v4906 = vpop.permute.xlu0 %4905
  %vm4907 = vcmp.eq.s32.totalorder %v2335, %v4870
  %vm4908 = vcmp.eq.s32.totalorder %v2336, %v4870
  %vm4909 = vcmp.eq.s32.totalorder %v2335, %v4873
  %vm4910 = vcmp.eq.s32.totalorder %v2336, %v4873
  %vm4911 = vcmp.eq.s32.totalorder %v2335, %v4876
  %vm4912 = vcmp.eq.s32.totalorder %v2336, %v4876
  %vm4913 = vcmp.eq.s32.totalorder %v2335, %v4879
  %vm4914 = vcmp.eq.s32.totalorder %v2336, %v4879
  %vm4915 = vcmp.eq.s32.totalorder %v2335, %v4882
  %vm4916 = vcmp.eq.s32.totalorder %v2336, %v4882
  %vm4917 = vcmp.eq.s32.totalorder %v2335, %v4885
  %vm4918 = vcmp.eq.s32.totalorder %v2336, %v4885
  %vm4919 = vcmp.eq.s32.totalorder %v2335, %v4888
  %vm4920 = vcmp.eq.s32.totalorder %v2336, %v4888
  %vm4921 = vcmp.eq.s32.totalorder %v2335, %v4891
  %vm4922 = vcmp.eq.s32.totalorder %v2336, %v4891
  %vm4923 = vcmp.eq.s32.totalorder %v2335, %v4894
  %vm4924 = vcmp.eq.s32.totalorder %v2336, %v4894
  %vm4925 = vcmp.eq.s32.totalorder %v2335, %v4897
  %vm4926 = vcmp.eq.s32.totalorder %v2336, %v4897
  %vm4927 = vcmp.eq.s32.totalorder %v2335, %v4900
  %vm4928 = vcmp.eq.s32.totalorder %v2336, %v4900
  %vm4929 = vcmp.eq.s32.totalorder %v2335, %v4903
  %vm4930 = vcmp.eq.s32.totalorder %v2336, %v4903
  %vm4931 = vcmp.eq.s32.totalorder %v2335, %v4906
  %vm4932 = vcmp.eq.s32.totalorder %v2336, %v4906
  %v4933 = vsel %vm4907, 1, 0
  %v4934 = vsel %vm4908, 1, 0
  %v4935 = vsel %vm4909, 1, 0
  %v4936 = vsel %vm4910, 1, 0
  %v4937 = vsel %vm4911, 1, 0
  %v4938 = vsel %vm4912, 1, 0
  %v4939 = vsel %vm4913, 1, 0
  %v4940 = vsel %vm4914, 1, 0
  %v4941 = vsel %vm4915, 1, 0
  %v4942 = vsel %vm4916, 1, 0
  %v4943 = vsel %vm4917, 1, 0
  %v4944 = vsel %vm4918, 1, 0
  %v4945 = vsel %vm4919, 1, 0
  %v4946 = vsel %vm4920, 1, 0
  %v4947 = vsel %vm4921, 1, 0
  %v4948 = vsel %vm4922, 1, 0
  %v4949 = vsel %vm4923, 1, 0
  %v4950 = vsel %vm4924, 1, 0
  %v4951 = vsel %vm4925, 1, 0
  %v4952 = vsel %vm4926, 1, 0
  %v4953 = vsel %vm4927, 1, 0
  %v4954 = vsel %vm4928, 1, 0
  %v4955 = vsel %vm4929, 1, 0
  %v4956 = vsel %vm4930, 1, 0
  %v4957 = vsel %vm4931, 1, 0
  %v4958 = vsel %vm4932, 1, 0
  %v4959 = vcvt.s32.f32 %v4933
  %v4960 = vcvt.s32.f32 %v4934
  %v4961 = vcvt.s32.f32 %v4935
  %v4962 = vcvt.s32.f32 %v4936
  %v4963 = vcvt.s32.f32 %v4937
  %v4964 = vcvt.s32.f32 %v4938
  %v4965 = vcvt.s32.f32 %v4939
  %v4966 = vcvt.s32.f32 %v4940
  %v4967 = vcvt.s32.f32 %v4941
  %v4968 = vcvt.s32.f32 %v4942
  %v4969 = vcvt.s32.f32 %v4943
  %v4970 = vcvt.s32.f32 %v4944
  %v4971 = vcvt.s32.f32 %v4945
  %v4972 = vcvt.s32.f32 %v4946
  %v4973 = vcvt.s32.f32 %v4947
  %v4974 = vcvt.s32.f32 %v4948
  %v4975 = vcvt.s32.f32 %v4949
  %v4976 = vcvt.s32.f32 %v4950
  %v4977 = vcvt.s32.f32 %v4951
  %v4978 = vcvt.s32.f32 %v4952
  %v4979 = vcvt.s32.f32 %v4953
  %v4980 = vcvt.s32.f32 %v4954
  %v4981 = vcvt.s32.f32 %v4955
  %v4982 = vcvt.s32.f32 %v4956
  %v4983 = vcvt.s32.f32 %v4957
  %v4984 = vcvt.s32.f32 %v4958
  %4985 = vrot.lane.b32.xlu0 %v3899, 32
  %v4986 = vpop.permute.xlu0 %4985
  %4987 = vrot.lane.b32.xlu0 %v3900, 32
  %v4988 = vpop.permute.xlu0 %4987
  %4989 = vrot.lane.b32.xlu0 %v3901, 32
  %v4990 = vpop.permute.xlu0 %4989
  %4991 = vrot.lane.b32.xlu0 %v3902, 32
  %v4992 = vpop.permute.xlu0 %4991
  %4993 = vrot.lane.b32.xlu0 %v3903, 32
  %v4994 = vpop.permute.xlu0 %4993
  %4995 = vrot.lane.b32.xlu0 %v3904, 32
  %v4996 = vpop.permute.xlu0 %4995
  %4997 = vrot.lane.b32.xlu0 %v3905, 32
  %v4998 = vpop.permute.xlu0 %4997
  %4999 = vrot.lane.b32.xlu0 %v3906, 32
  %v5000 = vpop.permute.xlu0 %4999
  %5001 = vrot.lane.b32.xlu0 %v3907, 32
  %v5002 = vpop.permute.xlu0 %5001
  %5003 = vrot.lane.b32.xlu0 %v3908, 32
  %v5004 = vpop.permute.xlu0 %5003
  %5005 = vrot.lane.b32.xlu0 %v3909, 32
  %v5006 = vpop.permute.xlu0 %5005
  %5007 = vrot.lane.b32.xlu0 %v3910, 32
  %v5008 = vpop.permute.xlu0 %5007
  %5009 = vrot.lane.b32.xlu0 %v3911, 32
  %v5010 = vpop.permute.xlu0 %5009
  %5011 = vrot.lane.b32.xlu0 %v3912, 32
  %v5012 = vpop.permute.xlu0 %5011
  %5013 = vrot.lane.b32.xlu0 %v3913, 32
  %v5014 = vpop.permute.xlu0 %5013
  %5015 = vrot.lane.b32.xlu0 %v3914, 32
  %v5016 = vpop.permute.xlu0 %5015
  %5017 = vrot.lane.b32.xlu0 %v3915, 32
  %v5018 = vpop.permute.xlu0 %5017
  %5019 = vrot.lane.b32.xlu0 %v3916, 32
  %v5020 = vpop.permute.xlu0 %5019
  %5021 = vrot.lane.b32.xlu0 %v3917, 32
  %v5022 = vpop.permute.xlu0 %5021
  %5023 = vrot.lane.b32.xlu0 %v3918, 32
  %v5024 = vpop.permute.xlu0 %5023
  %5025 = vrot.lane.b32.xlu0 %v3919, 32
  %v5026 = vpop.permute.xlu0 %5025
  %5027 = vrot.lane.b32.xlu0 %v3920, 32
  %v5028 = vpop.permute.xlu0 %5027
  %5029 = vrot.lane.b32.xlu0 %v3921, 32
  %v5030 = vpop.permute.xlu0 %5029
  %5031 = vrot.lane.b32.xlu0 %v3922, 32
  %v5032 = vpop.permute.xlu0 %5031
  %5033 = vrot.lane.b32.xlu0 %v3923, 32
  %v5034 = vpop.permute.xlu0 %5033
  %v5060 = vsel %vm2721, %v4960, 0
  %v5063 = vsel %vm2721, %v4962, 0
  %v5066 = vsel %vm2721, %v4964, 0
  %v5069 = vsel %vm2721, %v4966, 0
  %v5072 = vsel %vm2721, %v4968, 0
  %v5075 = vsel %vm2721, %v4970, 0
  %v5078 = vsel %vm2721, %v4972, 0
  %v5081 = vsel %vm2721, %v4974, 0
  %v5084 = vsel %vm2721, %v4976, 0
  %v5087 = vsel %vm2721, %v4978, 0
  %v5090 = vsel %vm2721, %v4980, 0
  %v5093 = vsel %vm2721, %v4982, 0
  %v5096 = vsel %vm2721, %v4984, 0
  %v5098 = vsel %vm2761, %v5034, 0
  %5100 = vmatpush.msra.mxu0 %v5016
  %5101 = vmatpush.msra.mxu0 %v5014
  %5102 = vmatpush.msra.mxu0 %v5012
  %5103 = vmatpush.msra.mxu0 %v5010
  %5104 = vmatpush.msra.mxu0 %v5008
  %5105 = vmatpush.msra.mxu0 %v5006
  %5106 = vmatpush.msra.mxu0 %v5004
  %5107 = vmatpush.msra.mxu0 %v5002
  %5108 = vmatpush.msra.mxu0 %v5000
  %5109 = vmatpush.msra.mxu0 %v4998
  %5110 = vmatpush.msra.mxu0 %v4996
  %5111 = vmatpush.msra.mxu0 %v4994
  %5112 = vmatpush.msra.mxu0 %v4992
  %5113 = vmatpush.msra.mxu0 %v4990
  %5114 = vmatpush.msra.mxu0 %v4988
  %5115 = vmatpush.msra.mxu0 %v4986
  %5116 = vmatmul.f32.gmra.mxu0 %v4959
  %v5117 = vpop.f32.mrf.mxu0
  %v5118 = vadd.f32 0.0, %v5117
  %5119 = vmatmul.f32.gmra.mxu0 %v4961
  %v5120 = vpop.f32.mrf.mxu0
  %v5121 = vadd.f32 0.0, %v5120
  %5122 = vmatmul.f32.gmra.mxu0 %v4963
  %v5123 = vpop.f32.mrf.mxu0
  %v5124 = vadd.f32 0.0, %v5123
  %5125 = vmatmul.f32.gmra.mxu0 %v4965
  %v5126 = vpop.f32.mrf.mxu0
  %v5127 = vadd.f32 0.0, %v5126
  %5128 = vmatmul.f32.gmra.mxu0 %v4967
  %v5129 = vpop.f32.mrf.mxu0
  %v5130 = vadd.f32 0.0, %v5129
  %5131 = vmatmul.f32.gmra.mxu0 %v4969
  %v5132 = vpop.f32.mrf.mxu0
  %v5133 = vadd.f32 0.0, %v5132
  %5134 = vmatmul.f32.gmra.mxu0 %v4971
  %v5135 = vpop.f32.mrf.mxu0
  %v5136 = vadd.f32 0.0, %v5135
  %5137 = vmatmul.f32.gmra.mxu0 %v4973
  %v5138 = vpop.f32.mrf.mxu0
  %v5139 = vadd.f32 0.0, %v5138
  %5140 = vmatmul.f32.gmra.mxu0 %v4975
  %v5141 = vpop.f32.mrf.mxu0
  %v5142 = vadd.f32 0.0, %v5141
  %5143 = vmatmul.f32.gmra.mxu0 %v4977
  %v5144 = vpop.f32.mrf.mxu0
  %v5145 = vadd.f32 0.0, %v5144
  %5146 = vmatmul.f32.gmra.mxu0 %v4979
  %v5147 = vpop.f32.mrf.mxu0
  %v5148 = vadd.f32 0.0, %v5147
  %5149 = vmatmul.f32.gmra.mxu0 %v4981
  %v5150 = vpop.f32.mrf.mxu0
  %v5151 = vadd.f32 0.0, %v5150
  %5152 = vmatmul.f32.gmra.mxu0 %v4983
  %v5153 = vpop.f32.mrf.mxu0
  %v5154 = vadd.f32 0.0, %v5153
  %5155 = vdwg.mxu0
  %5156 = vmatpush.msra.mxu0 0.0
  %5157 = vmatpush.msra.mxu0 0.0
  %5158 = vmatpush.msra.mxu0 0.0
  %5159 = vmatpush.msra.mxu0 0.0
  %5160 = vmatpush.msra.mxu0 0.0
  %5161 = vmatpush.msra.mxu0 0.0
  %5162 = vmatpush.msra.mxu0 0.0
  %5163 = vmatpush.msra.mxu0 %v5098
  %5164 = vmatpush.msra.mxu0 %v5032
  %5165 = vmatpush.msra.mxu0 %v5030
  %5166 = vmatpush.msra.mxu0 %v5028
  %5167 = vmatpush.msra.mxu0 %v5026
  %5168 = vmatpush.msra.mxu0 %v5024
  %5169 = vmatpush.msra.mxu0 %v5022
  %5170 = vmatpush.msra.mxu0 %v5020
  %5171 = vmatpush.msra.mxu0 %v5018
  %5172 = vmatmul.f32.gmra.mxu0 %v5060
  %v5173 = vpop.f32.mrf.mxu0
  %v5174 = vadd.f32 %v5118, %v5173
  %5175 = vmatmul.f32.gmra.mxu0 %v5063
  %v5176 = vpop.f32.mrf.mxu0
  %v5177 = vadd.f32 %v5121, %v5176
  %5178 = vmatmul.f32.gmra.mxu0 %v5066
  %v5179 = vpop.f32.mrf.mxu0
  %v5180 = vadd.f32 %v5124, %v5179
  %5181 = vmatmul.f32.gmra.mxu0 %v5069
  %v5182 = vpop.f32.mrf.mxu0
  %v5183 = vadd.f32 %v5127, %v5182
  %5184 = vmatmul.f32.gmra.mxu0 %v5072
  %v5185 = vpop.f32.mrf.mxu0
  %v5186 = vadd.f32 %v5130, %v5185
  %5187 = vmatmul.f32.gmra.mxu0 %v5075
  %v5188 = vpop.f32.mrf.mxu0
  %v5189 = vadd.f32 %v5133, %v5188
  %5190 = vmatmul.f32.gmra.mxu0 %v5078
  %v5191 = vpop.f32.mrf.mxu0
  %v5192 = vadd.f32 %v5136, %v5191
  %5193 = vmatmul.f32.gmra.mxu0 %v5081
  %v5194 = vpop.f32.mrf.mxu0
  %v5195 = vadd.f32 %v5139, %v5194
  %5196 = vmatmul.f32.gmra.mxu0 %v5084
  %v5197 = vpop.f32.mrf.mxu0
  %v5198 = vadd.f32 %v5142, %v5197
  %5199 = vmatmul.f32.gmra.mxu0 %v5087
  %v5200 = vpop.f32.mrf.mxu0
  %v5201 = vadd.f32 %v5145, %v5200
  %5202 = vmatmul.f32.gmra.mxu0 %v5090
  %v5203 = vpop.f32.mrf.mxu0
  %v5204 = vadd.f32 %v5148, %v5203
  %5205 = vmatmul.f32.gmra.mxu0 %v5093
  %v5206 = vpop.f32.mrf.mxu0
  %v5207 = vadd.f32 %v5151, %v5206
  %5208 = vmatmul.f32.gmra.mxu0 %v5096
  %v5209 = vpop.f32.mrf.mxu0
  %v5210 = vadd.f32 %v5154, %v5209
  %5211 = vdwg.mxu0
  %v5212 = vadd.f32 %v4842, %v5174
  %v5213 = vadd.f32 %v4843, %v5177
  %v5214 = vadd.f32 %v4844, %v5180
  %v5215 = vadd.f32 %v4845, %v5183
  %v5216 = vadd.f32 %v4846, %v5186
  %v5217 = vadd.f32 %v4847, %v5189
  %v5218 = vadd.f32 %v4848, %v5192
  %v5219 = vadd.f32 %v4849, %v5195
  %v5220 = vadd.f32 %v4850, %v5198
  %v5221 = vadd.f32 %v4851, %v5201
  %v5222 = vadd.f32 %v4852, %v5204
  %v5223 = vadd.f32 %v4853, %v5207
  %v5224 = vadd.f32 %v4854, %v5210
  %v5225 = vadd.s32 %v2337, 16
  %v5226 = vadd.s32 %v2338, 16
  %v5227 = vadd.s32 %v2339, 16
  %v5228 = vadd.s32 %v2340, 16
  %v5229 = vadd.s32 %v2341, 16
  %v5230 = vadd.s32 %v2342, 16
  %v5231 = vadd.s32 %v2343, 16
  %v5232 = vadd.s32 %v2344, 16
  %v5233 = vadd.s32 %v2345, 16
  %v5234 = vadd.s32 %v2346, 16
  %v5235 = vadd.s32 %v2347, 16
  %v5236 = vadd.s32 %v2348, 16
  %v5237 = vadd.s32 %v2349, 16
  %5238 = vset.pattern.permute.xlu0 0
  %5239 = vperm.xlu0 %5238, %v5225
  %v5240 = vpop.permute.xlu0 %5239
  %5241 = vset.pattern.permute.xlu0 0
  %5242 = vperm.xlu0 %5241, %v5226
  %v5243 = vpop.permute.xlu0 %5242
  %5244 = vset.pattern.permute.xlu0 0
  %5245 = vperm.xlu0 %5244, %v5227
  %v5246 = vpop.permute.xlu0 %5245
  %5247 = vset.pattern.permute.xlu0 0
  %5248 = vperm.xlu0 %5247, %v5228
  %v5249 = vpop.permute.xlu0 %5248
  %5250 = vset.pattern.permute.xlu0 0
  %5251 = vperm.xlu0 %5250, %v5229
  %v5252 = vpop.permute.xlu0 %5251
  %5253 = vset.pattern.permute.xlu0 0
  %5254 = vperm.xlu0 %5253, %v5230
  %v5255 = vpop.permute.xlu0 %5254
  %5256 = vset.pattern.permute.xlu0 0
  %5257 = vperm.xlu0 %5256, %v5231
  %v5258 = vpop.permute.xlu0 %5257
  %5259 = vset.pattern.permute.xlu0 0
  %5260 = vperm.xlu0 %5259, %v5232
  %v5261 = vpop.permute.xlu0 %5260
  %5262 = vset.pattern.permute.xlu0 0
  %5263 = vperm.xlu0 %5262, %v5233
  %v5264 = vpop.permute.xlu0 %5263
  %5265 = vset.pattern.permute.xlu0 0
  %5266 = vperm.xlu0 %5265, %v5234
  %v5267 = vpop.permute.xlu0 %5266
  %5268 = vset.pattern.permute.xlu0 0
  %5269 = vperm.xlu0 %5268, %v5235
  %v5270 = vpop.permute.xlu0 %5269
  %5271 = vset.pattern.permute.xlu0 0
  %5272 = vperm.xlu0 %5271, %v5236
  %v5273 = vpop.permute.xlu0 %5272
  %5274 = vset.pattern.permute.xlu0 0
  %5275 = vperm.xlu0 %5274, %v5237
  %v5276 = vpop.permute.xlu0 %5275
  %vm5277 = vcmp.eq.s32.totalorder %v2335, %v5240
  %vm5278 = vcmp.eq.s32.totalorder %v2336, %v5240
  %vm5279 = vcmp.eq.s32.totalorder %v2335, %v5243
  %vm5280 = vcmp.eq.s32.totalorder %v2336, %v5243
  %vm5281 = vcmp.eq.s32.totalorder %v2335, %v5246
  %vm5282 = vcmp.eq.s32.totalorder %v2336, %v5246
  %vm5283 = vcmp.eq.s32.totalorder %v2335, %v5249
  %vm5284 = vcmp.eq.s32.totalorder %v2336, %v5249
  %vm5285 = vcmp.eq.s32.totalorder %v2335, %v5252
  %vm5286 = vcmp.eq.s32.totalorder %v2336, %v5252
  %vm5287 = vcmp.eq.s32.totalorder %v2335, %v5255
  %vm5288 = vcmp.eq.s32.totalorder %v2336, %v5255
  %vm5289 = vcmp.eq.s32.totalorder %v2335, %v5258
  %vm5290 = vcmp.eq.s32.totalorder %v2336, %v5258
  %vm5291 = vcmp.eq.s32.totalorder %v2335, %v5261
  %vm5292 = vcmp.eq.s32.totalorder %v2336, %v5261
  %vm5293 = vcmp.eq.s32.totalorder %v2335, %v5264
  %vm5294 = vcmp.eq.s32.totalorder %v2336, %v5264
  %vm5295 = vcmp.eq.s32.totalorder %v2335, %v5267
  %vm5296 = vcmp.eq.s32.totalorder %v2336, %v5267
  %vm5297 = vcmp.eq.s32.totalorder %v2335, %v5270
  %vm5298 = vcmp.eq.s32.totalorder %v2336, %v5270
  %vm5299 = vcmp.eq.s32.totalorder %v2335, %v5273
  %vm5300 = vcmp.eq.s32.totalorder %v2336, %v5273
  %vm5301 = vcmp.eq.s32.totalorder %v2335, %v5276
  %vm5302 = vcmp.eq.s32.totalorder %v2336, %v5276
  %v5303 = vsel %vm5277, 1, 0
  %v5304 = vsel %vm5278, 1, 0
  %v5305 = vsel %vm5279, 1, 0
  %v5306 = vsel %vm5280, 1, 0
  %v5307 = vsel %vm5281, 1, 0
  %v5308 = vsel %vm5282, 1, 0
  %v5309 = vsel %vm5283, 1, 0
  %v5310 = vsel %vm5284, 1, 0
  %v5311 = vsel %vm5285, 1, 0
  %v5312 = vsel %vm5286, 1, 0
  %v5313 = vsel %vm5287, 1, 0
  %v5314 = vsel %vm5288, 1, 0
  %v5315 = vsel %vm5289, 1, 0
  %v5316 = vsel %vm5290, 1, 0
  %v5317 = vsel %vm5291, 1, 0
  %v5318 = vsel %vm5292, 1, 0
  %v5319 = vsel %vm5293, 1, 0
  %v5320 = vsel %vm5294, 1, 0
  %v5321 = vsel %vm5295, 1, 0
  %v5322 = vsel %vm5296, 1, 0
  %v5323 = vsel %vm5297, 1, 0
  %v5324 = vsel %vm5298, 1, 0
  %v5325 = vsel %vm5299, 1, 0
  %v5326 = vsel %vm5300, 1, 0
  %v5327 = vsel %vm5301, 1, 0
  %v5328 = vsel %vm5302, 1, 0
  %v5329 = vcvt.s32.f32 %v5303
  %v5330 = vcvt.s32.f32 %v5304
  %v5331 = vcvt.s32.f32 %v5305
  %v5332 = vcvt.s32.f32 %v5306
  %v5333 = vcvt.s32.f32 %v5307
  %v5334 = vcvt.s32.f32 %v5308
  %v5335 = vcvt.s32.f32 %v5309
  %v5336 = vcvt.s32.f32 %v5310
  %v5337 = vcvt.s32.f32 %v5311
  %v5338 = vcvt.s32.f32 %v5312
  %v5339 = vcvt.s32.f32 %v5313
  %v5340 = vcvt.s32.f32 %v5314
  %v5341 = vcvt.s32.f32 %v5315
  %v5342 = vcvt.s32.f32 %v5316
  %v5343 = vcvt.s32.f32 %v5317
  %v5344 = vcvt.s32.f32 %v5318
  %v5345 = vcvt.s32.f32 %v5319
  %v5346 = vcvt.s32.f32 %v5320
  %v5347 = vcvt.s32.f32 %v5321
  %v5348 = vcvt.s32.f32 %v5322
  %v5349 = vcvt.s32.f32 %v5323
  %v5350 = vcvt.s32.f32 %v5324
  %v5351 = vcvt.s32.f32 %v5325
  %v5352 = vcvt.s32.f32 %v5326
  %v5353 = vcvt.s32.f32 %v5327
  %v5354 = vcvt.s32.f32 %v5328
  %v5355 = vld [vmem:[#allocation4 + $0x10] sm:$0xff]
  %v5356 = vld [vmem:[#allocation4 + $0x28] sm:$0xff]
  %v5357 = vld [vmem:[#allocation4 + $0x40] sm:$0xff]
  %v5358 = vld [vmem:[#allocation4 + $0x58] sm:$0xff]
  %v5359 = vld [vmem:[#allocation4 + $0x70] sm:$0xff]
  %v5360 = vld [vmem:[#allocation4 + $0x88] sm:$0xff]
  %v5361 = vld [vmem:[#allocation4 + $0xa0] sm:$0xff]
  %v5362 = vld [vmem:[#allocation4 + $0xb8] sm:$0xff]
  %v5363 = vld [vmem:[#allocation4 + $0xd0] sm:$0xff]
  %v5364 = vld [vmem:[#allocation4 + $0xe8] sm:$0xff]
  %v5365 = vld [vmem:[#allocation4 + $0x100] sm:$0xff]
  %v5366 = vld [vmem:[#allocation4 + $0x118] sm:$0xff]
  %v5367 = vld [vmem:[#allocation4 + $0x130] sm:$0xff]
  %v5368 = vld [vmem:[#allocation4 + $0x148] sm:$0xff]
  %v5369 = vld [vmem:[#allocation4 + $0x160] sm:$0xff]
  %v5370 = vld [vmem:[#allocation4 + $0x178] sm:$0xff]
  %v5371 = vld [vmem:[#allocation4 + $0x190] sm:$0xff]
  %v5372 = vld [vmem:[#allocation4 + $0x1a8] sm:$0xff]
  %v5373 = vld [vmem:[#allocation4 + $0x1c0] sm:$0xff]
  %v5374 = vld [vmem:[#allocation4 + $0x1d8] sm:$0xff]
  %v5375 = vld [vmem:[#allocation4 + $0x1f0] sm:$0xff]
  %v5376 = vld [vmem:[#allocation4 + $0x208] sm:$0xff]
  %v5377 = vld [vmem:[#allocation4 + $0x220] sm:$0xff]
  %v5378 = vld [vmem:[#allocation4 + $0x238] sm:$0xff]
  %v5379 = vld [vmem:[#allocation4 + $0x250] sm:$0xf]
  %v5381 = vsel %vm2721, %v5330, 0
  %v5384 = vsel %vm2721, %v5332, 0
  %v5387 = vsel %vm2721, %v5334, 0
  %v5390 = vsel %vm2721, %v5336, 0
  %v5393 = vsel %vm2721, %v5338, 0
  %v5396 = vsel %vm2721, %v5340, 0
  %v5399 = vsel %vm2721, %v5342, 0
  %v5402 = vsel %vm2721, %v5344, 0
  %v5405 = vsel %vm2721, %v5346, 0
  %v5408 = vsel %vm2721, %v5348, 0
  %v5411 = vsel %vm2721, %v5350, 0
  %v5414 = vsel %vm2721, %v5352, 0
  %v5417 = vsel %vm2721, %v5354, 0
  %v5420 = vsel %vm2761, %v5379, 0
  %5422 = vmatpush.msra.mxu0 %v5370
  %5423 = vmatpush.msra.mxu0 %v5369
  %5424 = vmatpush.msra.mxu0 %v5368
  %5425 = vmatpush.msra.mxu0 %v5367
  %5426 = vmatpush.msra.mxu0 %v5366
  %5427 = vmatpush.msra.mxu0 %v5365
  %5428 = vmatpush.msra.mxu0 %v5364
  %5429 = vmatpush.msra.mxu0 %v5363
  %5430 = vmatpush.msra.mxu0 %v5362
  %5431 = vmatpush.msra.mxu0 %v5361
  %5432 = vmatpush.msra.mxu0 %v5360
  %5433 = vmatpush.msra.mxu0 %v5359
  %5434 = vmatpush.msra.mxu0 %v5358
  %5435 = vmatpush.msra.mxu0 %v5357
  %5436 = vmatpush.msra.mxu0 %v5356
  %5437 = vmatpush.msra.mxu0 %v5355
  %5438 = vmatmul.f32.gmra.mxu0 %v5329
  %v5439 = vpop.f32.mrf.mxu0
  %v5440 = vadd.f32 0.0, %v5439
  %5441 = vmatmul.f32.gmra.mxu0 %v5331
  %v5442 = vpop.f32.mrf.mxu0
  %v5443 = vadd.f32 0.0, %v5442
  %5444 = vmatmul.f32.gmra.mxu0 %v5333
  %v5445 = vpop.f32.mrf.mxu0
  %v5446 = vadd.f32 0.0, %v5445
  %5447 = vmatmul.f32.gmra.mxu0 %v5335
  %v5448 = vpop.f32.mrf.mxu0
  %v5449 = vadd.f32 0.0, %v5448
  %5450 = vmatmul.f32.gmra.mxu0 %v5337
  %v5451 = vpop.f32.mrf.mxu0
  %v5452 = vadd.f32 0.0, %v5451
  %5453 = vmatmul.f32.gmra.mxu0 %v5339
  %v5454 = vpop.f32.mrf.mxu0
  %v5455 = vadd.f32 0.0, %v5454
  %5456 = vmatmul.f32.gmra.mxu0 %v5341
  %v5457 = vpop.f32.mrf.mxu0
  %v5458 = vadd.f32 0.0, %v5457
  %5459 = vmatmul.f32.gmra.mxu0 %v5343
  %v5460 = vpop.f32.mrf.mxu0
  %v5461 = vadd.f32 0.0, %v5460
  %5462 = vmatmul.f32.gmra.mxu0 %v5345
  %v5463 = vpop.f32.mrf.mxu0
  %v5464 = vadd.f32 0.0, %v5463
  %5465 = vmatmul.f32.gmra.mxu0 %v5347
  %v5466 = vpop.f32.mrf.mxu0
  %v5467 = vadd.f32 0.0, %v5466
  %5468 = vmatmul.f32.gmra.mxu0 %v5349
  %v5469 = vpop.f32.mrf.mxu0
  %v5470 = vadd.f32 0.0, %v5469
  %5471 = vmatmul.f32.gmra.mxu0 %v5351
  %v5472 = vpop.f32.mrf.mxu0
  %v5473 = vadd.f32 0.0, %v5472
  %5474 = vmatmul.f32.gmra.mxu0 %v5353
  %v5475 = vpop.f32.mrf.mxu0
  %v5476 = vadd.f32 0.0, %v5475
  %5477 = vdwg.mxu0
  %5478 = vmatpush.msra.mxu0 0.0
  %5479 = vmatpush.msra.mxu0 0.0
  %5480 = vmatpush.msra.mxu0 0.0
  %5481 = vmatpush.msra.mxu0 0.0
  %5482 = vmatpush.msra.mxu0 0.0
  %5483 = vmatpush.msra.mxu0 0.0
  %5484 = vmatpush.msra.mxu0 0.0
  %5485 = vmatpush.msra.mxu0 %v5420
  %5486 = vmatpush.msra.mxu0 %v5378
  %5487 = vmatpush.msra.mxu0 %v5377
  %5488 = vmatpush.msra.mxu0 %v5376
  %5489 = vmatpush.msra.mxu0 %v5375
  %5490 = vmatpush.msra.mxu0 %v5374
  %5491 = vmatpush.msra.mxu0 %v5373
  %5492 = vmatpush.msra.mxu0 %v5372
  %5493 = vmatpush.msra.mxu0 %v5371
  %5494 = vmatmul.f32.gmra.mxu0 %v5381
  %v5495 = vpop.f32.mrf.mxu0
  %v5496 = vadd.f32 %v5440, %v5495
  %5497 = vmatmul.f32.gmra.mxu0 %v5384
  %v5498 = vpop.f32.mrf.mxu0
  %v5499 = vadd.f32 %v5443, %v5498
  %5500 = vmatmul.f32.gmra.mxu0 %v5387
  %v5501 = vpop.f32.mrf.mxu0
  %v5502 = vadd.f32 %v5446, %v5501
  %5503 = vmatmul.f32.gmra.mxu0 %v5390
  %v5504 = vpop.f32.mrf.mxu0
  %v5505 = vadd.f32 %v5449, %v5504
  %5506 = vmatmul.f32.gmra.mxu0 %v5393
  %v5507 = vpop.f32.mrf.mxu0
  %v5508 = vadd.f32 %v5452, %v5507
  %5509 = vmatmul.f32.gmra.mxu0 %v5396
  %v5510 = vpop.f32.mrf.mxu0
  %v5511 = vadd.f32 %v5455, %v5510
  %5512 = vmatmul.f32.gmra.mxu0 %v5399
  %v5513 = vpop.f32.mrf.mxu0
  %v5514 = vadd.f32 %v5458, %v5513
  %5515 = vmatmul.f32.gmra.mxu0 %v5402
  %v5516 = vpop.f32.mrf.mxu0
  %v5517 = vadd.f32 %v5461, %v5516
  %5518 = vmatmul.f32.gmra.mxu0 %v5405
  %v5519 = vpop.f32.mrf.mxu0
  %v5520 = vadd.f32 %v5464, %v5519
  %5521 = vmatmul.f32.gmra.mxu0 %v5408
  %v5522 = vpop.f32.mrf.mxu0
  %v5523 = vadd.f32 %v5467, %v5522
  %5524 = vmatmul.f32.gmra.mxu0 %v5411
  %v5525 = vpop.f32.mrf.mxu0
  %v5526 = vadd.f32 %v5470, %v5525
  %5527 = vmatmul.f32.gmra.mxu0 %v5414
  %v5528 = vpop.f32.mrf.mxu0
  %v5529 = vadd.f32 %v5473, %v5528
  %5530 = vmatmul.f32.gmra.mxu0 %v5417
  %v5531 = vpop.f32.mrf.mxu0
  %v5532 = vadd.f32 %v5476, %v5531
  %5533 = vdwg.mxu0
  %v5534 = vadd.f32 %v5212, %v5496
  %v5535 = vadd.f32 %v5213, %v5499
  %v5536 = vadd.f32 %v5214, %v5502
  %v5537 = vadd.f32 %v5215, %v5505
  %v5538 = vadd.f32 %v5216, %v5508
  %v5539 = vadd.f32 %v5217, %v5511
  %v5540 = vadd.f32 %v5218, %v5514
  %v5541 = vadd.f32 %v5219, %v5517
  %v5542 = vadd.f32 %v5220, %v5520
  %v5543 = vadd.f32 %v5221, %v5523
  %v5544 = vadd.f32 %v5222, %v5526
  %v5545 = vadd.f32 %v5223, %v5529
  %v5546 = vadd.f32 %v5224, %v5532
  %v5547 = vld [vmem:[%s6] sm:$0x1]
  %v5549 = vperm.slane %v5547, 0
  %v5551 = vadd.f32 %v5534, %v5549
  %v5552 = vadd.f32 %v5535, %v5549
  %v5553 = vadd.f32 %v5536, %v5549
  %v5554 = vadd.f32 %v5537, %v5549
  %v5555 = vadd.f32 %v5538, %v5549
  %v5556 = vadd.f32 %v5539, %v5549
  %v5557 = vadd.f32 %v5540, %v5549
  %v5558 = vadd.f32 %v5541, %v5549
  %v5559 = vadd.f32 %v5542, %v5549
  %v5560 = vadd.f32 %v5543, %v5549
  %v5561 = vadd.f32 %v5544, %v5549
  %v5562 = vadd.f32 %v5545, %v5549
  %v5563 = vadd.f32 %v5546, %v5549
  %5564 = vst.msk [vmem:[#allocation5] sm:$0xff] %vm1505, %v5551
  %5565 = vst.msk [vmem:[#allocation5 + $0x8] sm:$0xff] %vm1505, %v5552
  %5566 = vst.msk [vmem:[#allocation5 + $0x10] sm:$0xff] %vm1505, %v5553
  %5567 = vst.msk [vmem:[#allocation5 + $0x18] sm:$0xff] %vm1505, %v5554
  %5568 = vst.msk [vmem:[#allocation5 + $0x20] sm:$0xff] %vm1505, %v5555
  %5569 = vst.msk [vmem:[#allocation5 + $0x28] sm:$0xff] %vm1505, %v5556
  %5570 = vst.msk [vmem:[#allocation5 + $0x30] sm:$0xff] %vm1505, %v5557
  %5571 = vst.msk [vmem:[#allocation5 + $0x38] sm:$0xff] %vm1505, %v5558
  %5572 = vst.msk [vmem:[#allocation5 + $0x40] sm:$0xff] %vm1505, %v5559
  %5573 = vst.msk [vmem:[#allocation5 + $0x48] sm:$0xff] %vm1505, %v5560
  %5574 = vst.msk [vmem:[#allocation5 + $0x50] sm:$0xff] %vm1505, %v5561
  %5575 = vst.msk [vmem:[#allocation5 + $0x58] sm:$0xff] %vm1505, %v5562
  %5576 = vst.msk [vmem:[#allocation5 + $0x60] sm:$0xf] %vm2332, %v5563
  %v5577 = vld [vmem:[#allocation5] sm:$0xf]
  %5578 = vst.msk [vmem:[#allocation6] sm:$0xf] %vm2332, %v5577
  %v5579 = vld [vmem:[#allocation5 + $0x4] sm:$0xf]
  %5581 = vrot.lane.b32.xlu0 %v5579, 32
  %v5582 = vpop.permute.xlu0 %5581
  %vm5584 = vcmask 519424
  %5585 = vst.msk [vmem:[#allocation6] sm:$0xf] %vm5584, %v5582
  %v5586 = vld [vmem:[#allocation5 + $0x8] sm:$0xf]
  %5588 = vrot.lane.b32.xlu0 %v5586, 64
  %v5589 = vpop.permute.xlu0 %5588
  %vm5591 = vcmask 781824
  %5592 = vst.msk [vmem:[#allocation6] sm:$0xf] %vm5591, %v5589
  %v5593 = vld [vmem:[#allocation5 + $0xc] sm:$0xf]
  %5595 = vrot.lane.b32.xlu0 %v5593, 96
  %v5596 = vpop.permute.xlu0 %5595
  %vm5598 = vcmask 1044224
  %5599 = vst.msk [vmem:[#allocation6] sm:$0xf] %vm5598, %v5596
  %v5600 = vld [vmem:[#allocation5 + $0x10] sm:$0xf]
  %5601 = vst.msk [vmem:[#allocation6 + $0x4] sm:$0xf] %vm2332, %v5600
  %v5602 = vld [vmem:[#allocation5 + $0x14] sm:$0xf]
  %5604 = vrot.lane.b32.xlu0 %v5602, 32
  %v5605 = vpop.permute.xlu0 %5604
  %5607 = vst.msk [vmem:[#allocation6 + $0x4] sm:$0xf] %vm5584, %v5605
  %v5608 = vld [vmem:[#allocation5 + $0x18] sm:$0xf]
  %5610 = vrot.lane.b32.xlu0 %v5608, 64
  %v5611 = vpop.permute.xlu0 %5610
  %5613 = vst.msk [vmem:[#allocation6 + $0x4] sm:$0xf] %vm5591, %v5611
  %v5614 = vld [vmem:[#allocation5 + $0x1c] sm:$0xf]
  %5616 = vrot.lane.b32.xlu0 %v5614, 96
  %v5617 = vpop.permute.xlu0 %5616
  %5619 = vst.msk [vmem:[#allocation6 + $0x4] sm:$0xf] %vm5598, %v5617
  %v5620 = vld [vmem:[#allocation5 + $0x20] sm:$0xf]
  %5621 = vst.msk [vmem:[#allocation6 + $0x8] sm:$0xf] %vm2332, %v5620
  %v5622 = vld [vmem:[#allocation5 + $0x24] sm:$0xf]
  %5624 = vrot.lane.b32.xlu0 %v5622, 32
  %v5625 = vpop.permute.xlu0 %5624
  %5627 = vst.msk [vmem:[#allocation6 + $0x8] sm:$0xf] %vm5584, %v5625
  %v5628 = vld [vmem:[#allocation5 + $0x28] sm:$0xf]
  %5630 = vrot.lane.b32.xlu0 %v5628, 64
  %v5631 = vpop.permute.xlu0 %5630
  %5633 = vst.msk [vmem:[#allocation6 + $0x8] sm:$0xf] %vm5591, %v5631
  %v5634 = vld [vmem:[#allocation5 + $0x2c] sm:$0xf]
  %5636 = vrot.lane.b32.xlu0 %v5634, 96
  %v5637 = vpop.permute.xlu0 %5636
  %5639 = vst.msk [vmem:[#allocation6 + $0x8] sm:$0xf] %vm5598, %v5637
  %v5640 = vld [vmem:[#allocation5 + $0x30] sm:$0xf]
  %5641 = vst.msk [vmem:[#allocation6 + $0xc] sm:$0xf] %vm2332, %v5640
  %v5642 = vld [vmem:[#allocation5 + $0x34] sm:$0xf]
  %5644 = vrot.lane.b32.xlu0 %v5642, 32
  %v5645 = vpop.permute.xlu0 %5644
  %5647 = vst.msk [vmem:[#allocation6 + $0xc] sm:$0xf] %vm5584, %v5645
  %v5648 = vld [vmem:[#allocation5 + $0x38] sm:$0xf]
  %5650 = vrot.lane.b32.xlu0 %v5648, 64
  %v5651 = vpop.permute.xlu0 %5650
  %5653 = vst.msk [vmem:[#allocation6 + $0xc] sm:$0xf] %vm5591, %v5651
  %v5654 = vld [vmem:[#allocation5 + $0x3c] sm:$0xf]
  %5656 = vrot.lane.b32.xlu0 %v5654, 96
  %v5657 = vpop.permute.xlu0 %5656
  %5659 = vst.msk [vmem:[#allocation6 + $0xc] sm:$0xf] %vm5598, %v5657
  %v5660 = vld [vmem:[#allocation5 + $0x40] sm:$0xf]
  %5661 = vst.msk [vmem:[#allocation6 + $0x10] sm:$0xf] %vm2332, %v5660
  %v5662 = vld [vmem:[#allocation5 + $0x44] sm:$0xf]
  %5664 = vrot.lane.b32.xlu0 %v5662, 32
  %v5665 = vpop.permute.xlu0 %5664
  %5667 = vst.msk [vmem:[#allocation6 + $0x10] sm:$0xf] %vm5584, %v5665
  %v5668 = vld [vmem:[#allocation5 + $0x48] sm:$0xf]
  %5670 = vrot.lane.b32.xlu0 %v5668, 64
  %v5671 = vpop.permute.xlu0 %5670
  %5673 = vst.msk [vmem:[#allocation6 + $0x10] sm:$0xf] %vm5591, %v5671
  %v5674 = vld [vmem:[#allocation5 + $0x4c] sm:$0xf]
  %5676 = vrot.lane.b32.xlu0 %v5674, 96
  %v5677 = vpop.permute.xlu0 %5676
  %5679 = vst.msk [vmem:[#allocation6 + $0x10] sm:$0xf] %vm5598, %v5677
  %v5680 = vld [vmem:[#allocation5 + $0x50] sm:$0xf]
  %5681 = vst.msk [vmem:[#allocation6 + $0x14] sm:$0xf] %vm2332, %v5680
  %v5682 = vld [vmem:[#allocation5 + $0x54] sm:$0xf]
  %5684 = vrot.lane.b32.xlu0 %v5682, 32
  %v5685 = vpop.permute.xlu0 %5684
  %5687 = vst.msk [vmem:[#allocation6 + $0x14] sm:$0xf] %vm5584, %v5685
  %v5688 = vld [vmem:[#allocation5 + $0x58] sm:$0xf]
  %5690 = vrot.lane.b32.xlu0 %v5688, 64
  %v5691 = vpop.permute.xlu0 %5690
  %5693 = vst.msk [vmem:[#allocation6 + $0x14] sm:$0xf] %vm5591, %v5691
  %v5694 = vld [vmem:[#allocation5 + $0x5c] sm:$0xf]
  %5696 = vrot.lane.b32.xlu0 %v5694, 96
  %v5697 = vpop.permute.xlu0 %5696
  %5699 = vst.msk [vmem:[#allocation6 + $0x14] sm:$0xf] %vm5598, %v5697
  %v5700 = vld [vmem:[#allocation5 + $0x60] sm:$0xf]
  %5701 = vst.msk [vmem:[#allocation6 + $0x18] sm:$0xf] %vm2332, %v5700
  %s5702 = smul.u32 8, 100
  %s5703 = smul.u32 %s5702, 4
  %s5704 = sshll.u32 %s5703, 4
  %5705 = dma.done [#allocation7], %s5704
  %v5706 = vld [vmem:[%s2] sm:$0xf]
  %v5707 = vld [vmem:[%s7] sm:$0xff]
  %v5708 = vld [vmem:[%s7 + $0x8] sm:$0xff]
  %v5709 = vld [vmem:[%s7 + $0x10] sm:$0xff]
  %v5710 = vld [vmem:[%s7 + $0x18] sm:$0xff]
  %v5711 = vld [vmem:[%s7 + $0x20] sm:$0xff]
  %v5712 = vld [vmem:[%s7 + $0x28] sm:$0xff]
  %v5713 = vld [vmem:[%s7 + $0x30] sm:$0xff]
  %v5714 = vld [vmem:[%s7 + $0x38] sm:$0xff]
  %v5715 = vld [vmem:[%s7 + $0x40] sm:$0xff]
  %v5716 = vld [vmem:[%s7 + $0x48] sm:$0xff]
  %v5717 = vld [vmem:[%s7 + $0x50] sm:$0xff]
  %v5718 = vld [vmem:[%s7 + $0x58] sm:$0xff]
  %v5719 = vld [vmem:[%s7 + $0x60] sm:$0xff]
  %v5720 = vld [vmem:[%s7 + $0x68] sm:$0xff]
  %v5721 = vld [vmem:[%s7 + $0x70] sm:$0xff]
  %v5722 = vld [vmem:[%s7 + $0x78] sm:$0xff]
  %v5723 = vld [vmem:[%s7 + $0x80] sm:$0xff]
  %v5724 = vld [vmem:[%s7 + $0x88] sm:$0xff]
  %v5725 = vld [vmem:[%s7 + $0x90] sm:$0xff]
  %v5726 = vld [vmem:[%s7 + $0x98] sm:$0xff]
  %v5727 = vld [vmem:[%s7 + $0xa0] sm:$0xff]
  %v5728 = vld [vmem:[%s7 + $0xa8] sm:$0xff]
  %v5729 = vld [vmem:[%s7 + $0xb0] sm:$0xff]
  %v5730 = vld [vmem:[%s7 + $0xb8] sm:$0xff]
  %v5731 = vld [vmem:[%s7 + $0xc0] sm:$0x3]
  %v5732 = vld [vmem:[%s7 + $0xc8] sm:$0x3]
  %v5733 = vld [vmem:[%s7 + $0xd0] sm:$0x3]
  %v5734 = vld [vmem:[%s7 + $0xd8] sm:$0x3]
  %v5735 = vld [vmem:[%s8] sm:$0xf]
  %v5737 = vperm.slane %v5735, 0
  %v5738 = vperm.slane %v5735, 1
  %v5739 = vperm.slane %v5735, 2
  %v5740 = vperm.slane %v5735, 3
  %vm5745 = vcmask 408576
  %v5747 = vsel %vm5745, %v5706, 0
  %vm5749 = vcmask 1041408
  %v5751 = vsel %vm5749, %v5731, 0
  %v5754 = vsel %vm5749, %v5732, 0
  %v5757 = vsel %vm5749, %v5733, 0
  %v5760 = vsel %vm5749, %v5734, 0
  %5762 = vmatpush.msra.mxu0 0.0
  %5763 = vmatpush.msra.mxu0 0.0
  %5764 = vmatpush.msra.mxu0 0.0
  %5765 = vmatpush.msra.mxu0 0.0
  %5766 = vmatpush.msra.mxu0 0.0
  %5767 = vmatpush.msra.mxu0 0.0
  %5768 = vmatpush.msra.mxu0 0.0
  %5769 = vmatpush.msra.mxu0 0.0
  %5770 = vmatpush.msra.mxu0 0.0
  %5771 = vmatpush.msra.mxu0 %v5751
  %5772 = vmatpush.msra.mxu0 %v5727
  %5773 = vmatpush.msra.mxu0 %v5723
  %5774 = vmatpush.msra.mxu0 %v5719
  %5775 = vmatpush.msra.mxu0 %v5715
  %5776 = vmatpush.msra.mxu0 %v5711
  %5777 = vmatpush.msra.mxu0 %v5707
  %5778 = vmatmul.f32.gmra.mxu0 %v5747
  %v5779 = vpop.f32.mrf.mxu0
  %v5780 = vadd.f32 %v5737, %v5779
  %5781 = vdwg.mxu0
  %5782 = vmatpush.msra.mxu0 0.0
  %5783 = vmatpush.msra.mxu0 0.0
  %5784 = vmatpush.msra.mxu0 0.0
  %5785 = vmatpush.msra.mxu0 0.0
  %5786 = vmatpush.msra.mxu0 0.0
  %5787 = vmatpush.msra.mxu0 0.0
  %5788 = vmatpush.msra.mxu0 0.0
  %5789 = vmatpush.msra.mxu0 0.0
  %5790 = vmatpush.msra.mxu0 0.0
  %5791 = vmatpush.msra.mxu0 %v5754
  %5792 = vmatpush.msra.mxu0 %v5728
  %5793 = vmatpush.msra.mxu0 %v5724
  %5794 = vmatpush.msra.mxu0 %v5720
  %5795 = vmatpush.msra.mxu0 %v5716
  %5796 = vmatpush.msra.mxu0 %v5712
  %5797 = vmatpush.msra.mxu0 %v5708
  %5798 = vmatmul.f32.gmra.mxu0 %v5747
  %v5799 = vpop.f32.mrf.mxu0
  %v5800 = vadd.f32 %v5738, %v5799
  %5801 = vdwg.mxu0
  %5802 = vmatpush.msra.mxu0 0.0
  %5803 = vmatpush.msra.mxu0 0.0
  %5804 = vmatpush.msra.mxu0 0.0
  %5805 = vmatpush.msra.mxu0 0.0
  %5806 = vmatpush.msra.mxu0 0.0
  %5807 = vmatpush.msra.mxu0 0.0
  %5808 = vmatpush.msra.mxu0 0.0
  %5809 = vmatpush.msra.mxu0 0.0
  %5810 = vmatpush.msra.mxu0 0.0
  %5811 = vmatpush.msra.mxu0 %v5757
  %5812 = vmatpush.msra.mxu0 %v5729
  %5813 = vmatpush.msra.mxu0 %v5725
  %5814 = vmatpush.msra.mxu0 %v5721
  %5815 = vmatpush.msra.mxu0 %v5717
  %5816 = vmatpush.msra.mxu0 %v5713
  %5817 = vmatpush.msra.mxu0 %v5709
  %5818 = vmatmul.f32.gmra.mxu0 %v5747
  %v5819 = vpop.f32.mrf.mxu0
  %v5820 = vadd.f32 %v5739, %v5819
  %5821 = vdwg.mxu0
  %5822 = vmatpush.msra.mxu0 0.0
  %5823 = vmatpush.msra.mxu0 0.0
  %5824 = vmatpush.msra.mxu0 0.0
  %5825 = vmatpush.msra.mxu0 0.0
  %5826 = vmatpush.msra.mxu0 0.0
  %5827 = vmatpush.msra.mxu0 0.0
  %5828 = vmatpush.msra.mxu0 0.0
  %5829 = vmatpush.msra.mxu0 0.0
  %5830 = vmatpush.msra.mxu0 0.0
  %5831 = vmatpush.msra.mxu0 %v5760
  %5832 = vmatpush.msra.mxu0 %v5730
  %5833 = vmatpush.msra.mxu0 %v5726
  %5834 = vmatpush.msra.mxu0 %v5722
  %5835 = vmatpush.msra.mxu0 %v5718
  %5836 = vmatpush.msra.mxu0 %v5714
  %5837 = vmatpush.msra.mxu0 %v5710
  %5838 = vmatmul.f32.gmra.mxu0 %v5747
  %v5839 = vpop.f32.mrf.mxu0
  %v5840 = vadd.f32 %v5740, %v5839
  %5841 = vdwg.mxu0
  %v5842 = vld [vmem:[#allocation6] sm:$0xff]
  %v5843 = vld [vmem:[#allocation6 + $0x8] sm:$0xff]
  %v5844 = vld [vmem:[#allocation6 + $0x10] sm:$0xff]
  %v5845 = vld [vmem:[#allocation6 + $0x18] sm:$0xf]
  %v5846 = vld [vmem:[#allocation2] sm:$0xff]
  %v5847 = vld [vmem:[#allocation2 + $0x8] sm:$0xff]
  %v5848 = vld [vmem:[#allocation2 + $0x10] sm:$0xff]
  %v5849 = vld [vmem:[#allocation2 + $0x18] sm:$0xff]
  %v5850 = vld [vmem:[#allocation2 + $0x20] sm:$0xff]
  %v5851 = vld [vmem:[#allocation2 + $0x28] sm:$0xff]
  %v5852 = vld [vmem:[#allocation2 + $0x30] sm:$0xff]
  %v5853 = vld [vmem:[#allocation2 + $0x38] sm:$0xff]
  %v5854 = vld [vmem:[#allocation2 + $0x40] sm:$0xff]
  %v5855 = vld [vmem:[#allocation2 + $0x48] sm:$0xff]
  %v5856 = vld [vmem:[#allocation2 + $0x50] sm:$0xff]
  %v5857 = vld [vmem:[#allocation2 + $0x58] sm:$0xff]
  %v5858 = vld [vmem:[#allocation2 + $0x60] sm:$0xff]
  %v5859 = vld [vmem:[#allocation2 + $0x68] sm:$0xff]
  %v5860 = vld [vmem:[#allocation2 + $0x70] sm:$0xff]
  %v5861 = vld [vmem:[#allocation2 + $0x78] sm:$0xff]
  %v5862 = vld [vmem:[#allocation2 + $0x80] sm:$0xff]
  %v5863 = vld [vmem:[#allocation2 + $0x88] sm:$0xff]
  %v5864 = vld [vmem:[#allocation2 + $0x90] sm:$0xff]
  %v5865 = vld [vmem:[#allocation2 + $0x98] sm:$0xff]
  %v5866 = vld [vmem:[#allocation2 + $0xa0] sm:$0xff]
  %v5867 = vld [vmem:[#allocation2 + $0xa8] sm:$0xff]
  %v5868 = vld [vmem:[#allocation2 + $0xb0] sm:$0xff]
  %v5869 = vld [vmem:[#allocation2 + $0xb8] sm:$0xff]
  %v5870 = vld [vmem:[#allocation2 + $0xc0] sm:$0xff]
  %v5871 = vld [vmem:[#allocation2 + $0xc8] sm:$0xff]
  %v5872 = vld [vmem:[#allocation2 + $0xd0] sm:$0xff]
  %v5873 = vld [vmem:[#allocation2 + $0xd8] sm:$0xff]
  %v5874 = vld [vmem:[#allocation2 + $0xe0] sm:$0xff]
  %v5875 = vld [vmem:[#allocation2 + $0xe8] sm:$0xff]
  %v5876 = vld [vmem:[#allocation2 + $0xf0] sm:$0xff]
  %v5877 = vld [vmem:[#allocation2 + $0xf8] sm:$0xff]
  %v5878 = vld [vmem:[#allocation2 + $0x100] sm:$0xff]
  %v5879 = vld [vmem:[#allocation2 + $0x108] sm:$0xff]
  %v5880 = vld [vmem:[#allocation2 + $0x110] sm:$0xff]
  %v5881 = vld [vmem:[#allocation2 + $0x118] sm:$0xff]
  %v5882 = vld [vmem:[#allocation2 + $0x120] sm:$0xff]
  %v5883 = vld [vmem:[#allocation2 + $0x128] sm:$0xff]
  %v5884 = vld [vmem:[#allocation2 + $0x130] sm:$0xff]
  %v5885 = vld [vmem:[#allocation2 + $0x138] sm:$0xff]
  %v5886 = vld [vmem:[#allocation2 + $0x140] sm:$0xff]
  %v5887 = vld [vmem:[#allocation2 + $0x148] sm:$0xff]
  %v5888 = vld [vmem:[#allocation2 + $0x150] sm:$0xff]
  %v5889 = vld [vmem:[#allocation2 + $0x158] sm:$0xff]
  %v5890 = vld [vmem:[#allocation2 + $0x160] sm:$0xff]
  %v5891 = vld [vmem:[#allocation2 + $0x168] sm:$0xff]
  %v5892 = vld [vmem:[#allocation2 + $0x170] sm:$0xff]
  %v5893 = vld [vmem:[#allocation2 + $0x178] sm:$0xff]
  %v5894 = vld [vmem:[#allocation2 + $0x180] sm:$0xff]
  %v5895 = vld [vmem:[#allocation2 + $0x188] sm:$0xff]
  %v5896 = vld [vmem:[#allocation2 + $0x190] sm:$0xff]
  %v5897 = vld [vmem:[#allocation2 + $0x198] sm:$0xff]
  %v5898 = vld [vmem:[#allocation2 + $0x1a0] sm:$0xff]
  %v5899 = vld [vmem:[#allocation2 + $0x1a8] sm:$0xff]
  %v5900 = vld [vmem:[#allocation2 + $0x1b0] sm:$0xff]
  %v5901 = vld [vmem:[#allocation2 + $0x1b8] sm:$0xff]
  %v5902 = vld [vmem:[#allocation2 + $0x1c0] sm:$0xff]
  %v5903 = vld [vmem:[#allocation2 + $0x1c8] sm:$0xff]
  %v5904 = vld [vmem:[#allocation2 + $0x1d0] sm:$0xff]
  %v5905 = vld [vmem:[#allocation2 + $0x1d8] sm:$0xff]
  %v5906 = vld [vmem:[#allocation2 + $0x1e0] sm:$0xff]
  %v5907 = vld [vmem:[#allocation2 + $0x1e8] sm:$0xff]
  %v5908 = vld [vmem:[#allocation2 + $0x1f0] sm:$0xff]
  %v5909 = vld [vmem:[#allocation2 + $0x1f8] sm:$0xff]
  %v5910 = vld [vmem:[#allocation2 + $0x200] sm:$0xff]
  %v5911 = vld [vmem:[#allocation2 + $0x208] sm:$0xff]
  %v5912 = vld [vmem:[#allocation2 + $0x210] sm:$0xff]
  %v5913 = vld [vmem:[#allocation2 + $0x218] sm:$0xff]
  %v5914 = vld [vmem:[#allocation2 + $0x220] sm:$0xff]
  %v5915 = vld [vmem:[#allocation2 + $0x228] sm:$0xff]
  %v5916 = vld [vmem:[#allocation2 + $0x230] sm:$0xff]
  %v5917 = vld [vmem:[#allocation2 + $0x238] sm:$0xff]
  %v5918 = vld [vmem:[#allocation2 + $0x240] sm:$0xff]
  %v5919 = vld [vmem:[#allocation2 + $0x248] sm:$0xff]
  %v5920 = vld [vmem:[#allocation2 + $0x250] sm:$0xff]
  %v5921 = vld [vmem:[#allocation2 + $0x258] sm:$0xff]
  %v5922 = vld [vmem:[#allocation2 + $0x260] sm:$0xff]
  %v5923 = vld [vmem:[#allocation2 + $0x268] sm:$0xff]
  %v5924 = vld [vmem:[#allocation2 + $0x270] sm:$0xff]
  %v5925 = vld [vmem:[#allocation2 + $0x278] sm:$0xff]
  %v5926 = vld [vmem:[#allocation2 + $0x280] sm:$0xff]
  %v5927 = vld [vmem:[#allocation2 + $0x288] sm:$0xff]
  %v5928 = vld [vmem:[#allocation2 + $0x290] sm:$0xff]
  %v5929 = vld [vmem:[#allocation2 + $0x298] sm:$0xff]
  %v5930 = vld [vmem:[#allocation2 + $0x2a0] sm:$0xff]
  %v5931 = vld [vmem:[#allocation2 + $0x2a8] sm:$0xff]
  %v5932 = vld [vmem:[#allocation2 + $0x2b0] sm:$0xff]
  %v5933 = vld [vmem:[#allocation2 + $0x2b8] sm:$0xff]
  %v5934 = vld [vmem:[#allocation2 + $0x2c0] sm:$0xff]
  %v5935 = vld [vmem:[#allocation2 + $0x2c8] sm:$0xff]
  %v5936 = vld [vmem:[#allocation2 + $0x2d0] sm:$0xff]
  %v5937 = vld [vmem:[#allocation2 + $0x2d8] sm:$0xff]
  %v5938 = vld [vmem:[#allocation2 + $0x2e0] sm:$0xff]
  %v5939 = vld [vmem:[#allocation2 + $0x2e8] sm:$0xff]
  %v5940 = vld [vmem:[#allocation2 + $0x2f0] sm:$0xff]
  %v5941 = vld [vmem:[#allocation2 + $0x2f8] sm:$0xff]
  %v5942 = vld [vmem:[#allocation2 + $0x300] sm:$0xff]
  %v5943 = vld [vmem:[#allocation2 + $0x308] sm:$0xff]
  %v5944 = vld [vmem:[#allocation2 + $0x310] sm:$0xff]
  %v5945 = vld [vmem:[#allocation2 + $0x318] sm:$0xff]
  %v5946 = vld [vmem:[#allocation2 + $0x320] sm:$0xff]
  %v5947 = vld [vmem:[#allocation2 + $0x328] sm:$0xff]
  %v5948 = vld [vmem:[#allocation2 + $0x330] sm:$0xff]
  %v5949 = vld [vmem:[#allocation2 + $0x338] sm:$0xff]
  %v5950 = vld [vmem:[#allocation2 + $0x340] sm:$0xff]
  %v5951 = vld [vmem:[#allocation2 + $0x348] sm:$0xff]
  %v5952 = vld [vmem:[#allocation2 + $0x350] sm:$0xff]
  %v5953 = vld [vmem:[#allocation2 + $0x358] sm:$0xff]
  %v5954 = vld [vmem:[#allocation2 + $0x360] sm:$0xff]
  %v5955 = vld [vmem:[#allocation2 + $0x368] sm:$0xff]
  %v5956 = vld [vmem:[#allocation2 + $0x370] sm:$0xff]
  %v5957 = vld [vmem:[#allocation2 + $0x378] sm:$0xff]
  %v5958 = vld [vmem:[#allocation2 + $0x380] sm:$0xff]
  %v5959 = vld [vmem:[#allocation2 + $0x388] sm:$0xff]
  %v5960 = vld [vmem:[#allocation2 + $0x390] sm:$0xff]
  %v5961 = vld [vmem:[#allocation2 + $0x398] sm:$0xff]
  %v5962 = vld [vmem:[#allocation2 + $0x3a0] sm:$0xff]
  %v5963 = vld [vmem:[#allocation2 + $0x3a8] sm:$0xff]
  %v5964 = vld [vmem:[#allocation2 + $0x3b0] sm:$0xff]
  %v5965 = vld [vmem:[#allocation2 + $0x3b8] sm:$0xff]
  %v5966 = vld [vmem:[#allocation2 + $0x3c0] sm:$0xff]
  %v5967 = vld [vmem:[#allocation2 + $0x3c8] sm:$0xff]
  %v5968 = vld [vmem:[#allocation2 + $0x3d0] sm:$0xff]
  %v5969 = vld [vmem:[#allocation2 + $0x3d8] sm:$0xff]
  %v5970 = vld [vmem:[#allocation2 + $0x3e0] sm:$0xff]
  %v5971 = vld [vmem:[#allocation2 + $0x3e8] sm:$0xff]
  %v5972 = vld [vmem:[#allocation2 + $0x3f0] sm:$0xff]
  %v5973 = vld [vmem:[#allocation2 + $0x3f8] sm:$0xff]
  %v5974 = vld [vmem:[#allocation2 + $0x400] sm:$0xff]
  %v5975 = vld [vmem:[#allocation2 + $0x408] sm:$0xff]
  %v5976 = vld [vmem:[#allocation2 + $0x410] sm:$0xff]
  %v5977 = vld [vmem:[#allocation2 + $0x418] sm:$0xff]
  %v5978 = vld [vmem:[#allocation2 + $0x420] sm:$0xff]
  %v5979 = vld [vmem:[#allocation2 + $0x428] sm:$0xff]
  %v5980 = vld [vmem:[#allocation2 + $0x430] sm:$0xff]
  %v5981 = vld [vmem:[#allocation2 + $0x438] sm:$0xff]
  %v5982 = vld [vmem:[#allocation2 + $0x440] sm:$0xff]
  %v5983 = vld [vmem:[#allocation2 + $0x448] sm:$0xff]
  %v5984 = vld [vmem:[#allocation2 + $0x450] sm:$0xff]
  %v5985 = vld [vmem:[#allocation2 + $0x458] sm:$0xff]
  %v5986 = vld [vmem:[#allocation2 + $0x460] sm:$0xff]
  %v5987 = vld [vmem:[#allocation2 + $0x468] sm:$0xff]
  %v5988 = vld [vmem:[#allocation2 + $0x470] sm:$0xff]
  %v5989 = vld [vmem:[#allocation2 + $0x478] sm:$0xff]
  %v5990 = vld [vmem:[#allocation2 + $0x480] sm:$0xff]
  %v5991 = vld [vmem:[#allocation2 + $0x488] sm:$0xff]
  %v5992 = vld [vmem:[#allocation2 + $0x490] sm:$0xff]
  %v5993 = vld [vmem:[#allocation2 + $0x498] sm:$0xff]
  %v5994 = vld [vmem:[#allocation2 + $0x4a0] sm:$0xff]
  %v5995 = vld [vmem:[#allocation2 + $0x4a8] sm:$0xff]
  %v5996 = vld [vmem:[#allocation2 + $0x4b0] sm:$0xff]
  %v5997 = vld [vmem:[#allocation2 + $0x4b8] sm:$0xff]
  %v5998 = vld [vmem:[#allocation2 + $0x4c0] sm:$0xff]
  %v5999 = vld [vmem:[#allocation2 + $0x4c8] sm:$0xff]
  %v6000 = vld [vmem:[#allocation2 + $0x4d0] sm:$0xff]
  %v6001 = vld [vmem:[#allocation2 + $0x4d8] sm:$0xff]
  %v6002 = vld [vmem:[#allocation2 + $0x4e0] sm:$0xff]
  %v6003 = vld [vmem:[#allocation2 + $0x4e8] sm:$0xff]
  %v6004 = vld [vmem:[#allocation2 + $0x4f0] sm:$0xff]
  %v6005 = vld [vmem:[#allocation2 + $0x4f8] sm:$0xff]
  %v6006 = vld [vmem:[#allocation2 + $0x500] sm:$0xff]
  %v6007 = vld [vmem:[#allocation2 + $0x508] sm:$0xff]
  %v6008 = vld [vmem:[#allocation2 + $0x510] sm:$0xff]
  %v6009 = vld [vmem:[#allocation2 + $0x518] sm:$0xff]
  %v6010 = vld [vmem:[#allocation2 + $0x520] sm:$0xff]
  %v6011 = vld [vmem:[#allocation2 + $0x528] sm:$0xff]
  %v6012 = vld [vmem:[#allocation2 + $0x530] sm:$0xff]
  %v6013 = vld [vmem:[#allocation2 + $0x538] sm:$0xff]
  %v6014 = vld [vmem:[#allocation2 + $0x540] sm:$0xff]
  %v6015 = vld [vmem:[#allocation2 + $0x548] sm:$0xff]
  %v6016 = vld [vmem:[#allocation2 + $0x550] sm:$0xff]
  %v6017 = vld [vmem:[#allocation2 + $0x558] sm:$0xff]
  %v6018 = vld [vmem:[#allocation2 + $0x560] sm:$0xff]
  %v6019 = vld [vmem:[#allocation2 + $0x568] sm:$0xff]
  %v6020 = vld [vmem:[#allocation2 + $0x570] sm:$0xff]
  %v6021 = vld [vmem:[#allocation2 + $0x578] sm:$0xff]
  %v6022 = vld [vmem:[#allocation2 + $0x580] sm:$0xff]
  %v6023 = vld [vmem:[#allocation2 + $0x588] sm:$0xff]
  %v6024 = vld [vmem:[#allocation2 + $0x590] sm:$0xff]
  %v6025 = vld [vmem:[#allocation2 + $0x598] sm:$0xff]
  %v6026 = vld [vmem:[#allocation2 + $0x5a0] sm:$0xff]
  %v6027 = vld [vmem:[#allocation2 + $0x5a8] sm:$0xff]
  %v6028 = vld [vmem:[#allocation2 + $0x5b0] sm:$0xff]
  %v6029 = vld [vmem:[#allocation2 + $0x5b8] sm:$0xff]
  %v6030 = vld [vmem:[#allocation2 + $0x5c0] sm:$0xff]
  %v6031 = vld [vmem:[#allocation2 + $0x5c8] sm:$0xff]
  %v6032 = vld [vmem:[#allocation2 + $0x5d0] sm:$0xff]
  %v6033 = vld [vmem:[#allocation2 + $0x5d8] sm:$0xff]
  %v6034 = vld [vmem:[#allocation2 + $0x5e0] sm:$0xff]
  %v6035 = vld [vmem:[#allocation2 + $0x5e8] sm:$0xff]
  %v6036 = vld [vmem:[#allocation2 + $0x5f0] sm:$0xff]
  %v6037 = vld [vmem:[#allocation2 + $0x5f8] sm:$0xff]
  %v6038 = vld [vmem:[#allocation2 + $0x600] sm:$0xff]
  %v6039 = vld [vmem:[#allocation2 + $0x608] sm:$0xff]
  %v6040 = vld [vmem:[#allocation2 + $0x610] sm:$0xff]
  %v6041 = vld [vmem:[#allocation2 + $0x618] sm:$0xff]
  %v6042 = vld [vmem:[#allocation2 + $0x620] sm:$0xff]
  %v6043 = vld [vmem:[#allocation2 + $0x628] sm:$0xff]
  %v6044 = vld [vmem:[#allocation2 + $0x630] sm:$0xff]
  %v6045 = vld [vmem:[#allocation2 + $0x638] sm:$0xff]
  %v6046 = vld [vmem:[#allocation2 + $0x640] sm:$0xff]
  %v6047 = vld [vmem:[#allocation2 + $0x648] sm:$0xff]
  %v6048 = vld [vmem:[#allocation2 + $0x650] sm:$0xff]
  %v6049 = vld [vmem:[#allocation2 + $0x658] sm:$0xff]
  %v6050 = vld [vmem:[#allocation2 + $0x660] sm:$0xff]
  %v6051 = vld [vmem:[#allocation2 + $0x668] sm:$0xff]
  %v6052 = vld [vmem:[#allocation2 + $0x670] sm:$0xff]
  %v6053 = vld [vmem:[#allocation2 + $0x678] sm:$0xff]
  %v6054 = vld [vmem:[#allocation2 + $0x680] sm:$0xff]
  %v6055 = vld [vmem:[#allocation2 + $0x688] sm:$0xff]
  %v6056 = vld [vmem:[#allocation2 + $0x690] sm:$0xff]
  %v6057 = vld [vmem:[#allocation2 + $0x698] sm:$0xff]
  %v6058 = vld [vmem:[#allocation2 + $0x6a0] sm:$0xff]
  %v6059 = vld [vmem:[#allocation2 + $0x6a8] sm:$0xff]
  %v6060 = vld [vmem:[#allocation2 + $0x6b0] sm:$0xff]
  %v6061 = vld [vmem:[#allocation2 + $0x6b8] sm:$0xff]
  %v6062 = vld [vmem:[#allocation2 + $0x6c0] sm:$0xff]
  %v6063 = vld [vmem:[#allocation2 + $0x6c8] sm:$0xff]
  %v6064 = vld [vmem:[#allocation2 + $0x6d0] sm:$0xff]
  %v6065 = vld [vmem:[#allocation2 + $0x6d8] sm:$0xff]
  %v6066 = vld [vmem:[#allocation2 + $0x6e0] sm:$0xff]
  %v6067 = vld [vmem:[#allocation2 + $0x6e8] sm:$0xff]
  %v6068 = vld [vmem:[#allocation2 + $0x6f0] sm:$0xff]
  %v6069 = vld [vmem:[#allocation2 + $0x6f8] sm:$0xff]
  %v6070 = vld [vmem:[#allocation2 + $0x700] sm:$0xff]
  %v6071 = vld [vmem:[#allocation2 + $0x708] sm:$0xff]
  %v6072 = vld [vmem:[#allocation2 + $0x710] sm:$0xff]
  %v6073 = vld [vmem:[#allocation2 + $0x718] sm:$0xff]
  %v6074 = vld [vmem:[#allocation2 + $0x720] sm:$0xff]
  %v6075 = vld [vmem:[#allocation2 + $0x728] sm:$0xff]
  %v6076 = vld [vmem:[#allocation2 + $0x730] sm:$0xff]
  %v6077 = vld [vmem:[#allocation2 + $0x738] sm:$0xff]
  %v6078 = vld [vmem:[#allocation2 + $0x740] sm:$0xff]
  %v6079 = vld [vmem:[#allocation2 + $0x748] sm:$0xff]
  %v6080 = vld [vmem:[#allocation2 + $0x750] sm:$0xff]
  %v6081 = vld [vmem:[#allocation2 + $0x758] sm:$0xff]
  %v6082 = vld [vmem:[#allocation2 + $0x760] sm:$0xff]
  %v6083 = vld [vmem:[#allocation2 + $0x768] sm:$0xff]
  %v6084 = vld [vmem:[#allocation2 + $0x770] sm:$0xff]
  %v6085 = vld [vmem:[#allocation2 + $0x778] sm:$0xff]
  %v6086 = vld [vmem:[#allocation2 + $0x780] sm:$0xff]
  %v6087 = vld [vmem:[#allocation2 + $0x788] sm:$0xff]
  %v6088 = vld [vmem:[#allocation2 + $0x790] sm:$0xff]
  %v6089 = vld [vmem:[#allocation2 + $0x798] sm:$0xff]
  %v6090 = vld [vmem:[#allocation2 + $0x7a0] sm:$0xff]
  %v6091 = vld [vmem:[#allocation2 + $0x7a8] sm:$0xff]
  %v6092 = vld [vmem:[#allocation2 + $0x7b0] sm:$0xff]
  %v6093 = vld [vmem:[#allocation2 + $0x7b8] sm:$0xff]
  %v6094 = vld [vmem:[#allocation2 + $0x7c0] sm:$0xff]
  %v6095 = vld [vmem:[#allocation2 + $0x7c8] sm:$0xff]
  %v6096 = vld [vmem:[#allocation2 + $0x7d0] sm:$0xff]
  %v6097 = vld [vmem:[#allocation2 + $0x7d8] sm:$0xff]
  %v6098 = vld [vmem:[#allocation2 + $0x7e0] sm:$0xff]
  %v6099 = vld [vmem:[#allocation2 + $0x7e8] sm:$0xff]
  %v6100 = vld [vmem:[#allocation2 + $0x7f0] sm:$0xff]
  %v6101 = vld [vmem:[#allocation2 + $0x7f8] sm:$0xff]
  %v6102 = vld [vmem:[#allocation2 + $0x800] sm:$0xff]
  %v6103 = vld [vmem:[#allocation2 + $0x808] sm:$0xff]
  %v6104 = vld [vmem:[#allocation2 + $0x810] sm:$0xff]
  %v6105 = vld [vmem:[#allocation2 + $0x818] sm:$0xff]
  %v6106 = vld [vmem:[#allocation2 + $0x820] sm:$0xff]
  %v6107 = vld [vmem:[#allocation2 + $0x828] sm:$0xff]
  %v6108 = vld [vmem:[#allocation2 + $0x830] sm:$0xff]
  %v6109 = vld [vmem:[#allocation2 + $0x838] sm:$0xff]
  %v6110 = vld [vmem:[#allocation2 + $0x840] sm:$0xff]
  %v6111 = vld [vmem:[#allocation2 + $0x848] sm:$0xff]
  %v6112 = vld [vmem:[#allocation2 + $0x850] sm:$0xff]
  %v6113 = vld [vmem:[#allocation2 + $0x858] sm:$0xff]
  %v6114 = vld [vmem:[#allocation2 + $0x860] sm:$0xff]
  %v6115 = vld [vmem:[#allocation2 + $0x868] sm:$0xff]
  %v6116 = vld [vmem:[#allocation2 + $0x870] sm:$0xff]
  %v6117 = vld [vmem:[#allocation2 + $0x878] sm:$0xff]
  %v6118 = vld [vmem:[#allocation2 + $0x880] sm:$0xff]
  %v6119 = vld [vmem:[#allocation2 + $0x888] sm:$0xff]
  %v6120 = vld [vmem:[#allocation2 + $0x890] sm:$0xff]
  %v6121 = vld [vmem:[#allocation2 + $0x898] sm:$0xff]
  %v6122 = vld [vmem:[#allocation2 + $0x8a0] sm:$0xff]
  %v6123 = vld [vmem:[#allocation2 + $0x8a8] sm:$0xff]
  %v6124 = vld [vmem:[#allocation2 + $0x8b0] sm:$0xff]
  %v6125 = vld [vmem:[#allocation2 + $0x8b8] sm:$0xff]
  %v6126 = vld [vmem:[#allocation2 + $0x8c0] sm:$0xff]
  %v6127 = vld [vmem:[#allocation2 + $0x8c8] sm:$0xff]
  %v6128 = vld [vmem:[#allocation2 + $0x8d0] sm:$0xff]
  %v6129 = vld [vmem:[#allocation2 + $0x8d8] sm:$0xff]
  %v6130 = vld [vmem:[#allocation2 + $0x8e0] sm:$0xff]
  %v6131 = vld [vmem:[#allocation2 + $0x8e8] sm:$0xff]
  %v6132 = vld [vmem:[#allocation2 + $0x8f0] sm:$0xff]
  %v6133 = vld [vmem:[#allocation2 + $0x8f8] sm:$0xff]
  %v6134 = vld [vmem:[#allocation2 + $0x900] sm:$0xff]
  %v6135 = vld [vmem:[#allocation2 + $0x908] sm:$0xff]
  %v6136 = vld [vmem:[#allocation2 + $0x910] sm:$0xff]
  %v6137 = vld [vmem:[#allocation2 + $0x918] sm:$0xff]
  %v6138 = vld [vmem:[#allocation2 + $0x920] sm:$0xff]
  %v6139 = vld [vmem:[#allocation2 + $0x928] sm:$0xff]
  %v6140 = vld [vmem:[#allocation2 + $0x930] sm:$0xff]
  %v6141 = vld [vmem:[#allocation2 + $0x938] sm:$0xff]
  %v6142 = vld [vmem:[#allocation2 + $0x940] sm:$0xff]
  %v6143 = vld [vmem:[#allocation2 + $0x948] sm:$0xff]
  %v6144 = vld [vmem:[#allocation2 + $0x950] sm:$0xff]
  %v6145 = vld [vmem:[#allocation2 + $0x958] sm:$0xff]
  %v6146 = vld [vmem:[#allocation2 + $0x960] sm:$0xff]
  %v6147 = vld [vmem:[#allocation2 + $0x968] sm:$0xff]
  %v6148 = vld [vmem:[#allocation2 + $0x970] sm:$0xff]
  %v6149 = vld [vmem:[#allocation2 + $0x978] sm:$0xff]
  %v6150 = vld [vmem:[#allocation2 + $0x980] sm:$0xff]
  %v6151 = vld [vmem:[#allocation2 + $0x988] sm:$0xff]
  %v6152 = vld [vmem:[#allocation2 + $0x990] sm:$0xff]
  %v6153 = vld [vmem:[#allocation2 + $0x998] sm:$0xff]
  %v6154 = vld [vmem:[#allocation2 + $0x9a0] sm:$0xff]
  %v6155 = vld [vmem:[#allocation2 + $0x9a8] sm:$0xff]
  %v6156 = vld [vmem:[#allocation2 + $0x9b0] sm:$0xff]
  %v6157 = vld [vmem:[#allocation2 + $0x9b8] sm:$0xff]
  %v6158 = vld [vmem:[#allocation2 + $0x9c0] sm:$0xff]
  %v6159 = vld [vmem:[#allocation2 + $0x9c8] sm:$0xff]
  %v6160 = vld [vmem:[#allocation2 + $0x9d0] sm:$0xff]
  %v6161 = vld [vmem:[#allocation2 + $0x9d8] sm:$0xff]
  %v6162 = vld [vmem:[#allocation2 + $0x9e0] sm:$0xff]
  %v6163 = vld [vmem:[#allocation2 + $0x9e8] sm:$0xff]
  %v6164 = vld [vmem:[#allocation2 + $0x9f0] sm:$0xff]
  %v6165 = vld [vmem:[#allocation2 + $0x9f8] sm:$0xff]
  %v6166 = vld [vmem:[#allocation2 + $0xa00] sm:$0xff]
  %v6167 = vld [vmem:[#allocation2 + $0xa08] sm:$0xff]
  %v6168 = vld [vmem:[#allocation2 + $0xa10] sm:$0xff]
  %v6169 = vld [vmem:[#allocation2 + $0xa18] sm:$0xff]
  %v6170 = vld [vmem:[#allocation2 + $0xa20] sm:$0xff]
  %v6171 = vld [vmem:[#allocation2 + $0xa28] sm:$0xff]
  %v6172 = vld [vmem:[#allocation2 + $0xa30] sm:$0xff]
  %v6173 = vld [vmem:[#allocation2 + $0xa38] sm:$0xff]
  %v6174 = vld [vmem:[#allocation2 + $0xa40] sm:$0xff]
  %v6175 = vld [vmem:[#allocation2 + $0xa48] sm:$0xff]
  %v6176 = vld [vmem:[#allocation2 + $0xa50] sm:$0xff]
  %v6177 = vld [vmem:[#allocation2 + $0xa58] sm:$0xff]
  %v6178 = vld [vmem:[#allocation2 + $0xa60] sm:$0xff]
  %v6179 = vld [vmem:[#allocation2 + $0xa68] sm:$0xff]
  %v6180 = vld [vmem:[#allocation2 + $0xa70] sm:$0xff]
  %v6181 = vld [vmem:[#allocation2 + $0xa78] sm:$0xff]
  %v6182 = vld [vmem:[#allocation2 + $0xa80] sm:$0xff]
  %v6183 = vld [vmem:[#allocation2 + $0xa88] sm:$0xff]
  %v6184 = vld [vmem:[#allocation2 + $0xa90] sm:$0xff]
  %v6185 = vld [vmem:[#allocation2 + $0xa98] sm:$0xff]
  %v6186 = vld [vmem:[#allocation2 + $0xaa0] sm:$0xff]
  %v6187 = vld [vmem:[#allocation2 + $0xaa8] sm:$0xff]
  %v6188 = vld [vmem:[#allocation2 + $0xab0] sm:$0xff]
  %v6189 = vld [vmem:[#allocation2 + $0xab8] sm:$0xff]
  %v6190 = vld [vmem:[#allocation2 + $0xac0] sm:$0xff]
  %v6191 = vld [vmem:[#allocation2 + $0xac8] sm:$0xff]
  %v6192 = vld [vmem:[#allocation2 + $0xad0] sm:$0xff]
  %v6193 = vld [vmem:[#allocation2 + $0xad8] sm:$0xff]
  %v6194 = vld [vmem:[#allocation2 + $0xae0] sm:$0xff]
  %v6195 = vld [vmem:[#allocation2 + $0xae8] sm:$0xff]
  %v6196 = vld [vmem:[#allocation2 + $0xaf0] sm:$0xff]
  %v6197 = vld [vmem:[#allocation2 + $0xaf8] sm:$0xff]
  %v6198 = vld [vmem:[#allocation2 + $0xb00] sm:$0xff]
  %v6199 = vld [vmem:[#allocation2 + $0xb08] sm:$0xff]
  %v6200 = vld [vmem:[#allocation2 + $0xb10] sm:$0xff]
  %v6201 = vld [vmem:[#allocation2 + $0xb18] sm:$0xff]
  %v6202 = vld [vmem:[#allocation2 + $0xb20] sm:$0xff]
  %v6203 = vld [vmem:[#allocation2 + $0xb28] sm:$0xff]
  %v6204 = vld [vmem:[#allocation2 + $0xb30] sm:$0xff]
  %v6205 = vld [vmem:[#allocation2 + $0xb38] sm:$0xff]
  %v6206 = vld [vmem:[#allocation2 + $0xb40] sm:$0xff]
  %v6207 = vld [vmem:[#allocation2 + $0xb48] sm:$0xff]
  %v6208 = vld [vmem:[#allocation2 + $0xb50] sm:$0xff]
  %v6209 = vld [vmem:[#allocation2 + $0xb58] sm:$0xff]
  %v6210 = vld [vmem:[#allocation2 + $0xb60] sm:$0xff]
  %v6211 = vld [vmem:[#allocation2 + $0xb68] sm:$0xff]
  %v6212 = vld [vmem:[#allocation2 + $0xb70] sm:$0xff]
  %v6213 = vld [vmem:[#allocation2 + $0xb78] sm:$0xff]
  %v6214 = vld [vmem:[#allocation2 + $0xb80] sm:$0xff]
  %v6215 = vld [vmem:[#allocation2 + $0xb88] sm:$0xff]
  %v6216 = vld [vmem:[#allocation2 + $0xb90] sm:$0xff]
  %v6217 = vld [vmem:[#allocation2 + $0xb98] sm:$0xff]
  %v6218 = vld [vmem:[#allocation2 + $0xba0] sm:$0xff]
  %v6219 = vld [vmem:[#allocation2 + $0xba8] sm:$0xff]
  %v6220 = vld [vmem:[#allocation2 + $0xbb0] sm:$0xff]
  %v6221 = vld [vmem:[#allocation2 + $0xbb8] sm:$0xff]
  %v6222 = vld [vmem:[#allocation2 + $0xbc0] sm:$0xff]
  %v6223 = vld [vmem:[#allocation2 + $0xbc8] sm:$0xff]
  %v6224 = vld [vmem:[#allocation2 + $0xbd0] sm:$0xff]
  %v6225 = vld [vmem:[#allocation2 + $0xbd8] sm:$0xff]
  %v6226 = vld [vmem:[#allocation2 + $0xbe0] sm:$0xff]
  %v6227 = vld [vmem:[#allocation2 + $0xbe8] sm:$0xff]
  %v6228 = vld [vmem:[#allocation2 + $0xbf0] sm:$0xff]
  %v6229 = vld [vmem:[#allocation2 + $0xbf8] sm:$0xff]
  %v6230 = vld [vmem:[#allocation2 + $0xc00] sm:$0xff]
  %v6231 = vld [vmem:[#allocation2 + $0xc08] sm:$0xff]
  %v6232 = vld [vmem:[#allocation2 + $0xc10] sm:$0xff]
  %v6233 = vld [vmem:[#allocation2 + $0xc18] sm:$0xff]
  %v6234 = vld [vmem:[#allocation2 + $0xc20] sm:$0xff]
  %v6235 = vld [vmem:[#allocation2 + $0xc28] sm:$0xff]
  %v6236 = vld [vmem:[#allocation2 + $0xc30] sm:$0xff]
  %v6237 = vld [vmem:[#allocation2 + $0xc38] sm:$0xff]
  %v6238 = vld [vmem:[#allocation2 + $0xc40] sm:$0xff]
  %v6239 = vld [vmem:[#allocation2 + $0xc48] sm:$0xff]
  %v6240 = vld [vmem:[#allocation2 + $0xc50] sm:$0xff]
  %v6241 = vld [vmem:[#allocation2 + $0xc58] sm:$0xff]
  %v6242 = vld [vmem:[#allocation2 + $0xc60] sm:$0xff]
  %v6243 = vld [vmem:[#allocation2 + $0xc68] sm:$0xff]
  %v6244 = vld [vmem:[#allocation2 + $0xc70] sm:$0xff]
  %v6245 = vld [vmem:[#allocation2 + $0xc78] sm:$0xff]
  %6250 = vst [vmem:[#allocation1] ss:$2 sm:$0xff] %v5842
  %s6251 = scalar_lea.vmem [#allocation1], 16
  %6252 = vst [vmem:[%s6251] ss:$2 sm:$0xff] %v5843
  %s6253 = scalar_lea.vmem [#allocation1], 32
  %6254 = vst [vmem:[%s6253] ss:$2 sm:$0xff] %v5844
  %s6255 = scalar_lea.vmem [#allocation1], 48
  %6256 = vst [vmem:[%s6255] ss:$2 sm:$0xff] %v5845
  %v6257 = vld.sshfl [vmem:[#allocation1] sm:$0xff pattern:$0x75316420]
  %v6258 = vld.sshfl [vmem:[#allocation1 + $0x8] sm:$0xff pattern:$0x75316420]
  %v6259 = vld.sshfl [vmem:[#allocation1 + $0x10] sm:$0xff pattern:$0x75316420]
  %v6260 = vld.sshfl [vmem:[#allocation1 + $0x18] sm:$0xff pattern:$0x75316420]
  %v6261 = vld.sshfl [vmem:[#allocation1 + $0x20] sm:$0xff pattern:$0x75316420]
  %v6262 = vld.sshfl [vmem:[#allocation1 + $0x28] sm:$0xff pattern:$0x75316420]
  %v6263 = vld.sshfl [vmem:[#allocation1 + $0x30] sm:$0xff pattern:$0x75316420]
  %v6270 = vsel %vm1505, %v6263, 0
  %6272 = vmatpush.msra.mxu0 %v5906
  %6273 = vmatpush.msra.mxu0 %v5902
  %6274 = vmatpush.msra.mxu0 %v5898
  %6275 = vmatpush.msra.mxu0 %v5894
  %6276 = vmatpush.msra.mxu0 %v5890
  %6277 = vmatpush.msra.mxu0 %v5886
  %6278 = vmatpush.msra.mxu0 %v5882
  %6279 = vmatpush.msra.mxu0 %v5878
  %6280 = vmatpush.msra.mxu0 %v5874
  %6281 = vmatpush.msra.mxu0 %v5870
  %6282 = vmatpush.msra.mxu0 %v5866
  %6283 = vmatpush.msra.mxu0 %v5862
  %6284 = vmatpush.msra.mxu0 %v5858
  %6285 = vmatpush.msra.mxu0 %v5854
  %6286 = vmatpush.msra.mxu0 %v5850
  %6287 = vmatpush.msra.mxu0 %v5846
  %6288 = vmatmul.f32.gmra.mxu0 %v6257
  %v6289 = vpop.f32.mrf.mxu0
  %v6290 = vadd.f32 0.0, %v6289
  %6291 = vdwg.mxu0
  %6292 = vmatpush.msra.mxu0 %v5970
  %6293 = vmatpush.msra.mxu0 %v5966
  %6294 = vmatpush.msra.mxu0 %v5962
  %6295 = vmatpush.msra.mxu0 %v5958
  %6296 = vmatpush.msra.mxu0 %v5954
  %6297 = vmatpush.msra.mxu0 %v5950
  %6298 = vmatpush.msra.mxu0 %v5946
  %6299 = vmatpush.msra.mxu0 %v5942
  %6300 = vmatpush.msra.mxu0 %v5938
  %6301 = vmatpush.msra.mxu0 %v5934
  %6302 = vmatpush.msra.mxu0 %v5930
  %6303 = vmatpush.msra.mxu0 %v5926
  %6304 = vmatpush.msra.mxu0 %v5922
  %6305 = vmatpush.msra.mxu0 %v5918
  %6306 = vmatpush.msra.mxu0 %v5914
  %6307 = vmatpush.msra.mxu0 %v5910
  %6308 = vmatmul.f32.gmra.mxu0 %v6258
  %v6309 = vpop.f32.mrf.mxu0
  %v6310 = vadd.f32 %v6290, %v6309
  %6311 = vdwg.mxu0
  %6312 = vmatpush.msra.mxu0 %v6034
  %6313 = vmatpush.msra.mxu0 %v6030
  %6314 = vmatpush.msra.mxu0 %v6026
  %6315 = vmatpush.msra.mxu0 %v6022
  %6316 = vmatpush.msra.mxu0 %v6018
  %6317 = vmatpush.msra.mxu0 %v6014
  %6318 = vmatpush.msra.mxu0 %v6010
  %6319 = vmatpush.msra.mxu0 %v6006
  %6320 = vmatpush.msra.mxu0 %v6002
  %6321 = vmatpush.msra.mxu0 %v5998
  %6322 = vmatpush.msra.mxu0 %v5994
  %6323 = vmatpush.msra.mxu0 %v5990
  %6324 = vmatpush.msra.mxu0 %v5986
  %6325 = vmatpush.msra.mxu0 %v5982
  %6326 = vmatpush.msra.mxu0 %v5978
  %6327 = vmatpush.msra.mxu0 %v5974
  %6328 = vmatmul.f32.gmra.mxu0 %v6259
  %v6329 = vpop.f32.mrf.mxu0
  %v6330 = vadd.f32 %v6310, %v6329
  %6331 = vdwg.mxu0
  %6332 = vmatpush.msra.mxu0 %v6098
  %6333 = vmatpush.msra.mxu0 %v6094
  %6334 = vmatpush.msra.mxu0 %v6090
  %6335 = vmatpush.msra.mxu0 %v6086
  %6336 = vmatpush.msra.mxu0 %v6082
  %6337 = vmatpush.msra.mxu0 %v6078
  %6338 = vmatpush.msra.mxu0 %v6074
  %6339 = vmatpush.msra.mxu0 %v6070
  %6340 = vmatpush.msra.mxu0 %v6066
  %6341 = vmatpush.msra.mxu0 %v6062
  %6342 = vmatpush.msra.mxu0 %v6058
  %6343 = vmatpush.msra.mxu0 %v6054
  %6344 = vmatpush.msra.mxu0 %v6050
  %6345 = vmatpush.msra.mxu0 %v6046
  %6346 = vmatpush.msra.mxu0 %v6042
  %6347 = vmatpush.msra.mxu0 %v6038
  %6348 = vmatmul.f32.gmra.mxu0 %v6260
  %v6349 = vpop.f32.mrf.mxu0
  %v6350 = vadd.f32 %v6330, %v6349
  %6351 = vdwg.mxu0
  %6352 = vmatpush.msra.mxu0 %v6162
  %6353 = vmatpush.msra.mxu0 %v6158
  %6354 = vmatpush.msra.mxu0 %v6154
  %6355 = vmatpush.msra.mxu0 %v6150
  %6356 = vmatpush.msra.mxu0 %v6146
  %6357 = vmatpush.msra.mxu0 %v6142
  %6358 = vmatpush.msra.mxu0 %v6138
  %6359 = vmatpush.msra.mxu0 %v6134
  %6360 = vmatpush.msra.mxu0 %v6130
  %6361 = vmatpush.msra.mxu0 %v6126
  %6362 = vmatpush.msra.mxu0 %v6122
  %6363 = vmatpush.msra.mxu0 %v6118
  %6364 = vmatpush.msra.mxu0 %v6114
  %6365 = vmatpush.msra.mxu0 %v6110
  %6366 = vmatpush.msra.mxu0 %v6106
  %6367 = vmatpush.msra.mxu0 %v6102
  %6368 = vmatmul.f32.gmra.mxu0 %v6261
  %v6369 = vpop.f32.mrf.mxu0
  %v6370 = vadd.f32 %v6350, %v6369
  %6371 = vdwg.mxu0
  %6372 = vmatpush.msra.mxu0 %v6226
  %6373 = vmatpush.msra.mxu0 %v6222
  %6374 = vmatpush.msra.mxu0 %v6218
  %6375 = vmatpush.msra.mxu0 %v6214
  %6376 = vmatpush.msra.mxu0 %v6210
  %6377 = vmatpush.msra.mxu0 %v6206
  %6378 = vmatpush.msra.mxu0 %v6202
  %6379 = vmatpush.msra.mxu0 %v6198
  %6380 = vmatpush.msra.mxu0 %v6194
  %6381 = vmatpush.msra.mxu0 %v6190
  %6382 = vmatpush.msra.mxu0 %v6186
  %6383 = vmatpush.msra.mxu0 %v6182
  %6384 = vmatpush.msra.mxu0 %v6178
  %6385 = vmatpush.msra.mxu0 %v6174
  %6386 = vmatpush.msra.mxu0 %v6170
  %6387 = vmatpush.msra.mxu0 %v6166
  %6388 = vmatmul.f32.gmra.mxu0 %v6262
  %v6389 = vpop.f32.mrf.mxu0
  %v6390 = vadd.f32 %v6370, %v6389
  %6391 = vdwg.mxu0
  %6392 = vmatpush.msra.mxu0 0.0
  %6393 = vmatpush.msra.mxu0 0.0
  %6394 = vmatpush.msra.mxu0 0.0
  %6395 = vmatpush.msra.mxu0 0.0
  %6396 = vmatpush.msra.mxu0 0.0
  %6397 = vmatpush.msra.mxu0 0.0
  %6398 = vmatpush.msra.mxu0 0.0
  %6399 = vmatpush.msra.mxu0 0.0
  %6400 = vmatpush.msra.mxu0 0.0
  %6401 = vmatpush.msra.mxu0 0.0
  %6402 = vmatpush.msra.mxu0 0.0
  %6403 = vmatpush.msra.mxu0 0.0
  %6404 = vmatpush.msra.mxu0 %v6242
  %6405 = vmatpush.msra.mxu0 %v6238
  %6406 = vmatpush.msra.mxu0 %v6234
  %6407 = vmatpush.msra.mxu0 %v6230
  %6408 = vmatmul.f32.gmra.mxu0 %v6270
  %v6409 = vpop.f32.mrf.mxu0
  %v6410 = vadd.f32 %v6390, %v6409
  %6411 = vdwg.mxu0
  %6412 = vmatpush.msra.mxu0 %v5907
  %6413 = vmatpush.msra.mxu0 %v5903
  %6414 = vmatpush.msra.mxu0 %v5899
  %6415 = vmatpush.msra.mxu0 %v5895
  %6416 = vmatpush.msra.mxu0 %v5891
  %6417 = vmatpush.msra.mxu0 %v5887
  %6418 = vmatpush.msra.mxu0 %v5883
  %6419 = vmatpush.msra.mxu0 %v5879
  %6420 = vmatpush.msra.mxu0 %v5875
  %6421 = vmatpush.msra.mxu0 %v5871
  %6422 = vmatpush.msra.mxu0 %v5867
  %6423 = vmatpush.msra.mxu0 %v5863
  %6424 = vmatpush.msra.mxu0 %v5859
  %6425 = vmatpush.msra.mxu0 %v5855
  %6426 = vmatpush.msra.mxu0 %v5851
  %6427 = vmatpush.msra.mxu0 %v5847
  %6428 = vmatmul.f32.gmra.mxu0 %v6257
  %v6429 = vpop.f32.mrf.mxu0
  %v6430 = vadd.f32 0.0, %v6429
  %6431 = vdwg.mxu0
  %6432 = vmatpush.msra.mxu0 %v5971
  %6433 = vmatpush.msra.mxu0 %v5967
  %6434 = vmatpush.msra.mxu0 %v5963
  %6435 = vmatpush.msra.mxu0 %v5959
  %6436 = vmatpush.msra.mxu0 %v5955
  %6437 = vmatpush.msra.mxu0 %v5951
  %6438 = vmatpush.msra.mxu0 %v5947
  %6439 = vmatpush.msra.mxu0 %v5943
  %6440 = vmatpush.msra.mxu0 %v5939
  %6441 = vmatpush.msra.mxu0 %v5935
  %6442 = vmatpush.msra.mxu0 %v5931
  %6443 = vmatpush.msra.mxu0 %v5927
  %6444 = vmatpush.msra.mxu0 %v5923
  %6445 = vmatpush.msra.mxu0 %v5919
  %6446 = vmatpush.msra.mxu0 %v5915
  %6447 = vmatpush.msra.mxu0 %v5911
  %6448 = vmatmul.f32.gmra.mxu0 %v6258
  %v6449 = vpop.f32.mrf.mxu0
  %v6450 = vadd.f32 %v6430, %v6449
  %6451 = vdwg.mxu0
  %6452 = vmatpush.msra.mxu0 %v6035
  %6453 = vmatpush.msra.mxu0 %v6031
  %6454 = vmatpush.msra.mxu0 %v6027
  %6455 = vmatpush.msra.mxu0 %v6023
  %6456 = vmatpush.msra.mxu0 %v6019
  %6457 = vmatpush.msra.mxu0 %v6015
  %6458 = vmatpush.msra.mxu0 %v6011
  %6459 = vmatpush.msra.mxu0 %v6007
  %6460 = vmatpush.msra.mxu0 %v6003
  %6461 = vmatpush.msra.mxu0 %v5999
  %6462 = vmatpush.msra.mxu0 %v5995
  %6463 = vmatpush.msra.mxu0 %v5991
  %6464 = vmatpush.msra.mxu0 %v5987
  %6465 = vmatpush.msra.mxu0 %v5983
  %6466 = vmatpush.msra.mxu0 %v5979
  %6467 = vmatpush.msra.mxu0 %v5975
  %6468 = vmatmul.f32.gmra.mxu0 %v6259
  %v6469 = vpop.f32.mrf.mxu0
  %v6470 = vadd.f32 %v6450, %v6469
  %6471 = vdwg.mxu0
  %6472 = vmatpush.msra.mxu0 %v6099
  %6473 = vmatpush.msra.mxu0 %v6095
  %6474 = vmatpush.msra.mxu0 %v6091
  %6475 = vmatpush.msra.mxu0 %v6087
  %6476 = vmatpush.msra.mxu0 %v6083
  %6477 = vmatpush.msra.mxu0 %v6079
  %6478 = vmatpush.msra.mxu0 %v6075
  %6479 = vmatpush.msra.mxu0 %v6071
  %6480 = vmatpush.msra.mxu0 %v6067
  %6481 = vmatpush.msra.mxu0 %v6063
  %6482 = vmatpush.msra.mxu0 %v6059
  %6483 = vmatpush.msra.mxu0 %v6055
  %6484 = vmatpush.msra.mxu0 %v6051
  %6485 = vmatpush.msra.mxu0 %v6047
  %6486 = vmatpush.msra.mxu0 %v6043
  %6487 = vmatpush.msra.mxu0 %v6039
  %6488 = vmatmul.f32.gmra.mxu0 %v6260
  %v6489 = vpop.f32.mrf.mxu0
  %v6490 = vadd.f32 %v6470, %v6489
  %6491 = vdwg.mxu0
  %6492 = vmatpush.msra.mxu0 %v6163
  %6493 = vmatpush.msra.mxu0 %v6159
  %6494 = vmatpush.msra.mxu0 %v6155
  %6495 = vmatpush.msra.mxu0 %v6151
  %6496 = vmatpush.msra.mxu0 %v6147
  %6497 = vmatpush.msra.mxu0 %v6143
  %6498 = vmatpush.msra.mxu0 %v6139
  %6499 = vmatpush.msra.mxu0 %v6135
  %6500 = vmatpush.msra.mxu0 %v6131
  %6501 = vmatpush.msra.mxu0 %v6127
  %6502 = vmatpush.msra.mxu0 %v6123
  %6503 = vmatpush.msra.mxu0 %v6119
  %6504 = vmatpush.msra.mxu0 %v6115
  %6505 = vmatpush.msra.mxu0 %v6111
  %6506 = vmatpush.msra.mxu0 %v6107
  %6507 = vmatpush.msra.mxu0 %v6103
  %6508 = vmatmul.f32.gmra.mxu0 %v6261
  %v6509 = vpop.f32.mrf.mxu0
  %v6510 = vadd.f32 %v6490, %v6509
  %6511 = vdwg.mxu0
  %6512 = vmatpush.msra.mxu0 %v6227
  %6513 = vmatpush.msra.mxu0 %v6223
  %6514 = vmatpush.msra.mxu0 %v6219
  %6515 = vmatpush.msra.mxu0 %v6215
  %6516 = vmatpush.msra.mxu0 %v6211
  %6517 = vmatpush.msra.mxu0 %v6207
  %6518 = vmatpush.msra.mxu0 %v6203
  %6519 = vmatpush.msra.mxu0 %v6199
  %6520 = vmatpush.msra.mxu0 %v6195
  %6521 = vmatpush.msra.mxu0 %v6191
  %6522 = vmatpush.msra.mxu0 %v6187
  %6523 = vmatpush.msra.mxu0 %v6183
  %6524 = vmatpush.msra.mxu0 %v6179
  %6525 = vmatpush.msra.mxu0 %v6175
  %6526 = vmatpush.msra.mxu0 %v6171
  %6527 = vmatpush.msra.mxu0 %v6167
  %6528 = vmatmul.f32.gmra.mxu0 %v6262
  %v6529 = vpop.f32.mrf.mxu0
  %v6530 = vadd.f32 %v6510, %v6529
  %6531 = vdwg.mxu0
  %6532 = vmatpush.msra.mxu0 0.0
  %6533 = vmatpush.msra.mxu0 0.0
  %6534 = vmatpush.msra.mxu0 0.0
  %6535 = vmatpush.msra.mxu0 0.0
  %6536 = vmatpush.msra.mxu0 0.0
  %6537 = vmatpush.msra.mxu0 0.0
  %6538 = vmatpush.msra.mxu0 0.0
  %6539 = vmatpush.msra.mxu0 0.0
  %6540 = vmatpush.msra.mxu0 0.0
  %6541 = vmatpush.msra.mxu0 0.0
  %6542 = vmatpush.msra.mxu0 0.0
  %6543 = vmatpush.msra.mxu0 0.0
  %6544 = vmatpush.msra.mxu0 %v6243
  %6545 = vmatpush.msra.mxu0 %v6239
  %6546 = vmatpush.msra.mxu0 %v6235
  %6547 = vmatpush.msra.mxu0 %v6231
  %6548 = vmatmul.f32.gmra.mxu0 %v6270
  %v6549 = vpop.f32.mrf.mxu0
  %v6550 = vadd.f32 %v6530, %v6549
  %6551 = vdwg.mxu0
  %6552 = vmatpush.msra.mxu0 %v5908
  %6553 = vmatpush.msra.mxu0 %v5904
  %6554 = vmatpush.msra.mxu0 %v5900
  %6555 = vmatpush.msra.mxu0 %v5896
  %6556 = vmatpush.msra.mxu0 %v5892
  %6557 = vmatpush.msra.mxu0 %v5888
  %6558 = vmatpush.msra.mxu0 %v5884
  %6559 = vmatpush.msra.mxu0 %v5880
  %6560 = vmatpush.msra.mxu0 %v5876
  %6561 = vmatpush.msra.mxu0 %v5872
  %6562 = vmatpush.msra.mxu0 %v5868
  %6563 = vmatpush.msra.mxu0 %v5864
  %6564 = vmatpush.msra.mxu0 %v5860
  %6565 = vmatpush.msra.mxu0 %v5856
  %6566 = vmatpush.msra.mxu0 %v5852
  %6567 = vmatpush.msra.mxu0 %v5848
  %6568 = vmatmul.f32.gmra.mxu0 %v6257
  %v6569 = vpop.f32.mrf.mxu0
  %v6570 = vadd.f32 0.0, %v6569
  %6571 = vdwg.mxu0
  %6572 = vmatpush.msra.mxu0 %v5972
  %6573 = vmatpush.msra.mxu0 %v5968
  %6574 = vmatpush.msra.mxu0 %v5964
  %6575 = vmatpush.msra.mxu0 %v5960
  %6576 = vmatpush.msra.mxu0 %v5956
  %6577 = vmatpush.msra.mxu0 %v5952
  %6578 = vmatpush.msra.mxu0 %v5948
  %6579 = vmatpush.msra.mxu0 %v5944
  %6580 = vmatpush.msra.mxu0 %v5940
  %6581 = vmatpush.msra.mxu0 %v5936
  %6582 = vmatpush.msra.mxu0 %v5932
  %6583 = vmatpush.msra.mxu0 %v5928
  %6584 = vmatpush.msra.mxu0 %v5924
  %6585 = vmatpush.msra.mxu0 %v5920
  %6586 = vmatpush.msra.mxu0 %v5916
  %6587 = vmatpush.msra.mxu0 %v5912
  %6588 = vmatmul.f32.gmra.mxu0 %v6258
  %v6589 = vpop.f32.mrf.mxu0
  %v6590 = vadd.f32 %v6570, %v6589
  %6591 = vdwg.mxu0
  %6592 = vmatpush.msra.mxu0 %v6036
  %6593 = vmatpush.msra.mxu0 %v6032
  %6594 = vmatpush.msra.mxu0 %v6028
  %6595 = vmatpush.msra.mxu0 %v6024
  %6596 = vmatpush.msra.mxu0 %v6020
  %6597 = vmatpush.msra.mxu0 %v6016
  %6598 = vmatpush.msra.mxu0 %v6012
  %6599 = vmatpush.msra.mxu0 %v6008
  %6600 = vmatpush.msra.mxu0 %v6004
  %6601 = vmatpush.msra.mxu0 %v6000
  %6602 = vmatpush.msra.mxu0 %v5996
  %6603 = vmatpush.msra.mxu0 %v5992
  %6604 = vmatpush.msra.mxu0 %v5988
  %6605 = vmatpush.msra.mxu0 %v5984
  %6606 = vmatpush.msra.mxu0 %v5980
  %6607 = vmatpush.msra.mxu0 %v5976
  %6608 = vmatmul.f32.gmra.mxu0 %v6259
  %v6609 = vpop.f32.mrf.mxu0
  %v6610 = vadd.f32 %v6590, %v6609
  %6611 = vdwg.mxu0
  %6612 = vmatpush.msra.mxu0 %v6100
  %6613 = vmatpush.msra.mxu0 %v6096
  %6614 = vmatpush.msra.mxu0 %v6092
  %6615 = vmatpush.msra.mxu0 %v6088
  %6616 = vmatpush.msra.mxu0 %v6084
  %6617 = vmatpush.msra.mxu0 %v6080
  %6618 = vmatpush.msra.mxu0 %v6076
  %6619 = vmatpush.msra.mxu0 %v6072
  %6620 = vmatpush.msra.mxu0 %v6068
  %6621 = vmatpush.msra.mxu0 %v6064
  %6622 = vmatpush.msra.mxu0 %v6060
  %6623 = vmatpush.msra.mxu0 %v6056
  %6624 = vmatpush.msra.mxu0 %v6052
  %6625 = vmatpush.msra.mxu0 %v6048
  %6626 = vmatpush.msra.mxu0 %v6044
  %6627 = vmatpush.msra.mxu0 %v6040
  %6628 = vmatmul.f32.gmra.mxu0 %v6260
  %v6629 = vpop.f32.mrf.mxu0
  %v6630 = vadd.f32 %v6610, %v6629
  %6631 = vdwg.mxu0
  %6632 = vmatpush.msra.mxu0 %v6164
  %6633 = vmatpush.msra.mxu0 %v6160
  %6634 = vmatpush.msra.mxu0 %v6156
  %6635 = vmatpush.msra.mxu0 %v6152
  %6636 = vmatpush.msra.mxu0 %v6148
  %6637 = vmatpush.msra.mxu0 %v6144
  %6638 = vmatpush.msra.mxu0 %v6140
  %6639 = vmatpush.msra.mxu0 %v6136
  %6640 = vmatpush.msra.mxu0 %v6132
  %6641 = vmatpush.msra.mxu0 %v6128
  %6642 = vmatpush.msra.mxu0 %v6124
  %6643 = vmatpush.msra.mxu0 %v6120
  %6644 = vmatpush.msra.mxu0 %v6116
  %6645 = vmatpush.msra.mxu0 %v6112
  %6646 = vmatpush.msra.mxu0 %v6108
  %6647 = vmatpush.msra.mxu0 %v6104
  %6648 = vmatmul.f32.gmra.mxu0 %v6261
  %v6649 = vpop.f32.mrf.mxu0
  %v6650 = vadd.f32 %v6630, %v6649
  %6651 = vdwg.mxu0
  %6652 = vmatpush.msra.mxu0 %v6228
  %6653 = vmatpush.msra.mxu0 %v6224
  %6654 = vmatpush.msra.mxu0 %v6220
  %6655 = vmatpush.msra.mxu0 %v6216
  %6656 = vmatpush.msra.mxu0 %v6212
  %6657 = vmatpush.msra.mxu0 %v6208
  %6658 = vmatpush.msra.mxu0 %v6204
  %6659 = vmatpush.msra.mxu0 %v6200
  %6660 = vmatpush.msra.mxu0 %v6196
  %6661 = vmatpush.msra.mxu0 %v6192
  %6662 = vmatpush.msra.mxu0 %v6188
  %6663 = vmatpush.msra.mxu0 %v6184
  %6664 = vmatpush.msra.mxu0 %v6180
  %6665 = vmatpush.msra.mxu0 %v6176
  %6666 = vmatpush.msra.mxu0 %v6172
  %6667 = vmatpush.msra.mxu0 %v6168
  %6668 = vmatmul.f32.gmra.mxu0 %v6262
  %v6669 = vpop.f32.mrf.mxu0
  %v6670 = vadd.f32 %v6650, %v6669
  %6671 = vdwg.mxu0
  %6672 = vmatpush.msra.mxu0 0.0
  %6673 = vmatpush.msra.mxu0 0.0
  %6674 = vmatpush.msra.mxu0 0.0
  %6675 = vmatpush.msra.mxu0 0.0
  %6676 = vmatpush.msra.mxu0 0.0
  %6677 = vmatpush.msra.mxu0 0.0
  %6678 = vmatpush.msra.mxu0 0.0
  %6679 = vmatpush.msra.mxu0 0.0
  %6680 = vmatpush.msra.mxu0 0.0
  %6681 = vmatpush.msra.mxu0 0.0
  %6682 = vmatpush.msra.mxu0 0.0
  %6683 = vmatpush.msra.mxu0 0.0
  %6684 = vmatpush.msra.mxu0 %v6244
  %6685 = vmatpush.msra.mxu0 %v6240
  %6686 = vmatpush.msra.mxu0 %v6236
  %6687 = vmatpush.msra.mxu0 %v6232
  %6688 = vmatmul.f32.gmra.mxu0 %v6270
  %v6689 = vpop.f32.mrf.mxu0
  %v6690 = vadd.f32 %v6670, %v6689
  %6691 = vdwg.mxu0
  %6692 = vmatpush.msra.mxu0 %v5909
  %6693 = vmatpush.msra.mxu0 %v5905
  %6694 = vmatpush.msra.mxu0 %v5901
  %6695 = vmatpush.msra.mxu0 %v5897
  %6696 = vmatpush.msra.mxu0 %v5893
  %6697 = vmatpush.msra.mxu0 %v5889
  %6698 = vmatpush.msra.mxu0 %v5885
  %6699 = vmatpush.msra.mxu0 %v5881
  %6700 = vmatpush.msra.mxu0 %v5877
  %6701 = vmatpush.msra.mxu0 %v5873
  %6702 = vmatpush.msra.mxu0 %v5869
  %6703 = vmatpush.msra.mxu0 %v5865
  %6704 = vmatpush.msra.mxu0 %v5861
  %6705 = vmatpush.msra.mxu0 %v5857
  %6706 = vmatpush.msra.mxu0 %v5853
  %6707 = vmatpush.msra.mxu0 %v5849
  %6708 = vmatmul.f32.gmra.mxu0 %v6257
  %v6709 = vpop.f32.mrf.mxu0
  %v6710 = vadd.f32 0.0, %v6709
  %6711 = vdwg.mxu0
  %6712 = vmatpush.msra.mxu0 %v5973
  %6713 = vmatpush.msra.mxu0 %v5969
  %6714 = vmatpush.msra.mxu0 %v5965
  %6715 = vmatpush.msra.mxu0 %v5961
  %6716 = vmatpush.msra.mxu0 %v5957
  %6717 = vmatpush.msra.mxu0 %v5953
  %6718 = vmatpush.msra.mxu0 %v5949
  %6719 = vmatpush.msra.mxu0 %v5945
  %6720 = vmatpush.msra.mxu0 %v5941
  %6721 = vmatpush.msra.mxu0 %v5937
  %6722 = vmatpush.msra.mxu0 %v5933
  %6723 = vmatpush.msra.mxu0 %v5929
  %6724 = vmatpush.msra.mxu0 %v5925
  %6725 = vmatpush.msra.mxu0 %v5921
  %6726 = vmatpush.msra.mxu0 %v5917
  %6727 = vmatpush.msra.mxu0 %v5913
  %6728 = vmatmul.f32.gmra.mxu0 %v6258
  %v6729 = vpop.f32.mrf.mxu0
  %v6730 = vadd.f32 %v6710, %v6729
  %6731 = vdwg.mxu0
  %6732 = vmatpush.msra.mxu0 %v6037
  %6733 = vmatpush.msra.mxu0 %v6033
  %6734 = vmatpush.msra.mxu0 %v6029
  %6735 = vmatpush.msra.mxu0 %v6025
  %6736 = vmatpush.msra.mxu0 %v6021
  %6737 = vmatpush.msra.mxu0 %v6017
  %6738 = vmatpush.msra.mxu0 %v6013
  %6739 = vmatpush.msra.mxu0 %v6009
  %6740 = vmatpush.msra.mxu0 %v6005
  %6741 = vmatpush.msra.mxu0 %v6001
  %6742 = vmatpush.msra.mxu0 %v5997
  %6743 = vmatpush.msra.mxu0 %v5993
  %6744 = vmatpush.msra.mxu0 %v5989
  %6745 = vmatpush.msra.mxu0 %v5985
  %6746 = vmatpush.msra.mxu0 %v5981
  %6747 = vmatpush.msra.mxu0 %v5977
  %6748 = vmatmul.f32.gmra.mxu0 %v6259
  %v6749 = vpop.f32.mrf.mxu0
  %v6750 = vadd.f32 %v6730, %v6749
  %6751 = vdwg.mxu0
  %6752 = vmatpush.msra.mxu0 %v6101
  %6753 = vmatpush.msra.mxu0 %v6097
  %6754 = vmatpush.msra.mxu0 %v6093
  %6755 = vmatpush.msra.mxu0 %v6089
  %6756 = vmatpush.msra.mxu0 %v6085
  %6757 = vmatpush.msra.mxu0 %v6081
  %6758 = vmatpush.msra.mxu0 %v6077
  %6759 = vmatpush.msra.mxu0 %v6073
  %6760 = vmatpush.msra.mxu0 %v6069
  %6761 = vmatpush.msra.mxu0 %v6065
  %6762 = vmatpush.msra.mxu0 %v6061
  %6763 = vmatpush.msra.mxu0 %v6057
  %6764 = vmatpush.msra.mxu0 %v6053
  %6765 = vmatpush.msra.mxu0 %v6049
  %6766 = vmatpush.msra.mxu0 %v6045
  %6767 = vmatpush.msra.mxu0 %v6041
  %6768 = vmatmul.f32.gmra.mxu0 %v6260
  %v6769 = vpop.f32.mrf.mxu0
  %v6770 = vadd.f32 %v6750, %v6769
  %6771 = vdwg.mxu0
  %6772 = vmatpush.msra.mxu0 %v6165
  %6773 = vmatpush.msra.mxu0 %v6161
  %6774 = vmatpush.msra.mxu0 %v6157
  %6775 = vmatpush.msra.mxu0 %v6153
  %6776 = vmatpush.msra.mxu0 %v6149
  %6777 = vmatpush.msra.mxu0 %v6145
  %6778 = vmatpush.msra.mxu0 %v6141
  %6779 = vmatpush.msra.mxu0 %v6137
  %6780 = vmatpush.msra.mxu0 %v6133
  %6781 = vmatpush.msra.mxu0 %v6129
  %6782 = vmatpush.msra.mxu0 %v6125
  %6783 = vmatpush.msra.mxu0 %v6121
  %6784 = vmatpush.msra.mxu0 %v6117
  %6785 = vmatpush.msra.mxu0 %v6113
  %6786 = vmatpush.msra.mxu0 %v6109
  %6787 = vmatpush.msra.mxu0 %v6105
  %6788 = vmatmul.f32.gmra.mxu0 %v6261
  %v6789 = vpop.f32.mrf.mxu0
  %v6790 = vadd.f32 %v6770, %v6789
  %6791 = vdwg.mxu0
  %6792 = vmatpush.msra.mxu0 %v6229
  %6793 = vmatpush.msra.mxu0 %v6225
  %6794 = vmatpush.msra.mxu0 %v6221
  %6795 = vmatpush.msra.mxu0 %v6217
  %6796 = vmatpush.msra.mxu0 %v6213
  %6797 = vmatpush.msra.mxu0 %v6209
  %6798 = vmatpush.msra.mxu0 %v6205
  %6799 = vmatpush.msra.mxu0 %v6201
  %6800 = vmatpush.msra.mxu0 %v6197
  %6801 = vmatpush.msra.mxu0 %v6193
  %6802 = vmatpush.msra.mxu0 %v6189
  %6803 = vmatpush.msra.mxu0 %v6185
  %6804 = vmatpush.msra.mxu0 %v6181
  %6805 = vmatpush.msra.mxu0 %v6177
  %6806 = vmatpush.msra.mxu0 %v6173
  %6807 = vmatpush.msra.mxu0 %v6169
  %6808 = vmatmul.f32.gmra.mxu0 %v6262
  %v6809 = vpop.f32.mrf.mxu0
  %v6810 = vadd.f32 %v6790, %v6809
  %6811 = vdwg.mxu0
  %6812 = vmatpush.msra.mxu0 0.0
  %6813 = vmatpush.msra.mxu0 0.0
  %6814 = vmatpush.msra.mxu0 0.0
  %6815 = vmatpush.msra.mxu0 0.0
  %6816 = vmatpush.msra.mxu0 0.0
  %6817 = vmatpush.msra.mxu0 0.0
  %6818 = vmatpush.msra.mxu0 0.0
  %6819 = vmatpush.msra.mxu0 0.0
  %6820 = vmatpush.msra.mxu0 0.0
  %6821 = vmatpush.msra.mxu0 0.0
  %6822 = vmatpush.msra.mxu0 0.0
  %6823 = vmatpush.msra.mxu0 0.0
  %6824 = vmatpush.msra.mxu0 %v6245
  %6825 = vmatpush.msra.mxu0 %v6241
  %6826 = vmatpush.msra.mxu0 %v6237
  %6827 = vmatpush.msra.mxu0 %v6233
  %6828 = vmatmul.f32.gmra.mxu0 %v6270
  %v6829 = vpop.f32.mrf.mxu0
  %v6830 = vadd.f32 %v6810, %v6829
  %6831 = vdwg.mxu0
  %v6832 = vadd.f32 %v5780, %v6410
  %v6833 = vadd.f32 %v5800, %v6550
  %v6834 = vadd.f32 %v5820, %v6690
  %v6835 = vadd.f32 %v5840, %v6830
  %v6836 = vmax.f32 %v6832, 0.0
  %v6837 = vmax.f32 %v6833, 0.0
  %v6838 = vmax.f32 %v6834, 0.0
  %v6839 = vmax.f32 %v6835, 0.0
  %s6840 = smul.u32 8, 64
  %s6841 = smul.u32 %s6840, 4
  %s6842 = sshll.u32 %s6841, 4
  %6843 = dma.done %s861, %s6842
  %v6844 = vld [vmem:[#allocation3] sm:$0xff]
  %v6845 = vld [vmem:[#allocation3 + $0x8] sm:$0xff]
  %v6846 = vld [vmem:[#allocation3 + $0x10] sm:$0xff]
  %v6847 = vld [vmem:[#allocation3 + $0x18] sm:$0xff]
  %v6848 = vld [vmem:[#allocation3 + $0x20] sm:$0xff]
  %v6849 = vld [vmem:[#allocation3 + $0x28] sm:$0xff]
  %v6850 = vld [vmem:[#allocation3 + $0x30] sm:$0xff]
  %v6851 = vld [vmem:[#allocation3 + $0x38] sm:$0xff]
  %v6852 = vld [vmem:[#allocation3 + $0x40] sm:$0xff]
  %v6853 = vld [vmem:[#allocation3 + $0x48] sm:$0xff]
  %v6854 = vld [vmem:[#allocation3 + $0x50] sm:$0xff]
  %v6855 = vld [vmem:[#allocation3 + $0x58] sm:$0xff]
  %v6856 = vld [vmem:[#allocation3 + $0x60] sm:$0xff]
  %v6857 = vld [vmem:[#allocation3 + $0x68] sm:$0xff]
  %v6858 = vld [vmem:[#allocation3 + $0x70] sm:$0xff]
  %v6859 = vld [vmem:[#allocation3 + $0x78] sm:$0xff]
  %v6860 = vld [vmem:[#allocation3 + $0x80] sm:$0xff]
  %v6861 = vld [vmem:[#allocation3 + $0x88] sm:$0xff]
  %v6862 = vld [vmem:[#allocation3 + $0x90] sm:$0xff]
  %v6863 = vld [vmem:[#allocation3 + $0x98] sm:$0xff]
  %v6864 = vld [vmem:[#allocation3 + $0xa0] sm:$0xff]
  %v6865 = vld [vmem:[#allocation3 + $0xa8] sm:$0xff]
  %v6866 = vld [vmem:[#allocation3 + $0xb0] sm:$0xff]
  %v6867 = vld [vmem:[#allocation3 + $0xb8] sm:$0xff]
  %v6868 = vld [vmem:[#allocation3 + $0xc0] sm:$0xff]
  %v6869 = vld [vmem:[#allocation3 + $0xc8] sm:$0xff]
  %v6870 = vld [vmem:[#allocation3 + $0xd0] sm:$0xff]
  %v6871 = vld [vmem:[#allocation3 + $0xd8] sm:$0xff]
  %v6872 = vld [vmem:[#allocation3 + $0xe0] sm:$0xff]
  %v6873 = vld [vmem:[#allocation3 + $0xe8] sm:$0xff]
  %v6874 = vld [vmem:[#allocation3 + $0xf0] sm:$0xff]
  %v6875 = vld [vmem:[#allocation3 + $0xf8] sm:$0xff]
  %v6876 = vld [vmem:[#allocation3 + $0x100] sm:$0xff]
  %v6877 = vld [vmem:[#allocation3 + $0x108] sm:$0xff]
  %v6878 = vld [vmem:[#allocation3 + $0x110] sm:$0xff]
  %v6879 = vld [vmem:[#allocation3 + $0x118] sm:$0xff]
  %v6880 = vld [vmem:[#allocation3 + $0x120] sm:$0xff]
  %v6881 = vld [vmem:[#allocation3 + $0x128] sm:$0xff]
  %v6882 = vld [vmem:[#allocation3 + $0x130] sm:$0xff]
  %v6883 = vld [vmem:[#allocation3 + $0x138] sm:$0xff]
  %v6884 = vld [vmem:[#allocation3 + $0x140] sm:$0xff]
  %v6885 = vld [vmem:[#allocation3 + $0x148] sm:$0xff]
  %v6886 = vld [vmem:[#allocation3 + $0x150] sm:$0xff]
  %v6887 = vld [vmem:[#allocation3 + $0x158] sm:$0xff]
  %v6888 = vld [vmem:[#allocation3 + $0x160] sm:$0xff]
  %v6889 = vld [vmem:[#allocation3 + $0x168] sm:$0xff]
  %v6890 = vld [vmem:[#allocation3 + $0x170] sm:$0xff]
  %v6891 = vld [vmem:[#allocation3 + $0x178] sm:$0xff]
  %v6892 = vld [vmem:[#allocation3 + $0x180] sm:$0xff]
  %v6893 = vld [vmem:[#allocation3 + $0x188] sm:$0xff]
  %v6894 = vld [vmem:[#allocation3 + $0x190] sm:$0xff]
  %v6895 = vld [vmem:[#allocation3 + $0x198] sm:$0xff]
  %v6896 = vld [vmem:[#allocation3 + $0x1a0] sm:$0xff]
  %v6897 = vld [vmem:[#allocation3 + $0x1a8] sm:$0xff]
  %v6898 = vld [vmem:[#allocation3 + $0x1b0] sm:$0xff]
  %v6899 = vld [vmem:[#allocation3 + $0x1b8] sm:$0xff]
  %v6900 = vld [vmem:[#allocation3 + $0x1c0] sm:$0xff]
  %v6901 = vld [vmem:[#allocation3 + $0x1c8] sm:$0xff]
  %v6902 = vld [vmem:[#allocation3 + $0x1d0] sm:$0xff]
  %v6903 = vld [vmem:[#allocation3 + $0x1d8] sm:$0xff]
  %v6904 = vld [vmem:[#allocation3 + $0x1e0] sm:$0xff]
  %v6905 = vld [vmem:[#allocation3 + $0x1e8] sm:$0xff]
  %v6906 = vld [vmem:[#allocation3 + $0x1f0] sm:$0xff]
  %v6907 = vld [vmem:[#allocation3 + $0x1f8] sm:$0xff]
  %v6908 = vld [vmem:[#allocation3 + $0x200] sm:$0xff]
  %v6909 = vld [vmem:[#allocation3 + $0x208] sm:$0xff]
  %v6910 = vld [vmem:[#allocation3 + $0x210] sm:$0xff]
  %v6911 = vld [vmem:[#allocation3 + $0x218] sm:$0xff]
  %v6912 = vld [vmem:[#allocation3 + $0x220] sm:$0xff]
  %v6913 = vld [vmem:[#allocation3 + $0x228] sm:$0xff]
  %v6914 = vld [vmem:[#allocation3 + $0x230] sm:$0xff]
  %v6915 = vld [vmem:[#allocation3 + $0x238] sm:$0xff]
  %v6916 = vld [vmem:[#allocation3 + $0x240] sm:$0xff]
  %v6917 = vld [vmem:[#allocation3 + $0x248] sm:$0xff]
  %v6918 = vld [vmem:[#allocation3 + $0x250] sm:$0xff]
  %v6919 = vld [vmem:[#allocation3 + $0x258] sm:$0xff]
  %v6920 = vld [vmem:[#allocation3 + $0x260] sm:$0xff]
  %v6921 = vld [vmem:[#allocation3 + $0x268] sm:$0xff]
  %v6922 = vld [vmem:[#allocation3 + $0x270] sm:$0xff]
  %v6923 = vld [vmem:[#allocation3 + $0x278] sm:$0xff]
  %v6924 = vld [vmem:[#allocation3 + $0x280] sm:$0xff]
  %v6925 = vld [vmem:[#allocation3 + $0x288] sm:$0xff]
  %v6926 = vld [vmem:[#allocation3 + $0x290] sm:$0xff]
  %v6927 = vld [vmem:[#allocation3 + $0x298] sm:$0xff]
  %v6928 = vld [vmem:[#allocation3 + $0x2a0] sm:$0xff]
  %v6929 = vld [vmem:[#allocation3 + $0x2a8] sm:$0xff]
  %v6930 = vld [vmem:[#allocation3 + $0x2b0] sm:$0xff]
  %v6931 = vld [vmem:[#allocation3 + $0x2b8] sm:$0xff]
  %v6932 = vld [vmem:[#allocation3 + $0x2c0] sm:$0xff]
  %v6933 = vld [vmem:[#allocation3 + $0x2c8] sm:$0xff]
  %v6934 = vld [vmem:[#allocation3 + $0x2d0] sm:$0xff]
  %v6935 = vld [vmem:[#allocation3 + $0x2d8] sm:$0xff]
  %v6936 = vld [vmem:[#allocation3 + $0x2e0] sm:$0xff]
  %v6937 = vld [vmem:[#allocation3 + $0x2e8] sm:$0xff]
  %v6938 = vld [vmem:[#allocation3 + $0x2f0] sm:$0xff]
  %v6939 = vld [vmem:[#allocation3 + $0x2f8] sm:$0xff]
  %v6940 = vld [vmem:[#allocation3 + $0x300] sm:$0xff]
  %v6941 = vld [vmem:[#allocation3 + $0x308] sm:$0xff]
  %v6942 = vld [vmem:[#allocation3 + $0x310] sm:$0xff]
  %v6943 = vld [vmem:[#allocation3 + $0x318] sm:$0xff]
  %v6944 = vld [vmem:[#allocation3 + $0x320] sm:$0xff]
  %v6945 = vld [vmem:[#allocation3 + $0x328] sm:$0xff]
  %v6946 = vld [vmem:[#allocation3 + $0x330] sm:$0xff]
  %v6947 = vld [vmem:[#allocation3 + $0x338] sm:$0xff]
  %v6948 = vld [vmem:[#allocation3 + $0x340] sm:$0xff]
  %v6949 = vld [vmem:[#allocation3 + $0x348] sm:$0xff]
  %v6950 = vld [vmem:[#allocation3 + $0x350] sm:$0xff]
  %v6951 = vld [vmem:[#allocation3 + $0x358] sm:$0xff]
  %v6952 = vld [vmem:[#allocation3 + $0x360] sm:$0xff]
  %v6953 = vld [vmem:[#allocation3 + $0x368] sm:$0xff]
  %v6954 = vld [vmem:[#allocation3 + $0x370] sm:$0xff]
  %v6955 = vld [vmem:[#allocation3 + $0x378] sm:$0xff]
  %v6956 = vld [vmem:[#allocation3 + $0x380] sm:$0xff]
  %v6957 = vld [vmem:[#allocation3 + $0x388] sm:$0xff]
  %v6958 = vld [vmem:[#allocation3 + $0x390] sm:$0xff]
  %v6959 = vld [vmem:[#allocation3 + $0x398] sm:$0xff]
  %v6960 = vld [vmem:[#allocation3 + $0x3a0] sm:$0xff]
  %v6961 = vld [vmem:[#allocation3 + $0x3a8] sm:$0xff]
  %v6962 = vld [vmem:[#allocation3 + $0x3b0] sm:$0xff]
  %v6963 = vld [vmem:[#allocation3 + $0x3b8] sm:$0xff]
  %v6964 = vld [vmem:[#allocation3 + $0x3c0] sm:$0xff]
  %v6965 = vld [vmem:[#allocation3 + $0x3c8] sm:$0xff]
  %v6966 = vld [vmem:[#allocation3 + $0x3d0] sm:$0xff]
  %v6967 = vld [vmem:[#allocation3 + $0x3d8] sm:$0xff]
  %v6968 = vld [vmem:[#allocation3 + $0x3e0] sm:$0xff]
  %v6969 = vld [vmem:[#allocation3 + $0x3e8] sm:$0xff]
  %v6970 = vld [vmem:[#allocation3 + $0x3f0] sm:$0xff]
  %v6971 = vld [vmem:[#allocation3 + $0x3f8] sm:$0xff]
  %v6972 = vld [vmem:[#allocation3 + $0x400] sm:$0xff]
  %v6973 = vld [vmem:[#allocation3 + $0x408] sm:$0xff]
  %v6974 = vld [vmem:[#allocation3 + $0x410] sm:$0xff]
  %v6975 = vld [vmem:[#allocation3 + $0x418] sm:$0xff]
  %v6976 = vld [vmem:[#allocation3 + $0x420] sm:$0xff]
  %v6977 = vld [vmem:[#allocation3 + $0x428] sm:$0xff]
  %v6978 = vld [vmem:[#allocation3 + $0x430] sm:$0xff]
  %v6979 = vld [vmem:[#allocation3 + $0x438] sm:$0xff]
  %v6980 = vld [vmem:[#allocation3 + $0x440] sm:$0xff]
  %v6981 = vld [vmem:[#allocation3 + $0x448] sm:$0xff]
  %v6982 = vld [vmem:[#allocation3 + $0x450] sm:$0xff]
  %v6983 = vld [vmem:[#allocation3 + $0x458] sm:$0xff]
  %v6984 = vld [vmem:[#allocation3 + $0x460] sm:$0xff]
  %v6985 = vld [vmem:[#allocation3 + $0x468] sm:$0xff]
  %v6986 = vld [vmem:[#allocation3 + $0x470] sm:$0xff]
  %v6987 = vld [vmem:[#allocation3 + $0x478] sm:$0xff]
  %v6988 = vld [vmem:[#allocation3 + $0x480] sm:$0xff]
  %v6989 = vld [vmem:[#allocation3 + $0x488] sm:$0xff]
  %v6990 = vld [vmem:[#allocation3 + $0x490] sm:$0xff]
  %v6991 = vld [vmem:[#allocation3 + $0x498] sm:$0xff]
  %v6992 = vld [vmem:[#allocation3 + $0x4a0] sm:$0xff]
  %v6993 = vld [vmem:[#allocation3 + $0x4a8] sm:$0xff]
  %v6994 = vld [vmem:[#allocation3 + $0x4b0] sm:$0xff]
  %v6995 = vld [vmem:[#allocation3 + $0x4b8] sm:$0xff]
  %v6996 = vld [vmem:[#allocation3 + $0x4c0] sm:$0xff]
  %v6997 = vld [vmem:[#allocation3 + $0x4c8] sm:$0xff]
  %v6998 = vld [vmem:[#allocation3 + $0x4d0] sm:$0xff]
  %v6999 = vld [vmem:[#allocation3 + $0x4d8] sm:$0xff]
  %v7000 = vld [vmem:[#allocation3 + $0x4e0] sm:$0xff]
  %v7001 = vld [vmem:[#allocation3 + $0x4e8] sm:$0xff]
  %v7002 = vld [vmem:[#allocation3 + $0x4f0] sm:$0xff]
  %v7003 = vld [vmem:[#allocation3 + $0x4f8] sm:$0xff]
  %v7004 = vld [vmem:[#allocation3 + $0x500] sm:$0xff]
  %v7005 = vld [vmem:[#allocation3 + $0x508] sm:$0xff]
  %v7006 = vld [vmem:[#allocation3 + $0x510] sm:$0xff]
  %v7007 = vld [vmem:[#allocation3 + $0x518] sm:$0xff]
  %v7008 = vld [vmem:[#allocation3 + $0x520] sm:$0xff]
  %v7009 = vld [vmem:[#allocation3 + $0x528] sm:$0xff]
  %v7010 = vld [vmem:[#allocation3 + $0x530] sm:$0xff]
  %v7011 = vld [vmem:[#allocation3 + $0x538] sm:$0xff]
  %v7012 = vld [vmem:[#allocation3 + $0x540] sm:$0xff]
  %v7013 = vld [vmem:[#allocation3 + $0x548] sm:$0xff]
  %v7014 = vld [vmem:[#allocation3 + $0x550] sm:$0xff]
  %v7015 = vld [vmem:[#allocation3 + $0x558] sm:$0xff]
  %v7016 = vld [vmem:[#allocation3 + $0x560] sm:$0xff]
  %v7017 = vld [vmem:[#allocation3 + $0x568] sm:$0xff]
  %v7018 = vld [vmem:[#allocation3 + $0x570] sm:$0xff]
  %v7019 = vld [vmem:[#allocation3 + $0x578] sm:$0xff]
  %v7020 = vld [vmem:[#allocation3 + $0x580] sm:$0xff]
  %v7021 = vld [vmem:[#allocation3 + $0x588] sm:$0xff]
  %v7022 = vld [vmem:[#allocation3 + $0x590] sm:$0xff]
  %v7023 = vld [vmem:[#allocation3 + $0x598] sm:$0xff]
  %v7024 = vld [vmem:[#allocation3 + $0x5a0] sm:$0xff]
  %v7025 = vld [vmem:[#allocation3 + $0x5a8] sm:$0xff]
  %v7026 = vld [vmem:[#allocation3 + $0x5b0] sm:$0xff]
  %v7027 = vld [vmem:[#allocation3 + $0x5b8] sm:$0xff]
  %v7028 = vld [vmem:[#allocation3 + $0x5c0] sm:$0xff]
  %v7029 = vld [vmem:[#allocation3 + $0x5c8] sm:$0xff]
  %v7030 = vld [vmem:[#allocation3 + $0x5d0] sm:$0xff]
  %v7031 = vld [vmem:[#allocation3 + $0x5d8] sm:$0xff]
  %v7032 = vld [vmem:[#allocation3 + $0x5e0] sm:$0xff]
  %v7033 = vld [vmem:[#allocation3 + $0x5e8] sm:$0xff]
  %v7034 = vld [vmem:[#allocation3 + $0x5f0] sm:$0xff]
  %v7035 = vld [vmem:[#allocation3 + $0x5f8] sm:$0xff]
  %v7036 = vld [vmem:[#allocation3 + $0x600] sm:$0xff]
  %v7037 = vld [vmem:[#allocation3 + $0x608] sm:$0xff]
  %v7038 = vld [vmem:[#allocation3 + $0x610] sm:$0xff]
  %v7039 = vld [vmem:[#allocation3 + $0x618] sm:$0xff]
  %v7040 = vld [vmem:[#allocation3 + $0x620] sm:$0xff]
  %v7041 = vld [vmem:[#allocation3 + $0x628] sm:$0xff]
  %v7042 = vld [vmem:[#allocation3 + $0x630] sm:$0xff]
  %v7043 = vld [vmem:[#allocation3 + $0x638] sm:$0xff]
  %v7044 = vld [vmem:[#allocation3 + $0x640] sm:$0xff]
  %v7045 = vld [vmem:[#allocation3 + $0x648] sm:$0xff]
  %v7046 = vld [vmem:[#allocation3 + $0x650] sm:$0xff]
  %v7047 = vld [vmem:[#allocation3 + $0x658] sm:$0xff]
  %v7048 = vld [vmem:[#allocation3 + $0x660] sm:$0xff]
  %v7049 = vld [vmem:[#allocation3 + $0x668] sm:$0xff]
  %v7050 = vld [vmem:[#allocation3 + $0x670] sm:$0xff]
  %v7051 = vld [vmem:[#allocation3 + $0x678] sm:$0xff]
  %v7052 = vld [vmem:[#allocation3 + $0x680] sm:$0xff]
  %v7053 = vld [vmem:[#allocation3 + $0x688] sm:$0xff]
  %v7054 = vld [vmem:[#allocation3 + $0x690] sm:$0xff]
  %v7055 = vld [vmem:[#allocation3 + $0x698] sm:$0xff]
  %v7056 = vld [vmem:[#allocation3 + $0x6a0] sm:$0xff]
  %v7057 = vld [vmem:[#allocation3 + $0x6a8] sm:$0xff]
  %v7058 = vld [vmem:[#allocation3 + $0x6b0] sm:$0xff]
  %v7059 = vld [vmem:[#allocation3 + $0x6b8] sm:$0xff]
  %v7060 = vld [vmem:[#allocation3 + $0x6c0] sm:$0xff]
  %v7061 = vld [vmem:[#allocation3 + $0x6c8] sm:$0xff]
  %v7062 = vld [vmem:[#allocation3 + $0x6d0] sm:$0xff]
  %v7063 = vld [vmem:[#allocation3 + $0x6d8] sm:$0xff]
  %v7064 = vld [vmem:[#allocation3 + $0x6e0] sm:$0xff]
  %v7065 = vld [vmem:[#allocation3 + $0x6e8] sm:$0xff]
  %v7066 = vld [vmem:[#allocation3 + $0x6f0] sm:$0xff]
  %v7067 = vld [vmem:[#allocation3 + $0x6f8] sm:$0xff]
  %v7068 = vld [vmem:[#allocation3 + $0x700] sm:$0xff]
  %v7069 = vld [vmem:[#allocation3 + $0x708] sm:$0xff]
  %v7070 = vld [vmem:[#allocation3 + $0x710] sm:$0xff]
  %v7071 = vld [vmem:[#allocation3 + $0x718] sm:$0xff]
  %v7072 = vld [vmem:[#allocation3 + $0x720] sm:$0xff]
  %v7073 = vld [vmem:[#allocation3 + $0x728] sm:$0xff]
  %v7074 = vld [vmem:[#allocation3 + $0x730] sm:$0xff]
  %v7075 = vld [vmem:[#allocation3 + $0x738] sm:$0xff]
  %v7076 = vld [vmem:[#allocation3 + $0x740] sm:$0xff]
  %v7077 = vld [vmem:[#allocation3 + $0x748] sm:$0xff]
  %v7078 = vld [vmem:[#allocation3 + $0x750] sm:$0xff]
  %v7079 = vld [vmem:[#allocation3 + $0x758] sm:$0xff]
  %v7080 = vld [vmem:[#allocation3 + $0x760] sm:$0xff]
  %v7081 = vld [vmem:[#allocation3 + $0x768] sm:$0xff]
  %v7082 = vld [vmem:[#allocation3 + $0x770] sm:$0xff]
  %v7083 = vld [vmem:[#allocation3 + $0x778] sm:$0xff]
  %v7084 = vld [vmem:[#allocation3 + $0x780] sm:$0xff]
  %v7085 = vld [vmem:[#allocation3 + $0x788] sm:$0xff]
  %v7086 = vld [vmem:[#allocation3 + $0x790] sm:$0xff]
  %v7087 = vld [vmem:[#allocation3 + $0x798] sm:$0xff]
  %v7088 = vld [vmem:[#allocation3 + $0x7a0] sm:$0xff]
  %v7089 = vld [vmem:[#allocation3 + $0x7a8] sm:$0xff]
  %v7090 = vld [vmem:[#allocation3 + $0x7b0] sm:$0xff]
  %v7091 = vld [vmem:[#allocation3 + $0x7b8] sm:$0xff]
  %v7092 = vld [vmem:[#allocation3 + $0x7c0] sm:$0xff]
  %v7093 = vld [vmem:[#allocation3 + $0x7c8] sm:$0xff]
  %v7094 = vld [vmem:[#allocation3 + $0x7d0] sm:$0xff]
  %v7095 = vld [vmem:[#allocation3 + $0x7d8] sm:$0xff]
  %v7096 = vld [vmem:[#allocation3 + $0x7e0] sm:$0xff]
  %v7097 = vld [vmem:[#allocation3 + $0x7e8] sm:$0xff]
  %v7098 = vld [vmem:[#allocation3 + $0x7f0] sm:$0xff]
  %v7099 = vld [vmem:[#allocation3 + $0x7f8] sm:$0xff]
  %v7100 = vld [vmem:[%s11] sm:$0xf]
  %v7102 = vperm.slane %v7100, 0
  %v7103 = vperm.slane %v7100, 1
  %v7104 = vperm.slane %v7100, 2
  %v7105 = vperm.slane %v7100, 3
  %7110 = vmatpush.msra.mxu0 %v6904
  %7111 = vmatpush.msra.mxu0 %v6900
  %7112 = vmatpush.msra.mxu0 %v6896
  %7113 = vmatpush.msra.mxu0 %v6892
  %7114 = vmatpush.msra.mxu0 %v6888
  %7115 = vmatpush.msra.mxu0 %v6884
  %7116 = vmatpush.msra.mxu0 %v6880
  %7117 = vmatpush.msra.mxu0 %v6876
  %7118 = vmatpush.msra.mxu0 %v6872
  %7119 = vmatpush.msra.mxu0 %v6868
  %7120 = vmatpush.msra.mxu0 %v6864
  %7121 = vmatpush.msra.mxu0 %v6860
  %7122 = vmatpush.msra.mxu0 %v6856
  %7123 = vmatpush.msra.mxu0 %v6852
  %7124 = vmatpush.msra.mxu0 %v6848
  %7125 = vmatpush.msra.mxu0 %v6844
  %7126 = vmatmul.f32.gmra.mxu0 %v6836
  %v7127 = vpop.f32.mrf.mxu0
  %v7128 = vadd.f32 %v7102, %v7127
  %7129 = vdwg.mxu0
  %7130 = vmatpush.msra.mxu0 %v6968
  %7131 = vmatpush.msra.mxu0 %v6964
  %7132 = vmatpush.msra.mxu0 %v6960
  %7133 = vmatpush.msra.mxu0 %v6956
  %7134 = vmatpush.msra.mxu0 %v6952
  %7135 = vmatpush.msra.mxu0 %v6948
  %7136 = vmatpush.msra.mxu0 %v6944
  %7137 = vmatpush.msra.mxu0 %v6940
  %7138 = vmatpush.msra.mxu0 %v6936
  %7139 = vmatpush.msra.mxu0 %v6932
  %7140 = vmatpush.msra.mxu0 %v6928
  %7141 = vmatpush.msra.mxu0 %v6924
  %7142 = vmatpush.msra.mxu0 %v6920
  %7143 = vmatpush.msra.mxu0 %v6916
  %7144 = vmatpush.msra.mxu0 %v6912
  %7145 = vmatpush.msra.mxu0 %v6908
  %7146 = vmatmul.f32.gmra.mxu0 %v6837
  %v7147 = vpop.f32.mrf.mxu0
  %v7148 = vadd.f32 %v7128, %v7147
  %7149 = vdwg.mxu0
  %7150 = vmatpush.msra.mxu0 %v7032
  %7151 = vmatpush.msra.mxu0 %v7028
  %7152 = vmatpush.msra.mxu0 %v7024
  %7153 = vmatpush.msra.mxu0 %v7020
  %7154 = vmatpush.msra.mxu0 %v7016
  %7155 = vmatpush.msra.mxu0 %v7012
  %7156 = vmatpush.msra.mxu0 %v7008
  %7157 = vmatpush.msra.mxu0 %v7004
  %7158 = vmatpush.msra.mxu0 %v7000
  %7159 = vmatpush.msra.mxu0 %v6996
  %7160 = vmatpush.msra.mxu0 %v6992
  %7161 = vmatpush.msra.mxu0 %v6988
  %7162 = vmatpush.msra.mxu0 %v6984
  %7163 = vmatpush.msra.mxu0 %v6980
  %7164 = vmatpush.msra.mxu0 %v6976
  %7165 = vmatpush.msra.mxu0 %v6972
  %7166 = vmatmul.f32.gmra.mxu0 %v6838
  %v7167 = vpop.f32.mrf.mxu0
  %v7168 = vadd.f32 %v7148, %v7167
  %7169 = vdwg.mxu0
  %7170 = vmatpush.msra.mxu0 %v7096
  %7171 = vmatpush.msra.mxu0 %v7092
  %7172 = vmatpush.msra.mxu0 %v7088
  %7173 = vmatpush.msra.mxu0 %v7084
  %7174 = vmatpush.msra.mxu0 %v7080
  %7175 = vmatpush.msra.mxu0 %v7076
  %7176 = vmatpush.msra.mxu0 %v7072
  %7177 = vmatpush.msra.mxu0 %v7068
  %7178 = vmatpush.msra.mxu0 %v7064
  %7179 = vmatpush.msra.mxu0 %v7060
  %7180 = vmatpush.msra.mxu0 %v7056
  %7181 = vmatpush.msra.mxu0 %v7052
  %7182 = vmatpush.msra.mxu0 %v7048
  %7183 = vmatpush.msra.mxu0 %v7044
  %7184 = vmatpush.msra.mxu0 %v7040
  %7185 = vmatpush.msra.mxu0 %v7036
  %7186 = vmatmul.f32.gmra.mxu0 %v6839
  %v7187 = vpop.f32.mrf.mxu0
  %v7188 = vadd.f32 %v7168, %v7187
  %7189 = vdwg.mxu0
  %7190 = vmatpush.msra.mxu0 %v6905
  %7191 = vmatpush.msra.mxu0 %v6901
  %7192 = vmatpush.msra.mxu0 %v6897
  %7193 = vmatpush.msra.mxu0 %v6893
  %7194 = vmatpush.msra.mxu0 %v6889
  %7195 = vmatpush.msra.mxu0 %v6885
  %7196 = vmatpush.msra.mxu0 %v6881
  %7197 = vmatpush.msra.mxu0 %v6877
  %7198 = vmatpush.msra.mxu0 %v6873
  %7199 = vmatpush.msra.mxu0 %v6869
  %7200 = vmatpush.msra.mxu0 %v6865
  %7201 = vmatpush.msra.mxu0 %v6861
  %7202 = vmatpush.msra.mxu0 %v6857
  %7203 = vmatpush.msra.mxu0 %v6853
  %7204 = vmatpush.msra.mxu0 %v6849
  %7205 = vmatpush.msra.mxu0 %v6845
  %7206 = vmatmul.f32.gmra.mxu0 %v6836
  %v7207 = vpop.f32.mrf.mxu0
  %v7208 = vadd.f32 %v7103, %v7207
  %7209 = vdwg.mxu0
  %7210 = vmatpush.msra.mxu0 %v6969
  %7211 = vmatpush.msra.mxu0 %v6965
  %7212 = vmatpush.msra.mxu0 %v6961
  %7213 = vmatpush.msra.mxu0 %v6957
  %7214 = vmatpush.msra.mxu0 %v6953
  %7215 = vmatpush.msra.mxu0 %v6949
  %7216 = vmatpush.msra.mxu0 %v6945
  %7217 = vmatpush.msra.mxu0 %v6941
  %7218 = vmatpush.msra.mxu0 %v6937
  %7219 = vmatpush.msra.mxu0 %v6933
  %7220 = vmatpush.msra.mxu0 %v6929
  %7221 = vmatpush.msra.mxu0 %v6925
  %7222 = vmatpush.msra.mxu0 %v6921
  %7223 = vmatpush.msra.mxu0 %v6917
  %7224 = vmatpush.msra.mxu0 %v6913
  %7225 = vmatpush.msra.mxu0 %v6909
  %7226 = vmatmul.f32.gmra.mxu0 %v6837
  %v7227 = vpop.f32.mrf.mxu0
  %v7228 = vadd.f32 %v7208, %v7227
  %7229 = vdwg.mxu0
  %7230 = vmatpush.msra.mxu0 %v7033
  %7231 = vmatpush.msra.mxu0 %v7029
  %7232 = vmatpush.msra.mxu0 %v7025
  %7233 = vmatpush.msra.mxu0 %v7021
  %7234 = vmatpush.msra.mxu0 %v7017
  %7235 = vmatpush.msra.mxu0 %v7013
  %7236 = vmatpush.msra.mxu0 %v7009
  %7237 = vmatpush.msra.mxu0 %v7005
  %7238 = vmatpush.msra.mxu0 %v7001
  %7239 = vmatpush.msra.mxu0 %v6997
  %7240 = vmatpush.msra.mxu0 %v6993
  %7241 = vmatpush.msra.mxu0 %v6989
  %7242 = vmatpush.msra.mxu0 %v6985
  %7243 = vmatpush.msra.mxu0 %v6981
  %7244 = vmatpush.msra.mxu0 %v6977
  %7245 = vmatpush.msra.mxu0 %v6973
  %7246 = vmatmul.f32.gmra.mxu0 %v6838
  %v7247 = vpop.f32.mrf.mxu0
  %v7248 = vadd.f32 %v7228, %v7247
  %7249 = vdwg.mxu0
  %7250 = vmatpush.msra.mxu0 %v7097
  %7251 = vmatpush.msra.mxu0 %v7093
  %7252 = vmatpush.msra.mxu0 %v7089
  %7253 = vmatpush.msra.mxu0 %v7085
  %7254 = vmatpush.msra.mxu0 %v7081
  %7255 = vmatpush.msra.mxu0 %v7077
  %7256 = vmatpush.msra.mxu0 %v7073
  %7257 = vmatpush.msra.mxu0 %v7069
  %7258 = vmatpush.msra.mxu0 %v7065
  %7259 = vmatpush.msra.mxu0 %v7061
  %7260 = vmatpush.msra.mxu0 %v7057
  %7261 = vmatpush.msra.mxu0 %v7053
  %7262 = vmatpush.msra.mxu0 %v7049
  %7263 = vmatpush.msra.mxu0 %v7045
  %7264 = vmatpush.msra.mxu0 %v7041
  %7265 = vmatpush.msra.mxu0 %v7037
  %7266 = vmatmul.f32.gmra.mxu0 %v6839
  %v7267 = vpop.f32.mrf.mxu0
  %v7268 = vadd.f32 %v7248, %v7267
  %7269 = vdwg.mxu0
  %7270 = vmatpush.msra.mxu0 %v6906
  %7271 = vmatpush.msra.mxu0 %v6902
  %7272 = vmatpush.msra.mxu0 %v6898
  %7273 = vmatpush.msra.mxu0 %v6894
  %7274 = vmatpush.msra.mxu0 %v6890
  %7275 = vmatpush.msra.mxu0 %v6886
  %7276 = vmatpush.msra.mxu0 %v6882
  %7277 = vmatpush.msra.mxu0 %v6878
  %7278 = vmatpush.msra.mxu0 %v6874
  %7279 = vmatpush.msra.mxu0 %v6870
  %7280 = vmatpush.msra.mxu0 %v6866
  %7281 = vmatpush.msra.mxu0 %v6862
  %7282 = vmatpush.msra.mxu0 %v6858
  %7283 = vmatpush.msra.mxu0 %v6854
  %7284 = vmatpush.msra.mxu0 %v6850
  %7285 = vmatpush.msra.mxu0 %v6846
  %7286 = vmatmul.f32.gmra.mxu0 %v6836
  %v7287 = vpop.f32.mrf.mxu0
  %v7288 = vadd.f32 %v7104, %v7287
  %7289 = vdwg.mxu0
  %7290 = vmatpush.msra.mxu0 %v6970
  %7291 = vmatpush.msra.mxu0 %v6966
  %7292 = vmatpush.msra.mxu0 %v6962
  %7293 = vmatpush.msra.mxu0 %v6958
  %7294 = vmatpush.msra.mxu0 %v6954
  %7295 = vmatpush.msra.mxu0 %v6950
  %7296 = vmatpush.msra.mxu0 %v6946
  %7297 = vmatpush.msra.mxu0 %v6942
  %7298 = vmatpush.msra.mxu0 %v6938
  %7299 = vmatpush.msra.mxu0 %v6934
  %7300 = vmatpush.msra.mxu0 %v6930
  %7301 = vmatpush.msra.mxu0 %v6926
  %7302 = vmatpush.msra.mxu0 %v6922
  %7303 = vmatpush.msra.mxu0 %v6918
  %7304 = vmatpush.msra.mxu0 %v6914
  %7305 = vmatpush.msra.mxu0 %v6910
  %7306 = vmatmul.f32.gmra.mxu0 %v6837
  %v7307 = vpop.f32.mrf.mxu0
  %v7308 = vadd.f32 %v7288, %v7307
  %7309 = vdwg.mxu0
  %7310 = vmatpush.msra.mxu0 %v7034
  %7311 = vmatpush.msra.mxu0 %v7030
  %7312 = vmatpush.msra.mxu0 %v7026
  %7313 = vmatpush.msra.mxu0 %v7022
  %7314 = vmatpush.msra.mxu0 %v7018
  %7315 = vmatpush.msra.mxu0 %v7014
  %7316 = vmatpush.msra.mxu0 %v7010
  %7317 = vmatpush.msra.mxu0 %v7006
  %7318 = vmatpush.msra.mxu0 %v7002
  %7319 = vmatpush.msra.mxu0 %v6998
  %7320 = vmatpush.msra.mxu0 %v6994
  %7321 = vmatpush.msra.mxu0 %v6990
  %7322 = vmatpush.msra.mxu0 %v6986
  %7323 = vmatpush.msra.mxu0 %v6982
  %7324 = vmatpush.msra.mxu0 %v6978
  %7325 = vmatpush.msra.mxu0 %v6974
  %7326 = vmatmul.f32.gmra.mxu0 %v6838
  %v7327 = vpop.f32.mrf.mxu0
  %v7328 = vadd.f32 %v7308, %v7327
  %7329 = vdwg.mxu0
  %7330 = vmatpush.msra.mxu0 %v7098
  %7331 = vmatpush.msra.mxu0 %v7094
  %7332 = vmatpush.msra.mxu0 %v7090
  %7333 = vmatpush.msra.mxu0 %v7086
  %7334 = vmatpush.msra.mxu0 %v7082
  %7335 = vmatpush.msra.mxu0 %v7078
  %7336 = vmatpush.msra.mxu0 %v7074
  %7337 = vmatpush.msra.mxu0 %v7070
  %7338 = vmatpush.msra.mxu0 %v7066
  %7339 = vmatpush.msra.mxu0 %v7062
  %7340 = vmatpush.msra.mxu0 %v7058
  %7341 = vmatpush.msra.mxu0 %v7054
  %7342 = vmatpush.msra.mxu0 %v7050
  %7343 = vmatpush.msra.mxu0 %v7046
  %7344 = vmatpush.msra.mxu0 %v7042
  %7345 = vmatpush.msra.mxu0 %v7038
  %7346 = vmatmul.f32.gmra.mxu0 %v6839
  %v7347 = vpop.f32.mrf.mxu0
  %v7348 = vadd.f32 %v7328, %v7347
  %7349 = vdwg.mxu0
  %7350 = vmatpush.msra.mxu0 %v6907
  %7351 = vmatpush.msra.mxu0 %v6903
  %7352 = vmatpush.msra.mxu0 %v6899
  %7353 = vmatpush.msra.mxu0 %v6895
  %7354 = vmatpush.msra.mxu0 %v6891
  %7355 = vmatpush.msra.mxu0 %v6887
  %7356 = vmatpush.msra.mxu0 %v6883
  %7357 = vmatpush.msra.mxu0 %v6879
  %7358 = vmatpush.msra.mxu0 %v6875
  %7359 = vmatpush.msra.mxu0 %v6871
  %7360 = vmatpush.msra.mxu0 %v6867
  %7361 = vmatpush.msra.mxu0 %v6863
  %7362 = vmatpush.msra.mxu0 %v6859
  %7363 = vmatpush.msra.mxu0 %v6855
  %7364 = vmatpush.msra.mxu0 %v6851
  %7365 = vmatpush.msra.mxu0 %v6847
  %7366 = vmatmul.f32.gmra.mxu0 %v6836
  %v7367 = vpop.f32.mrf.mxu0
  %v7368 = vadd.f32 %v7105, %v7367
  %7369 = vdwg.mxu0
  %7370 = vmatpush.msra.mxu0 %v6971
  %7371 = vmatpush.msra.mxu0 %v6967
  %7372 = vmatpush.msra.mxu0 %v6963
  %7373 = vmatpush.msra.mxu0 %v6959
  %7374 = vmatpush.msra.mxu0 %v6955
  %7375 = vmatpush.msra.mxu0 %v6951
  %7376 = vmatpush.msra.mxu0 %v6947
  %7377 = vmatpush.msra.mxu0 %v6943
  %7378 = vmatpush.msra.mxu0 %v6939
  %7379 = vmatpush.msra.mxu0 %v6935
  %7380 = vmatpush.msra.mxu0 %v6931
  %7381 = vmatpush.msra.mxu0 %v6927
  %7382 = vmatpush.msra.mxu0 %v6923
  %7383 = vmatpush.msra.mxu0 %v6919
  %7384 = vmatpush.msra.mxu0 %v6915
  %7385 = vmatpush.msra.mxu0 %v6911
  %7386 = vmatmul.f32.gmra.mxu0 %v6837
  %v7387 = vpop.f32.mrf.mxu0
  %v7388 = vadd.f32 %v7368, %v7387
  %7389 = vdwg.mxu0
  %7390 = vmatpush.msra.mxu0 %v7035
  %7391 = vmatpush.msra.mxu0 %v7031
  %7392 = vmatpush.msra.mxu0 %v7027
  %7393 = vmatpush.msra.mxu0 %v7023
  %7394 = vmatpush.msra.mxu0 %v7019
  %7395 = vmatpush.msra.mxu0 %v7015
  %7396 = vmatpush.msra.mxu0 %v7011
  %7397 = vmatpush.msra.mxu0 %v7007
  %7398 = vmatpush.msra.mxu0 %v7003
  %7399 = vmatpush.msra.mxu0 %v6999
  %7400 = vmatpush.msra.mxu0 %v6995
  %7401 = vmatpush.msra.mxu0 %v6991
  %7402 = vmatpush.msra.mxu0 %v6987
  %7403 = vmatpush.msra.mxu0 %v6983
  %7404 = vmatpush.msra.mxu0 %v6979
  %7405 = vmatpush.msra.mxu0 %v6975
  %7406 = vmatmul.f32.gmra.mxu0 %v6838
  %v7407 = vpop.f32.mrf.mxu0
  %v7408 = vadd.f32 %v7388, %v7407
  %7409 = vdwg.mxu0
  %7410 = vmatpush.msra.mxu0 %v7099
  %7411 = vmatpush.msra.mxu0 %v7095
  %7412 = vmatpush.msra.mxu0 %v7091
  %7413 = vmatpush.msra.mxu0 %v7087
  %7414 = vmatpush.msra.mxu0 %v7083
  %7415 = vmatpush.msra.mxu0 %v7079
  %7416 = vmatpush.msra.mxu0 %v7075
  %7417 = vmatpush.msra.mxu0 %v7071
  %7418 = vmatpush.msra.mxu0 %v7067
  %7419 = vmatpush.msra.mxu0 %v7063
  %7420 = vmatpush.msra.mxu0 %v7059
  %7421 = vmatpush.msra.mxu0 %v7055
  %7422 = vmatpush.msra.mxu0 %v7051
  %7423 = vmatpush.msra.mxu0 %v7047
  %7424 = vmatpush.msra.mxu0 %v7043
  %7425 = vmatpush.msra.mxu0 %v7039
  %7426 = vmatmul.f32.gmra.mxu0 %v6839
  %v7427 = vpop.f32.mrf.mxu0
  %v7428 = vadd.f32 %v7408, %v7427
  %7429 = vdwg.mxu0
  %v7430 = vmax.f32 %v7188, 0.0
  %v7431 = vmax.f32 %v7268, 0.0
  %v7432 = vmax.f32 %v7348, 0.0
  %v7433 = vmax.f32 %v7428, 0.0
  %v7434 = vld [vmem:[%s12] sm:$0xff]
  %v7435 = vld [vmem:[%s12 + $0x8] sm:$0xff]
  %v7436 = vld [vmem:[%s12 + $0x10] sm:$0xff]
  %v7437 = vld [vmem:[%s12 + $0x18] sm:$0xff]
  %v7438 = vld [vmem:[%s12 + $0x20] sm:$0xff]
  %v7439 = vld [vmem:[%s12 + $0x28] sm:$0xff]
  %v7440 = vld [vmem:[%s12 + $0x30] sm:$0xff]
  %v7441 = vld [vmem:[%s12 + $0x38] sm:$0xff]
  %v7442 = vld [vmem:[%s12 + $0x40] sm:$0xff]
  %v7443 = vld [vmem:[%s12 + $0x48] sm:$0xff]
  %v7444 = vld [vmem:[%s12 + $0x50] sm:$0xff]
  %v7445 = vld [vmem:[%s12 + $0x58] sm:$0xff]
  %v7446 = vld [vmem:[%s12 + $0x60] sm:$0xff]
  %v7447 = vld [vmem:[%s12 + $0x68] sm:$0xff]
  %v7448 = vld [vmem:[%s12 + $0x70] sm:$0xff]
  %v7449 = vld [vmem:[%s12 + $0x78] sm:$0xff]
  %v7450 = vld [vmem:[%s12 + $0x80] sm:$0xff]
  %v7451 = vld [vmem:[%s12 + $0x88] sm:$0xff]
  %v7452 = vld [vmem:[%s12 + $0x90] sm:$0xff]
  %v7453 = vld [vmem:[%s12 + $0x98] sm:$0xff]
  %v7454 = vld [vmem:[%s12 + $0xa0] sm:$0xff]
  %v7455 = vld [vmem:[%s12 + $0xa8] sm:$0xff]
  %v7456 = vld [vmem:[%s12 + $0xb0] sm:$0xff]
  %v7457 = vld [vmem:[%s12 + $0xb8] sm:$0xff]
  %v7458 = vld [vmem:[%s12 + $0xc0] sm:$0xff]
  %v7459 = vld [vmem:[%s12 + $0xc8] sm:$0xff]
  %v7460 = vld [vmem:[%s12 + $0xd0] sm:$0xff]
  %v7461 = vld [vmem:[%s12 + $0xd8] sm:$0xff]
  %v7462 = vld [vmem:[%s12 + $0xe0] sm:$0xff]
  %v7463 = vld [vmem:[%s12 + $0xe8] sm:$0xff]
  %v7464 = vld [vmem:[%s12 + $0xf0] sm:$0xff]
  %v7465 = vld [vmem:[%s12 + $0xf8] sm:$0xff]
  %v7466 = vld [vmem:[%s12 + $0x100] sm:$0xff]
  %v7467 = vld [vmem:[%s12 + $0x108] sm:$0xff]
  %v7468 = vld [vmem:[%s12 + $0x110] sm:$0xff]
  %v7469 = vld [vmem:[%s12 + $0x118] sm:$0xff]
  %v7470 = vld [vmem:[%s12 + $0x120] sm:$0xff]
  %v7471 = vld [vmem:[%s12 + $0x128] sm:$0xff]
  %v7472 = vld [vmem:[%s12 + $0x130] sm:$0xff]
  %v7473 = vld [vmem:[%s12 + $0x138] sm:$0xff]
  %v7474 = vld [vmem:[%s12 + $0x140] sm:$0xff]
  %v7475 = vld [vmem:[%s12 + $0x148] sm:$0xff]
  %v7476 = vld [vmem:[%s12 + $0x150] sm:$0xff]
  %v7477 = vld [vmem:[%s12 + $0x158] sm:$0xff]
  %v7478 = vld [vmem:[%s12 + $0x160] sm:$0xff]
  %v7479 = vld [vmem:[%s12 + $0x168] sm:$0xff]
  %v7480 = vld [vmem:[%s12 + $0x170] sm:$0xff]
  %v7481 = vld [vmem:[%s12 + $0x178] sm:$0xff]
  %v7482 = vld [vmem:[%s12 + $0x180] sm:$0xff]
  %v7483 = vld [vmem:[%s12 + $0x188] sm:$0xff]
  %v7484 = vld [vmem:[%s12 + $0x190] sm:$0xff]
  %v7485 = vld [vmem:[%s12 + $0x198] sm:$0xff]
  %v7486 = vld [vmem:[%s12 + $0x1a0] sm:$0xff]
  %v7487 = vld [vmem:[%s12 + $0x1a8] sm:$0xff]
  %v7488 = vld [vmem:[%s12 + $0x1b0] sm:$0xff]
  %v7489 = vld [vmem:[%s12 + $0x1b8] sm:$0xff]
  %v7490 = vld [vmem:[%s12 + $0x1c0] sm:$0xff]
  %v7491 = vld [vmem:[%s12 + $0x1c8] sm:$0xff]
  %v7492 = vld [vmem:[%s12 + $0x1d0] sm:$0xff]
  %v7493 = vld [vmem:[%s12 + $0x1d8] sm:$0xff]
  %v7494 = vld [vmem:[%s12 + $0x1e0] sm:$0xff]
  %v7495 = vld [vmem:[%s12 + $0x1e8] sm:$0xff]
  %v7496 = vld [vmem:[%s12 + $0x1f0] sm:$0xff]
  %v7497 = vld [vmem:[%s12 + $0x1f8] sm:$0xff]
  %v7498 = vld [vmem:[#allocation8] sm:$0x1]
  %v7500 = vperm.slane %v7498, 0
  %7502 = vmatpush.msra.mxu0 %v7449
  %7503 = vmatpush.msra.mxu0 %v7448
  %7504 = vmatpush.msra.mxu0 %v7447
  %7505 = vmatpush.msra.mxu0 %v7446
  %7506 = vmatpush.msra.mxu0 %v7445
  %7507 = vmatpush.msra.mxu0 %v7444
  %7508 = vmatpush.msra.mxu0 %v7443
  %7509 = vmatpush.msra.mxu0 %v7442
  %7510 = vmatpush.msra.mxu0 %v7441
  %7511 = vmatpush.msra.mxu0 %v7440
  %7512 = vmatpush.msra.mxu0 %v7439
  %7513 = vmatpush.msra.mxu0 %v7438
  %7514 = vmatpush.msra.mxu0 %v7437
  %7515 = vmatpush.msra.mxu0 %v7436
  %7516 = vmatpush.msra.mxu0 %v7435
  %7517 = vmatpush.msra.mxu0 %v7434
  %7518 = vmatmul.f32.gmra.mxu0 %v7430
  %v7519 = vpop.f32.mrf.mxu0
  %v7520 = vadd.f32 %v7500, %v7519
  %7521 = vdwg.mxu0
  %7522 = vmatpush.msra.mxu0 %v7465
  %7523 = vmatpush.msra.mxu0 %v7464
  %7524 = vmatpush.msra.mxu0 %v7463
  %7525 = vmatpush.msra.mxu0 %v7462
  %7526 = vmatpush.msra.mxu0 %v7461
  %7527 = vmatpush.msra.mxu0 %v7460
  %7528 = vmatpush.msra.mxu0 %v7459
  %7529 = vmatpush.msra.mxu0 %v7458
  %7530 = vmatpush.msra.mxu0 %v7457
  %7531 = vmatpush.msra.mxu0 %v7456
  %7532 = vmatpush.msra.mxu0 %v7455
  %7533 = vmatpush.msra.mxu0 %v7454
  %7534 = vmatpush.msra.mxu0 %v7453
  %7535 = vmatpush.msra.mxu0 %v7452
  %7536 = vmatpush.msra.mxu0 %v7451
  %7537 = vmatpush.msra.mxu0 %v7450
  %7538 = vmatmul.f32.gmra.mxu0 %v7431
  %v7539 = vpop.f32.mrf.mxu0
  %v7540 = vadd.f32 %v7520, %v7539
  %7541 = vdwg.mxu0
  %7542 = vmatpush.msra.mxu0 %v7481
  %7543 = vmatpush.msra.mxu0 %v7480
  %7544 = vmatpush.msra.mxu0 %v7479
  %7545 = vmatpush.msra.mxu0 %v7478
  %7546 = vmatpush.msra.mxu0 %v7477
  %7547 = vmatpush.msra.mxu0 %v7476
  %7548 = vmatpush.msra.mxu0 %v7475
  %7549 = vmatpush.msra.mxu0 %v7474
  %7550 = vmatpush.msra.mxu0 %v7473
  %7551 = vmatpush.msra.mxu0 %v7472
  %7552 = vmatpush.msra.mxu0 %v7471
  %7553 = vmatpush.msra.mxu0 %v7470
  %7554 = vmatpush.msra.mxu0 %v7469
  %7555 = vmatpush.msra.mxu0 %v7468
  %7556 = vmatpush.msra.mxu0 %v7467
  %7557 = vmatpush.msra.mxu0 %v7466
  %7558 = vmatmul.f32.gmra.mxu0 %v7432
  %v7559 = vpop.f32.mrf.mxu0
  %v7560 = vadd.f32 %v7540, %v7559
  %7561 = vdwg.mxu0
  %7562 = vmatpush.msra.mxu0 %v7497
  %7563 = vmatpush.msra.mxu0 %v7496
  %7564 = vmatpush.msra.mxu0 %v7495
  %7565 = vmatpush.msra.mxu0 %v7494
  %7566 = vmatpush.msra.mxu0 %v7493
  %7567 = vmatpush.msra.mxu0 %v7492
  %7568 = vmatpush.msra.mxu0 %v7491
  %7569 = vmatpush.msra.mxu0 %v7490
  %7570 = vmatpush.msra.mxu0 %v7489
  %7571 = vmatpush.msra.mxu0 %v7488
  %7572 = vmatpush.msra.mxu0 %v7487
  %7573 = vmatpush.msra.mxu0 %v7486
  %7574 = vmatpush.msra.mxu0 %v7485
  %7575 = vmatpush.msra.mxu0 %v7484
  %7576 = vmatpush.msra.mxu0 %v7483
  %7577 = vmatpush.msra.mxu0 %v7482
  %7578 = vmatmul.f32.gmra.mxu0 %v7433
  %v7579 = vpop.f32.mrf.mxu0
  %v7580 = vadd.f32 %v7560, %v7579
  %7581 = vdwg.mxu0
  %vm7582 = vcmask 3072
  %7583 = vst.msk [vmem:[%s14] sm:$0xf] %vm7582, %v7580
  // Predicated region
  $region88: #{global_discriminator.1} parent=0 // pred_check
    _
  $region89: #{global_discriminator.1} parent=0 // pred_check_branch
    %7585 = sbr.rel (0) target = $region91
  $region90: #{global_discriminator.1} parent=0 // pred_region
    _
  $region91: #{global_discriminator.1} parent=0 // pred_fallthru
    _
  // Predicated region
  $region92: #{global_discriminator.1} parent=0 // pred_check
    _
  $region93: #{global_discriminator.1} parent=0 // pred_check_branch
    %7587 = sbr.rel (0) target = $region95
  $region94: #{global_discriminator.1} parent=0 // pred_region
    _
  $region95: #{global_discriminator.1} parent=0 // pred_fallthru
    _
  %7588 = vsyncmov [#allocation7]
  %s7589 = vpop.sfrf %7588
  %p7590 = scmp.eq.s32.totalorder %s7589, 0
  %p7591 = pneg %p7590
  %7593 = shalt.err (%p7591)
  %s7594 = scalar_lea.sflag [#allocation7], 1
  %7595 = vsyncmov %s7594
  %s7596 = vpop.sfrf %7595
  %p7597 = scmp.eq.s32.totalorder %s7596, 0
  %p7598 = pneg %p7597
  %7600 = shalt.err (%p7598)

</llo_original>
